<compile_context>
chip_gen: v5e
topology: v5e:2x2
jax: 0.10.0
libtpu: 0.0.40
codegen_flags: <defaults>
</compile_context>

<pallas_src>
import functools

import jax
import jax.numpy as jnp
from jax.experimental import pallas as pl
from jax.experimental.pallas import tpu as pltpu


_LANE = 128  # pad the 10-wide logits to one full lane group


# ---------------------------------------------------------------------------
# Fused kernel: layer-1 K-reduction + layers 2..6 on the final K step.
# ---------------------------------------------------------------------------
def _mlp2_fused_kernel(
    x_ref,                     # (B, 3072) f32   resident, sliced per K step
    w1_ref, b1_ref,            # (TK, 1024) bf16 streamed | (1, 1024) f32 resident
    w2_ref, b2_ref,            # bf16 / f32 residents
    w3_ref, b3_ref,
    w4_ref, b4_ref,
    w5_ref, b5_ref,
    w6_ref, b6_ref,            # (128, 128) bf16 zero-padded | (1, 128) f32
    o_ref,                     # (B, 128) f32 (lane-padded logits)
    acc_ref,                   # (B, 1024) f32 scratch: layer-1 accumulator
    *,
    tk: int,
):
    k = pl.program_id(0)

    @pl.when(k == 0)
    def _():
        acc_ref[...] = jnp.zeros_like(acc_ref)

    # Layer-1 partial product for this K tile (x resident, w1 streamed).
    start = pl.multiple_of(k * tk, tk)
    xk = x_ref[:, pl.ds(start, tk)].astype(jnp.bfloat16)
    acc_ref[...] += jnp.dot(xk, w1_ref[...], preferred_element_type=jnp.float32)

    # On the last K tile: bias + ReLU, then the VMEM-resident tail layers.
    @pl.when(k == pl.num_programs(0) - 1)
    def _():
        def layer(h, w_ref, b_ref, relu=True):
            y = jnp.dot(h.astype(jnp.bfloat16), w_ref[...],
                        preferred_element_type=jnp.float32) + b_ref[...]
            return jnp.maximum(y, 0.0) if relu else y

        h = jnp.maximum(acc_ref[...] + b1_ref[...], 0.0)
        h = layer(h, w2_ref, b2_ref)
        h = layer(h, w3_ref, b3_ref)
        h = layer(h, w4_ref, b4_ref)
        h = layer(h, w5_ref, b5_ref)
        logits = layer(h, w6_ref, b6_ref, relu=False)   # padded to 128 lanes
        o_ref[...] = logits.astype(o_ref.dtype)


def _pick_tk(k1: int) -> int:
    """Layer-1 K tile per chip generation (fallback is always-safe 1024)."""
    try:
        kind = jax.devices()[0].device_kind.lower()
    except Exception:
        return 1024
    if "v7" in kind or "7x" in kind:
        return k1            # grid=(1,): w1 fully resident (~6 MB bf16)
    if "v6" in kind:
        return k1 // 2       # grid=(2,): ~3 MB bf16 tiles
    return 1024              # v5e / others: grid=(3,), ~2 MB bf16 tiles


def mlp2_forward_pallas(x, params, *, tk=None):
    """x: (B, 3, 32, 32) f32 NCHW -> logits (B, 10) f32, single pallas_call."""
    B = x.shape[0]
    h0 = x.reshape(B, -1).astype(jnp.float32)        # same as x.view(B, -1)
    (w1, b1), (w2, b2), (w3, b3), (w4, b4), (w5, b5), (w6, b6) = params

    K1, N1 = w1.shape
    if tk is None:
        tk = _pick_tk(K1)
    assert h0.shape[1] == K1 and K1 % tk == 0
    n_k = K1 // tk

    # Weights cross HBM as bf16 (f32 accumulate keeps accuracy); biases f32.
    w1q, w2q, w3q, w4q, w5q = (w.astype(jnp.bfloat16)
                               for w in (w1, w2, w3, w4, w5))

    # Pad the last layer to lane width 128 -> unmasked stores / full-lane MXU.
    n_cls = w6.shape[1]
    w6q = jnp.zeros((w6.shape[0], _LANE), jnp.bfloat16).at[:, :n_cls].set(
        w6.astype(jnp.bfloat16))
    b6q = jnp.zeros((1, _LANE), jnp.float32).at[:, :n_cls].set(b6)

    b1r, b2r, b3r, b4r, b5r = (b.reshape(1, -1).astype(jnp.float32)
                               for b in (b1, b2, b3, b4, b5))

    def resident(arr):
        # Full array, constant block index, single-buffered: DMA'd once and
        # kept resident in VMEM for the whole grid.
        return pl.BlockSpec(arr.shape, lambda k: (0, 0),
                            pipeline_mode=pl.Buffered(1))

    # w1 is the only streamed operand; single-buffer it too when grid=(1,).
    w1_spec = pl.BlockSpec((tk, N1), lambda k: (k, 0),
                           pipeline_mode=pl.Buffered(1 if n_k == 1 else 2))

    in_specs = [
        resident(h0),                 # x: resident, sliced in-kernel
        w1_spec, resident(b1r),
        resident(w2q), resident(b2r),
        resident(w3q), resident(b3r),
        resident(w4q), resident(b4r),
        resident(w5q), resident(b5r),
        resident(w6q), resident(b6q),
    ]
    out_spec = pl.BlockSpec((B, _LANE), lambda k: (0, 0))

    out_padded = pl.pallas_call(
        functools.partial(_mlp2_fused_kernel, tk=tk),
        out_shape=jax.ShapeDtypeStruct((B, _LANE), jnp.float32),
        grid_spec=pltpu.PrefetchScalarGridSpec(
            num_scalar_prefetch=0,
            grid=(n_k,),                                # layer-1 K reduction
            in_specs=in_specs,
            out_specs=out_spec,
            scratch_shapes=[pltpu.VMEM((B, N1), jnp.float32)],
        ),
        compiler_params=pltpu.CompilerParams(
            dimension_semantics=("arbitrary",),         # reduction axis
            # ~10 MB actually live (bf16 weights, Buffered(1) residents);
            # 24 MiB gives ample margin and stays well under v7x's 64 MiB.
            vmem_limit_bytes=24 * 1024 * 1024,
        ),
    )(h0, w1q, b1r, w2q, b2r, w3q, b3r, w4q, b4r, w5q, b5r, w6q, b6q)

    return out_padded[:, :n_cls]


mlp2_forward = jax.jit(mlp2_forward_pallas)


# ---------------------------------------------------------------------------
# Parameter construction (deterministic, kaiming-normal-like for weights).
# ---------------------------------------------------------------------------
_LAYER_DIMS = [
    (3 * 32 * 32, 1024),
    (1024, 1024),
    (1024, 512),
    (512, 256),
    (256, 128),
    (128, 10),
]


def init_params(key):
    params = []
    for (fan_in, fan_out) in _LAYER_DIMS:
        key, kw, kb = jax.random.split(key, 3)
        # kaiming_normal_: std = sqrt(2 / fan_in); stored transposed (in, out).
        w_t = jax.random.normal(kw, (fan_in, fan_out), jnp.float32) * jnp.sqrt(
            2.0 / fan_in
        )
        b = jax.random.normal(kb, (fan_out,), jnp.float32) * 0.01
        params.append((w_t, b))
    return params


if __name__ == "__main__":
    key = jax.random.PRNGKey(0)
    key, kx = jax.random.split(key)

    B = 2
    x = jax.random.normal(kx, (B, 3, 32, 32), jnp.float32)  # NCHW like PyTorch

    params = init_params(key)

    out = mlp2_forward(x, params)
    out = jax.block_until_ready(out)

    assert out.shape == (B, 10), out.shape
    assert out.dtype == jnp.float32

    # Reference in plain JAX using the same bf16-rounded weights (f32 math);
    # the kernel additionally rounds activations to bf16 at each matmul, so
    # the tolerance is loosened per the bf16-weight change.
    ref = x.reshape(B, -1)
    for i, (w_t, b) in enumerate(params):
        wq = w_t.astype(jnp.bfloat16).astype(jnp.float32)
        ref = ref @ wq + b
        if i < len(params) - 1:
            ref = jnp.maximum(ref, 0.0)
    assert jnp.allclose(out, ref, rtol=2e-2, atol=2e-2), (
        float(jnp.max(jnp.abs(out - ref)))
    )

    print("KERNEL_OK")
</pallas_src>

<mosaic_0001>
module attributes {stable_mosaic.version = 11 : i64} {
  func.func @_mlp2_fused_kernel(%arg0: i32, %arg1: memref<2x3072xf32, #tpu.memory_space<vmem>>, %arg2: memref<1024x1024xbf16, #tpu.memory_space<vmem>>, %arg3: memref<1x1024xf32, #tpu.memory_space<vmem>>, %arg4: memref<1024x1024xbf16, #tpu.memory_space<vmem>>, %arg5: memref<1x1024xf32, #tpu.memory_space<vmem>>, %arg6: memref<1024x512xbf16, #tpu.memory_space<vmem>>, %arg7: memref<1x512xf32, #tpu.memory_space<vmem>>, %arg8: memref<512x256xbf16, #tpu.memory_space<vmem>>, %arg9: memref<1x256xf32, #tpu.memory_space<vmem>>, %arg10: memref<256x128xbf16, #tpu.memory_space<vmem>>, %arg11: memref<1x128xf32, #tpu.memory_space<vmem>>, %arg12: memref<128x128xbf16, #tpu.memory_space<vmem>>, %arg13: memref<1x128xf32, #tpu.memory_space<vmem>>, %arg14: memref<2x128xf32, #tpu.memory_space<vmem>>, %arg15: memref<2x1024xf32, #tpu.memory_space<vmem>>) attributes {dimension_semantics = [#tpu.dimension_semantics<arbitrary>], iteration_bounds = array<i64: 3>, scalar_prefetch = 0 : i64, scratch_operands = 1 : i64, tpu.core_type = #tpu.core_type<tc>, window_params = [{pipeline_mode = #tpu.pipeline_mode<synchronous>, transform_indices = @transform_0, window_bounds = array<i64: 2, 3072>}, {pipeline_mode = #tpu.pipeline_mode<double_buffered>, transform_indices = @transform_1, window_bounds = array<i64: 1024, 1024>}, {pipeline_mode = #tpu.pipeline_mode<synchronous>, transform_indices = @transform_2, window_bounds = array<i64: 1, 1024>}, {pipeline_mode = #tpu.pipeline_mode<synchronous>, transform_indices = @transform_3, window_bounds = array<i64: 1024, 1024>}, {pipeline_mode = #tpu.pipeline_mode<synchronous>, transform_indices = @transform_4, window_bounds = array<i64: 1, 1024>}, {pipeline_mode = #tpu.pipeline_mode<synchronous>, transform_indices = @transform_5, window_bounds = array<i64: 1024, 512>}, {pipeline_mode = #tpu.pipeline_mode<synchronous>, transform_indices = @transform_6, window_bounds = array<i64: 1, 512>}, {pipeline_mode = #tpu.pipeline_mode<synchronous>, transform_indices = @transform_7, window_bounds = array<i64: 512, 256>}, {pipeline_mode = #tpu.pipeline_mode<synchronous>, transform_indices = @transform_8, window_bounds = array<i64: 1, 256>}, {pipeline_mode = #tpu.pipeline_mode<synchronous>, transform_indices = @transform_9, window_bounds = array<i64: 256, 128>}, {pipeline_mode = #tpu.pipeline_mode<synchronous>, transform_indices = @transform_10, window_bounds = array<i64: 1, 128>}, {pipeline_mode = #tpu.pipeline_mode<synchronous>, transform_indices = @transform_11, window_bounds = array<i64: 128, 128>}, {pipeline_mode = #tpu.pipeline_mode<synchronous>, transform_indices = @transform_12, window_bounds = array<i64: 1, 128>}, {pipeline_mode = #tpu.pipeline_mode<synchronous>, transform_indices = @transform_13, window_bounds = array<i64: 2, 128>}]} {
    %c0_i32 = arith.constant 0 : i32
    %0 = arith.cmpi eq, %arg0, %c0_i32 : i32
    %1 = arith.extui %0 : i1 to i32
    %c0_i32_0 = arith.constant 0 : i32
    %2 = arith.cmpi ne, %1, %c0_i32_0 : i32
    scf.if %2 {
      %cst_8 = arith.constant 0.000000e+00 : f32
      %16 = vector.broadcast %cst_8 : f32 to vector<2x1024xf32>
      %c0_9 = arith.constant 0 : index
      %c0_10 = arith.constant 0 : index
      %17 = vector.load %arg15[%c0_9, %c0_10] : memref<2x1024xf32, #tpu.memory_space<vmem>>, vector<2x1024xf32>
      tpu.vector_store %arg15[%c0_9, %c0_10], %16 {strides = array<i32>} : memref<2x1024xf32, #tpu.memory_space<vmem>>, vector<2x1024xf32>,
    } else {
    }
    %c1024_i32 = arith.constant 1024 : i32
    %3 = arith.muli %arg0, %c1024_i32 : i32
    %4 = tpu.assume_multiple %3, 1024 : i32
    %c0 = arith.constant 0 : index
    %5 = arith.index_cast %4 : i32 to index
    %6 = vector.load %arg1[%c0, %5] : memref<2x3072xf32, #tpu.memory_space<vmem>>, vector<2x1024xf32>
    %7 = arith.truncf %6 : vector<2x1024xf32> to vector<2x1024xbf16>
    %c0_1 = arith.constant 0 : index
    %c0_2 = arith.constant 0 : index
    %8 = vector.load %arg15[%c0_1, %c0_2] : memref<2x1024xf32, #tpu.memory_space<vmem>>, vector<2x1024xf32>
    %c0_3 = arith.constant 0 : index
    %c0_4 = arith.constant 0 : index
    %9 = vector.load %arg2[%c0_3, %c0_4] : memref<1024x1024xbf16, #tpu.memory_space<vmem>>, vector<1024x1024xbf16>
    %cst = arith.constant dense<0.000000e+00> : vector<2x1024xf32>
    %10 = tpu.matmul %7, %9, %cst {dimension_numbers = #tpu.dot_dimension_numbers<[1], [0], [0], [1], [0, 0, 1, 1], [], []>} : vector<2x1024xbf16>, vector<1024x1024xbf16>, vector<2x1024xf32> -> vector<2x1024xf32>
    %11 = arith.addf %8, %10 : vector<2x1024xf32>
    %c0_5 = arith.constant 0 : index
    %c0_6 = arith.constant 0 : index
    %12 = vector.load %arg15[%c0_5, %c0_6] : memref<2x1024xf32, #tpu.memory_space<vmem>>, vector<2x1024xf32>
    tpu.vector_store %arg15[%c0_5, %c0_6], %11 {strides = array<i32>} : memref<2x1024xf32, #tpu.memory_space<vmem>>, vector<2x1024xf32>,
    %c2_i32 = arith.constant 2 : i32
    %13 = arith.cmpi eq, %arg0, %c2_i32 : i32
    %14 = arith.extui %13 : i1 to i32
    %c0_i32_7 = arith.constant 0 : i32
    %15 = arith.cmpi ne, %14, %c0_i32_7 : i32
    scf.if %15 {
      %c0_8 = arith.constant 0 : index
      %c0_9 = arith.constant 0 : index
      %16 = vector.load %arg15[%c0_8, %c0_9] : memref<2x1024xf32, #tpu.memory_space<vmem>>, vector<2x1024xf32>
      %c0_10 = arith.constant 0 : index
      %c0_11 = arith.constant 0 : index
      %17 = vector.load %arg3[%c0_10, %c0_11] : memref<1x1024xf32, #tpu.memory_space<vmem>>, vector<1x1024xf32>
      %18 = vector.broadcast %17 : vector<1x1024xf32> to vector<2x1024xf32>
      %19 = arith.addf %16, %18 : vector<2x1024xf32>
      %cst_12 = arith.constant 0.000000e+00 : f32
      %20 = vector.broadcast %cst_12 : f32 to vector<2x1024xf32>
      %21 = arith.maximumf %19, %20 : vector<2x1024xf32>
      %22 = arith.truncf %21 : vector<2x1024xf32> to vector<2x1024xbf16>
      %c0_13 = arith.constant 0 : index
      %c0_14 = arith.constant 0 : index
      %23 = vector.load %arg4[%c0_13, %c0_14] : memref<1024x1024xbf16, #tpu.memory_space<vmem>>, vector<1024x1024xbf16>
      %cst_15 = arith.constant dense<0.000000e+00> : vector<2x1024xf32>
      %24 = tpu.matmul %22, %23, %cst_15 {dimension_numbers = #tpu.dot_dimension_numbers<[1], [0], [0], [1], [0, 0, 1, 1], [], []>} : vector<2x1024xbf16>, vector<1024x1024xbf16>, vector<2x1024xf32> -> vector<2x1024xf32>
      %c0_16 = arith.constant 0 : index
      %c0_17 = arith.constant 0 : index
      %25 = vector.load %arg5[%c0_16, %c0_17] : memref<1x1024xf32, #tpu.memory_space<vmem>>, vector<1x1024xf32>
      %26 = vector.broadcast %25 : vector<1x1024xf32> to vector<2x1024xf32>
      %27 = arith.addf %24, %26 : vector<2x1024xf32>
      %cst_18 = arith.constant 0.000000e+00 : f32
      %28 = vector.broadcast %cst_18 : f32 to vector<2x1024xf32>
      %29 = arith.maximumf %27, %28 : vector<2x1024xf32>
      %30 = arith.truncf %29 : vector<2x1024xf32> to vector<2x1024xbf16>
      %c0_19 = arith.constant 0 : index
      %c0_20 = arith.constant 0 : index
      %31 = vector.load %arg6[%c0_19, %c0_20] : memref<1024x512xbf16, #tpu.memory_space<vmem>>, vector<1024x512xbf16>
      %cst_21 = arith.constant dense<0.000000e+00> : vector<2x512xf32>
      %32 = tpu.matmul %30, %31, %cst_21 {dimension_numbers = #tpu.dot_dimension_numbers<[1], [0], [0], [1], [0, 0, 1, 1], [], []>} : vector<2x1024xbf16>, vector<1024x512xbf16>, vector<2x512xf32> -> vector<2x512xf32>
      %c0_22 = arith.constant 0 : index
      %c0_23 = arith.constant 0 : index
      %33 = vector.load %arg7[%c0_22, %c0_23] : memref<1x512xf32, #tpu.memory_space<vmem>>, vector<1x512xf32>
      %34 = vector.broadcast %33 : vector<1x512xf32> to vector<2x512xf32>
      %35 = arith.addf %32, %34 : vector<2x512xf32>
      %cst_24 = arith.constant 0.000000e+00 : f32
      %36 = vector.broadcast %cst_24 : f32 to vector<2x512xf32>
      %37 = arith.maximumf %35, %36 : vector<2x512xf32>
      %38 = arith.truncf %37 : vector<2x512xf32> to vector<2x512xbf16>
      %c0_25 = arith.constant 0 : index
      %c0_26 = arith.constant 0 : index
      %39 = vector.load %arg8[%c0_25, %c0_26] : memref<512x256xbf16, #tpu.memory_space<vmem>>, vector<512x256xbf16>
      %cst_27 = arith.constant dense<0.000000e+00> : vector<2x256xf32>
      %40 = tpu.matmul %38, %39, %cst_27 {dimension_numbers = #tpu.dot_dimension_numbers<[1], [0], [0], [1], [0, 0, 1, 1], [], []>} : vector<2x512xbf16>, vector<512x256xbf16>, vector<2x256xf32> -> vector<2x256xf32>
      %c0_28 = arith.constant 0 : index
      %c0_29 = arith.constant 0 : index
      %41 = vector.load %arg9[%c0_28, %c0_29] : memref<1x256xf32, #tpu.memory_space<vmem>>, vector<1x256xf32>
      %42 = vector.broadcast %41 : vector<1x256xf32> to vector<2x256xf32>
      %43 = arith.addf %40, %42 : vector<2x256xf32>
      %cst_30 = arith.constant 0.000000e+00 : f32
      %44 = vector.broadcast %cst_30 : f32 to vector<2x256xf32>
      %45 = arith.maximumf %43, %44 : vector<2x256xf32>
      %46 = arith.truncf %45 : vector<2x256xf32> to vector<2x256xbf16>
      %c0_31 = arith.constant 0 : index
      %c0_32 = arith.constant 0 : index
      %47 = vector.load %arg10[%c0_31, %c0_32] : memref<256x128xbf16, #tpu.memory_space<vmem>>, vector<256x128xbf16>
      %cst_33 = arith.constant dense<0.000000e+00> : vector<2x128xf32>
      %48 = tpu.matmul %46, %47, %cst_33 {dimension_numbers = #tpu.dot_dimension_numbers<[1], [0], [0], [1], [0, 0, 1, 1], [], []>} : vector<2x256xbf16>, vector<256x128xbf16>, vector<2x128xf32> -> vector<2x128xf32>
      %c0_34 = arith.constant 0 : index
      %c0_35 = arith.constant 0 : index
      %49 = vector.load %arg11[%c0_34, %c0_35] : memref<1x128xf32, #tpu.memory_space<vmem>>, vector<1x128xf32>
      %50 = vector.broadcast %49 : vector<1x128xf32> to vector<2x128xf32>
      %51 = arith.addf %48, %50 : vector<2x128xf32>
      %cst_36 = arith.constant 0.000000e+00 : f32
      %52 = vector.broadcast %cst_36 : f32 to vector<2x128xf32>
      %53 = arith.maximumf %51, %52 : vector<2x128xf32>
      %54 = arith.truncf %53 : vector<2x128xf32> to vector<2x128xbf16>
      %c0_37 = arith.constant 0 : index
      %c0_38 = arith.constant 0 : index
      %55 = vector.load %arg12[%c0_37, %c0_38] : memref<128x128xbf16, #tpu.memory_space<vmem>>, vector<128x128xbf16>
      %cst_39 = arith.constant dense<0.000000e+00> : vector<2x128xf32>
      %56 = tpu.matmul %54, %55, %cst_39 {dimension_numbers = #tpu.dot_dimension_numbers<[1], [0], [0], [1], [0, 0, 1, 1], [], []>} : vector<2x128xbf16>, vector<128x128xbf16>, vector<2x128xf32> -> vector<2x128xf32>
      %c0_40 = arith.constant 0 : index
      %c0_41 = arith.constant 0 : index
      %57 = vector.load %arg13[%c0_40, %c0_41] : memref<1x128xf32, #tpu.memory_space<vmem>>, vector<1x128xf32>
      %58 = vector.broadcast %57 : vector<1x128xf32> to vector<2x128xf32>
      %59 = arith.addf %56, %58 : vector<2x128xf32>
      %c0_42 = arith.constant 0 : index
      %c0_43 = arith.constant 0 : index
      %60 = vector.load %arg14[%c0_42, %c0_43] : memref<2x128xf32, #tpu.memory_space<vmem>>, vector<2x128xf32>
      tpu.vector_store %arg14[%c0_42, %c0_43], %59 {strides = array<i32>} : memref<2x128xf32, #tpu.memory_space<vmem>>, vector<2x128xf32>,
    } else {
    }
    return
  }
  func.func @transform_0(%arg0: i32) -> (i32, i32) {
    %c0_i32 = arith.constant 0 : i32
    %c0_i32_0 = arith.constant 0 : i32
    %c0_i32_1 = arith.constant 0 : i32
    return %c0_i32, %c0_i32_0 : i32, i32
  }
  func.func @transform_1(%arg0: i32) -> (i32, i32) {
    %c0_i32 = arith.constant 0 : i32
    %c0_i32_0 = arith.constant 0 : i32
    return %arg0, %c0_i32 : i32, i32
  }
  func.func @transform_2(%arg0: i32) -> (i32, i32) {
    %c0_i32 = arith.constant 0 : i32
    %c0_i32_0 = arith.constant 0 : i32
    %c0_i32_1 = arith.constant 0 : i32
    return %c0_i32, %c0_i32_0 : i32, i32
  }
  func.func @transform_3(%arg0: i32) -> (i32, i32) {
    %c0_i32 = arith.constant 0 : i32
    %c0_i32_0 = arith.constant 0 : i32
    %c0_i32_1 = arith.constant 0 : i32
    return %c0_i32, %c0_i32_0 : i32, i32
  }
  func.func @transform_4(%arg0: i32) -> (i32, i32) {
    %c0_i32 = arith.constant 0 : i32
    %c0_i32_0 = arith.constant 0 : i32
    %c0_i32_1 = arith.constant 0 : i32
    return %c0_i32, %c0_i32_0 : i32, i32
  }
  func.func @transform_5(%arg0: i32) -> (i32, i32) {
    %c0_i32 = arith.constant 0 : i32
    %c0_i32_0 = arith.constant 0 : i32
    %c0_i32_1 = arith.constant 0 : i32
    return %c0_i32, %c0_i32_0 : i32, i32
  }
  func.func @transform_6(%arg0: i32) -> (i32, i32) {
    %c0_i32 = arith.constant 0 : i32
    %c0_i32_0 = arith.constant 0 : i32
    %c0_i32_1 = arith.constant 0 : i32
    return %c0_i32, %c0_i32_0 : i32, i32
  }
  func.func @transform_7(%arg0: i32) -> (i32, i32) {
    %c0_i32 = arith.constant 0 : i32
    %c0_i32_0 = arith.constant 0 : i32
    %c0_i32_1 = arith.constant 0 : i32
    return %c0_i32, %c0_i32_0 : i32, i32
  }
  func.func @transform_8(%arg0: i32) -> (i32, i32) {
    %c0_i32 = arith.constant 0 : i32
    %c0_i32_0 = arith.constant 0 : i32
    %c0_i32_1 = arith.constant 0 : i32
    return %c0_i32, %c0_i32_0 : i32, i32
  }
  func.func @transform_9(%arg0: i32) -> (i32, i32) {
    %c0_i32 = arith.constant 0 : i32
    %c0_i32_0 = arith.constant 0 : i32
    %c0_i32_1 = arith.constant 0 : i32
    return %c0_i32, %c0_i32_0 : i32, i32
  }
  func.func @transform_10(%arg0: i32) -> (i32, i32) {
    %c0_i32 = arith.constant 0 : i32
    %c0_i32_0 = arith.constant 0 : i32
    %c0_i32_1 = arith.constant 0 : i32
    return %c0_i32, %c0_i32_0 : i32, i32
  }
  func.func @transform_11(%arg0: i32) -> (i32, i32) {
    %c0_i32 = arith.constant 0 : i32
    %c0_i32_0 = arith.constant 0 : i32
    %c0_i32_1 = arith.constant 0 : i32
    return %c0_i32, %c0_i32_0 : i32, i32
  }
  func.func @transform_12(%arg0: i32) -> (i32, i32) {
    %c0_i32 = arith.constant 0 : i32
    %c0_i32_0 = arith.constant 0 : i32
    %c0_i32_1 = arith.constant 0 : i32
    return %c0_i32, %c0_i32_0 : i32, i32
  }
  func.func @transform_13(%arg0: i32) -> (i32, i32) {
    %c0_i32 = arith.constant 0 : i32
    %c0_i32_0 = arith.constant 0 : i32
    %c0_i32_1 = arith.constant 0 : i32
    return %c0_i32, %c0_i32_0 : i32, i32
  }
}

</mosaic_0001>

<llo_original>
// kernel: mlp2_forward_pallas.1
$region0: #{mlp2_forward_pallas.1}
  #allocation0 [shape = 'u32[]', space=smem, size = 0x4, offset = 0x4, fixed_abs, tag = 'smem constant byte address 0x4 - core index']
  #allocation1 [shape = 'u32[72,128]{1,0:T(1,128)}', space=vmem, size = 0x9000, scoped, tag = 'internal scratch']
  #allocation2 [shape = 'f32[2,1024]{1,0:T(2,128)}', space=vmem, size = 0x2000, scoped, tag = 'scratch operand']
  %s0 = inlined_call_operand.vmem [shape: f32[2,3072], index: 0, kind: input, shape index: {}]
  %s1 = inlined_call_operand.vmem [shape: bf16[3072,1024], index: 1, kind: input, shape index: {}]
  %s2 = inlined_call_operand.vmem [shape: f32[1,1024], index: 2, kind: input, shape index: {}]
  %s3 = inlined_call_operand.vmem [shape: bf16[1024,1024], index: 3, kind: input, shape index: {}]
  %s4 = inlined_call_operand.vmem [shape: f32[1,1024], index: 4, kind: input, shape index: {}]
  %s5 = inlined_call_operand.vmem [shape: bf16[1024,512], index: 5, kind: input, shape index: {}]
  %s6 = inlined_call_operand.vmem [shape: f32[1,512], index: 6, kind: input, shape index: {}]
  %s7 = inlined_call_operand.vmem [shape: bf16[512,256], index: 7, kind: input, shape index: {}]
  %s8 = inlined_call_operand.vmem [shape: f32[1,256], index: 8, kind: input, shape index: {}]
  %s9 = inlined_call_operand.vmem [shape: bf16[256,128], index: 9, kind: input, shape index: {}]
  %s10 = inlined_call_operand.vmem [shape: f32[1,128], index: 10, kind: input, shape index: {}]
  %s11 = inlined_call_operand.vmem [shape: bf16[128,128], index: 11, kind: input, shape index: {}]
  %s12 = inlined_call_operand.vmem [shape: f32[1,128], index: 12, kind: input, shape index: {}]
  %s13 = inlined_call_operand.hbm [shape: f32[2,128], index: 13, kind: output, shape index: {}]
  %s14 = sld [smem:[#allocation0]]
  $region93: #{mlp2_forward_pallas.1} parent=0
    _
  %s16 = ssub.s32 1, %s14
  %s17 = scalar_select 0, %s16, %s14
  $region1: #{mlp2_forward_pallas.1} parent=0
    #allocation3 [shape = 'u8[1024]{0}', space=vmem, size = 0x400, scoped, tag = 'output window, operand 0, single buffered']
    #allocation4 [shape = 's32[2]{0}', space=sflag, size = 0x8, scoped, tag = 'scoped memory for mlp2_forward_pallas.1']
    %18 = vsyncpa [#allocation4], 0
    loop: start=0, step=1, limit=5
    $region2: #{mlp2_forward_pallas.1} parent=1 // loop_pre_header
      _
    $region3: #{mlp2_forward_pallas.1} parent=1 // loop_header
      %s20 = sphi 0, %s24
      %p21 = scmp.ge.s32.totalorder %s20, 5
      %s28 = sphi 0, %s28
      %s30 = sphi 0, %s28
      %s31 = sphi 0, %s30
      %s45 = sphi 0, %s31
      %s51 = sphi 0, %s53
      %s54 = sphi 0, %s51
      %s55 = sphi 0, %s54
      %s71 = sphi 0, %s55
      %s75 = sphi 0, %s75
      %s77 = sphi 0, %s75
      %s78 = sphi 0, %s77
      %s92 = sphi 0, %s78
      %s96 = sphi 0, %s96
      %s98 = sphi 0, %s96
      %s99 = sphi 0, %s98
      %s113 = sphi 0, %s99
      %s117 = sphi 0, %s117
      %s119 = sphi 0, %s117
      %s120 = sphi 0, %s119
      %s134 = sphi 0, %s120
      %s138 = sphi 0, %s138
      %s140 = sphi 0, %s138
      %s141 = sphi 0, %s140
      %s155 = sphi 0, %s141
      %s159 = sphi 0, %s159
      %s161 = sphi 0, %s159
      %s162 = sphi 0, %s161
      %s176 = sphi 0, %s162
      %s180 = sphi 0, %s180
      %s182 = sphi 0, %s180
      %s183 = sphi 0, %s182
      %s197 = sphi 0, %s183
      %s201 = sphi 0, %s201
      %s203 = sphi 0, %s201
      %s204 = sphi 0, %s203
      %s218 = sphi 0, %s204
      %s222 = sphi 0, %s222
      %s224 = sphi 0, %s222
      %s225 = sphi 0, %s224
      %s239 = sphi 0, %s225
      %s243 = sphi 0, %s243
      %s245 = sphi 0, %s243
      %s246 = sphi 0, %s245
      %s260 = sphi 0, %s246
      %s264 = sphi 0, %s264
      %s266 = sphi 0, %s264
      %s267 = sphi 0, %s266
      %s281 = sphi 0, %s267
      %s285 = sphi 0, %s285
      %s287 = sphi 0, %s285
      %s288 = sphi 0, %s287
      %s302 = sphi 0, %s288
      %s306 = sphi 0, %s306
      %s308 = sphi 0, %s306
      %s309 = sphi 0, %s308
      %s323 = sphi 0, %s309
    $region4: #{mlp2_forward_pallas.1} parent=1 // loop_header_branch
      %23 = sbr.rel (%p21) target = $region8
    $region5: #{mlp2_forward_pallas.1} parent=1 // loop_body
      %s25 = ssub.s32 %s20, 1
      %s26 = ssub.s32 %s20, 2
      %s27 = sadd.s32 %s20, 1
      %s29 = sadd.s32 %s28, 1
      %p32 = scmp.eq.s32.totalorder %s20, 2
      %p33 = scmp.ne.s32.totalorder %s28, %s30
      %p34 = scmp.eq.s32.totalorder %s20, 0
      %p35 = por %p33, %p34
      %p36 = scmp.ne.s32.totalorder %s28, %s30
      %p37 = scmp.eq.s32.totalorder %s25, 2
      %p38 = por %p36, %p37
      %p39 = scmp.ne.s32.totalorder %s30, %s31
      %p40 = scmp.eq.s32.totalorder %s25, 0
      %p41 = por %p39, %p40
      %p42 = scmp.ne.s32.totalorder %s30, %s31
      %p43 = scmp.eq.s32.totalorder %s26, 2
      %p44 = por %p42, %p43
      %p46 = scmp.ne.s32.totalorder %s31, %s45
      %p47 = scmp.eq.s32.totalorder %s26, 0
      %p48 = por %p46, %p47
      %s49 = ssub.s32 %s20, %s27
      %p50 = scmp.eq.s32.totalorder %s49, 0
      %s52 = sadd.s32 %s51, 1
      %s53 = scalar_select %p50, %s51, %s52
      %p56 = pneg %p50
      %p57 = scmp.eq.s32.totalorder %s20, 2
      %p58 = por %p56, %p57
      %p59 = scmp.ne.s32.totalorder %s51, %s54
      %p60 = scmp.eq.s32.totalorder %s20, 0
      %p61 = por %p59, %p60
      %p62 = scmp.ne.s32.totalorder %s51, %s54
      %p63 = scmp.eq.s32.totalorder %s25, 2
      %p64 = por %p62, %p63
      %p65 = scmp.ne.s32.totalorder %s54, %s55
      %p66 = scmp.eq.s32.totalorder %s25, 0
      %p67 = por %p65, %p66
      %p68 = scmp.ne.s32.totalorder %s54, %s55
      %p69 = scmp.eq.s32.totalorder %s26, 2
      %p70 = por %p68, %p69
      %p72 = scmp.ne.s32.totalorder %s55, %s71
      %p73 = scmp.eq.s32.totalorder %s26, 0
      %p74 = por %p72, %p73
      %s76 = sadd.s32 %s75, 1
      %p79 = scmp.eq.s32.totalorder %s20, 2
      %p80 = scmp.ne.s32.totalorder %s75, %s77
      %p81 = scmp.eq.s32.totalorder %s20, 0
      %p82 = por %p80, %p81
      %p83 = scmp.ne.s32.totalorder %s75, %s77
      %p84 = scmp.eq.s32.totalorder %s25, 2
      %p85 = por %p83, %p84
      %p86 = scmp.ne.s32.totalorder %s77, %s78
      %p87 = scmp.eq.s32.totalorder %s25, 0
      %p88 = por %p86, %p87
      %p89 = scmp.ne.s32.totalorder %s77, %s78
      %p90 = scmp.eq.s32.totalorder %s26, 2
      %p91 = por %p89, %p90
      %p93 = scmp.ne.s32.totalorder %s78, %s92
      %p94 = scmp.eq.s32.totalorder %s26, 0
      %p95 = por %p93, %p94
      %s97 = sadd.s32 %s96, 1
      %p100 = scmp.eq.s32.totalorder %s20, 2
      %p101 = scmp.ne.s32.totalorder %s96, %s98
      %p102 = scmp.eq.s32.totalorder %s20, 0
      %p103 = por %p101, %p102
      %p104 = scmp.ne.s32.totalorder %s96, %s98
      %p105 = scmp.eq.s32.totalorder %s25, 2
      %p106 = por %p104, %p105
      %p107 = scmp.ne.s32.totalorder %s98, %s99
      %p108 = scmp.eq.s32.totalorder %s25, 0
      %p109 = por %p107, %p108
      %p110 = scmp.ne.s32.totalorder %s98, %s99
      %p111 = scmp.eq.s32.totalorder %s26, 2
      %p112 = por %p110, %p111
      %p114 = scmp.ne.s32.totalorder %s99, %s113
      %p115 = scmp.eq.s32.totalorder %s26, 0
      %p116 = por %p114, %p115
      %s118 = sadd.s32 %s117, 1
      %p121 = scmp.eq.s32.totalorder %s20, 2
      %p122 = scmp.ne.s32.totalorder %s117, %s119
      %p123 = scmp.eq.s32.totalorder %s20, 0
      %p124 = por %p122, %p123
      %p125 = scmp.ne.s32.totalorder %s117, %s119
      %p126 = scmp.eq.s32.totalorder %s25, 2
      %p127 = por %p125, %p126
      %p128 = scmp.ne.s32.totalorder %s119, %s120
      %p129 = scmp.eq.s32.totalorder %s25, 0
      %p130 = por %p128, %p129
      %p131 = scmp.ne.s32.totalorder %s119, %s120
      %p132 = scmp.eq.s32.totalorder %s26, 2
      %p133 = por %p131, %p132
      %p135 = scmp.ne.s32.totalorder %s120, %s134
      %p136 = scmp.eq.s32.totalorder %s26, 0
      %p137 = por %p135, %p136
      %s139 = sadd.s32 %s138, 1
      %p142 = scmp.eq.s32.totalorder %s20, 2
      %p143 = scmp.ne.s32.totalorder %s138, %s140
      %p144 = scmp.eq.s32.totalorder %s20, 0
      %p145 = por %p143, %p144
      %p146 = scmp.ne.s32.totalorder %s138, %s140
      %p147 = scmp.eq.s32.totalorder %s25, 2
      %p148 = por %p146, %p147
      %p149 = scmp.ne.s32.totalorder %s140, %s141
      %p150 = scmp.eq.s32.totalorder %s25, 0
      %p151 = por %p149, %p150
      %p152 = scmp.ne.s32.totalorder %s140, %s141
      %p153 = scmp.eq.s32.totalorder %s26, 2
      %p154 = por %p152, %p153
      %p156 = scmp.ne.s32.totalorder %s141, %s155
      %p157 = scmp.eq.s32.totalorder %s26, 0
      %p158 = por %p156, %p157
      %s160 = sadd.s32 %s159, 1
      %p163 = scmp.eq.s32.totalorder %s20, 2
      %p164 = scmp.ne.s32.totalorder %s159, %s161
      %p165 = scmp.eq.s32.totalorder %s20, 0
      %p166 = por %p164, %p165
      %p167 = scmp.ne.s32.totalorder %s159, %s161
      %p168 = scmp.eq.s32.totalorder %s25, 2
      %p169 = por %p167, %p168
      %p170 = scmp.ne.s32.totalorder %s161, %s162
      %p171 = scmp.eq.s32.totalorder %s25, 0
      %p172 = por %p170, %p171
      %p173 = scmp.ne.s32.totalorder %s161, %s162
      %p174 = scmp.eq.s32.totalorder %s26, 2
      %p175 = por %p173, %p174
      %p177 = scmp.ne.s32.totalorder %s162, %s176
      %p178 = scmp.eq.s32.totalorder %s26, 0
      %p179 = por %p177, %p178
      %s181 = sadd.s32 %s180, 1
      %p184 = scmp.eq.s32.totalorder %s20, 2
      %p185 = scmp.ne.s32.totalorder %s180, %s182
      %p186 = scmp.eq.s32.totalorder %s20, 0
      %p187 = por %p185, %p186
      %p188 = scmp.ne.s32.totalorder %s180, %s182
      %p189 = scmp.eq.s32.totalorder %s25, 2
      %p190 = por %p188, %p189
      %p191 = scmp.ne.s32.totalorder %s182, %s183
      %p192 = scmp.eq.s32.totalorder %s25, 0
      %p193 = por %p191, %p192
      %p194 = scmp.ne.s32.totalorder %s182, %s183
      %p195 = scmp.eq.s32.totalorder %s26, 2
      %p196 = por %p194, %p195
      %p198 = scmp.ne.s32.totalorder %s183, %s197
      %p199 = scmp.eq.s32.totalorder %s26, 0
      %p200 = por %p198, %p199
      %s202 = sadd.s32 %s201, 1
      %p205 = scmp.eq.s32.totalorder %s20, 2
      %p206 = scmp.ne.s32.totalorder %s201, %s203
      %p207 = scmp.eq.s32.totalorder %s20, 0
      %p208 = por %p206, %p207
      %p209 = scmp.ne.s32.totalorder %s201, %s203
      %p210 = scmp.eq.s32.totalorder %s25, 2
      %p211 = por %p209, %p210
      %p212 = scmp.ne.s32.totalorder %s203, %s204
      %p213 = scmp.eq.s32.totalorder %s25, 0
      %p214 = por %p212, %p213
      %p215 = scmp.ne.s32.totalorder %s203, %s204
      %p216 = scmp.eq.s32.totalorder %s26, 2
      %p217 = por %p215, %p216
      %p219 = scmp.ne.s32.totalorder %s204, %s218
      %p220 = scmp.eq.s32.totalorder %s26, 0
      %p221 = por %p219, %p220
      %s223 = sadd.s32 %s222, 1
      %p226 = scmp.eq.s32.totalorder %s20, 2
      %p227 = scmp.ne.s32.totalorder %s222, %s224
      %p228 = scmp.eq.s32.totalorder %s20, 0
      %p229 = por %p227, %p228
      %p230 = scmp.ne.s32.totalorder %s222, %s224
      %p231 = scmp.eq.s32.totalorder %s25, 2
      %p232 = por %p230, %p231
      %p233 = scmp.ne.s32.totalorder %s224, %s225
      %p234 = scmp.eq.s32.totalorder %s25, 0
      %p235 = por %p233, %p234
      %p236 = scmp.ne.s32.totalorder %s224, %s225
      %p237 = scmp.eq.s32.totalorder %s26, 2
      %p238 = por %p236, %p237
      %p240 = scmp.ne.s32.totalorder %s225, %s239
      %p241 = scmp.eq.s32.totalorder %s26, 0
      %p242 = por %p240, %p241
      %s244 = sadd.s32 %s243, 1
      %p247 = scmp.eq.s32.totalorder %s20, 2
      %p248 = scmp.ne.s32.totalorder %s243, %s245
      %p249 = scmp.eq.s32.totalorder %s20, 0
      %p250 = por %p248, %p249
      %p251 = scmp.ne.s32.totalorder %s243, %s245
      %p252 = scmp.eq.s32.totalorder %s25, 2
      %p253 = por %p251, %p252
      %p254 = scmp.ne.s32.totalorder %s245, %s246
      %p255 = scmp.eq.s32.totalorder %s25, 0
      %p256 = por %p254, %p255
      %p257 = scmp.ne.s32.totalorder %s245, %s246
      %p258 = scmp.eq.s32.totalorder %s26, 2
      %p259 = por %p257, %p258
      %p261 = scmp.ne.s32.totalorder %s246, %s260
      %p262 = scmp.eq.s32.totalorder %s26, 0
      %p263 = por %p261, %p262
      %s265 = sadd.s32 %s264, 1
      %p268 = scmp.eq.s32.totalorder %s20, 2
      %p269 = scmp.ne.s32.totalorder %s264, %s266
      %p270 = scmp.eq.s32.totalorder %s20, 0
      %p271 = por %p269, %p270
      %p272 = scmp.ne.s32.totalorder %s264, %s266
      %p273 = scmp.eq.s32.totalorder %s25, 2
      %p274 = por %p272, %p273
      %p275 = scmp.ne.s32.totalorder %s266, %s267
      %p276 = scmp.eq.s32.totalorder %s25, 0
      %p277 = por %p275, %p276
      %p278 = scmp.ne.s32.totalorder %s266, %s267
      %p279 = scmp.eq.s32.totalorder %s26, 2
      %p280 = por %p278, %p279
      %p282 = scmp.ne.s32.totalorder %s267, %s281
      %p283 = scmp.eq.s32.totalorder %s26, 0
      %p284 = por %p282, %p283
      %s286 = sadd.s32 %s285, 1
      %p289 = scmp.eq.s32.totalorder %s20, 2
      %p290 = scmp.ne.s32.totalorder %s285, %s287
      %p291 = scmp.eq.s32.totalorder %s20, 0
      %p292 = por %p290, %p291
      %p293 = scmp.ne.s32.totalorder %s285, %s287
      %p294 = scmp.eq.s32.totalorder %s25, 2
      %p295 = por %p293, %p294
      %p296 = scmp.ne.s32.totalorder %s287, %s288
      %p297 = scmp.eq.s32.totalorder %s25, 0
      %p298 = por %p296, %p297
      %p299 = scmp.ne.s32.totalorder %s287, %s288
      %p300 = scmp.eq.s32.totalorder %s26, 2
      %p301 = por %p299, %p300
      %p303 = scmp.ne.s32.totalorder %s288, %s302
      %p304 = scmp.eq.s32.totalorder %s26, 0
      %p305 = por %p303, %p304
      %s307 = sadd.s32 %s306, 1
      %p310 = scmp.eq.s32.totalorder %s20, 2
      %p311 = scmp.ne.s32.totalorder %s306, %s308
      %p312 = scmp.eq.s32.totalorder %s20, 0
      %p313 = por %p311, %p312
      %p314 = scmp.ne.s32.totalorder %s306, %s308
      %p315 = scmp.eq.s32.totalorder %s25, 2
      %p316 = por %p314, %p315
      %p317 = scmp.ne.s32.totalorder %s308, %s309
      %p318 = scmp.eq.s32.totalorder %s25, 0
      %p319 = por %p317, %p318
      %p320 = scmp.ne.s32.totalorder %s308, %s309
      %p321 = scmp.eq.s32.totalorder %s26, 2
      %p322 = por %p320, %p321
      %p324 = scmp.ne.s32.totalorder %s309, %s323
      %p325 = scmp.eq.s32.totalorder %s26, 0
      %p326 = por %p324, %p325
      %p327 = scmp.le.s32.totalorder 1, %s20
      %p328 = scmp.lt.s32.totalorder %s20, 4
      %p329 = pnand %p327, %p328
      %p330 = pneg %p329
      // Predicated region
      $region9: #{mlp2_forward_pallas.1} parent=5 // pred_check
        _
      $region10: #{mlp2_forward_pallas.1} parent=5 // pred_check_branch
        %332 = sbr.rel (%p329) target = $region12
      $region11: #{mlp2_forward_pallas.1} parent=5 // pred_region
        %s333 = ssub.s32 %s20, 1
        // Predicated region
        $region13: #{mlp2_forward_pallas.1} parent=11 // pred_check
          %p334 = pneg %p41
        $region14: #{mlp2_forward_pallas.1} parent=11 // pred_check_branch
          %336 = sbr.rel (%p334) target = $region16
        $region15: #{mlp2_forward_pallas.1} parent=11 // pred_region
          _
        $region16: #{mlp2_forward_pallas.1} parent=11 // pred_fallthru
          _
        // Predicated region
        $region17: #{mlp2_forward_pallas.1} parent=11 // pred_check
          %p337 = pneg %p88
        $region18: #{mlp2_forward_pallas.1} parent=11 // pred_check_branch
          %339 = sbr.rel (%p337) target = $region20
        $region19: #{mlp2_forward_pallas.1} parent=11 // pred_region
          _
        $region20: #{mlp2_forward_pallas.1} parent=11 // pred_fallthru
          _
        // Predicated region
        $region21: #{mlp2_forward_pallas.1} parent=11 // pred_check
          %p340 = pneg %p109
        $region22: #{mlp2_forward_pallas.1} parent=11 // pred_check_branch
          %342 = sbr.rel (%p340) target = $region24
        $region23: #{mlp2_forward_pallas.1} parent=11 // pred_region
          _
        $region24: #{mlp2_forward_pallas.1} parent=11 // pred_fallthru
          _
        // Predicated region
        $region25: #{mlp2_forward_pallas.1} parent=11 // pred_check
          %p343 = pneg %p130
        $region26: #{mlp2_forward_pallas.1} parent=11 // pred_check_branch
          %345 = sbr.rel (%p343) target = $region28
        $region27: #{mlp2_forward_pallas.1} parent=11 // pred_region
          _
        $region28: #{mlp2_forward_pallas.1} parent=11 // pred_fallthru
          _
        // Predicated region
        $region29: #{mlp2_forward_pallas.1} parent=11 // pred_check
          %p346 = pneg %p151
        $region30: #{mlp2_forward_pallas.1} parent=11 // pred_check_branch
          %348 = sbr.rel (%p346) target = $region32
        $region31: #{mlp2_forward_pallas.1} parent=11 // pred_region
          _
        $region32: #{mlp2_forward_pallas.1} parent=11 // pred_fallthru
          _
        // Predicated region
        $region33: #{mlp2_forward_pallas.1} parent=11 // pred_check
          %p349 = pneg %p172
        $region34: #{mlp2_forward_pallas.1} parent=11 // pred_check_branch
          %351 = sbr.rel (%p349) target = $region36
        $region35: #{mlp2_forward_pallas.1} parent=11 // pred_region
          _
        $region36: #{mlp2_forward_pallas.1} parent=11 // pred_fallthru
          _
        // Predicated region
        $region37: #{mlp2_forward_pallas.1} parent=11 // pred_check
          %p352 = pneg %p193
        $region38: #{mlp2_forward_pallas.1} parent=11 // pred_check_branch
          %354 = sbr.rel (%p352) target = $region40
        $region39: #{mlp2_forward_pallas.1} parent=11 // pred_region
          _
        $region40: #{mlp2_forward_pallas.1} parent=11 // pred_fallthru
          _
        // Predicated region
        $region41: #{mlp2_forward_pallas.1} parent=11 // pred_check
          %p355 = pneg %p214
        $region42: #{mlp2_forward_pallas.1} parent=11 // pred_check_branch
          %357 = sbr.rel (%p355) target = $region44
        $region43: #{mlp2_forward_pallas.1} parent=11 // pred_region
          _
        $region44: #{mlp2_forward_pallas.1} parent=11 // pred_fallthru
          _
        // Predicated region
        $region45: #{mlp2_forward_pallas.1} parent=11 // pred_check
          %p358 = pneg %p235
        $region46: #{mlp2_forward_pallas.1} parent=11 // pred_check_branch
          %360 = sbr.rel (%p358) target = $region48
        $region47: #{mlp2_forward_pallas.1} parent=11 // pred_region
          _
        $region48: #{mlp2_forward_pallas.1} parent=11 // pred_fallthru
          _
        // Predicated region
        $region49: #{mlp2_forward_pallas.1} parent=11 // pred_check
          %p361 = pneg %p256
        $region50: #{mlp2_forward_pallas.1} parent=11 // pred_check_branch
          %363 = sbr.rel (%p361) target = $region52
        $region51: #{mlp2_forward_pallas.1} parent=11 // pred_region
          _
        $region52: #{mlp2_forward_pallas.1} parent=11 // pred_fallthru
          _
        // Predicated region
        $region53: #{mlp2_forward_pallas.1} parent=11 // pred_check
          %p364 = pneg %p277
        $region54: #{mlp2_forward_pallas.1} parent=11 // pred_check_branch
          %366 = sbr.rel (%p364) target = $region56
        $region55: #{mlp2_forward_pallas.1} parent=11 // pred_region
          _
        $region56: #{mlp2_forward_pallas.1} parent=11 // pred_fallthru
          _
        // Predicated region
        $region57: #{mlp2_forward_pallas.1} parent=11 // pred_check
          %p367 = pneg %p298
        $region58: #{mlp2_forward_pallas.1} parent=11 // pred_check_branch
          %369 = sbr.rel (%p367) target = $region60
        $region59: #{mlp2_forward_pallas.1} parent=11 // pred_region
          _
        $region60: #{mlp2_forward_pallas.1} parent=11 // pred_fallthru
          _
      $region12: #{mlp2_forward_pallas.1} parent=5 // pred_fallthru
        _
      %p370 = scmp.lt.s32.totalorder %s20, 3
      // Predicated region
      $region61: #{mlp2_forward_pallas.1} parent=5 // pred_check
        %p371 = pneg %p370
      $region62: #{mlp2_forward_pallas.1} parent=5 // pred_check_branch
        %373 = sbr.rel (%p371) target = $region64
      $region63: #{mlp2_forward_pallas.1} parent=5 // pred_region
        // Predicated region
        $region65: #{mlp2_forward_pallas.1} parent=63 // pred_check
          %p374 = pneg %p61
        $region66: #{mlp2_forward_pallas.1} parent=63 // pred_check_branch
          %376 = sbr.rel (%p374) target = $region68
        $region67: #{mlp2_forward_pallas.1} parent=63 // pred_region
          %s377 = smul.u32 128, %s20
          %p378 = scmp.lt.s32.totalorder %s377, 383
          %s379 = scalar_select %p378, %s377, 383
          %s380 = smul.addr %s379, 8
          %s381 = smul.addr %s380, 4
          %s382 = scalar_lea.vmem %s1, %s381
          %s383 = smul.u32 128, %s20
        $region68: #{mlp2_forward_pallas.1} parent=63 // pred_fallthru
          _
      $region64: #{mlp2_forward_pallas.1} parent=5 // pred_fallthru
        _
      %p384 = scmp.le.s32.totalorder 1, %s20
      %p385 = scmp.lt.s32.totalorder %s20, 4
      %p386 = pnand %p384, %p385
      %p387 = pneg %p386
      // Predicated region
      $region69: #{mlp2_forward_pallas.1} parent=5 // pred_check
        _
      $region70: #{mlp2_forward_pallas.1} parent=5 // pred_check_branch
        %389 = sbr.rel (%p386) target = $region72
      $region71: #{mlp2_forward_pallas.1} parent=5 // pred_region
        %s390 = ssub.s32 %s20, 1
        %p391 = pneg %p41
        %p392 = pneg %p38
        %s393 = smul.u32 128, %s25
        %p394 = scmp.lt.s32.totalorder %s393, 383
        %s395 = scalar_select %p394, %s393, 383
        %s396 = smul.addr %s395, 8
        %s397 = smul.addr %s396, 4
        %s398 = scalar_lea.vmem %s1, %s397
        %p399 = pneg %p67
        %p400 = pneg %p64
        %p401 = pneg %p88
        %p402 = pneg %p85
        %p403 = pneg %p109
        %p404 = pneg %p106
        %p405 = pneg %p130
        %p406 = pneg %p127
        %p407 = pneg %p151
        %p408 = pneg %p148
        %p409 = pneg %p172
        %p410 = pneg %p169
        %p411 = pneg %p193
        %p412 = pneg %p190
        %p413 = pneg %p214
        %p414 = pneg %p211
        %p415 = pneg %p235
        %p416 = pneg %p232
        %p417 = pneg %p256
        %p418 = pneg %p253
        %p419 = pneg %p277
        %p420 = pneg %p274
        %p421 = pneg %p298
        %p422 = pneg %p295
        %p423 = pneg %p319
        %p424 = pneg %p316
        %s425 = smul.u32 128, %s25
        %p426 = scmp.lt.s32.totalorder %s425, 383
        %s427 = scalar_select %p426, %s425, 383
        %s428 = smul.addr %s427, 8
        %s429 = smul.addr %s428, 4
        %s430 = scalar_lea.vmem %s1, %s429
        %s431 = smul.u32 128, %s25
        %p432 = scmp.eq.s32.totalorder %s25, 0
        // Predicated region
        $region73: #{mlp2_forward_pallas.1} parent=71 // pred_check
          %p433 = pneg %p432
        $region74: #{mlp2_forward_pallas.1} parent=71 // pred_check_branch
          %435 = sbr.rel (%p433) target = $region76
        $region75: #{mlp2_forward_pallas.1} parent=71 // pred_region
          %436 = vst [vmem:[#allocation2] sm:$0xff] 0.0
          %437 = vst [vmem:[#allocation2 + $0x8] sm:$0xff] 0.0
        $region76: #{mlp2_forward_pallas.1} parent=71 // pred_fallthru
          _
        %s438 = smul.u32 %s25, 1024
        %s439 = sshra.s32 %s438, 7
        %s440 = sand.u32 %s438, 127
        %s441 = smul.addr %s439, 2
        %s442 = scalar_lea.vmem %s0, %s441
        %v443 = vld [vmem:[%s442] sm:$0xff]
        %v444 = vld [vmem:[%s442 + $0x8] sm:$0xff]
        %447 = vst [vmem:[#allocation1] ss:$4 sm:$0xff] %v443
        %s448 = scalar_lea.vmem [#allocation1], 32
        %449 = vst [vmem:[%s448] ss:$4 sm:$0xff] %v444
        %v450 = vld.sshfl [vmem:[#allocation1] sm:$0xff pattern:$0x73625140]
        %v451 = vld.sshfl [vmem:[#allocation1 + $0x8] sm:$0xff pattern:$0x73625140]
        %v452 = vld.sshfl [vmem:[#allocation1 + $0x10] sm:$0xff pattern:$0x73625140]
        %v453 = vld.sshfl [vmem:[#allocation1 + $0x18] sm:$0xff pattern:$0x73625140]
        %v454 = vld.sshfl [vmem:[#allocation1 + $0x20] sm:$0xff pattern:$0x73625140]
        %v455 = vld.sshfl [vmem:[#allocation1 + $0x28] sm:$0xff pattern:$0x73625140]
        %v456 = vld.sshfl [vmem:[#allocation1 + $0x30] sm:$0xff pattern:$0x73625140]
        %v457 = vld.sshfl [vmem:[#allocation1 + $0x38] sm:$0xff pattern:$0x73625140]
        %v466 = vpack.c.bf16 %v450, %v450
        %v467 = vpack.c.bf16 %v451, %v451
        %v468 = vpack.c.bf16 %v452, %v452
        %v469 = vpack.c.bf16 %v453, %v453
        %v470 = vpack.c.bf16 %v454, %v454
        %v471 = vpack.c.bf16 %v455, %v455
        %v472 = vpack.c.bf16 %v456, %v456
        %v473 = vpack.c.bf16 %v457, %v457
        %v474 = vld [vmem:[#allocation2] sm:$0xff]
        %v475 = vld [vmem:[#allocation2 + $0x8] sm:$0xff]
        %v476 = vld [vmem:[%s430] sm:$0xff]
        %v477 = vld [vmem:[%s430 + $0x8] sm:$0xff]
        %v478 = vld [vmem:[%s430 + $0x10] sm:$0xff]
        %v479 = vld [vmem:[%s430 + $0x18] sm:$0xff]
        %v480 = vld [vmem:[%s430 + $0x20] sm:$0xff]
        %v481 = vld [vmem:[%s430 + $0x28] sm:$0xff]
        %v482 = vld [vmem:[%s430 + $0x30] sm:$0xff]
        %v483 = vld [vmem:[%s430 + $0x38] sm:$0xff]
        %v484 = vld [vmem:[%s430 + $0x40] sm:$0xff]
        %v485 = vld [vmem:[%s430 + $0x48] sm:$0xff]
        %v486 = vld [vmem:[%s430 + $0x50] sm:$0xff]
        %v487 = vld [vmem:[%s430 + $0x58] sm:$0xff]
        %v488 = vld [vmem:[%s430 + $0x60] sm:$0xff]
        %v489 = vld [vmem:[%s430 + $0x68] sm:$0xff]
        %v490 = vld [vmem:[%s430 + $0x70] sm:$0xff]
        %v491 = vld [vmem:[%s430 + $0x78] sm:$0xff]
        %v492 = vld [vmem:[%s430 + $0x80] sm:$0xff]
        %v493 = vld [vmem:[%s430 + $0x88] sm:$0xff]
        %v494 = vld [vmem:[%s430 + $0x90] sm:$0xff]
        %v495 = vld [vmem:[%s430 + $0x98] sm:$0xff]
        %v496 = vld [vmem:[%s430 + $0xa0] sm:$0xff]
        %v497 = vld [vmem:[%s430 + $0xa8] sm:$0xff]
        %v498 = vld [vmem:[%s430 + $0xb0] sm:$0xff]
        %v499 = vld [vmem:[%s430 + $0xb8] sm:$0xff]
        %v500 = vld [vmem:[%s430 + $0xc0] sm:$0xff]
        %v501 = vld [vmem:[%s430 + $0xc8] sm:$0xff]
        %v502 = vld [vmem:[%s430 + $0xd0] sm:$0xff]
        %v503 = vld [vmem:[%s430 + $0xd8] sm:$0xff]
        %v504 = vld [vmem:[%s430 + $0xe0] sm:$0xff]
        %v505 = vld [vmem:[%s430 + $0xe8] sm:$0xff]
        %v506 = vld [vmem:[%s430 + $0xf0] sm:$0xff]
        %v507 = vld [vmem:[%s430 + $0xf8] sm:$0xff]
        %v508 = vld [vmem:[%s430 + $0x100] sm:$0xff]
        %v509 = vld [vmem:[%s430 + $0x108] sm:$0xff]
        %v510 = vld [vmem:[%s430 + $0x110] sm:$0xff]
        %v511 = vld [vmem:[%s430 + $0x118] sm:$0xff]
        %v512 = vld [vmem:[%s430 + $0x120] sm:$0xff]
        %v513 = vld [vmem:[%s430 + $0x128] sm:$0xff]
        %v514 = vld [vmem:[%s430 + $0x130] sm:$0xff]
        %v515 = vld [vmem:[%s430 + $0x138] sm:$0xff]
        %v516 = vld [vmem:[%s430 + $0x140] sm:$0xff]
        %v517 = vld [vmem:[%s430 + $0x148] sm:$0xff]
        %v518 = vld [vmem:[%s430 + $0x150] sm:$0xff]
        %v519 = vld [vmem:[%s430 + $0x158] sm:$0xff]
        %v520 = vld [vmem:[%s430 + $0x160] sm:$0xff]
        %v521 = vld [vmem:[%s430 + $0x168] sm:$0xff]
        %v522 = vld [vmem:[%s430 + $0x170] sm:$0xff]
        %v523 = vld [vmem:[%s430 + $0x178] sm:$0xff]
        %v524 = vld [vmem:[%s430 + $0x180] sm:$0xff]
        %v525 = vld [vmem:[%s430 + $0x188] sm:$0xff]
        %v526 = vld [vmem:[%s430 + $0x190] sm:$0xff]
        %v527 = vld [vmem:[%s430 + $0x198] sm:$0xff]
        %v528 = vld [vmem:[%s430 + $0x1a0] sm:$0xff]
        %v529 = vld [vmem:[%s430 + $0x1a8] sm:$0xff]
        %v530 = vld [vmem:[%s430 + $0x1b0] sm:$0xff]
        %v531 = vld [vmem:[%s430 + $0x1b8] sm:$0xff]
        %v532 = vld [vmem:[%s430 + $0x1c0] sm:$0xff]
        %v533 = vld [vmem:[%s430 + $0x1c8] sm:$0xff]
        %v534 = vld [vmem:[%s430 + $0x1d0] sm:$0xff]
        %v535 = vld [vmem:[%s430 + $0x1d8] sm:$0xff]
        %v536 = vld [vmem:[%s430 + $0x1e0] sm:$0xff]
        %v537 = vld [vmem:[%s430 + $0x1e8] sm:$0xff]
        %v538 = vld [vmem:[%s430 + $0x1f0] sm:$0xff]
        %v539 = vld [vmem:[%s430 + $0x1f8] sm:$0xff]
        %v540 = vld [vmem:[%s430 + $0x200] sm:$0xff]
        %v541 = vld [vmem:[%s430 + $0x208] sm:$0xff]
        %v542 = vld [vmem:[%s430 + $0x210] sm:$0xff]
        %v543 = vld [vmem:[%s430 + $0x218] sm:$0xff]
        %v544 = vld [vmem:[%s430 + $0x220] sm:$0xff]
        %v545 = vld [vmem:[%s430 + $0x228] sm:$0xff]
        %v546 = vld [vmem:[%s430 + $0x230] sm:$0xff]
        %v547 = vld [vmem:[%s430 + $0x238] sm:$0xff]
        %v548 = vld [vmem:[%s430 + $0x240] sm:$0xff]
        %v549 = vld [vmem:[%s430 + $0x248] sm:$0xff]
        %v550 = vld [vmem:[%s430 + $0x250] sm:$0xff]
        %v551 = vld [vmem:[%s430 + $0x258] sm:$0xff]
        %v552 = vld [vmem:[%s430 + $0x260] sm:$0xff]
        %v553 = vld [vmem:[%s430 + $0x268] sm:$0xff]
        %v554 = vld [vmem:[%s430 + $0x270] sm:$0xff]
        %v555 = vld [vmem:[%s430 + $0x278] sm:$0xff]
        %v556 = vld [vmem:[%s430 + $0x280] sm:$0xff]
        %v557 = vld [vmem:[%s430 + $0x288] sm:$0xff]
        %v558 = vld [vmem:[%s430 + $0x290] sm:$0xff]
        %v559 = vld [vmem:[%s430 + $0x298] sm:$0xff]
        %v560 = vld [vmem:[%s430 + $0x2a0] sm:$0xff]
        %v561 = vld [vmem:[%s430 + $0x2a8] sm:$0xff]
        %v562 = vld [vmem:[%s430 + $0x2b0] sm:$0xff]
        %v563 = vld [vmem:[%s430 + $0x2b8] sm:$0xff]
        %v564 = vld [vmem:[%s430 + $0x2c0] sm:$0xff]
        %v565 = vld [vmem:[%s430 + $0x2c8] sm:$0xff]
        %v566 = vld [vmem:[%s430 + $0x2d0] sm:$0xff]
        %v567 = vld [vmem:[%s430 + $0x2d8] sm:$0xff]
        %v568 = vld [vmem:[%s430 + $0x2e0] sm:$0xff]
        %v569 = vld [vmem:[%s430 + $0x2e8] sm:$0xff]
        %v570 = vld [vmem:[%s430 + $0x2f0] sm:$0xff]
        %v571 = vld [vmem:[%s430 + $0x2f8] sm:$0xff]
        %v572 = vld [vmem:[%s430 + $0x300] sm:$0xff]
        %v573 = vld [vmem:[%s430 + $0x308] sm:$0xff]
        %v574 = vld [vmem:[%s430 + $0x310] sm:$0xff]
        %v575 = vld [vmem:[%s430 + $0x318] sm:$0xff]
        %v576 = vld [vmem:[%s430 + $0x320] sm:$0xff]
        %v577 = vld [vmem:[%s430 + $0x328] sm:$0xff]
        %v578 = vld [vmem:[%s430 + $0x330] sm:$0xff]
        %v579 = vld [vmem:[%s430 + $0x338] sm:$0xff]
        %v580 = vld [vmem:[%s430 + $0x340] sm:$0xff]
        %v581 = vld [vmem:[%s430 + $0x348] sm:$0xff]
        %v582 = vld [vmem:[%s430 + $0x350] sm:$0xff]
        %v583 = vld [vmem:[%s430 + $0x358] sm:$0xff]
        %v584 = vld [vmem:[%s430 + $0x360] sm:$0xff]
        %v585 = vld [vmem:[%s430 + $0x368] sm:$0xff]
        %v586 = vld [vmem:[%s430 + $0x370] sm:$0xff]
        %v587 = vld [vmem:[%s430 + $0x378] sm:$0xff]
        %v588 = vld [vmem:[%s430 + $0x380] sm:$0xff]
        %v589 = vld [vmem:[%s430 + $0x388] sm:$0xff]
        %v590 = vld [vmem:[%s430 + $0x390] sm:$0xff]
        %v591 = vld [vmem:[%s430 + $0x398] sm:$0xff]
        %v592 = vld [vmem:[%s430 + $0x3a0] sm:$0xff]
        %v593 = vld [vmem:[%s430 + $0x3a8] sm:$0xff]
        %v594 = vld [vmem:[%s430 + $0x3b0] sm:$0xff]
        %v595 = vld [vmem:[%s430 + $0x3b8] sm:$0xff]
        %v596 = vld [vmem:[%s430 + $0x3c0] sm:$0xff]
        %v597 = vld [vmem:[%s430 + $0x3c8] sm:$0xff]
        %v598 = vld [vmem:[%s430 + $0x3d0] sm:$0xff]
        %v599 = vld [vmem:[%s430 + $0x3d8] sm:$0xff]
        %v600 = vld [vmem:[%s430 + $0x3e0] sm:$0xff]
        %v601 = vld [vmem:[%s430 + $0x3e8] sm:$0xff]
        %v602 = vld [vmem:[%s430 + $0x3f0] sm:$0xff]
        %v603 = vld [vmem:[%s430 + $0x3f8] sm:$0xff]
        %v604 = vld [vmem:[%s430 + $0x400] sm:$0xff]
        %v605 = vld [vmem:[%s430 + $0x408] sm:$0xff]
        %v606 = vld [vmem:[%s430 + $0x410] sm:$0xff]
        %v607 = vld [vmem:[%s430 + $0x418] sm:$0xff]
        %v608 = vld [vmem:[%s430 + $0x420] sm:$0xff]
        %v609 = vld [vmem:[%s430 + $0x428] sm:$0xff]
        %v610 = vld [vmem:[%s430 + $0x430] sm:$0xff]
        %v611 = vld [vmem:[%s430 + $0x438] sm:$0xff]
        %v612 = vld [vmem:[%s430 + $0x440] sm:$0xff]
        %v613 = vld [vmem:[%s430 + $0x448] sm:$0xff]
        %v614 = vld [vmem:[%s430 + $0x450] sm:$0xff]
        %v615 = vld [vmem:[%s430 + $0x458] sm:$0xff]
        %v616 = vld [vmem:[%s430 + $0x460] sm:$0xff]
        %v617 = vld [vmem:[%s430 + $0x468] sm:$0xff]
        %v618 = vld [vmem:[%s430 + $0x470] sm:$0xff]
        %v619 = vld [vmem:[%s430 + $0x478] sm:$0xff]
        %v620 = vld [vmem:[%s430 + $0x480] sm:$0xff]
        %v621 = vld [vmem:[%s430 + $0x488] sm:$0xff]
        %v622 = vld [vmem:[%s430 + $0x490] sm:$0xff]
        %v623 = vld [vmem:[%s430 + $0x498] sm:$0xff]
        %v624 = vld [vmem:[%s430 + $0x4a0] sm:$0xff]
        %v625 = vld [vmem:[%s430 + $0x4a8] sm:$0xff]
        %v626 = vld [vmem:[%s430 + $0x4b0] sm:$0xff]
        %v627 = vld [vmem:[%s430 + $0x4b8] sm:$0xff]
        %v628 = vld [vmem:[%s430 + $0x4c0] sm:$0xff]
        %v629 = vld [vmem:[%s430 + $0x4c8] sm:$0xff]
        %v630 = vld [vmem:[%s430 + $0x4d0] sm:$0xff]
        %v631 = vld [vmem:[%s430 + $0x4d8] sm:$0xff]
        %v632 = vld [vmem:[%s430 + $0x4e0] sm:$0xff]
        %v633 = vld [vmem:[%s430 + $0x4e8] sm:$0xff]
        %v634 = vld [vmem:[%s430 + $0x4f0] sm:$0xff]
        %v635 = vld [vmem:[%s430 + $0x4f8] sm:$0xff]
        %v636 = vld [vmem:[%s430 + $0x500] sm:$0xff]
        %v637 = vld [vmem:[%s430 + $0x508] sm:$0xff]
        %v638 = vld [vmem:[%s430 + $0x510] sm:$0xff]
        %v639 = vld [vmem:[%s430 + $0x518] sm:$0xff]
        %v640 = vld [vmem:[%s430 + $0x520] sm:$0xff]
        %v641 = vld [vmem:[%s430 + $0x528] sm:$0xff]
        %v642 = vld [vmem:[%s430 + $0x530] sm:$0xff]
        %v643 = vld [vmem:[%s430 + $0x538] sm:$0xff]
        %v644 = vld [vmem:[%s430 + $0x540] sm:$0xff]
        %v645 = vld [vmem:[%s430 + $0x548] sm:$0xff]
        %v646 = vld [vmem:[%s430 + $0x550] sm:$0xff]
        %v647 = vld [vmem:[%s430 + $0x558] sm:$0xff]
        %v648 = vld [vmem:[%s430 + $0x560] sm:$0xff]
        %v649 = vld [vmem:[%s430 + $0x568] sm:$0xff]
        %v650 = vld [vmem:[%s430 + $0x570] sm:$0xff]
        %v651 = vld [vmem:[%s430 + $0x578] sm:$0xff]
        %v652 = vld [vmem:[%s430 + $0x580] sm:$0xff]
        %v653 = vld [vmem:[%s430 + $0x588] sm:$0xff]
        %v654 = vld [vmem:[%s430 + $0x590] sm:$0xff]
        %v655 = vld [vmem:[%s430 + $0x598] sm:$0xff]
        %v656 = vld [vmem:[%s430 + $0x5a0] sm:$0xff]
        %v657 = vld [vmem:[%s430 + $0x5a8] sm:$0xff]
        %v658 = vld [vmem:[%s430 + $0x5b0] sm:$0xff]
        %v659 = vld [vmem:[%s430 + $0x5b8] sm:$0xff]
        %v660 = vld [vmem:[%s430 + $0x5c0] sm:$0xff]
        %v661 = vld [vmem:[%s430 + $0x5c8] sm:$0xff]
        %v662 = vld [vmem:[%s430 + $0x5d0] sm:$0xff]
        %v663 = vld [vmem:[%s430 + $0x5d8] sm:$0xff]
        %v664 = vld [vmem:[%s430 + $0x5e0] sm:$0xff]
        %v665 = vld [vmem:[%s430 + $0x5e8] sm:$0xff]
        %v666 = vld [vmem:[%s430 + $0x5f0] sm:$0xff]
        %v667 = vld [vmem:[%s430 + $0x5f8] sm:$0xff]
        %v668 = vld [vmem:[%s430 + $0x600] sm:$0xff]
        %v669 = vld [vmem:[%s430 + $0x608] sm:$0xff]
        %v670 = vld [vmem:[%s430 + $0x610] sm:$0xff]
        %v671 = vld [vmem:[%s430 + $0x618] sm:$0xff]
        %v672 = vld [vmem:[%s430 + $0x620] sm:$0xff]
        %v673 = vld [vmem:[%s430 + $0x628] sm:$0xff]
        %v674 = vld [vmem:[%s430 + $0x630] sm:$0xff]
        %v675 = vld [vmem:[%s430 + $0x638] sm:$0xff]
        %v676 = vld [vmem:[%s430 + $0x640] sm:$0xff]
        %v677 = vld [vmem:[%s430 + $0x648] sm:$0xff]
        %v678 = vld [vmem:[%s430 + $0x650] sm:$0xff]
        %v679 = vld [vmem:[%s430 + $0x658] sm:$0xff]
        %v680 = vld [vmem:[%s430 + $0x660] sm:$0xff]
        %v681 = vld [vmem:[%s430 + $0x668] sm:$0xff]
        %v682 = vld [vmem:[%s430 + $0x670] sm:$0xff]
        %v683 = vld [vmem:[%s430 + $0x678] sm:$0xff]
        %v684 = vld [vmem:[%s430 + $0x680] sm:$0xff]
        %v685 = vld [vmem:[%s430 + $0x688] sm:$0xff]
        %v686 = vld [vmem:[%s430 + $0x690] sm:$0xff]
        %v687 = vld [vmem:[%s430 + $0x698] sm:$0xff]
        %v688 = vld [vmem:[%s430 + $0x6a0] sm:$0xff]
        %v689 = vld [vmem:[%s430 + $0x6a8] sm:$0xff]
        %v690 = vld [vmem:[%s430 + $0x6b0] sm:$0xff]
        %v691 = vld [vmem:[%s430 + $0x6b8] sm:$0xff]
        %v692 = vld [vmem:[%s430 + $0x6c0] sm:$0xff]
        %v693 = vld [vmem:[%s430 + $0x6c8] sm:$0xff]
        %v694 = vld [vmem:[%s430 + $0x6d0] sm:$0xff]
        %v695 = vld [vmem:[%s430 + $0x6d8] sm:$0xff]
        %v696 = vld [vmem:[%s430 + $0x6e0] sm:$0xff]
        %v697 = vld [vmem:[%s430 + $0x6e8] sm:$0xff]
        %v698 = vld [vmem:[%s430 + $0x6f0] sm:$0xff]
        %v699 = vld [vmem:[%s430 + $0x6f8] sm:$0xff]
        %v700 = vld [vmem:[%s430 + $0x700] sm:$0xff]
        %v701 = vld [vmem:[%s430 + $0x708] sm:$0xff]
        %v702 = vld [vmem:[%s430 + $0x710] sm:$0xff]
        %v703 = vld [vmem:[%s430 + $0x718] sm:$0xff]
        %v704 = vld [vmem:[%s430 + $0x720] sm:$0xff]
        %v705 = vld [vmem:[%s430 + $0x728] sm:$0xff]
        %v706 = vld [vmem:[%s430 + $0x730] sm:$0xff]
        %v707 = vld [vmem:[%s430 + $0x738] sm:$0xff]
        %v708 = vld [vmem:[%s430 + $0x740] sm:$0xff]
        %v709 = vld [vmem:[%s430 + $0x748] sm:$0xff]
        %v710 = vld [vmem:[%s430 + $0x750] sm:$0xff]
        %v711 = vld [vmem:[%s430 + $0x758] sm:$0xff]
        %v712 = vld [vmem:[%s430 + $0x760] sm:$0xff]
        %v713 = vld [vmem:[%s430 + $0x768] sm:$0xff]
        %v714 = vld [vmem:[%s430 + $0x770] sm:$0xff]
        %v715 = vld [vmem:[%s430 + $0x778] sm:$0xff]
        %v716 = vld [vmem:[%s430 + $0x780] sm:$0xff]
        %v717 = vld [vmem:[%s430 + $0x788] sm:$0xff]
        %v718 = vld [vmem:[%s430 + $0x790] sm:$0xff]
        %v719 = vld [vmem:[%s430 + $0x798] sm:$0xff]
        %v720 = vld [vmem:[%s430 + $0x7a0] sm:$0xff]
        %v721 = vld [vmem:[%s430 + $0x7a8] sm:$0xff]
        %v722 = vld [vmem:[%s430 + $0x7b0] sm:$0xff]
        %v723 = vld [vmem:[%s430 + $0x7b8] sm:$0xff]
        %v724 = vld [vmem:[%s430 + $0x7c0] sm:$0xff]
        %v725 = vld [vmem:[%s430 + $0x7c8] sm:$0xff]
        %v726 = vld [vmem:[%s430 + $0x7d0] sm:$0xff]
        %v727 = vld [vmem:[%s430 + $0x7d8] sm:$0xff]
        %v728 = vld [vmem:[%s430 + $0x7e0] sm:$0xff]
        %v729 = vld [vmem:[%s430 + $0x7e8] sm:$0xff]
        %v730 = vld [vmem:[%s430 + $0x7f0] sm:$0xff]
        %v731 = vld [vmem:[%s430 + $0x7f8] sm:$0xff]
        %v732 = vld [vmem:[%s430 + $0x800] sm:$0xff]
        %v733 = vld [vmem:[%s430 + $0x808] sm:$0xff]
        %v734 = vld [vmem:[%s430 + $0x810] sm:$0xff]
        %v735 = vld [vmem:[%s430 + $0x818] sm:$0xff]
        %v736 = vld [vmem:[%s430 + $0x820] sm:$0xff]
        %v737 = vld [vmem:[%s430 + $0x828] sm:$0xff]
        %v738 = vld [vmem:[%s430 + $0x830] sm:$0xff]
        %v739 = vld [vmem:[%s430 + $0x838] sm:$0xff]
        %v740 = vld [vmem:[%s430 + $0x840] sm:$0xff]
        %v741 = vld [vmem:[%s430 + $0x848] sm:$0xff]
        %v742 = vld [vmem:[%s430 + $0x850] sm:$0xff]
        %v743 = vld [vmem:[%s430 + $0x858] sm:$0xff]
        %v744 = vld [vmem:[%s430 + $0x860] sm:$0xff]
        %v745 = vld [vmem:[%s430 + $0x868] sm:$0xff]
        %v746 = vld [vmem:[%s430 + $0x870] sm:$0xff]
        %v747 = vld [vmem:[%s430 + $0x878] sm:$0xff]
        %v748 = vld [vmem:[%s430 + $0x880] sm:$0xff]
        %v749 = vld [vmem:[%s430 + $0x888] sm:$0xff]
        %v750 = vld [vmem:[%s430 + $0x890] sm:$0xff]
        %v751 = vld [vmem:[%s430 + $0x898] sm:$0xff]
        %v752 = vld [vmem:[%s430 + $0x8a0] sm:$0xff]
        %v753 = vld [vmem:[%s430 + $0x8a8] sm:$0xff]
        %v754 = vld [vmem:[%s430 + $0x8b0] sm:$0xff]
        %v755 = vld [vmem:[%s430 + $0x8b8] sm:$0xff]
        %v756 = vld [vmem:[%s430 + $0x8c0] sm:$0xff]
        %v757 = vld [vmem:[%s430 + $0x8c8] sm:$0xff]
        %v758 = vld [vmem:[%s430 + $0x8d0] sm:$0xff]
        %v759 = vld [vmem:[%s430 + $0x8d8] sm:$0xff]
        %v760 = vld [vmem:[%s430 + $0x8e0] sm:$0xff]
        %v761 = vld [vmem:[%s430 + $0x8e8] sm:$0xff]
        %v762 = vld [vmem:[%s430 + $0x8f0] sm:$0xff]
        %v763 = vld [vmem:[%s430 + $0x8f8] sm:$0xff]
        %v764 = vld [vmem:[%s430 + $0x900] sm:$0xff]
        %v765 = vld [vmem:[%s430 + $0x908] sm:$0xff]
        %v766 = vld [vmem:[%s430 + $0x910] sm:$0xff]
        %v767 = vld [vmem:[%s430 + $0x918] sm:$0xff]
        %v768 = vld [vmem:[%s430 + $0x920] sm:$0xff]
        %v769 = vld [vmem:[%s430 + $0x928] sm:$0xff]
        %v770 = vld [vmem:[%s430 + $0x930] sm:$0xff]
        %v771 = vld [vmem:[%s430 + $0x938] sm:$0xff]
        %v772 = vld [vmem:[%s430 + $0x940] sm:$0xff]
        %v773 = vld [vmem:[%s430 + $0x948] sm:$0xff]
        %v774 = vld [vmem:[%s430 + $0x950] sm:$0xff]
        %v775 = vld [vmem:[%s430 + $0x958] sm:$0xff]
        %v776 = vld [vmem:[%s430 + $0x960] sm:$0xff]
        %v777 = vld [vmem:[%s430 + $0x968] sm:$0xff]
        %v778 = vld [vmem:[%s430 + $0x970] sm:$0xff]
        %v779 = vld [vmem:[%s430 + $0x978] sm:$0xff]
        %v780 = vld [vmem:[%s430 + $0x980] sm:$0xff]
        %v781 = vld [vmem:[%s430 + $0x988] sm:$0xff]
        %v782 = vld [vmem:[%s430 + $0x990] sm:$0xff]
        %v783 = vld [vmem:[%s430 + $0x998] sm:$0xff]
        %v784 = vld [vmem:[%s430 + $0x9a0] sm:$0xff]
        %v785 = vld [vmem:[%s430 + $0x9a8] sm:$0xff]
        %v786 = vld [vmem:[%s430 + $0x9b0] sm:$0xff]
        %v787 = vld [vmem:[%s430 + $0x9b8] sm:$0xff]
        %v788 = vld [vmem:[%s430 + $0x9c0] sm:$0xff]
        %v789 = vld [vmem:[%s430 + $0x9c8] sm:$0xff]
        %v790 = vld [vmem:[%s430 + $0x9d0] sm:$0xff]
        %v791 = vld [vmem:[%s430 + $0x9d8] sm:$0xff]
        %v792 = vld [vmem:[%s430 + $0x9e0] sm:$0xff]
        %v793 = vld [vmem:[%s430 + $0x9e8] sm:$0xff]
        %v794 = vld [vmem:[%s430 + $0x9f0] sm:$0xff]
        %v795 = vld [vmem:[%s430 + $0x9f8] sm:$0xff]
        %v796 = vld [vmem:[%s430 + $0xa00] sm:$0xff]
        %v797 = vld [vmem:[%s430 + $0xa08] sm:$0xff]
        %v798 = vld [vmem:[%s430 + $0xa10] sm:$0xff]
        %v799 = vld [vmem:[%s430 + $0xa18] sm:$0xff]
        %v800 = vld [vmem:[%s430 + $0xa20] sm:$0xff]
        %v801 = vld [vmem:[%s430 + $0xa28] sm:$0xff]
        %v802 = vld [vmem:[%s430 + $0xa30] sm:$0xff]
        %v803 = vld [vmem:[%s430 + $0xa38] sm:$0xff]
        %v804 = vld [vmem:[%s430 + $0xa40] sm:$0xff]
        %v805 = vld [vmem:[%s430 + $0xa48] sm:$0xff]
        %v806 = vld [vmem:[%s430 + $0xa50] sm:$0xff]
        %v807 = vld [vmem:[%s430 + $0xa58] sm:$0xff]
        %v808 = vld [vmem:[%s430 + $0xa60] sm:$0xff]
        %v809 = vld [vmem:[%s430 + $0xa68] sm:$0xff]
        %v810 = vld [vmem:[%s430 + $0xa70] sm:$0xff]
        %v811 = vld [vmem:[%s430 + $0xa78] sm:$0xff]
        %v812 = vld [vmem:[%s430 + $0xa80] sm:$0xff]
        %v813 = vld [vmem:[%s430 + $0xa88] sm:$0xff]
        %v814 = vld [vmem:[%s430 + $0xa90] sm:$0xff]
        %v815 = vld [vmem:[%s430 + $0xa98] sm:$0xff]
        %v816 = vld [vmem:[%s430 + $0xaa0] sm:$0xff]
        %v817 = vld [vmem:[%s430 + $0xaa8] sm:$0xff]
        %v818 = vld [vmem:[%s430 + $0xab0] sm:$0xff]
        %v819 = vld [vmem:[%s430 + $0xab8] sm:$0xff]
        %v820 = vld [vmem:[%s430 + $0xac0] sm:$0xff]
        %v821 = vld [vmem:[%s430 + $0xac8] sm:$0xff]
        %v822 = vld [vmem:[%s430 + $0xad0] sm:$0xff]
        %v823 = vld [vmem:[%s430 + $0xad8] sm:$0xff]
        %v824 = vld [vmem:[%s430 + $0xae0] sm:$0xff]
        %v825 = vld [vmem:[%s430 + $0xae8] sm:$0xff]
        %v826 = vld [vmem:[%s430 + $0xaf0] sm:$0xff]
        %v827 = vld [vmem:[%s430 + $0xaf8] sm:$0xff]
        %v828 = vld [vmem:[%s430 + $0xb00] sm:$0xff]
        %v829 = vld [vmem:[%s430 + $0xb08] sm:$0xff]
        %v830 = vld [vmem:[%s430 + $0xb10] sm:$0xff]
        %v831 = vld [vmem:[%s430 + $0xb18] sm:$0xff]
        %v832 = vld [vmem:[%s430 + $0xb20] sm:$0xff]
        %v833 = vld [vmem:[%s430 + $0xb28] sm:$0xff]
        %v834 = vld [vmem:[%s430 + $0xb30] sm:$0xff]
        %v835 = vld [vmem:[%s430 + $0xb38] sm:$0xff]
        %v836 = vld [vmem:[%s430 + $0xb40] sm:$0xff]
        %v837 = vld [vmem:[%s430 + $0xb48] sm:$0xff]
        %v838 = vld [vmem:[%s430 + $0xb50] sm:$0xff]
        %v839 = vld [vmem:[%s430 + $0xb58] sm:$0xff]
        %v840 = vld [vmem:[%s430 + $0xb60] sm:$0xff]
        %v841 = vld [vmem:[%s430 + $0xb68] sm:$0xff]
        %v842 = vld [vmem:[%s430 + $0xb70] sm:$0xff]
        %v843 = vld [vmem:[%s430 + $0xb78] sm:$0xff]
        %v844 = vld [vmem:[%s430 + $0xb80] sm:$0xff]
        %v845 = vld [vmem:[%s430 + $0xb88] sm:$0xff]
        %v846 = vld [vmem:[%s430 + $0xb90] sm:$0xff]
        %v847 = vld [vmem:[%s430 + $0xb98] sm:$0xff]
        %v848 = vld [vmem:[%s430 + $0xba0] sm:$0xff]
        %v849 = vld [vmem:[%s430 + $0xba8] sm:$0xff]
        %v850 = vld [vmem:[%s430 + $0xbb0] sm:$0xff]
        %v851 = vld [vmem:[%s430 + $0xbb8] sm:$0xff]
        %v852 = vld [vmem:[%s430 + $0xbc0] sm:$0xff]
        %v853 = vld [vmem:[%s430 + $0xbc8] sm:$0xff]
        %v854 = vld [vmem:[%s430 + $0xbd0] sm:$0xff]
        %v855 = vld [vmem:[%s430 + $0xbd8] sm:$0xff]
        %v856 = vld [vmem:[%s430 + $0xbe0] sm:$0xff]
        %v857 = vld [vmem:[%s430 + $0xbe8] sm:$0xff]
        %v858 = vld [vmem:[%s430 + $0xbf0] sm:$0xff]
        %v859 = vld [vmem:[%s430 + $0xbf8] sm:$0xff]
        %v860 = vld [vmem:[%s430 + $0xc00] sm:$0xff]
        %v861 = vld [vmem:[%s430 + $0xc08] sm:$0xff]
        %v862 = vld [vmem:[%s430 + $0xc10] sm:$0xff]
        %v863 = vld [vmem:[%s430 + $0xc18] sm:$0xff]
        %v864 = vld [vmem:[%s430 + $0xc20] sm:$0xff]
        %v865 = vld [vmem:[%s430 + $0xc28] sm:$0xff]
        %v866 = vld [vmem:[%s430 + $0xc30] sm:$0xff]
        %v867 = vld [vmem:[%s430 + $0xc38] sm:$0xff]
        %v868 = vld [vmem:[%s430 + $0xc40] sm:$0xff]
        %v869 = vld [vmem:[%s430 + $0xc48] sm:$0xff]
        %v870 = vld [vmem:[%s430 + $0xc50] sm:$0xff]
        %v871 = vld [vmem:[%s430 + $0xc58] sm:$0xff]
        %v872 = vld [vmem:[%s430 + $0xc60] sm:$0xff]
        %v873 = vld [vmem:[%s430 + $0xc68] sm:$0xff]
        %v874 = vld [vmem:[%s430 + $0xc70] sm:$0xff]
        %v875 = vld [vmem:[%s430 + $0xc78] sm:$0xff]
        %v876 = vld [vmem:[%s430 + $0xc80] sm:$0xff]
        %v877 = vld [vmem:[%s430 + $0xc88] sm:$0xff]
        %v878 = vld [vmem:[%s430 + $0xc90] sm:$0xff]
        %v879 = vld [vmem:[%s430 + $0xc98] sm:$0xff]
        %v880 = vld [vmem:[%s430 + $0xca0] sm:$0xff]
        %v881 = vld [vmem:[%s430 + $0xca8] sm:$0xff]
        %v882 = vld [vmem:[%s430 + $0xcb0] sm:$0xff]
        %v883 = vld [vmem:[%s430 + $0xcb8] sm:$0xff]
        %v884 = vld [vmem:[%s430 + $0xcc0] sm:$0xff]
        %v885 = vld [vmem:[%s430 + $0xcc8] sm:$0xff]
        %v886 = vld [vmem:[%s430 + $0xcd0] sm:$0xff]
        %v887 = vld [vmem:[%s430 + $0xcd8] sm:$0xff]
        %v888 = vld [vmem:[%s430 + $0xce0] sm:$0xff]
        %v889 = vld [vmem:[%s430 + $0xce8] sm:$0xff]
        %v890 = vld [vmem:[%s430 + $0xcf0] sm:$0xff]
        %v891 = vld [vmem:[%s430 + $0xcf8] sm:$0xff]
        %v892 = vld [vmem:[%s430 + $0xd00] sm:$0xff]
        %v893 = vld [vmem:[%s430 + $0xd08] sm:$0xff]
        %v894 = vld [vmem:[%s430 + $0xd10] sm:$0xff]
        %v895 = vld [vmem:[%s430 + $0xd18] sm:$0xff]
        %v896 = vld [vmem:[%s430 + $0xd20] sm:$0xff]
        %v897 = vld [vmem:[%s430 + $0xd28] sm:$0xff]
        %v898 = vld [vmem:[%s430 + $0xd30] sm:$0xff]
        %v899 = vld [vmem:[%s430 + $0xd38] sm:$0xff]
        %v900 = vld [vmem:[%s430 + $0xd40] sm:$0xff]
        %v901 = vld [vmem:[%s430 + $0xd48] sm:$0xff]
        %v902 = vld [vmem:[%s430 + $0xd50] sm:$0xff]
        %v903 = vld [vmem:[%s430 + $0xd58] sm:$0xff]
        %v904 = vld [vmem:[%s430 + $0xd60] sm:$0xff]
        %v905 = vld [vmem:[%s430 + $0xd68] sm:$0xff]
        %v906 = vld [vmem:[%s430 + $0xd70] sm:$0xff]
        %v907 = vld [vmem:[%s430 + $0xd78] sm:$0xff]
        %v908 = vld [vmem:[%s430 + $0xd80] sm:$0xff]
        %v909 = vld [vmem:[%s430 + $0xd88] sm:$0xff]
        %v910 = vld [vmem:[%s430 + $0xd90] sm:$0xff]
        %v911 = vld [vmem:[%s430 + $0xd98] sm:$0xff]
        %v912 = vld [vmem:[%s430 + $0xda0] sm:$0xff]
        %v913 = vld [vmem:[%s430 + $0xda8] sm:$0xff]
        %v914 = vld [vmem:[%s430 + $0xdb0] sm:$0xff]
        %v915 = vld [vmem:[%s430 + $0xdb8] sm:$0xff]
        %v916 = vld [vmem:[%s430 + $0xdc0] sm:$0xff]
        %v917 = vld [vmem:[%s430 + $0xdc8] sm:$0xff]
        %v918 = vld [vmem:[%s430 + $0xdd0] sm:$0xff]
        %v919 = vld [vmem:[%s430 + $0xdd8] sm:$0xff]
        %v920 = vld [vmem:[%s430 + $0xde0] sm:$0xff]
        %v921 = vld [vmem:[%s430 + $0xde8] sm:$0xff]
        %v922 = vld [vmem:[%s430 + $0xdf0] sm:$0xff]
        %v923 = vld [vmem:[%s430 + $0xdf8] sm:$0xff]
        %v924 = vld [vmem:[%s430 + $0xe00] sm:$0xff]
        %v925 = vld [vmem:[%s430 + $0xe08] sm:$0xff]
        %v926 = vld [vmem:[%s430 + $0xe10] sm:$0xff]
        %v927 = vld [vmem:[%s430 + $0xe18] sm:$0xff]
        %v928 = vld [vmem:[%s430 + $0xe20] sm:$0xff]
        %v929 = vld [vmem:[%s430 + $0xe28] sm:$0xff]
        %v930 = vld [vmem:[%s430 + $0xe30] sm:$0xff]
        %v931 = vld [vmem:[%s430 + $0xe38] sm:$0xff]
        %v932 = vld [vmem:[%s430 + $0xe40] sm:$0xff]
        %v933 = vld [vmem:[%s430 + $0xe48] sm:$0xff]
        %v934 = vld [vmem:[%s430 + $0xe50] sm:$0xff]
        %v935 = vld [vmem:[%s430 + $0xe58] sm:$0xff]
        %v936 = vld [vmem:[%s430 + $0xe60] sm:$0xff]
        %v937 = vld [vmem:[%s430 + $0xe68] sm:$0xff]
        %v938 = vld [vmem:[%s430 + $0xe70] sm:$0xff]
        %v939 = vld [vmem:[%s430 + $0xe78] sm:$0xff]
        %v940 = vld [vmem:[%s430 + $0xe80] sm:$0xff]
        %v941 = vld [vmem:[%s430 + $0xe88] sm:$0xff]
        %v942 = vld [vmem:[%s430 + $0xe90] sm:$0xff]
        %v943 = vld [vmem:[%s430 + $0xe98] sm:$0xff]
        %v944 = vld [vmem:[%s430 + $0xea0] sm:$0xff]
        %v945 = vld [vmem:[%s430 + $0xea8] sm:$0xff]
        %v946 = vld [vmem:[%s430 + $0xeb0] sm:$0xff]
        %v947 = vld [vmem:[%s430 + $0xeb8] sm:$0xff]
        %v948 = vld [vmem:[%s430 + $0xec0] sm:$0xff]
        %v949 = vld [vmem:[%s430 + $0xec8] sm:$0xff]
        %v950 = vld [vmem:[%s430 + $0xed0] sm:$0xff]
        %v951 = vld [vmem:[%s430 + $0xed8] sm:$0xff]
        %v952 = vld [vmem:[%s430 + $0xee0] sm:$0xff]
        %v953 = vld [vmem:[%s430 + $0xee8] sm:$0xff]
        %v954 = vld [vmem:[%s430 + $0xef0] sm:$0xff]
        %v955 = vld [vmem:[%s430 + $0xef8] sm:$0xff]
        %v956 = vld [vmem:[%s430 + $0xf00] sm:$0xff]
        %v957 = vld [vmem:[%s430 + $0xf08] sm:$0xff]
        %v958 = vld [vmem:[%s430 + $0xf10] sm:$0xff]
        %v959 = vld [vmem:[%s430 + $0xf18] sm:$0xff]
        %v960 = vld [vmem:[%s430 + $0xf20] sm:$0xff]
        %v961 = vld [vmem:[%s430 + $0xf28] sm:$0xff]
        %v962 = vld [vmem:[%s430 + $0xf30] sm:$0xff]
        %v963 = vld [vmem:[%s430 + $0xf38] sm:$0xff]
        %v964 = vld [vmem:[%s430 + $0xf40] sm:$0xff]
        %v965 = vld [vmem:[%s430 + $0xf48] sm:$0xff]
        %v966 = vld [vmem:[%s430 + $0xf50] sm:$0xff]
        %v967 = vld [vmem:[%s430 + $0xf58] sm:$0xff]
        %v968 = vld [vmem:[%s430 + $0xf60] sm:$0xff]
        %v969 = vld [vmem:[%s430 + $0xf68] sm:$0xff]
        %v970 = vld [vmem:[%s430 + $0xf70] sm:$0xff]
        %v971 = vld [vmem:[%s430 + $0xf78] sm:$0xff]
        %v972 = vld [vmem:[%s430 + $0xf80] sm:$0xff]
        %v973 = vld [vmem:[%s430 + $0xf88] sm:$0xff]
        %v974 = vld [vmem:[%s430 + $0xf90] sm:$0xff]
        %v975 = vld [vmem:[%s430 + $0xf98] sm:$0xff]
        %v976 = vld [vmem:[%s430 + $0xfa0] sm:$0xff]
        %v977 = vld [vmem:[%s430 + $0xfa8] sm:$0xff]
        %v978 = vld [vmem:[%s430 + $0xfb0] sm:$0xff]
        %v979 = vld [vmem:[%s430 + $0xfb8] sm:$0xff]
        %v980 = vld [vmem:[%s430 + $0xfc0] sm:$0xff]
        %v981 = vld [vmem:[%s430 + $0xfc8] sm:$0xff]
        %v982 = vld [vmem:[%s430 + $0xfd0] sm:$0xff]
        %v983 = vld [vmem:[%s430 + $0xfd8] sm:$0xff]
        %v984 = vld [vmem:[%s430 + $0xfe0] sm:$0xff]
        %v985 = vld [vmem:[%s430 + $0xfe8] sm:$0xff]
        %v986 = vld [vmem:[%s430 + $0xff0] sm:$0xff]
        %v987 = vld [vmem:[%s430 + $0xff8] sm:$0xff]
        %v1500 = vunpack.c.l.b16 %v476
        %v1501 = vunpack.c.h.b16 %v476
        %v1502 = vunpack.c.l.b16 %v477
        %v1503 = vunpack.c.h.b16 %v477
        %v1504 = vunpack.c.l.b16 %v478
        %v1505 = vunpack.c.h.b16 %v478
        %v1506 = vunpack.c.l.b16 %v479
        %v1507 = vunpack.c.h.b16 %v479
        %v1508 = vunpack.c.l.b16 %v480
        %v1509 = vunpack.c.h.b16 %v480
        %v1510 = vunpack.c.l.b16 %v481
        %v1511 = vunpack.c.h.b16 %v481
        %v1512 = vunpack.c.l.b16 %v482
        %v1513 = vunpack.c.h.b16 %v482
        %v1514 = vunpack.c.l.b16 %v483
        %v1515 = vunpack.c.h.b16 %v483
        %v1516 = vunpack.c.l.b16 %v484
        %v1517 = vunpack.c.h.b16 %v484
        %v1518 = vunpack.c.l.b16 %v485
        %v1519 = vunpack.c.h.b16 %v485
        %v1520 = vunpack.c.l.b16 %v486
        %v1521 = vunpack.c.h.b16 %v486
        %v1522 = vunpack.c.l.b16 %v487
        %v1523 = vunpack.c.h.b16 %v487
        %v1524 = vunpack.c.l.b16 %v488
        %v1525 = vunpack.c.h.b16 %v488
        %v1526 = vunpack.c.l.b16 %v489
        %v1527 = vunpack.c.h.b16 %v489
        %v1528 = vunpack.c.l.b16 %v490
        %v1529 = vunpack.c.h.b16 %v490
        %v1530 = vunpack.c.l.b16 %v491
        %v1531 = vunpack.c.h.b16 %v491
        %v1532 = vunpack.c.l.b16 %v492
        %v1533 = vunpack.c.h.b16 %v492
        %v1534 = vunpack.c.l.b16 %v493
        %v1535 = vunpack.c.h.b16 %v493
        %v1536 = vunpack.c.l.b16 %v494
        %v1537 = vunpack.c.h.b16 %v494
        %v1538 = vunpack.c.l.b16 %v495
        %v1539 = vunpack.c.h.b16 %v495
        %v1540 = vunpack.c.l.b16 %v496
        %v1541 = vunpack.c.h.b16 %v496
        %v1542 = vunpack.c.l.b16 %v497
        %v1543 = vunpack.c.h.b16 %v497
        %v1544 = vunpack.c.l.b16 %v498
        %v1545 = vunpack.c.h.b16 %v498
        %v1546 = vunpack.c.l.b16 %v499
        %v1547 = vunpack.c.h.b16 %v499
        %v1548 = vunpack.c.l.b16 %v500
        %v1549 = vunpack.c.h.b16 %v500
        %v1550 = vunpack.c.l.b16 %v501
        %v1551 = vunpack.c.h.b16 %v501
        %v1552 = vunpack.c.l.b16 %v502
        %v1553 = vunpack.c.h.b16 %v502
        %v1554 = vunpack.c.l.b16 %v503
        %v1555 = vunpack.c.h.b16 %v503
        %v1556 = vunpack.c.l.b16 %v504
        %v1557 = vunpack.c.h.b16 %v504
        %v1558 = vunpack.c.l.b16 %v505
        %v1559 = vunpack.c.h.b16 %v505
        %v1560 = vunpack.c.l.b16 %v506
        %v1561 = vunpack.c.h.b16 %v506
        %v1562 = vunpack.c.l.b16 %v507
        %v1563 = vunpack.c.h.b16 %v507
        %v1564 = vunpack.c.l.b16 %v508
        %v1565 = vunpack.c.h.b16 %v508
        %v1566 = vunpack.c.l.b16 %v509
        %v1567 = vunpack.c.h.b16 %v509
        %v1568 = vunpack.c.l.b16 %v510
        %v1569 = vunpack.c.h.b16 %v510
        %v1570 = vunpack.c.l.b16 %v511
        %v1571 = vunpack.c.h.b16 %v511
        %v1572 = vunpack.c.l.b16 %v512
        %v1573 = vunpack.c.h.b16 %v512
        %v1574 = vunpack.c.l.b16 %v513
        %v1575 = vunpack.c.h.b16 %v513
        %v1576 = vunpack.c.l.b16 %v514
        %v1577 = vunpack.c.h.b16 %v514
        %v1578 = vunpack.c.l.b16 %v515
        %v1579 = vunpack.c.h.b16 %v515
        %v1580 = vunpack.c.l.b16 %v516
        %v1581 = vunpack.c.h.b16 %v516
        %v1582 = vunpack.c.l.b16 %v517
        %v1583 = vunpack.c.h.b16 %v517
        %v1584 = vunpack.c.l.b16 %v518
        %v1585 = vunpack.c.h.b16 %v518
        %v1586 = vunpack.c.l.b16 %v519
        %v1587 = vunpack.c.h.b16 %v519
        %v1588 = vunpack.c.l.b16 %v520
        %v1589 = vunpack.c.h.b16 %v520
        %v1590 = vunpack.c.l.b16 %v521
        %v1591 = vunpack.c.h.b16 %v521
        %v1592 = vunpack.c.l.b16 %v522
        %v1593 = vunpack.c.h.b16 %v522
        %v1594 = vunpack.c.l.b16 %v523
        %v1595 = vunpack.c.h.b16 %v523
        %v1596 = vunpack.c.l.b16 %v524
        %v1597 = vunpack.c.h.b16 %v524
        %v1598 = vunpack.c.l.b16 %v525
        %v1599 = vunpack.c.h.b16 %v525
        %v1600 = vunpack.c.l.b16 %v526
        %v1601 = vunpack.c.h.b16 %v526
        %v1602 = vunpack.c.l.b16 %v527
        %v1603 = vunpack.c.h.b16 %v527
        %v1604 = vunpack.c.l.b16 %v528
        %v1605 = vunpack.c.h.b16 %v528
        %v1606 = vunpack.c.l.b16 %v529
        %v1607 = vunpack.c.h.b16 %v529
        %v1608 = vunpack.c.l.b16 %v530
        %v1609 = vunpack.c.h.b16 %v530
        %v1610 = vunpack.c.l.b16 %v531
        %v1611 = vunpack.c.h.b16 %v531
        %v1612 = vunpack.c.l.b16 %v532
        %v1613 = vunpack.c.h.b16 %v532
        %v1614 = vunpack.c.l.b16 %v533
        %v1615 = vunpack.c.h.b16 %v533
        %v1616 = vunpack.c.l.b16 %v534
        %v1617 = vunpack.c.h.b16 %v534
        %v1618 = vunpack.c.l.b16 %v535
        %v1619 = vunpack.c.h.b16 %v535
        %v1620 = vunpack.c.l.b16 %v536
        %v1621 = vunpack.c.h.b16 %v536
        %v1622 = vunpack.c.l.b16 %v537
        %v1623 = vunpack.c.h.b16 %v537
        %v1624 = vunpack.c.l.b16 %v538
        %v1625 = vunpack.c.h.b16 %v538
        %v1626 = vunpack.c.l.b16 %v539
        %v1627 = vunpack.c.h.b16 %v539
        %v1628 = vunpack.c.l.b16 %v540
        %v1629 = vunpack.c.h.b16 %v540
        %v1630 = vunpack.c.l.b16 %v541
        %v1631 = vunpack.c.h.b16 %v541
        %v1632 = vunpack.c.l.b16 %v542
        %v1633 = vunpack.c.h.b16 %v542
        %v1634 = vunpack.c.l.b16 %v543
        %v1635 = vunpack.c.h.b16 %v543
        %v1636 = vunpack.c.l.b16 %v544
        %v1637 = vunpack.c.h.b16 %v544
        %v1638 = vunpack.c.l.b16 %v545
        %v1639 = vunpack.c.h.b16 %v545
        %v1640 = vunpack.c.l.b16 %v546
        %v1641 = vunpack.c.h.b16 %v546
        %v1642 = vunpack.c.l.b16 %v547
        %v1643 = vunpack.c.h.b16 %v547
        %v1644 = vunpack.c.l.b16 %v548
        %v1645 = vunpack.c.h.b16 %v548
        %v1646 = vunpack.c.l.b16 %v549
        %v1647 = vunpack.c.h.b16 %v549
        %v1648 = vunpack.c.l.b16 %v550
        %v1649 = vunpack.c.h.b16 %v550
        %v1650 = vunpack.c.l.b16 %v551
        %v1651 = vunpack.c.h.b16 %v551
        %v1652 = vunpack.c.l.b16 %v552
        %v1653 = vunpack.c.h.b16 %v552
        %v1654 = vunpack.c.l.b16 %v553
        %v1655 = vunpack.c.h.b16 %v553
        %v1656 = vunpack.c.l.b16 %v554
        %v1657 = vunpack.c.h.b16 %v554
        %v1658 = vunpack.c.l.b16 %v555
        %v1659 = vunpack.c.h.b16 %v555
        %v1660 = vunpack.c.l.b16 %v556
        %v1661 = vunpack.c.h.b16 %v556
        %v1662 = vunpack.c.l.b16 %v557
        %v1663 = vunpack.c.h.b16 %v557
        %v1664 = vunpack.c.l.b16 %v558
        %v1665 = vunpack.c.h.b16 %v558
        %v1666 = vunpack.c.l.b16 %v559
        %v1667 = vunpack.c.h.b16 %v559
        %v1668 = vunpack.c.l.b16 %v560
        %v1669 = vunpack.c.h.b16 %v560
        %v1670 = vunpack.c.l.b16 %v561
        %v1671 = vunpack.c.h.b16 %v561
        %v1672 = vunpack.c.l.b16 %v562
        %v1673 = vunpack.c.h.b16 %v562
        %v1674 = vunpack.c.l.b16 %v563
        %v1675 = vunpack.c.h.b16 %v563
        %v1676 = vunpack.c.l.b16 %v564
        %v1677 = vunpack.c.h.b16 %v564
        %v1678 = vunpack.c.l.b16 %v565
        %v1679 = vunpack.c.h.b16 %v565
        %v1680 = vunpack.c.l.b16 %v566
        %v1681 = vunpack.c.h.b16 %v566
        %v1682 = vunpack.c.l.b16 %v567
        %v1683 = vunpack.c.h.b16 %v567
        %v1684 = vunpack.c.l.b16 %v568
        %v1685 = vunpack.c.h.b16 %v568
        %v1686 = vunpack.c.l.b16 %v569
        %v1687 = vunpack.c.h.b16 %v569
        %v1688 = vunpack.c.l.b16 %v570
        %v1689 = vunpack.c.h.b16 %v570
        %v1690 = vunpack.c.l.b16 %v571
        %v1691 = vunpack.c.h.b16 %v571
        %v1692 = vunpack.c.l.b16 %v572
        %v1693 = vunpack.c.h.b16 %v572
        %v1694 = vunpack.c.l.b16 %v573
        %v1695 = vunpack.c.h.b16 %v573
        %v1696 = vunpack.c.l.b16 %v574
        %v1697 = vunpack.c.h.b16 %v574
        %v1698 = vunpack.c.l.b16 %v575
        %v1699 = vunpack.c.h.b16 %v575
        %v1700 = vunpack.c.l.b16 %v576
        %v1701 = vunpack.c.h.b16 %v576
        %v1702 = vunpack.c.l.b16 %v577
        %v1703 = vunpack.c.h.b16 %v577
        %v1704 = vunpack.c.l.b16 %v578
        %v1705 = vunpack.c.h.b16 %v578
        %v1706 = vunpack.c.l.b16 %v579
        %v1707 = vunpack.c.h.b16 %v579
        %v1708 = vunpack.c.l.b16 %v580
        %v1709 = vunpack.c.h.b16 %v580
        %v1710 = vunpack.c.l.b16 %v581
        %v1711 = vunpack.c.h.b16 %v581
        %v1712 = vunpack.c.l.b16 %v582
        %v1713 = vunpack.c.h.b16 %v582
        %v1714 = vunpack.c.l.b16 %v583
        %v1715 = vunpack.c.h.b16 %v583
        %v1716 = vunpack.c.l.b16 %v584
        %v1717 = vunpack.c.h.b16 %v584
        %v1718 = vunpack.c.l.b16 %v585
        %v1719 = vunpack.c.h.b16 %v585
        %v1720 = vunpack.c.l.b16 %v586
        %v1721 = vunpack.c.h.b16 %v586
        %v1722 = vunpack.c.l.b16 %v587
        %v1723 = vunpack.c.h.b16 %v587
        %v1724 = vunpack.c.l.b16 %v588
        %v1725 = vunpack.c.h.b16 %v588
        %v1726 = vunpack.c.l.b16 %v589
        %v1727 = vunpack.c.h.b16 %v589
        %v1728 = vunpack.c.l.b16 %v590
        %v1729 = vunpack.c.h.b16 %v590
        %v1730 = vunpack.c.l.b16 %v591
        %v1731 = vunpack.c.h.b16 %v591
        %v1732 = vunpack.c.l.b16 %v592
        %v1733 = vunpack.c.h.b16 %v592
        %v1734 = vunpack.c.l.b16 %v593
        %v1735 = vunpack.c.h.b16 %v593
        %v1736 = vunpack.c.l.b16 %v594
        %v1737 = vunpack.c.h.b16 %v594
        %v1738 = vunpack.c.l.b16 %v595
        %v1739 = vunpack.c.h.b16 %v595
        %v1740 = vunpack.c.l.b16 %v596
        %v1741 = vunpack.c.h.b16 %v596
        %v1742 = vunpack.c.l.b16 %v597
        %v1743 = vunpack.c.h.b16 %v597
        %v1744 = vunpack.c.l.b16 %v598
        %v1745 = vunpack.c.h.b16 %v598
        %v1746 = vunpack.c.l.b16 %v599
        %v1747 = vunpack.c.h.b16 %v599
        %v1748 = vunpack.c.l.b16 %v600
        %v1749 = vunpack.c.h.b16 %v600
        %v1750 = vunpack.c.l.b16 %v601
        %v1751 = vunpack.c.h.b16 %v601
        %v1752 = vunpack.c.l.b16 %v602
        %v1753 = vunpack.c.h.b16 %v602
        %v1754 = vunpack.c.l.b16 %v603
        %v1755 = vunpack.c.h.b16 %v603
        %v1756 = vunpack.c.l.b16 %v604
        %v1757 = vunpack.c.h.b16 %v604
        %v1758 = vunpack.c.l.b16 %v605
        %v1759 = vunpack.c.h.b16 %v605
        %v1760 = vunpack.c.l.b16 %v606
        %v1761 = vunpack.c.h.b16 %v606
        %v1762 = vunpack.c.l.b16 %v607
        %v1763 = vunpack.c.h.b16 %v607
        %v1764 = vunpack.c.l.b16 %v608
        %v1765 = vunpack.c.h.b16 %v608
        %v1766 = vunpack.c.l.b16 %v609
        %v1767 = vunpack.c.h.b16 %v609
        %v1768 = vunpack.c.l.b16 %v610
        %v1769 = vunpack.c.h.b16 %v610
        %v1770 = vunpack.c.l.b16 %v611
        %v1771 = vunpack.c.h.b16 %v611
        %v1772 = vunpack.c.l.b16 %v612
        %v1773 = vunpack.c.h.b16 %v612
        %v1774 = vunpack.c.l.b16 %v613
        %v1775 = vunpack.c.h.b16 %v613
        %v1776 = vunpack.c.l.b16 %v614
        %v1777 = vunpack.c.h.b16 %v614
        %v1778 = vunpack.c.l.b16 %v615
        %v1779 = vunpack.c.h.b16 %v615
        %v1780 = vunpack.c.l.b16 %v616
        %v1781 = vunpack.c.h.b16 %v616
        %v1782 = vunpack.c.l.b16 %v617
        %v1783 = vunpack.c.h.b16 %v617
        %v1784 = vunpack.c.l.b16 %v618
        %v1785 = vunpack.c.h.b16 %v618
        %v1786 = vunpack.c.l.b16 %v619
        %v1787 = vunpack.c.h.b16 %v619
        %v1788 = vunpack.c.l.b16 %v620
        %v1789 = vunpack.c.h.b16 %v620
        %v1790 = vunpack.c.l.b16 %v621
        %v1791 = vunpack.c.h.b16 %v621
        %v1792 = vunpack.c.l.b16 %v622
        %v1793 = vunpack.c.h.b16 %v622
        %v1794 = vunpack.c.l.b16 %v623
        %v1795 = vunpack.c.h.b16 %v623
        %v1796 = vunpack.c.l.b16 %v624
        %v1797 = vunpack.c.h.b16 %v624
        %v1798 = vunpack.c.l.b16 %v625
        %v1799 = vunpack.c.h.b16 %v625
        %v1800 = vunpack.c.l.b16 %v626
        %v1801 = vunpack.c.h.b16 %v626
        %v1802 = vunpack.c.l.b16 %v627
        %v1803 = vunpack.c.h.b16 %v627
        %v1804 = vunpack.c.l.b16 %v628
        %v1805 = vunpack.c.h.b16 %v628
        %v1806 = vunpack.c.l.b16 %v629
        %v1807 = vunpack.c.h.b16 %v629
        %v1808 = vunpack.c.l.b16 %v630
        %v1809 = vunpack.c.h.b16 %v630
        %v1810 = vunpack.c.l.b16 %v631
        %v1811 = vunpack.c.h.b16 %v631
        %v1812 = vunpack.c.l.b16 %v632
        %v1813 = vunpack.c.h.b16 %v632
        %v1814 = vunpack.c.l.b16 %v633
        %v1815 = vunpack.c.h.b16 %v633
        %v1816 = vunpack.c.l.b16 %v634
        %v1817 = vunpack.c.h.b16 %v634
        %v1818 = vunpack.c.l.b16 %v635
        %v1819 = vunpack.c.h.b16 %v635
        %v1820 = vunpack.c.l.b16 %v636
        %v1821 = vunpack.c.h.b16 %v636
        %v1822 = vunpack.c.l.b16 %v637
        %v1823 = vunpack.c.h.b16 %v637
        %v1824 = vunpack.c.l.b16 %v638
        %v1825 = vunpack.c.h.b16 %v638
        %v1826 = vunpack.c.l.b16 %v639
        %v1827 = vunpack.c.h.b16 %v639
        %v1828 = vunpack.c.l.b16 %v640
        %v1829 = vunpack.c.h.b16 %v640
        %v1830 = vunpack.c.l.b16 %v641
        %v1831 = vunpack.c.h.b16 %v641
        %v1832 = vunpack.c.l.b16 %v642
        %v1833 = vunpack.c.h.b16 %v642
        %v1834 = vunpack.c.l.b16 %v643
        %v1835 = vunpack.c.h.b16 %v643
        %v1836 = vunpack.c.l.b16 %v644
        %v1837 = vunpack.c.h.b16 %v644
        %v1838 = vunpack.c.l.b16 %v645
        %v1839 = vunpack.c.h.b16 %v645
        %v1840 = vunpack.c.l.b16 %v646
        %v1841 = vunpack.c.h.b16 %v646
        %v1842 = vunpack.c.l.b16 %v647
        %v1843 = vunpack.c.h.b16 %v647
        %v1844 = vunpack.c.l.b16 %v648
        %v1845 = vunpack.c.h.b16 %v648
        %v1846 = vunpack.c.l.b16 %v649
        %v1847 = vunpack.c.h.b16 %v649
        %v1848 = vunpack.c.l.b16 %v650
        %v1849 = vunpack.c.h.b16 %v650
        %v1850 = vunpack.c.l.b16 %v651
        %v1851 = vunpack.c.h.b16 %v651
        %v1852 = vunpack.c.l.b16 %v652
        %v1853 = vunpack.c.h.b16 %v652
        %v1854 = vunpack.c.l.b16 %v653
        %v1855 = vunpack.c.h.b16 %v653
        %v1856 = vunpack.c.l.b16 %v654
        %v1857 = vunpack.c.h.b16 %v654
        %v1858 = vunpack.c.l.b16 %v655
        %v1859 = vunpack.c.h.b16 %v655
        %v1860 = vunpack.c.l.b16 %v656
        %v1861 = vunpack.c.h.b16 %v656
        %v1862 = vunpack.c.l.b16 %v657
        %v1863 = vunpack.c.h.b16 %v657
        %v1864 = vunpack.c.l.b16 %v658
        %v1865 = vunpack.c.h.b16 %v658
        %v1866 = vunpack.c.l.b16 %v659
        %v1867 = vunpack.c.h.b16 %v659
        %v1868 = vunpack.c.l.b16 %v660
        %v1869 = vunpack.c.h.b16 %v660
        %v1870 = vunpack.c.l.b16 %v661
        %v1871 = vunpack.c.h.b16 %v661
        %v1872 = vunpack.c.l.b16 %v662
        %v1873 = vunpack.c.h.b16 %v662
        %v1874 = vunpack.c.l.b16 %v663
        %v1875 = vunpack.c.h.b16 %v663
        %v1876 = vunpack.c.l.b16 %v664
        %v1877 = vunpack.c.h.b16 %v664
        %v1878 = vunpack.c.l.b16 %v665
        %v1879 = vunpack.c.h.b16 %v665
        %v1880 = vunpack.c.l.b16 %v666
        %v1881 = vunpack.c.h.b16 %v666
        %v1882 = vunpack.c.l.b16 %v667
        %v1883 = vunpack.c.h.b16 %v667
        %v1884 = vunpack.c.l.b16 %v668
        %v1885 = vunpack.c.h.b16 %v668
        %v1886 = vunpack.c.l.b16 %v669
        %v1887 = vunpack.c.h.b16 %v669
        %v1888 = vunpack.c.l.b16 %v670
        %v1889 = vunpack.c.h.b16 %v670
        %v1890 = vunpack.c.l.b16 %v671
        %v1891 = vunpack.c.h.b16 %v671
        %v1892 = vunpack.c.l.b16 %v672
        %v1893 = vunpack.c.h.b16 %v672
        %v1894 = vunpack.c.l.b16 %v673
        %v1895 = vunpack.c.h.b16 %v673
        %v1896 = vunpack.c.l.b16 %v674
        %v1897 = vunpack.c.h.b16 %v674
        %v1898 = vunpack.c.l.b16 %v675
        %v1899 = vunpack.c.h.b16 %v675
        %v1900 = vunpack.c.l.b16 %v676
        %v1901 = vunpack.c.h.b16 %v676
        %v1902 = vunpack.c.l.b16 %v677
        %v1903 = vunpack.c.h.b16 %v677
        %v1904 = vunpack.c.l.b16 %v678
        %v1905 = vunpack.c.h.b16 %v678
        %v1906 = vunpack.c.l.b16 %v679
        %v1907 = vunpack.c.h.b16 %v679
        %v1908 = vunpack.c.l.b16 %v680
        %v1909 = vunpack.c.h.b16 %v680
        %v1910 = vunpack.c.l.b16 %v681
        %v1911 = vunpack.c.h.b16 %v681
        %v1912 = vunpack.c.l.b16 %v682
        %v1913 = vunpack.c.h.b16 %v682
        %v1914 = vunpack.c.l.b16 %v683
        %v1915 = vunpack.c.h.b16 %v683
        %v1916 = vunpack.c.l.b16 %v684
        %v1917 = vunpack.c.h.b16 %v684
        %v1918 = vunpack.c.l.b16 %v685
        %v1919 = vunpack.c.h.b16 %v685
        %v1920 = vunpack.c.l.b16 %v686
        %v1921 = vunpack.c.h.b16 %v686
        %v1922 = vunpack.c.l.b16 %v687
        %v1923 = vunpack.c.h.b16 %v687
        %v1924 = vunpack.c.l.b16 %v688
        %v1925 = vunpack.c.h.b16 %v688
        %v1926 = vunpack.c.l.b16 %v689
        %v1927 = vunpack.c.h.b16 %v689
        %v1928 = vunpack.c.l.b16 %v690
        %v1929 = vunpack.c.h.b16 %v690
        %v1930 = vunpack.c.l.b16 %v691
        %v1931 = vunpack.c.h.b16 %v691
        %v1932 = vunpack.c.l.b16 %v692
        %v1933 = vunpack.c.h.b16 %v692
        %v1934 = vunpack.c.l.b16 %v693
        %v1935 = vunpack.c.h.b16 %v693
        %v1936 = vunpack.c.l.b16 %v694
        %v1937 = vunpack.c.h.b16 %v694
        %v1938 = vunpack.c.l.b16 %v695
        %v1939 = vunpack.c.h.b16 %v695
        %v1940 = vunpack.c.l.b16 %v696
        %v1941 = vunpack.c.h.b16 %v696
        %v1942 = vunpack.c.l.b16 %v697
        %v1943 = vunpack.c.h.b16 %v697
        %v1944 = vunpack.c.l.b16 %v698
        %v1945 = vunpack.c.h.b16 %v698
        %v1946 = vunpack.c.l.b16 %v699
        %v1947 = vunpack.c.h.b16 %v699
        %v1948 = vunpack.c.l.b16 %v700
        %v1949 = vunpack.c.h.b16 %v700
        %v1950 = vunpack.c.l.b16 %v701
        %v1951 = vunpack.c.h.b16 %v701
        %v1952 = vunpack.c.l.b16 %v702
        %v1953 = vunpack.c.h.b16 %v702
        %v1954 = vunpack.c.l.b16 %v703
        %v1955 = vunpack.c.h.b16 %v703
        %v1956 = vunpack.c.l.b16 %v704
        %v1957 = vunpack.c.h.b16 %v704
        %v1958 = vunpack.c.l.b16 %v705
        %v1959 = vunpack.c.h.b16 %v705
        %v1960 = vunpack.c.l.b16 %v706
        %v1961 = vunpack.c.h.b16 %v706
        %v1962 = vunpack.c.l.b16 %v707
        %v1963 = vunpack.c.h.b16 %v707
        %v1964 = vunpack.c.l.b16 %v708
        %v1965 = vunpack.c.h.b16 %v708
        %v1966 = vunpack.c.l.b16 %v709
        %v1967 = vunpack.c.h.b16 %v709
        %v1968 = vunpack.c.l.b16 %v710
        %v1969 = vunpack.c.h.b16 %v710
        %v1970 = vunpack.c.l.b16 %v711
        %v1971 = vunpack.c.h.b16 %v711
        %v1972 = vunpack.c.l.b16 %v712
        %v1973 = vunpack.c.h.b16 %v712
        %v1974 = vunpack.c.l.b16 %v713
        %v1975 = vunpack.c.h.b16 %v713
        %v1976 = vunpack.c.l.b16 %v714
        %v1977 = vunpack.c.h.b16 %v714
        %v1978 = vunpack.c.l.b16 %v715
        %v1979 = vunpack.c.h.b16 %v715
        %v1980 = vunpack.c.l.b16 %v716
        %v1981 = vunpack.c.h.b16 %v716
        %v1982 = vunpack.c.l.b16 %v717
        %v1983 = vunpack.c.h.b16 %v717
        %v1984 = vunpack.c.l.b16 %v718
        %v1985 = vunpack.c.h.b16 %v718
        %v1986 = vunpack.c.l.b16 %v719
        %v1987 = vunpack.c.h.b16 %v719
        %v1988 = vunpack.c.l.b16 %v720
        %v1989 = vunpack.c.h.b16 %v720
        %v1990 = vunpack.c.l.b16 %v721
        %v1991 = vunpack.c.h.b16 %v721
        %v1992 = vunpack.c.l.b16 %v722
        %v1993 = vunpack.c.h.b16 %v722
        %v1994 = vunpack.c.l.b16 %v723
        %v1995 = vunpack.c.h.b16 %v723
        %v1996 = vunpack.c.l.b16 %v724
        %v1997 = vunpack.c.h.b16 %v724
        %v1998 = vunpack.c.l.b16 %v725
        %v1999 = vunpack.c.h.b16 %v725
        %v2000 = vunpack.c.l.b16 %v726
        %v2001 = vunpack.c.h.b16 %v726
        %v2002 = vunpack.c.l.b16 %v727
        %v2003 = vunpack.c.h.b16 %v727
        %v2004 = vunpack.c.l.b16 %v728
        %v2005 = vunpack.c.h.b16 %v728
        %v2006 = vunpack.c.l.b16 %v729
        %v2007 = vunpack.c.h.b16 %v729
        %v2008 = vunpack.c.l.b16 %v730
        %v2009 = vunpack.c.h.b16 %v730
        %v2010 = vunpack.c.l.b16 %v731
        %v2011 = vunpack.c.h.b16 %v731
        %v2012 = vunpack.c.l.b16 %v732
        %v2013 = vunpack.c.h.b16 %v732
        %v2014 = vunpack.c.l.b16 %v733
        %v2015 = vunpack.c.h.b16 %v733
        %v2016 = vunpack.c.l.b16 %v734
        %v2017 = vunpack.c.h.b16 %v734
        %v2018 = vunpack.c.l.b16 %v735
        %v2019 = vunpack.c.h.b16 %v735
        %v2020 = vunpack.c.l.b16 %v736
        %v2021 = vunpack.c.h.b16 %v736
        %v2022 = vunpack.c.l.b16 %v737
        %v2023 = vunpack.c.h.b16 %v737
        %v2024 = vunpack.c.l.b16 %v738
        %v2025 = vunpack.c.h.b16 %v738
        %v2026 = vunpack.c.l.b16 %v739
        %v2027 = vunpack.c.h.b16 %v739
        %v2028 = vunpack.c.l.b16 %v740
        %v2029 = vunpack.c.h.b16 %v740
        %v2030 = vunpack.c.l.b16 %v741
        %v2031 = vunpack.c.h.b16 %v741
        %v2032 = vunpack.c.l.b16 %v742
        %v2033 = vunpack.c.h.b16 %v742
        %v2034 = vunpack.c.l.b16 %v743
        %v2035 = vunpack.c.h.b16 %v743
        %v2036 = vunpack.c.l.b16 %v744
        %v2037 = vunpack.c.h.b16 %v744
        %v2038 = vunpack.c.l.b16 %v745
        %v2039 = vunpack.c.h.b16 %v745
        %v2040 = vunpack.c.l.b16 %v746
        %v2041 = vunpack.c.h.b16 %v746
        %v2042 = vunpack.c.l.b16 %v747
        %v2043 = vunpack.c.h.b16 %v747
        %v2044 = vunpack.c.l.b16 %v748
        %v2045 = vunpack.c.h.b16 %v748
        %v2046 = vunpack.c.l.b16 %v749
        %v2047 = vunpack.c.h.b16 %v749
        %v2048 = vunpack.c.l.b16 %v750
        %v2049 = vunpack.c.h.b16 %v750
        %v2050 = vunpack.c.l.b16 %v751
        %v2051 = vunpack.c.h.b16 %v751
        %v2052 = vunpack.c.l.b16 %v752
        %v2053 = vunpack.c.h.b16 %v752
        %v2054 = vunpack.c.l.b16 %v753
        %v2055 = vunpack.c.h.b16 %v753
        %v2056 = vunpack.c.l.b16 %v754
        %v2057 = vunpack.c.h.b16 %v754
        %v2058 = vunpack.c.l.b16 %v755
        %v2059 = vunpack.c.h.b16 %v755
        %v2060 = vunpack.c.l.b16 %v756
        %v2061 = vunpack.c.h.b16 %v756
        %v2062 = vunpack.c.l.b16 %v757
        %v2063 = vunpack.c.h.b16 %v757
        %v2064 = vunpack.c.l.b16 %v758
        %v2065 = vunpack.c.h.b16 %v758
        %v2066 = vunpack.c.l.b16 %v759
        %v2067 = vunpack.c.h.b16 %v759
        %v2068 = vunpack.c.l.b16 %v760
        %v2069 = vunpack.c.h.b16 %v760
        %v2070 = vunpack.c.l.b16 %v761
        %v2071 = vunpack.c.h.b16 %v761
        %v2072 = vunpack.c.l.b16 %v762
        %v2073 = vunpack.c.h.b16 %v762
        %v2074 = vunpack.c.l.b16 %v763
        %v2075 = vunpack.c.h.b16 %v763
        %v2076 = vunpack.c.l.b16 %v764
        %v2077 = vunpack.c.h.b16 %v764
        %v2078 = vunpack.c.l.b16 %v765
        %v2079 = vunpack.c.h.b16 %v765
        %v2080 = vunpack.c.l.b16 %v766
        %v2081 = vunpack.c.h.b16 %v766
        %v2082 = vunpack.c.l.b16 %v767
        %v2083 = vunpack.c.h.b16 %v767
        %v2084 = vunpack.c.l.b16 %v768
        %v2085 = vunpack.c.h.b16 %v768
        %v2086 = vunpack.c.l.b16 %v769
        %v2087 = vunpack.c.h.b16 %v769
        %v2088 = vunpack.c.l.b16 %v770
        %v2089 = vunpack.c.h.b16 %v770
        %v2090 = vunpack.c.l.b16 %v771
        %v2091 = vunpack.c.h.b16 %v771
        %v2092 = vunpack.c.l.b16 %v772
        %v2093 = vunpack.c.h.b16 %v772
        %v2094 = vunpack.c.l.b16 %v773
        %v2095 = vunpack.c.h.b16 %v773
        %v2096 = vunpack.c.l.b16 %v774
        %v2097 = vunpack.c.h.b16 %v774
        %v2098 = vunpack.c.l.b16 %v775
        %v2099 = vunpack.c.h.b16 %v775
        %v2100 = vunpack.c.l.b16 %v776
        %v2101 = vunpack.c.h.b16 %v776
        %v2102 = vunpack.c.l.b16 %v777
        %v2103 = vunpack.c.h.b16 %v777
        %v2104 = vunpack.c.l.b16 %v778
        %v2105 = vunpack.c.h.b16 %v778
        %v2106 = vunpack.c.l.b16 %v779
        %v2107 = vunpack.c.h.b16 %v779
        %v2108 = vunpack.c.l.b16 %v780
        %v2109 = vunpack.c.h.b16 %v780
        %v2110 = vunpack.c.l.b16 %v781
        %v2111 = vunpack.c.h.b16 %v781
        %v2112 = vunpack.c.l.b16 %v782
        %v2113 = vunpack.c.h.b16 %v782
        %v2114 = vunpack.c.l.b16 %v783
        %v2115 = vunpack.c.h.b16 %v783
        %v2116 = vunpack.c.l.b16 %v784
        %v2117 = vunpack.c.h.b16 %v784
        %v2118 = vunpack.c.l.b16 %v785
        %v2119 = vunpack.c.h.b16 %v785
        %v2120 = vunpack.c.l.b16 %v786
        %v2121 = vunpack.c.h.b16 %v786
        %v2122 = vunpack.c.l.b16 %v787
        %v2123 = vunpack.c.h.b16 %v787
        %v2124 = vunpack.c.l.b16 %v788
        %v2125 = vunpack.c.h.b16 %v788
        %v2126 = vunpack.c.l.b16 %v789
        %v2127 = vunpack.c.h.b16 %v789
        %v2128 = vunpack.c.l.b16 %v790
        %v2129 = vunpack.c.h.b16 %v790
        %v2130 = vunpack.c.l.b16 %v791
        %v2131 = vunpack.c.h.b16 %v791
        %v2132 = vunpack.c.l.b16 %v792
        %v2133 = vunpack.c.h.b16 %v792
        %v2134 = vunpack.c.l.b16 %v793
        %v2135 = vunpack.c.h.b16 %v793
        %v2136 = vunpack.c.l.b16 %v794
        %v2137 = vunpack.c.h.b16 %v794
        %v2138 = vunpack.c.l.b16 %v795
        %v2139 = vunpack.c.h.b16 %v795
        %v2140 = vunpack.c.l.b16 %v796
        %v2141 = vunpack.c.h.b16 %v796
        %v2142 = vunpack.c.l.b16 %v797
        %v2143 = vunpack.c.h.b16 %v797
        %v2144 = vunpack.c.l.b16 %v798
        %v2145 = vunpack.c.h.b16 %v798
        %v2146 = vunpack.c.l.b16 %v799
        %v2147 = vunpack.c.h.b16 %v799
        %v2148 = vunpack.c.l.b16 %v800
        %v2149 = vunpack.c.h.b16 %v800
        %v2150 = vunpack.c.l.b16 %v801
        %v2151 = vunpack.c.h.b16 %v801
        %v2152 = vunpack.c.l.b16 %v802
        %v2153 = vunpack.c.h.b16 %v802
        %v2154 = vunpack.c.l.b16 %v803
        %v2155 = vunpack.c.h.b16 %v803
        %v2156 = vunpack.c.l.b16 %v804
        %v2157 = vunpack.c.h.b16 %v804
        %v2158 = vunpack.c.l.b16 %v805
        %v2159 = vunpack.c.h.b16 %v805
        %v2160 = vunpack.c.l.b16 %v806
        %v2161 = vunpack.c.h.b16 %v806
        %v2162 = vunpack.c.l.b16 %v807
        %v2163 = vunpack.c.h.b16 %v807
        %v2164 = vunpack.c.l.b16 %v808
        %v2165 = vunpack.c.h.b16 %v808
        %v2166 = vunpack.c.l.b16 %v809
        %v2167 = vunpack.c.h.b16 %v809
        %v2168 = vunpack.c.l.b16 %v810
        %v2169 = vunpack.c.h.b16 %v810
        %v2170 = vunpack.c.l.b16 %v811
        %v2171 = vunpack.c.h.b16 %v811
        %v2172 = vunpack.c.l.b16 %v812
        %v2173 = vunpack.c.h.b16 %v812
        %v2174 = vunpack.c.l.b16 %v813
        %v2175 = vunpack.c.h.b16 %v813
        %v2176 = vunpack.c.l.b16 %v814
        %v2177 = vunpack.c.h.b16 %v814
        %v2178 = vunpack.c.l.b16 %v815
        %v2179 = vunpack.c.h.b16 %v815
        %v2180 = vunpack.c.l.b16 %v816
        %v2181 = vunpack.c.h.b16 %v816
        %v2182 = vunpack.c.l.b16 %v817
        %v2183 = vunpack.c.h.b16 %v817
        %v2184 = vunpack.c.l.b16 %v818
        %v2185 = vunpack.c.h.b16 %v818
        %v2186 = vunpack.c.l.b16 %v819
        %v2187 = vunpack.c.h.b16 %v819
        %v2188 = vunpack.c.l.b16 %v820
        %v2189 = vunpack.c.h.b16 %v820
        %v2190 = vunpack.c.l.b16 %v821
        %v2191 = vunpack.c.h.b16 %v821
        %v2192 = vunpack.c.l.b16 %v822
        %v2193 = vunpack.c.h.b16 %v822
        %v2194 = vunpack.c.l.b16 %v823
        %v2195 = vunpack.c.h.b16 %v823
        %v2196 = vunpack.c.l.b16 %v824
        %v2197 = vunpack.c.h.b16 %v824
        %v2198 = vunpack.c.l.b16 %v825
        %v2199 = vunpack.c.h.b16 %v825
        %v2200 = vunpack.c.l.b16 %v826
        %v2201 = vunpack.c.h.b16 %v826
        %v2202 = vunpack.c.l.b16 %v827
        %v2203 = vunpack.c.h.b16 %v827
        %v2204 = vunpack.c.l.b16 %v828
        %v2205 = vunpack.c.h.b16 %v828
        %v2206 = vunpack.c.l.b16 %v829
        %v2207 = vunpack.c.h.b16 %v829
        %v2208 = vunpack.c.l.b16 %v830
        %v2209 = vunpack.c.h.b16 %v830
        %v2210 = vunpack.c.l.b16 %v831
        %v2211 = vunpack.c.h.b16 %v831
        %v2212 = vunpack.c.l.b16 %v832
        %v2213 = vunpack.c.h.b16 %v832
        %v2214 = vunpack.c.l.b16 %v833
        %v2215 = vunpack.c.h.b16 %v833
        %v2216 = vunpack.c.l.b16 %v834
        %v2217 = vunpack.c.h.b16 %v834
        %v2218 = vunpack.c.l.b16 %v835
        %v2219 = vunpack.c.h.b16 %v835
        %v2220 = vunpack.c.l.b16 %v836
        %v2221 = vunpack.c.h.b16 %v836
        %v2222 = vunpack.c.l.b16 %v837
        %v2223 = vunpack.c.h.b16 %v837
        %v2224 = vunpack.c.l.b16 %v838
        %v2225 = vunpack.c.h.b16 %v838
        %v2226 = vunpack.c.l.b16 %v839
        %v2227 = vunpack.c.h.b16 %v839
        %v2228 = vunpack.c.l.b16 %v840
        %v2229 = vunpack.c.h.b16 %v840
        %v2230 = vunpack.c.l.b16 %v841
        %v2231 = vunpack.c.h.b16 %v841
        %v2232 = vunpack.c.l.b16 %v842
        %v2233 = vunpack.c.h.b16 %v842
        %v2234 = vunpack.c.l.b16 %v843
        %v2235 = vunpack.c.h.b16 %v843
        %v2236 = vunpack.c.l.b16 %v844
        %v2237 = vunpack.c.h.b16 %v844
        %v2238 = vunpack.c.l.b16 %v845
        %v2239 = vunpack.c.h.b16 %v845
        %v2240 = vunpack.c.l.b16 %v846
        %v2241 = vunpack.c.h.b16 %v846
        %v2242 = vunpack.c.l.b16 %v847
        %v2243 = vunpack.c.h.b16 %v847
        %v2244 = vunpack.c.l.b16 %v848
        %v2245 = vunpack.c.h.b16 %v848
        %v2246 = vunpack.c.l.b16 %v849
        %v2247 = vunpack.c.h.b16 %v849
        %v2248 = vunpack.c.l.b16 %v850
        %v2249 = vunpack.c.h.b16 %v850
        %v2250 = vunpack.c.l.b16 %v851
        %v2251 = vunpack.c.h.b16 %v851
        %v2252 = vunpack.c.l.b16 %v852
        %v2253 = vunpack.c.h.b16 %v852
        %v2254 = vunpack.c.l.b16 %v853
        %v2255 = vunpack.c.h.b16 %v853
        %v2256 = vunpack.c.l.b16 %v854
        %v2257 = vunpack.c.h.b16 %v854
        %v2258 = vunpack.c.l.b16 %v855
        %v2259 = vunpack.c.h.b16 %v855
        %v2260 = vunpack.c.l.b16 %v856
        %v2261 = vunpack.c.h.b16 %v856
        %v2262 = vunpack.c.l.b16 %v857
        %v2263 = vunpack.c.h.b16 %v857
        %v2264 = vunpack.c.l.b16 %v858
        %v2265 = vunpack.c.h.b16 %v858
        %v2266 = vunpack.c.l.b16 %v859
        %v2267 = vunpack.c.h.b16 %v859
        %v2268 = vunpack.c.l.b16 %v860
        %v2269 = vunpack.c.h.b16 %v860
        %v2270 = vunpack.c.l.b16 %v861
        %v2271 = vunpack.c.h.b16 %v861
        %v2272 = vunpack.c.l.b16 %v862
        %v2273 = vunpack.c.h.b16 %v862
        %v2274 = vunpack.c.l.b16 %v863
        %v2275 = vunpack.c.h.b16 %v863
        %v2276 = vunpack.c.l.b16 %v864
        %v2277 = vunpack.c.h.b16 %v864
        %v2278 = vunpack.c.l.b16 %v865
        %v2279 = vunpack.c.h.b16 %v865
        %v2280 = vunpack.c.l.b16 %v866
        %v2281 = vunpack.c.h.b16 %v866
        %v2282 = vunpack.c.l.b16 %v867
        %v2283 = vunpack.c.h.b16 %v867
        %v2284 = vunpack.c.l.b16 %v868
        %v2285 = vunpack.c.h.b16 %v868
        %v2286 = vunpack.c.l.b16 %v869
        %v2287 = vunpack.c.h.b16 %v869
        %v2288 = vunpack.c.l.b16 %v870
        %v2289 = vunpack.c.h.b16 %v870
        %v2290 = vunpack.c.l.b16 %v871
        %v2291 = vunpack.c.h.b16 %v871
        %v2292 = vunpack.c.l.b16 %v872
        %v2293 = vunpack.c.h.b16 %v872
        %v2294 = vunpack.c.l.b16 %v873
        %v2295 = vunpack.c.h.b16 %v873
        %v2296 = vunpack.c.l.b16 %v874
        %v2297 = vunpack.c.h.b16 %v874
        %v2298 = vunpack.c.l.b16 %v875
        %v2299 = vunpack.c.h.b16 %v875
        %v2300 = vunpack.c.l.b16 %v876
        %v2301 = vunpack.c.h.b16 %v876
        %v2302 = vunpack.c.l.b16 %v877
        %v2303 = vunpack.c.h.b16 %v877
        %v2304 = vunpack.c.l.b16 %v878
        %v2305 = vunpack.c.h.b16 %v878
        %v2306 = vunpack.c.l.b16 %v879
        %v2307 = vunpack.c.h.b16 %v879
        %v2308 = vunpack.c.l.b16 %v880
        %v2309 = vunpack.c.h.b16 %v880
        %v2310 = vunpack.c.l.b16 %v881
        %v2311 = vunpack.c.h.b16 %v881
        %v2312 = vunpack.c.l.b16 %v882
        %v2313 = vunpack.c.h.b16 %v882
        %v2314 = vunpack.c.l.b16 %v883
        %v2315 = vunpack.c.h.b16 %v883
        %v2316 = vunpack.c.l.b16 %v884
        %v2317 = vunpack.c.h.b16 %v884
        %v2318 = vunpack.c.l.b16 %v885
        %v2319 = vunpack.c.h.b16 %v885
        %v2320 = vunpack.c.l.b16 %v886
        %v2321 = vunpack.c.h.b16 %v886
        %v2322 = vunpack.c.l.b16 %v887
        %v2323 = vunpack.c.h.b16 %v887
        %v2324 = vunpack.c.l.b16 %v888
        %v2325 = vunpack.c.h.b16 %v888
        %v2326 = vunpack.c.l.b16 %v889
        %v2327 = vunpack.c.h.b16 %v889
        %v2328 = vunpack.c.l.b16 %v890
        %v2329 = vunpack.c.h.b16 %v890
        %v2330 = vunpack.c.l.b16 %v891
        %v2331 = vunpack.c.h.b16 %v891
        %v2332 = vunpack.c.l.b16 %v892
        %v2333 = vunpack.c.h.b16 %v892
        %v2334 = vunpack.c.l.b16 %v893
        %v2335 = vunpack.c.h.b16 %v893
        %v2336 = vunpack.c.l.b16 %v894
        %v2337 = vunpack.c.h.b16 %v894
        %v2338 = vunpack.c.l.b16 %v895
        %v2339 = vunpack.c.h.b16 %v895
        %v2340 = vunpack.c.l.b16 %v896
        %v2341 = vunpack.c.h.b16 %v896
        %v2342 = vunpack.c.l.b16 %v897
        %v2343 = vunpack.c.h.b16 %v897
        %v2344 = vunpack.c.l.b16 %v898
        %v2345 = vunpack.c.h.b16 %v898
        %v2346 = vunpack.c.l.b16 %v899
        %v2347 = vunpack.c.h.b16 %v899
        %v2348 = vunpack.c.l.b16 %v900
        %v2349 = vunpack.c.h.b16 %v900
        %v2350 = vunpack.c.l.b16 %v901
        %v2351 = vunpack.c.h.b16 %v901
        %v2352 = vunpack.c.l.b16 %v902
        %v2353 = vunpack.c.h.b16 %v902
        %v2354 = vunpack.c.l.b16 %v903
        %v2355 = vunpack.c.h.b16 %v903
        %v2356 = vunpack.c.l.b16 %v904
        %v2357 = vunpack.c.h.b16 %v904
        %v2358 = vunpack.c.l.b16 %v905
        %v2359 = vunpack.c.h.b16 %v905
        %v2360 = vunpack.c.l.b16 %v906
        %v2361 = vunpack.c.h.b16 %v906
        %v2362 = vunpack.c.l.b16 %v907
        %v2363 = vunpack.c.h.b16 %v907
        %v2364 = vunpack.c.l.b16 %v908
        %v2365 = vunpack.c.h.b16 %v908
        %v2366 = vunpack.c.l.b16 %v909
        %v2367 = vunpack.c.h.b16 %v909
        %v2368 = vunpack.c.l.b16 %v910
        %v2369 = vunpack.c.h.b16 %v910
        %v2370 = vunpack.c.l.b16 %v911
        %v2371 = vunpack.c.h.b16 %v911
        %v2372 = vunpack.c.l.b16 %v912
        %v2373 = vunpack.c.h.b16 %v912
        %v2374 = vunpack.c.l.b16 %v913
        %v2375 = vunpack.c.h.b16 %v913
        %v2376 = vunpack.c.l.b16 %v914
        %v2377 = vunpack.c.h.b16 %v914
        %v2378 = vunpack.c.l.b16 %v915
        %v2379 = vunpack.c.h.b16 %v915
        %v2380 = vunpack.c.l.b16 %v916
        %v2381 = vunpack.c.h.b16 %v916
        %v2382 = vunpack.c.l.b16 %v917
        %v2383 = vunpack.c.h.b16 %v917
        %v2384 = vunpack.c.l.b16 %v918
        %v2385 = vunpack.c.h.b16 %v918
        %v2386 = vunpack.c.l.b16 %v919
        %v2387 = vunpack.c.h.b16 %v919
        %v2388 = vunpack.c.l.b16 %v920
        %v2389 = vunpack.c.h.b16 %v920
        %v2390 = vunpack.c.l.b16 %v921
        %v2391 = vunpack.c.h.b16 %v921
        %v2392 = vunpack.c.l.b16 %v922
        %v2393 = vunpack.c.h.b16 %v922
        %v2394 = vunpack.c.l.b16 %v923
        %v2395 = vunpack.c.h.b16 %v923
        %v2396 = vunpack.c.l.b16 %v924
        %v2397 = vunpack.c.h.b16 %v924
        %v2398 = vunpack.c.l.b16 %v925
        %v2399 = vunpack.c.h.b16 %v925
        %v2400 = vunpack.c.l.b16 %v926
        %v2401 = vunpack.c.h.b16 %v926
        %v2402 = vunpack.c.l.b16 %v927
        %v2403 = vunpack.c.h.b16 %v927
        %v2404 = vunpack.c.l.b16 %v928
        %v2405 = vunpack.c.h.b16 %v928
        %v2406 = vunpack.c.l.b16 %v929
        %v2407 = vunpack.c.h.b16 %v929
        %v2408 = vunpack.c.l.b16 %v930
        %v2409 = vunpack.c.h.b16 %v930
        %v2410 = vunpack.c.l.b16 %v931
        %v2411 = vunpack.c.h.b16 %v931
        %v2412 = vunpack.c.l.b16 %v932
        %v2413 = vunpack.c.h.b16 %v932
        %v2414 = vunpack.c.l.b16 %v933
        %v2415 = vunpack.c.h.b16 %v933
        %v2416 = vunpack.c.l.b16 %v934
        %v2417 = vunpack.c.h.b16 %v934
        %v2418 = vunpack.c.l.b16 %v935
        %v2419 = vunpack.c.h.b16 %v935
        %v2420 = vunpack.c.l.b16 %v936
        %v2421 = vunpack.c.h.b16 %v936
        %v2422 = vunpack.c.l.b16 %v937
        %v2423 = vunpack.c.h.b16 %v937
        %v2424 = vunpack.c.l.b16 %v938
        %v2425 = vunpack.c.h.b16 %v938
        %v2426 = vunpack.c.l.b16 %v939
        %v2427 = vunpack.c.h.b16 %v939
        %v2428 = vunpack.c.l.b16 %v940
        %v2429 = vunpack.c.h.b16 %v940
        %v2430 = vunpack.c.l.b16 %v941
        %v2431 = vunpack.c.h.b16 %v941
        %v2432 = vunpack.c.l.b16 %v942
        %v2433 = vunpack.c.h.b16 %v942
        %v2434 = vunpack.c.l.b16 %v943
        %v2435 = vunpack.c.h.b16 %v943
        %v2436 = vunpack.c.l.b16 %v944
        %v2437 = vunpack.c.h.b16 %v944
        %v2438 = vunpack.c.l.b16 %v945
        %v2439 = vunpack.c.h.b16 %v945
        %v2440 = vunpack.c.l.b16 %v946
        %v2441 = vunpack.c.h.b16 %v946
        %v2442 = vunpack.c.l.b16 %v947
        %v2443 = vunpack.c.h.b16 %v947
        %v2444 = vunpack.c.l.b16 %v948
        %v2445 = vunpack.c.h.b16 %v948
        %v2446 = vunpack.c.l.b16 %v949
        %v2447 = vunpack.c.h.b16 %v949
        %v2448 = vunpack.c.l.b16 %v950
        %v2449 = vunpack.c.h.b16 %v950
        %v2450 = vunpack.c.l.b16 %v951
        %v2451 = vunpack.c.h.b16 %v951
        %v2452 = vunpack.c.l.b16 %v952
        %v2453 = vunpack.c.h.b16 %v952
        %v2454 = vunpack.c.l.b16 %v953
        %v2455 = vunpack.c.h.b16 %v953
        %v2456 = vunpack.c.l.b16 %v954
        %v2457 = vunpack.c.h.b16 %v954
        %v2458 = vunpack.c.l.b16 %v955
        %v2459 = vunpack.c.h.b16 %v955
        %v2460 = vunpack.c.l.b16 %v956
        %v2461 = vunpack.c.h.b16 %v956
        %v2462 = vunpack.c.l.b16 %v957
        %v2463 = vunpack.c.h.b16 %v957
        %v2464 = vunpack.c.l.b16 %v958
        %v2465 = vunpack.c.h.b16 %v958
        %v2466 = vunpack.c.l.b16 %v959
        %v2467 = vunpack.c.h.b16 %v959
        %v2468 = vunpack.c.l.b16 %v960
        %v2469 = vunpack.c.h.b16 %v960
        %v2470 = vunpack.c.l.b16 %v961
        %v2471 = vunpack.c.h.b16 %v961
        %v2472 = vunpack.c.l.b16 %v962
        %v2473 = vunpack.c.h.b16 %v962
        %v2474 = vunpack.c.l.b16 %v963
        %v2475 = vunpack.c.h.b16 %v963
        %v2476 = vunpack.c.l.b16 %v964
        %v2477 = vunpack.c.h.b16 %v964
        %v2478 = vunpack.c.l.b16 %v965
        %v2479 = vunpack.c.h.b16 %v965
        %v2480 = vunpack.c.l.b16 %v966
        %v2481 = vunpack.c.h.b16 %v966
        %v2482 = vunpack.c.l.b16 %v967
        %v2483 = vunpack.c.h.b16 %v967
        %v2484 = vunpack.c.l.b16 %v968
        %v2485 = vunpack.c.h.b16 %v968
        %v2486 = vunpack.c.l.b16 %v969
        %v2487 = vunpack.c.h.b16 %v969
        %v2488 = vunpack.c.l.b16 %v970
        %v2489 = vunpack.c.h.b16 %v970
        %v2490 = vunpack.c.l.b16 %v971
        %v2491 = vunpack.c.h.b16 %v971
        %v2492 = vunpack.c.l.b16 %v972
        %v2493 = vunpack.c.h.b16 %v972
        %v2494 = vunpack.c.l.b16 %v973
        %v2495 = vunpack.c.h.b16 %v973
        %v2496 = vunpack.c.l.b16 %v974
        %v2497 = vunpack.c.h.b16 %v974
        %v2498 = vunpack.c.l.b16 %v975
        %v2499 = vunpack.c.h.b16 %v975
        %v2500 = vunpack.c.l.b16 %v976
        %v2501 = vunpack.c.h.b16 %v976
        %v2502 = vunpack.c.l.b16 %v977
        %v2503 = vunpack.c.h.b16 %v977
        %v2504 = vunpack.c.l.b16 %v978
        %v2505 = vunpack.c.h.b16 %v978
        %v2506 = vunpack.c.l.b16 %v979
        %v2507 = vunpack.c.h.b16 %v979
        %v2508 = vunpack.c.l.b16 %v980
        %v2509 = vunpack.c.h.b16 %v980
        %v2510 = vunpack.c.l.b16 %v981
        %v2511 = vunpack.c.h.b16 %v981
        %v2512 = vunpack.c.l.b16 %v982
        %v2513 = vunpack.c.h.b16 %v982
        %v2514 = vunpack.c.l.b16 %v983
        %v2515 = vunpack.c.h.b16 %v983
        %v2516 = vunpack.c.l.b16 %v984
        %v2517 = vunpack.c.h.b16 %v984
        %v2518 = vunpack.c.l.b16 %v985
        %v2519 = vunpack.c.h.b16 %v985
        %v2520 = vunpack.c.l.b16 %v986
        %v2521 = vunpack.c.h.b16 %v986
        %v2522 = vunpack.c.l.b16 %v987
        %v2523 = vunpack.c.h.b16 %v987
        %v2524 = vpack.c.b16 %v1508, %v1500
        %v2525 = vpack.c.b16 %v1509, %v1501
        %v2526 = vpack.c.b16 %v1510, %v1502
        %v2527 = vpack.c.b16 %v1511, %v1503
        %v2528 = vpack.c.b16 %v1512, %v1504
        %v2529 = vpack.c.b16 %v1513, %v1505
        %v2530 = vpack.c.b16 %v1514, %v1506
        %v2531 = vpack.c.b16 %v1515, %v1507
        %v2532 = vpack.c.b16 %v1524, %v1516
        %v2533 = vpack.c.b16 %v1525, %v1517
        %v2534 = vpack.c.b16 %v1526, %v1518
        %v2535 = vpack.c.b16 %v1527, %v1519
        %v2536 = vpack.c.b16 %v1528, %v1520
        %v2537 = vpack.c.b16 %v1529, %v1521
        %v2538 = vpack.c.b16 %v1530, %v1522
        %v2539 = vpack.c.b16 %v1531, %v1523
        %v2540 = vpack.c.b16 %v1540, %v1532
        %v2541 = vpack.c.b16 %v1541, %v1533
        %v2542 = vpack.c.b16 %v1542, %v1534
        %v2543 = vpack.c.b16 %v1543, %v1535
        %v2544 = vpack.c.b16 %v1544, %v1536
        %v2545 = vpack.c.b16 %v1545, %v1537
        %v2546 = vpack.c.b16 %v1546, %v1538
        %v2547 = vpack.c.b16 %v1547, %v1539
        %v2548 = vpack.c.b16 %v1556, %v1548
        %v2549 = vpack.c.b16 %v1557, %v1549
        %v2550 = vpack.c.b16 %v1558, %v1550
        %v2551 = vpack.c.b16 %v1559, %v1551
        %v2552 = vpack.c.b16 %v1560, %v1552
        %v2553 = vpack.c.b16 %v1561, %v1553
        %v2554 = vpack.c.b16 %v1562, %v1554
        %v2555 = vpack.c.b16 %v1563, %v1555
        %v2556 = vpack.c.b16 %v1572, %v1564
        %v2557 = vpack.c.b16 %v1573, %v1565
        %v2558 = vpack.c.b16 %v1574, %v1566
        %v2559 = vpack.c.b16 %v1575, %v1567
        %v2560 = vpack.c.b16 %v1576, %v1568
        %v2561 = vpack.c.b16 %v1577, %v1569
        %v2562 = vpack.c.b16 %v1578, %v1570
        %v2563 = vpack.c.b16 %v1579, %v1571
        %v2564 = vpack.c.b16 %v1588, %v1580
        %v2565 = vpack.c.b16 %v1589, %v1581
        %v2566 = vpack.c.b16 %v1590, %v1582
        %v2567 = vpack.c.b16 %v1591, %v1583
        %v2568 = vpack.c.b16 %v1592, %v1584
        %v2569 = vpack.c.b16 %v1593, %v1585
        %v2570 = vpack.c.b16 %v1594, %v1586
        %v2571 = vpack.c.b16 %v1595, %v1587
        %v2572 = vpack.c.b16 %v1604, %v1596
        %v2573 = vpack.c.b16 %v1605, %v1597
        %v2574 = vpack.c.b16 %v1606, %v1598
        %v2575 = vpack.c.b16 %v1607, %v1599
        %v2576 = vpack.c.b16 %v1608, %v1600
        %v2577 = vpack.c.b16 %v1609, %v1601
        %v2578 = vpack.c.b16 %v1610, %v1602
        %v2579 = vpack.c.b16 %v1611, %v1603
        %v2580 = vpack.c.b16 %v1620, %v1612
        %v2581 = vpack.c.b16 %v1621, %v1613
        %v2582 = vpack.c.b16 %v1622, %v1614
        %v2583 = vpack.c.b16 %v1623, %v1615
        %v2584 = vpack.c.b16 %v1624, %v1616
        %v2585 = vpack.c.b16 %v1625, %v1617
        %v2586 = vpack.c.b16 %v1626, %v1618
        %v2587 = vpack.c.b16 %v1627, %v1619
        %v2588 = vpack.c.b16 %v1636, %v1628
        %v2589 = vpack.c.b16 %v1637, %v1629
        %v2590 = vpack.c.b16 %v1638, %v1630
        %v2591 = vpack.c.b16 %v1639, %v1631
        %v2592 = vpack.c.b16 %v1640, %v1632
        %v2593 = vpack.c.b16 %v1641, %v1633
        %v2594 = vpack.c.b16 %v1642, %v1634
        %v2595 = vpack.c.b16 %v1643, %v1635
        %v2596 = vpack.c.b16 %v1652, %v1644
        %v2597 = vpack.c.b16 %v1653, %v1645
        %v2598 = vpack.c.b16 %v1654, %v1646
        %v2599 = vpack.c.b16 %v1655, %v1647
        %v2600 = vpack.c.b16 %v1656, %v1648
        %v2601 = vpack.c.b16 %v1657, %v1649
        %v2602 = vpack.c.b16 %v1658, %v1650
        %v2603 = vpack.c.b16 %v1659, %v1651
        %v2604 = vpack.c.b16 %v1668, %v1660
        %v2605 = vpack.c.b16 %v1669, %v1661
        %v2606 = vpack.c.b16 %v1670, %v1662
        %v2607 = vpack.c.b16 %v1671, %v1663
        %v2608 = vpack.c.b16 %v1672, %v1664
        %v2609 = vpack.c.b16 %v1673, %v1665
        %v2610 = vpack.c.b16 %v1674, %v1666
        %v2611 = vpack.c.b16 %v1675, %v1667
        %v2612 = vpack.c.b16 %v1684, %v1676
        %v2613 = vpack.c.b16 %v1685, %v1677
        %v2614 = vpack.c.b16 %v1686, %v1678
        %v2615 = vpack.c.b16 %v1687, %v1679
        %v2616 = vpack.c.b16 %v1688, %v1680
        %v2617 = vpack.c.b16 %v1689, %v1681
        %v2618 = vpack.c.b16 %v1690, %v1682
        %v2619 = vpack.c.b16 %v1691, %v1683
        %v2620 = vpack.c.b16 %v1700, %v1692
        %v2621 = vpack.c.b16 %v1701, %v1693
        %v2622 = vpack.c.b16 %v1702, %v1694
        %v2623 = vpack.c.b16 %v1703, %v1695
        %v2624 = vpack.c.b16 %v1704, %v1696
        %v2625 = vpack.c.b16 %v1705, %v1697
        %v2626 = vpack.c.b16 %v1706, %v1698
        %v2627 = vpack.c.b16 %v1707, %v1699
        %v2628 = vpack.c.b16 %v1716, %v1708
        %v2629 = vpack.c.b16 %v1717, %v1709
        %v2630 = vpack.c.b16 %v1718, %v1710
        %v2631 = vpack.c.b16 %v1719, %v1711
        %v2632 = vpack.c.b16 %v1720, %v1712
        %v2633 = vpack.c.b16 %v1721, %v1713
        %v2634 = vpack.c.b16 %v1722, %v1714
        %v2635 = vpack.c.b16 %v1723, %v1715
        %v2636 = vpack.c.b16 %v1732, %v1724
        %v2637 = vpack.c.b16 %v1733, %v1725
        %v2638 = vpack.c.b16 %v1734, %v1726
        %v2639 = vpack.c.b16 %v1735, %v1727
        %v2640 = vpack.c.b16 %v1736, %v1728
        %v2641 = vpack.c.b16 %v1737, %v1729
        %v2642 = vpack.c.b16 %v1738, %v1730
        %v2643 = vpack.c.b16 %v1739, %v1731
        %v2644 = vpack.c.b16 %v1748, %v1740
        %v2645 = vpack.c.b16 %v1749, %v1741
        %v2646 = vpack.c.b16 %v1750, %v1742
        %v2647 = vpack.c.b16 %v1751, %v1743
        %v2648 = vpack.c.b16 %v1752, %v1744
        %v2649 = vpack.c.b16 %v1753, %v1745
        %v2650 = vpack.c.b16 %v1754, %v1746
        %v2651 = vpack.c.b16 %v1755, %v1747
        %v2652 = vpack.c.b16 %v1764, %v1756
        %v2653 = vpack.c.b16 %v1765, %v1757
        %v2654 = vpack.c.b16 %v1766, %v1758
        %v2655 = vpack.c.b16 %v1767, %v1759
        %v2656 = vpack.c.b16 %v1768, %v1760
        %v2657 = vpack.c.b16 %v1769, %v1761
        %v2658 = vpack.c.b16 %v1770, %v1762
        %v2659 = vpack.c.b16 %v1771, %v1763
        %v2660 = vpack.c.b16 %v1780, %v1772
        %v2661 = vpack.c.b16 %v1781, %v1773
        %v2662 = vpack.c.b16 %v1782, %v1774
        %v2663 = vpack.c.b16 %v1783, %v1775
        %v2664 = vpack.c.b16 %v1784, %v1776
        %v2665 = vpack.c.b16 %v1785, %v1777
        %v2666 = vpack.c.b16 %v1786, %v1778
        %v2667 = vpack.c.b16 %v1787, %v1779
        %v2668 = vpack.c.b16 %v1796, %v1788
        %v2669 = vpack.c.b16 %v1797, %v1789
        %v2670 = vpack.c.b16 %v1798, %v1790
        %v2671 = vpack.c.b16 %v1799, %v1791
        %v2672 = vpack.c.b16 %v1800, %v1792
        %v2673 = vpack.c.b16 %v1801, %v1793
        %v2674 = vpack.c.b16 %v1802, %v1794
        %v2675 = vpack.c.b16 %v1803, %v1795
        %v2676 = vpack.c.b16 %v1812, %v1804
        %v2677 = vpack.c.b16 %v1813, %v1805
        %v2678 = vpack.c.b16 %v1814, %v1806
        %v2679 = vpack.c.b16 %v1815, %v1807
        %v2680 = vpack.c.b16 %v1816, %v1808
        %v2681 = vpack.c.b16 %v1817, %v1809
        %v2682 = vpack.c.b16 %v1818, %v1810
        %v2683 = vpack.c.b16 %v1819, %v1811
        %v2684 = vpack.c.b16 %v1828, %v1820
        %v2685 = vpack.c.b16 %v1829, %v1821
        %v2686 = vpack.c.b16 %v1830, %v1822
        %v2687 = vpack.c.b16 %v1831, %v1823
        %v2688 = vpack.c.b16 %v1832, %v1824
        %v2689 = vpack.c.b16 %v1833, %v1825
        %v2690 = vpack.c.b16 %v1834, %v1826
        %v2691 = vpack.c.b16 %v1835, %v1827
        %v2692 = vpack.c.b16 %v1844, %v1836
        %v2693 = vpack.c.b16 %v1845, %v1837
        %v2694 = vpack.c.b16 %v1846, %v1838
        %v2695 = vpack.c.b16 %v1847, %v1839
        %v2696 = vpack.c.b16 %v1848, %v1840
        %v2697 = vpack.c.b16 %v1849, %v1841
        %v2698 = vpack.c.b16 %v1850, %v1842
        %v2699 = vpack.c.b16 %v1851, %v1843
        %v2700 = vpack.c.b16 %v1860, %v1852
        %v2701 = vpack.c.b16 %v1861, %v1853
        %v2702 = vpack.c.b16 %v1862, %v1854
        %v2703 = vpack.c.b16 %v1863, %v1855
        %v2704 = vpack.c.b16 %v1864, %v1856
        %v2705 = vpack.c.b16 %v1865, %v1857
        %v2706 = vpack.c.b16 %v1866, %v1858
        %v2707 = vpack.c.b16 %v1867, %v1859
        %v2708 = vpack.c.b16 %v1876, %v1868
        %v2709 = vpack.c.b16 %v1877, %v1869
        %v2710 = vpack.c.b16 %v1878, %v1870
        %v2711 = vpack.c.b16 %v1879, %v1871
        %v2712 = vpack.c.b16 %v1880, %v1872
        %v2713 = vpack.c.b16 %v1881, %v1873
        %v2714 = vpack.c.b16 %v1882, %v1874
        %v2715 = vpack.c.b16 %v1883, %v1875
        %v2716 = vpack.c.b16 %v1892, %v1884
        %v2717 = vpack.c.b16 %v1893, %v1885
        %v2718 = vpack.c.b16 %v1894, %v1886
        %v2719 = vpack.c.b16 %v1895, %v1887
        %v2720 = vpack.c.b16 %v1896, %v1888
        %v2721 = vpack.c.b16 %v1897, %v1889
        %v2722 = vpack.c.b16 %v1898, %v1890
        %v2723 = vpack.c.b16 %v1899, %v1891
        %v2724 = vpack.c.b16 %v1908, %v1900
        %v2725 = vpack.c.b16 %v1909, %v1901
        %v2726 = vpack.c.b16 %v1910, %v1902
        %v2727 = vpack.c.b16 %v1911, %v1903
        %v2728 = vpack.c.b16 %v1912, %v1904
        %v2729 = vpack.c.b16 %v1913, %v1905
        %v2730 = vpack.c.b16 %v1914, %v1906
        %v2731 = vpack.c.b16 %v1915, %v1907
        %v2732 = vpack.c.b16 %v1924, %v1916
        %v2733 = vpack.c.b16 %v1925, %v1917
        %v2734 = vpack.c.b16 %v1926, %v1918
        %v2735 = vpack.c.b16 %v1927, %v1919
        %v2736 = vpack.c.b16 %v1928, %v1920
        %v2737 = vpack.c.b16 %v1929, %v1921
        %v2738 = vpack.c.b16 %v1930, %v1922
        %v2739 = vpack.c.b16 %v1931, %v1923
        %v2740 = vpack.c.b16 %v1940, %v1932
        %v2741 = vpack.c.b16 %v1941, %v1933
        %v2742 = vpack.c.b16 %v1942, %v1934
        %v2743 = vpack.c.b16 %v1943, %v1935
        %v2744 = vpack.c.b16 %v1944, %v1936
        %v2745 = vpack.c.b16 %v1945, %v1937
        %v2746 = vpack.c.b16 %v1946, %v1938
        %v2747 = vpack.c.b16 %v1947, %v1939
        %v2748 = vpack.c.b16 %v1956, %v1948
        %v2749 = vpack.c.b16 %v1957, %v1949
        %v2750 = vpack.c.b16 %v1958, %v1950
        %v2751 = vpack.c.b16 %v1959, %v1951
        %v2752 = vpack.c.b16 %v1960, %v1952
        %v2753 = vpack.c.b16 %v1961, %v1953
        %v2754 = vpack.c.b16 %v1962, %v1954
        %v2755 = vpack.c.b16 %v1963, %v1955
        %v2756 = vpack.c.b16 %v1972, %v1964
        %v2757 = vpack.c.b16 %v1973, %v1965
        %v2758 = vpack.c.b16 %v1974, %v1966
        %v2759 = vpack.c.b16 %v1975, %v1967
        %v2760 = vpack.c.b16 %v1976, %v1968
        %v2761 = vpack.c.b16 %v1977, %v1969
        %v2762 = vpack.c.b16 %v1978, %v1970
        %v2763 = vpack.c.b16 %v1979, %v1971
        %v2764 = vpack.c.b16 %v1988, %v1980
        %v2765 = vpack.c.b16 %v1989, %v1981
        %v2766 = vpack.c.b16 %v1990, %v1982
        %v2767 = vpack.c.b16 %v1991, %v1983
        %v2768 = vpack.c.b16 %v1992, %v1984
        %v2769 = vpack.c.b16 %v1993, %v1985
        %v2770 = vpack.c.b16 %v1994, %v1986
        %v2771 = vpack.c.b16 %v1995, %v1987
        %v2772 = vpack.c.b16 %v2004, %v1996
        %v2773 = vpack.c.b16 %v2005, %v1997
        %v2774 = vpack.c.b16 %v2006, %v1998
        %v2775 = vpack.c.b16 %v2007, %v1999
        %v2776 = vpack.c.b16 %v2008, %v2000
        %v2777 = vpack.c.b16 %v2009, %v2001
        %v2778 = vpack.c.b16 %v2010, %v2002
        %v2779 = vpack.c.b16 %v2011, %v2003
        %v2780 = vpack.c.b16 %v2020, %v2012
        %v2781 = vpack.c.b16 %v2021, %v2013
        %v2782 = vpack.c.b16 %v2022, %v2014
        %v2783 = vpack.c.b16 %v2023, %v2015
        %v2784 = vpack.c.b16 %v2024, %v2016
        %v2785 = vpack.c.b16 %v2025, %v2017
        %v2786 = vpack.c.b16 %v2026, %v2018
        %v2787 = vpack.c.b16 %v2027, %v2019
        %v2788 = vpack.c.b16 %v2036, %v2028
        %v2789 = vpack.c.b16 %v2037, %v2029
        %v2790 = vpack.c.b16 %v2038, %v2030
        %v2791 = vpack.c.b16 %v2039, %v2031
        %v2792 = vpack.c.b16 %v2040, %v2032
        %v2793 = vpack.c.b16 %v2041, %v2033
        %v2794 = vpack.c.b16 %v2042, %v2034
        %v2795 = vpack.c.b16 %v2043, %v2035
        %v2796 = vpack.c.b16 %v2052, %v2044
        %v2797 = vpack.c.b16 %v2053, %v2045
        %v2798 = vpack.c.b16 %v2054, %v2046
        %v2799 = vpack.c.b16 %v2055, %v2047
        %v2800 = vpack.c.b16 %v2056, %v2048
        %v2801 = vpack.c.b16 %v2057, %v2049
        %v2802 = vpack.c.b16 %v2058, %v2050
        %v2803 = vpack.c.b16 %v2059, %v2051
        %v2804 = vpack.c.b16 %v2068, %v2060
        %v2805 = vpack.c.b16 %v2069, %v2061
        %v2806 = vpack.c.b16 %v2070, %v2062
        %v2807 = vpack.c.b16 %v2071, %v2063
        %v2808 = vpack.c.b16 %v2072, %v2064
        %v2809 = vpack.c.b16 %v2073, %v2065
        %v2810 = vpack.c.b16 %v2074, %v2066
        %v2811 = vpack.c.b16 %v2075, %v2067
        %v2812 = vpack.c.b16 %v2084, %v2076
        %v2813 = vpack.c.b16 %v2085, %v2077
        %v2814 = vpack.c.b16 %v2086, %v2078
        %v2815 = vpack.c.b16 %v2087, %v2079
        %v2816 = vpack.c.b16 %v2088, %v2080
        %v2817 = vpack.c.b16 %v2089, %v2081
        %v2818 = vpack.c.b16 %v2090, %v2082
        %v2819 = vpack.c.b16 %v2091, %v2083
        %v2820 = vpack.c.b16 %v2100, %v2092
        %v2821 = vpack.c.b16 %v2101, %v2093
        %v2822 = vpack.c.b16 %v2102, %v2094
        %v2823 = vpack.c.b16 %v2103, %v2095
        %v2824 = vpack.c.b16 %v2104, %v2096
        %v2825 = vpack.c.b16 %v2105, %v2097
        %v2826 = vpack.c.b16 %v2106, %v2098
        %v2827 = vpack.c.b16 %v2107, %v2099
        %v2828 = vpack.c.b16 %v2116, %v2108
        %v2829 = vpack.c.b16 %v2117, %v2109
        %v2830 = vpack.c.b16 %v2118, %v2110
        %v2831 = vpack.c.b16 %v2119, %v2111
        %v2832 = vpack.c.b16 %v2120, %v2112
        %v2833 = vpack.c.b16 %v2121, %v2113
        %v2834 = vpack.c.b16 %v2122, %v2114
        %v2835 = vpack.c.b16 %v2123, %v2115
        %v2836 = vpack.c.b16 %v2132, %v2124
        %v2837 = vpack.c.b16 %v2133, %v2125
        %v2838 = vpack.c.b16 %v2134, %v2126
        %v2839 = vpack.c.b16 %v2135, %v2127
        %v2840 = vpack.c.b16 %v2136, %v2128
        %v2841 = vpack.c.b16 %v2137, %v2129
        %v2842 = vpack.c.b16 %v2138, %v2130
        %v2843 = vpack.c.b16 %v2139, %v2131
        %v2844 = vpack.c.b16 %v2148, %v2140
        %v2845 = vpack.c.b16 %v2149, %v2141
        %v2846 = vpack.c.b16 %v2150, %v2142
        %v2847 = vpack.c.b16 %v2151, %v2143
        %v2848 = vpack.c.b16 %v2152, %v2144
        %v2849 = vpack.c.b16 %v2153, %v2145
        %v2850 = vpack.c.b16 %v2154, %v2146
        %v2851 = vpack.c.b16 %v2155, %v2147
        %v2852 = vpack.c.b16 %v2164, %v2156
        %v2853 = vpack.c.b16 %v2165, %v2157
        %v2854 = vpack.c.b16 %v2166, %v2158
        %v2855 = vpack.c.b16 %v2167, %v2159
        %v2856 = vpack.c.b16 %v2168, %v2160
        %v2857 = vpack.c.b16 %v2169, %v2161
        %v2858 = vpack.c.b16 %v2170, %v2162
        %v2859 = vpack.c.b16 %v2171, %v2163
        %v2860 = vpack.c.b16 %v2180, %v2172
        %v2861 = vpack.c.b16 %v2181, %v2173
        %v2862 = vpack.c.b16 %v2182, %v2174
        %v2863 = vpack.c.b16 %v2183, %v2175
        %v2864 = vpack.c.b16 %v2184, %v2176
        %v2865 = vpack.c.b16 %v2185, %v2177
        %v2866 = vpack.c.b16 %v2186, %v2178
        %v2867 = vpack.c.b16 %v2187, %v2179
        %v2868 = vpack.c.b16 %v2196, %v2188
        %v2869 = vpack.c.b16 %v2197, %v2189
        %v2870 = vpack.c.b16 %v2198, %v2190
        %v2871 = vpack.c.b16 %v2199, %v2191
        %v2872 = vpack.c.b16 %v2200, %v2192
        %v2873 = vpack.c.b16 %v2201, %v2193
        %v2874 = vpack.c.b16 %v2202, %v2194
        %v2875 = vpack.c.b16 %v2203, %v2195
        %v2876 = vpack.c.b16 %v2212, %v2204
        %v2877 = vpack.c.b16 %v2213, %v2205
        %v2878 = vpack.c.b16 %v2214, %v2206
        %v2879 = vpack.c.b16 %v2215, %v2207
        %v2880 = vpack.c.b16 %v2216, %v2208
        %v2881 = vpack.c.b16 %v2217, %v2209
        %v2882 = vpack.c.b16 %v2218, %v2210
        %v2883 = vpack.c.b16 %v2219, %v2211
        %v2884 = vpack.c.b16 %v2228, %v2220
        %v2885 = vpack.c.b16 %v2229, %v2221
        %v2886 = vpack.c.b16 %v2230, %v2222
        %v2887 = vpack.c.b16 %v2231, %v2223
        %v2888 = vpack.c.b16 %v2232, %v2224
        %v2889 = vpack.c.b16 %v2233, %v2225
        %v2890 = vpack.c.b16 %v2234, %v2226
        %v2891 = vpack.c.b16 %v2235, %v2227
        %v2892 = vpack.c.b16 %v2244, %v2236
        %v2893 = vpack.c.b16 %v2245, %v2237
        %v2894 = vpack.c.b16 %v2246, %v2238
        %v2895 = vpack.c.b16 %v2247, %v2239
        %v2896 = vpack.c.b16 %v2248, %v2240
        %v2897 = vpack.c.b16 %v2249, %v2241
        %v2898 = vpack.c.b16 %v2250, %v2242
        %v2899 = vpack.c.b16 %v2251, %v2243
        %v2900 = vpack.c.b16 %v2260, %v2252
        %v2901 = vpack.c.b16 %v2261, %v2253
        %v2902 = vpack.c.b16 %v2262, %v2254
        %v2903 = vpack.c.b16 %v2263, %v2255
        %v2904 = vpack.c.b16 %v2264, %v2256
        %v2905 = vpack.c.b16 %v2265, %v2257
        %v2906 = vpack.c.b16 %v2266, %v2258
        %v2907 = vpack.c.b16 %v2267, %v2259
        %v2908 = vpack.c.b16 %v2276, %v2268
        %v2909 = vpack.c.b16 %v2277, %v2269
        %v2910 = vpack.c.b16 %v2278, %v2270
        %v2911 = vpack.c.b16 %v2279, %v2271
        %v2912 = vpack.c.b16 %v2280, %v2272
        %v2913 = vpack.c.b16 %v2281, %v2273
        %v2914 = vpack.c.b16 %v2282, %v2274
        %v2915 = vpack.c.b16 %v2283, %v2275
        %v2916 = vpack.c.b16 %v2292, %v2284
        %v2917 = vpack.c.b16 %v2293, %v2285
        %v2918 = vpack.c.b16 %v2294, %v2286
        %v2919 = vpack.c.b16 %v2295, %v2287
        %v2920 = vpack.c.b16 %v2296, %v2288
        %v2921 = vpack.c.b16 %v2297, %v2289
        %v2922 = vpack.c.b16 %v2298, %v2290
        %v2923 = vpack.c.b16 %v2299, %v2291
        %v2924 = vpack.c.b16 %v2308, %v2300
        %v2925 = vpack.c.b16 %v2309, %v2301
        %v2926 = vpack.c.b16 %v2310, %v2302
        %v2927 = vpack.c.b16 %v2311, %v2303
        %v2928 = vpack.c.b16 %v2312, %v2304
        %v2929 = vpack.c.b16 %v2313, %v2305
        %v2930 = vpack.c.b16 %v2314, %v2306
        %v2931 = vpack.c.b16 %v2315, %v2307
        %v2932 = vpack.c.b16 %v2324, %v2316
        %v2933 = vpack.c.b16 %v2325, %v2317
        %v2934 = vpack.c.b16 %v2326, %v2318
        %v2935 = vpack.c.b16 %v2327, %v2319
        %v2936 = vpack.c.b16 %v2328, %v2320
        %v2937 = vpack.c.b16 %v2329, %v2321
        %v2938 = vpack.c.b16 %v2330, %v2322
        %v2939 = vpack.c.b16 %v2331, %v2323
        %v2940 = vpack.c.b16 %v2340, %v2332
        %v2941 = vpack.c.b16 %v2341, %v2333
        %v2942 = vpack.c.b16 %v2342, %v2334
        %v2943 = vpack.c.b16 %v2343, %v2335
        %v2944 = vpack.c.b16 %v2344, %v2336
        %v2945 = vpack.c.b16 %v2345, %v2337
        %v2946 = vpack.c.b16 %v2346, %v2338
        %v2947 = vpack.c.b16 %v2347, %v2339
        %v2948 = vpack.c.b16 %v2356, %v2348
        %v2949 = vpack.c.b16 %v2357, %v2349
        %v2950 = vpack.c.b16 %v2358, %v2350
        %v2951 = vpack.c.b16 %v2359, %v2351
        %v2952 = vpack.c.b16 %v2360, %v2352
        %v2953 = vpack.c.b16 %v2361, %v2353
        %v2954 = vpack.c.b16 %v2362, %v2354
        %v2955 = vpack.c.b16 %v2363, %v2355
        %v2956 = vpack.c.b16 %v2372, %v2364
        %v2957 = vpack.c.b16 %v2373, %v2365
        %v2958 = vpack.c.b16 %v2374, %v2366
        %v2959 = vpack.c.b16 %v2375, %v2367
        %v2960 = vpack.c.b16 %v2376, %v2368
        %v2961 = vpack.c.b16 %v2377, %v2369
        %v2962 = vpack.c.b16 %v2378, %v2370
        %v2963 = vpack.c.b16 %v2379, %v2371
        %v2964 = vpack.c.b16 %v2388, %v2380
        %v2965 = vpack.c.b16 %v2389, %v2381
        %v2966 = vpack.c.b16 %v2390, %v2382
        %v2967 = vpack.c.b16 %v2391, %v2383
        %v2968 = vpack.c.b16 %v2392, %v2384
        %v2969 = vpack.c.b16 %v2393, %v2385
        %v2970 = vpack.c.b16 %v2394, %v2386
        %v2971 = vpack.c.b16 %v2395, %v2387
        %v2972 = vpack.c.b16 %v2404, %v2396
        %v2973 = vpack.c.b16 %v2405, %v2397
        %v2974 = vpack.c.b16 %v2406, %v2398
        %v2975 = vpack.c.b16 %v2407, %v2399
        %v2976 = vpack.c.b16 %v2408, %v2400
        %v2977 = vpack.c.b16 %v2409, %v2401
        %v2978 = vpack.c.b16 %v2410, %v2402
        %v2979 = vpack.c.b16 %v2411, %v2403
        %v2980 = vpack.c.b16 %v2420, %v2412
        %v2981 = vpack.c.b16 %v2421, %v2413
        %v2982 = vpack.c.b16 %v2422, %v2414
        %v2983 = vpack.c.b16 %v2423, %v2415
        %v2984 = vpack.c.b16 %v2424, %v2416
        %v2985 = vpack.c.b16 %v2425, %v2417
        %v2986 = vpack.c.b16 %v2426, %v2418
        %v2987 = vpack.c.b16 %v2427, %v2419
        %v2988 = vpack.c.b16 %v2436, %v2428
        %v2989 = vpack.c.b16 %v2437, %v2429
        %v2990 = vpack.c.b16 %v2438, %v2430
        %v2991 = vpack.c.b16 %v2439, %v2431
        %v2992 = vpack.c.b16 %v2440, %v2432
        %v2993 = vpack.c.b16 %v2441, %v2433
        %v2994 = vpack.c.b16 %v2442, %v2434
        %v2995 = vpack.c.b16 %v2443, %v2435
        %v2996 = vpack.c.b16 %v2452, %v2444
        %v2997 = vpack.c.b16 %v2453, %v2445
        %v2998 = vpack.c.b16 %v2454, %v2446
        %v2999 = vpack.c.b16 %v2455, %v2447
        %v3000 = vpack.c.b16 %v2456, %v2448
        %v3001 = vpack.c.b16 %v2457, %v2449
        %v3002 = vpack.c.b16 %v2458, %v2450
        %v3003 = vpack.c.b16 %v2459, %v2451
        %v3004 = vpack.c.b16 %v2468, %v2460
        %v3005 = vpack.c.b16 %v2469, %v2461
        %v3006 = vpack.c.b16 %v2470, %v2462
        %v3007 = vpack.c.b16 %v2471, %v2463
        %v3008 = vpack.c.b16 %v2472, %v2464
        %v3009 = vpack.c.b16 %v2473, %v2465
        %v3010 = vpack.c.b16 %v2474, %v2466
        %v3011 = vpack.c.b16 %v2475, %v2467
        %v3012 = vpack.c.b16 %v2484, %v2476
        %v3013 = vpack.c.b16 %v2485, %v2477
        %v3014 = vpack.c.b16 %v2486, %v2478
        %v3015 = vpack.c.b16 %v2487, %v2479
        %v3016 = vpack.c.b16 %v2488, %v2480
        %v3017 = vpack.c.b16 %v2489, %v2481
        %v3018 = vpack.c.b16 %v2490, %v2482
        %v3019 = vpack.c.b16 %v2491, %v2483
        %v3020 = vpack.c.b16 %v2500, %v2492
        %v3021 = vpack.c.b16 %v2501, %v2493
        %v3022 = vpack.c.b16 %v2502, %v2494
        %v3023 = vpack.c.b16 %v2503, %v2495
        %v3024 = vpack.c.b16 %v2504, %v2496
        %v3025 = vpack.c.b16 %v2505, %v2497
        %v3026 = vpack.c.b16 %v2506, %v2498
        %v3027 = vpack.c.b16 %v2507, %v2499
        %v3028 = vpack.c.b16 %v2516, %v2508
        %v3029 = vpack.c.b16 %v2517, %v2509
        %v3030 = vpack.c.b16 %v2518, %v2510
        %v3031 = vpack.c.b16 %v2519, %v2511
        %v3032 = vpack.c.b16 %v2520, %v2512
        %v3033 = vpack.c.b16 %v2521, %v2513
        %v3034 = vpack.c.b16 %v2522, %v2514
        %v3035 = vpack.c.b16 %v2523, %v2515
        %3548 = vmatpush.bf16.msra.mxu0 %v2580
        %3549 = vmatpush.bf16.msra.mxu0 %v2572
        %3550 = vmatpush.bf16.msra.mxu0 %v2564
        %3551 = vmatpush.bf16.msra.mxu0 %v2556
        %3552 = vmatpush.bf16.msra.mxu0 %v2548
        %3553 = vmatpush.bf16.msra.mxu0 %v2540
        %3554 = vmatpush.bf16.msra.mxu0 %v2532
        %3555 = vmatpush.bf16.msra.mxu0 %v2524
        %3556 = vmatmul.bf16.gmra.mxu0 %v466
        %v3557 = vpop.f32.mrf.mxu0
        %v3558 = vadd.f32 0.0, %v3557
        %v3559 = vpop.f32.mrf.mxu0
        %3560 = vdwg.mxu0
        %3561 = vmatpush.bf16.msra.mxu0 %v2644
        %3562 = vmatpush.bf16.msra.mxu0 %v2636
        %3563 = vmatpush.bf16.msra.mxu0 %v2628
        %3564 = vmatpush.bf16.msra.mxu0 %v2620
        %3565 = vmatpush.bf16.msra.mxu0 %v2612
        %3566 = vmatpush.bf16.msra.mxu0 %v2604
        %3567 = vmatpush.bf16.msra.mxu0 %v2596
        %3568 = vmatpush.bf16.msra.mxu0 %v2588
        %3569 = vmatmul.bf16.gmra.mxu0 %v467
        %v3570 = vpop.f32.mrf.mxu0
        %v3571 = vadd.f32 %v3558, %v3570
        %v3572 = vpop.f32.mrf.mxu0
        %3573 = vdwg.mxu0
        %3574 = vmatpush.bf16.msra.mxu0 %v2708
        %3575 = vmatpush.bf16.msra.mxu0 %v2700
        %3576 = vmatpush.bf16.msra.mxu0 %v2692
        %3577 = vmatpush.bf16.msra.mxu0 %v2684
        %3578 = vmatpush.bf16.msra.mxu0 %v2676
        %3579 = vmatpush.bf16.msra.mxu0 %v2668
        %3580 = vmatpush.bf16.msra.mxu0 %v2660
        %3581 = vmatpush.bf16.msra.mxu0 %v2652
        %3582 = vmatmul.bf16.gmra.mxu0 %v468
        %v3583 = vpop.f32.mrf.mxu0
        %v3584 = vadd.f32 %v3571, %v3583
        %v3585 = vpop.f32.mrf.mxu0
        %3586 = vdwg.mxu0
        %3587 = vmatpush.bf16.msra.mxu0 %v2772
        %3588 = vmatpush.bf16.msra.mxu0 %v2764
        %3589 = vmatpush.bf16.msra.mxu0 %v2756
        %3590 = vmatpush.bf16.msra.mxu0 %v2748
        %3591 = vmatpush.bf16.msra.mxu0 %v2740
        %3592 = vmatpush.bf16.msra.mxu0 %v2732
        %3593 = vmatpush.bf16.msra.mxu0 %v2724
        %3594 = vmatpush.bf16.msra.mxu0 %v2716
        %3595 = vmatmul.bf16.gmra.mxu0 %v469
        %v3596 = vpop.f32.mrf.mxu0
        %v3597 = vadd.f32 %v3584, %v3596
        %v3598 = vpop.f32.mrf.mxu0
        %3599 = vdwg.mxu0
        %3600 = vmatpush.bf16.msra.mxu0 %v2836
        %3601 = vmatpush.bf16.msra.mxu0 %v2828
        %3602 = vmatpush.bf16.msra.mxu0 %v2820
        %3603 = vmatpush.bf16.msra.mxu0 %v2812
        %3604 = vmatpush.bf16.msra.mxu0 %v2804
        %3605 = vmatpush.bf16.msra.mxu0 %v2796
        %3606 = vmatpush.bf16.msra.mxu0 %v2788
        %3607 = vmatpush.bf16.msra.mxu0 %v2780
        %3608 = vmatmul.bf16.gmra.mxu0 %v470
        %v3609 = vpop.f32.mrf.mxu0
        %v3610 = vadd.f32 %v3597, %v3609
        %v3611 = vpop.f32.mrf.mxu0
        %3612 = vdwg.mxu0
        %3613 = vmatpush.bf16.msra.mxu0 %v2900
        %3614 = vmatpush.bf16.msra.mxu0 %v2892
        %3615 = vmatpush.bf16.msra.mxu0 %v2884
        %3616 = vmatpush.bf16.msra.mxu0 %v2876
        %3617 = vmatpush.bf16.msra.mxu0 %v2868
        %3618 = vmatpush.bf16.msra.mxu0 %v2860
        %3619 = vmatpush.bf16.msra.mxu0 %v2852
        %3620 = vmatpush.bf16.msra.mxu0 %v2844
        %3621 = vmatmul.bf16.gmra.mxu0 %v471
        %v3622 = vpop.f32.mrf.mxu0
        %v3623 = vadd.f32 %v3610, %v3622
        %v3624 = vpop.f32.mrf.mxu0
        %3625 = vdwg.mxu0
        %3626 = vmatpush.bf16.msra.mxu0 %v2964
        %3627 = vmatpush.bf16.msra.mxu0 %v2956
        %3628 = vmatpush.bf16.msra.mxu0 %v2948
        %3629 = vmatpush.bf16.msra.mxu0 %v2940
        %3630 = vmatpush.bf16.msra.mxu0 %v2932
        %3631 = vmatpush.bf16.msra.mxu0 %v2924
        %3632 = vmatpush.bf16.msra.mxu0 %v2916
        %3633 = vmatpush.bf16.msra.mxu0 %v2908
        %3634 = vmatmul.bf16.gmra.mxu0 %v472
        %v3635 = vpop.f32.mrf.mxu0
        %v3636 = vadd.f32 %v3623, %v3635
        %v3637 = vpop.f32.mrf.mxu0
        %3638 = vdwg.mxu0
        %3639 = vmatpush.bf16.msra.mxu0 %v3028
        %3640 = vmatpush.bf16.msra.mxu0 %v3020
        %3641 = vmatpush.bf16.msra.mxu0 %v3012
        %3642 = vmatpush.bf16.msra.mxu0 %v3004
        %3643 = vmatpush.bf16.msra.mxu0 %v2996
        %3644 = vmatpush.bf16.msra.mxu0 %v2988
        %3645 = vmatpush.bf16.msra.mxu0 %v2980
        %3646 = vmatpush.bf16.msra.mxu0 %v2972
        %3647 = vmatmul.bf16.gmra.mxu0 %v473
        %v3648 = vpop.f32.mrf.mxu0
        %v3649 = vadd.f32 %v3636, %v3648
        %v3650 = vpop.f32.mrf.mxu0
        %3651 = vdwg.mxu0
        %3652 = vmatpush.bf16.msra.mxu0 %v2581
        %3653 = vmatpush.bf16.msra.mxu0 %v2573
        %3654 = vmatpush.bf16.msra.mxu0 %v2565
        %3655 = vmatpush.bf16.msra.mxu0 %v2557
        %3656 = vmatpush.bf16.msra.mxu0 %v2549
        %3657 = vmatpush.bf16.msra.mxu0 %v2541
        %3658 = vmatpush.bf16.msra.mxu0 %v2533
        %3659 = vmatpush.bf16.msra.mxu0 %v2525
        %3660 = vmatmul.bf16.gmra.mxu0 %v466
        %v3661 = vpop.f32.mrf.mxu0
        %v3662 = vadd.f32 0.0, %v3661
        %v3663 = vpop.f32.mrf.mxu0
        %3664 = vdwg.mxu0
        %3665 = vmatpush.bf16.msra.mxu0 %v2645
        %3666 = vmatpush.bf16.msra.mxu0 %v2637
        %3667 = vmatpush.bf16.msra.mxu0 %v2629
        %3668 = vmatpush.bf16.msra.mxu0 %v2621
        %3669 = vmatpush.bf16.msra.mxu0 %v2613
        %3670 = vmatpush.bf16.msra.mxu0 %v2605
        %3671 = vmatpush.bf16.msra.mxu0 %v2597
        %3672 = vmatpush.bf16.msra.mxu0 %v2589
        %3673 = vmatmul.bf16.gmra.mxu0 %v467
        %v3674 = vpop.f32.mrf.mxu0
        %v3675 = vadd.f32 %v3662, %v3674
        %v3676 = vpop.f32.mrf.mxu0
        %3677 = vdwg.mxu0
        %3678 = vmatpush.bf16.msra.mxu0 %v2709
        %3679 = vmatpush.bf16.msra.mxu0 %v2701
        %3680 = vmatpush.bf16.msra.mxu0 %v2693
        %3681 = vmatpush.bf16.msra.mxu0 %v2685
        %3682 = vmatpush.bf16.msra.mxu0 %v2677
        %3683 = vmatpush.bf16.msra.mxu0 %v2669
        %3684 = vmatpush.bf16.msra.mxu0 %v2661
        %3685 = vmatpush.bf16.msra.mxu0 %v2653
        %3686 = vmatmul.bf16.gmra.mxu0 %v468
        %v3687 = vpop.f32.mrf.mxu0
        %v3688 = vadd.f32 %v3675, %v3687
        %v3689 = vpop.f32.mrf.mxu0
        %3690 = vdwg.mxu0
        %3691 = vmatpush.bf16.msra.mxu0 %v2773
        %3692 = vmatpush.bf16.msra.mxu0 %v2765
        %3693 = vmatpush.bf16.msra.mxu0 %v2757
        %3694 = vmatpush.bf16.msra.mxu0 %v2749
        %3695 = vmatpush.bf16.msra.mxu0 %v2741
        %3696 = vmatpush.bf16.msra.mxu0 %v2733
        %3697 = vmatpush.bf16.msra.mxu0 %v2725
        %3698 = vmatpush.bf16.msra.mxu0 %v2717
        %3699 = vmatmul.bf16.gmra.mxu0 %v469
        %v3700 = vpop.f32.mrf.mxu0
        %v3701 = vadd.f32 %v3688, %v3700
        %v3702 = vpop.f32.mrf.mxu0
        %3703 = vdwg.mxu0
        %3704 = vmatpush.bf16.msra.mxu0 %v2837
        %3705 = vmatpush.bf16.msra.mxu0 %v2829
        %3706 = vmatpush.bf16.msra.mxu0 %v2821
        %3707 = vmatpush.bf16.msra.mxu0 %v2813
        %3708 = vmatpush.bf16.msra.mxu0 %v2805
        %3709 = vmatpush.bf16.msra.mxu0 %v2797
        %3710 = vmatpush.bf16.msra.mxu0 %v2789
        %3711 = vmatpush.bf16.msra.mxu0 %v2781
        %3712 = vmatmul.bf16.gmra.mxu0 %v470
        %v3713 = vpop.f32.mrf.mxu0
        %v3714 = vadd.f32 %v3701, %v3713
        %v3715 = vpop.f32.mrf.mxu0
        %3716 = vdwg.mxu0
        %3717 = vmatpush.bf16.msra.mxu0 %v2901
        %3718 = vmatpush.bf16.msra.mxu0 %v2893
        %3719 = vmatpush.bf16.msra.mxu0 %v2885
        %3720 = vmatpush.bf16.msra.mxu0 %v2877
        %3721 = vmatpush.bf16.msra.mxu0 %v2869
        %3722 = vmatpush.bf16.msra.mxu0 %v2861
        %3723 = vmatpush.bf16.msra.mxu0 %v2853
        %3724 = vmatpush.bf16.msra.mxu0 %v2845
        %3725 = vmatmul.bf16.gmra.mxu0 %v471
        %v3726 = vpop.f32.mrf.mxu0
        %v3727 = vadd.f32 %v3714, %v3726
        %v3728 = vpop.f32.mrf.mxu0
        %3729 = vdwg.mxu0
        %3730 = vmatpush.bf16.msra.mxu0 %v2965
        %3731 = vmatpush.bf16.msra.mxu0 %v2957
        %3732 = vmatpush.bf16.msra.mxu0 %v2949
        %3733 = vmatpush.bf16.msra.mxu0 %v2941
        %3734 = vmatpush.bf16.msra.mxu0 %v2933
        %3735 = vmatpush.bf16.msra.mxu0 %v2925
        %3736 = vmatpush.bf16.msra.mxu0 %v2917
        %3737 = vmatpush.bf16.msra.mxu0 %v2909
        %3738 = vmatmul.bf16.gmra.mxu0 %v472
        %v3739 = vpop.f32.mrf.mxu0
        %v3740 = vadd.f32 %v3727, %v3739
        %v3741 = vpop.f32.mrf.mxu0
        %3742 = vdwg.mxu0
        %3743 = vmatpush.bf16.msra.mxu0 %v3029
        %3744 = vmatpush.bf16.msra.mxu0 %v3021
        %3745 = vmatpush.bf16.msra.mxu0 %v3013
        %3746 = vmatpush.bf16.msra.mxu0 %v3005
        %3747 = vmatpush.bf16.msra.mxu0 %v2997
        %3748 = vmatpush.bf16.msra.mxu0 %v2989
        %3749 = vmatpush.bf16.msra.mxu0 %v2981
        %3750 = vmatpush.bf16.msra.mxu0 %v2973
        %3751 = vmatmul.bf16.gmra.mxu0 %v473
        %v3752 = vpop.f32.mrf.mxu0
        %v3753 = vadd.f32 %v3740, %v3752
        %v3754 = vpop.f32.mrf.mxu0
        %3755 = vdwg.mxu0
        %3756 = vmatpush.bf16.msra.mxu0 %v2582
        %3757 = vmatpush.bf16.msra.mxu0 %v2574
        %3758 = vmatpush.bf16.msra.mxu0 %v2566
        %3759 = vmatpush.bf16.msra.mxu0 %v2558
        %3760 = vmatpush.bf16.msra.mxu0 %v2550
        %3761 = vmatpush.bf16.msra.mxu0 %v2542
        %3762 = vmatpush.bf16.msra.mxu0 %v2534
        %3763 = vmatpush.bf16.msra.mxu0 %v2526
        %3764 = vmatmul.bf16.gmra.mxu0 %v466
        %v3765 = vpop.f32.mrf.mxu0
        %v3766 = vadd.f32 0.0, %v3765
        %v3767 = vpop.f32.mrf.mxu0
        %3768 = vdwg.mxu0
        %3769 = vmatpush.bf16.msra.mxu0 %v2646
        %3770 = vmatpush.bf16.msra.mxu0 %v2638
        %3771 = vmatpush.bf16.msra.mxu0 %v2630
        %3772 = vmatpush.bf16.msra.mxu0 %v2622
        %3773 = vmatpush.bf16.msra.mxu0 %v2614
        %3774 = vmatpush.bf16.msra.mxu0 %v2606
        %3775 = vmatpush.bf16.msra.mxu0 %v2598
        %3776 = vmatpush.bf16.msra.mxu0 %v2590
        %3777 = vmatmul.bf16.gmra.mxu0 %v467
        %v3778 = vpop.f32.mrf.mxu0
        %v3779 = vadd.f32 %v3766, %v3778
        %v3780 = vpop.f32.mrf.mxu0
        %3781 = vdwg.mxu0
        %3782 = vmatpush.bf16.msra.mxu0 %v2710
        %3783 = vmatpush.bf16.msra.mxu0 %v2702
        %3784 = vmatpush.bf16.msra.mxu0 %v2694
        %3785 = vmatpush.bf16.msra.mxu0 %v2686
        %3786 = vmatpush.bf16.msra.mxu0 %v2678
        %3787 = vmatpush.bf16.msra.mxu0 %v2670
        %3788 = vmatpush.bf16.msra.mxu0 %v2662
        %3789 = vmatpush.bf16.msra.mxu0 %v2654
        %3790 = vmatmul.bf16.gmra.mxu0 %v468
        %v3791 = vpop.f32.mrf.mxu0
        %v3792 = vadd.f32 %v3779, %v3791
        %v3793 = vpop.f32.mrf.mxu0
        %3794 = vdwg.mxu0
        %3795 = vmatpush.bf16.msra.mxu0 %v2774
        %3796 = vmatpush.bf16.msra.mxu0 %v2766
        %3797 = vmatpush.bf16.msra.mxu0 %v2758
        %3798 = vmatpush.bf16.msra.mxu0 %v2750
        %3799 = vmatpush.bf16.msra.mxu0 %v2742
        %3800 = vmatpush.bf16.msra.mxu0 %v2734
        %3801 = vmatpush.bf16.msra.mxu0 %v2726
        %3802 = vmatpush.bf16.msra.mxu0 %v2718
        %3803 = vmatmul.bf16.gmra.mxu0 %v469
        %v3804 = vpop.f32.mrf.mxu0
        %v3805 = vadd.f32 %v3792, %v3804
        %v3806 = vpop.f32.mrf.mxu0
        %3807 = vdwg.mxu0
        %3808 = vmatpush.bf16.msra.mxu0 %v2838
        %3809 = vmatpush.bf16.msra.mxu0 %v2830
        %3810 = vmatpush.bf16.msra.mxu0 %v2822
        %3811 = vmatpush.bf16.msra.mxu0 %v2814
        %3812 = vmatpush.bf16.msra.mxu0 %v2806
        %3813 = vmatpush.bf16.msra.mxu0 %v2798
        %3814 = vmatpush.bf16.msra.mxu0 %v2790
        %3815 = vmatpush.bf16.msra.mxu0 %v2782
        %3816 = vmatmul.bf16.gmra.mxu0 %v470
        %v3817 = vpop.f32.mrf.mxu0
        %v3818 = vadd.f32 %v3805, %v3817
        %v3819 = vpop.f32.mrf.mxu0
        %3820 = vdwg.mxu0
        %3821 = vmatpush.bf16.msra.mxu0 %v2902
        %3822 = vmatpush.bf16.msra.mxu0 %v2894
        %3823 = vmatpush.bf16.msra.mxu0 %v2886
        %3824 = vmatpush.bf16.msra.mxu0 %v2878
        %3825 = vmatpush.bf16.msra.mxu0 %v2870
        %3826 = vmatpush.bf16.msra.mxu0 %v2862
        %3827 = vmatpush.bf16.msra.mxu0 %v2854
        %3828 = vmatpush.bf16.msra.mxu0 %v2846
        %3829 = vmatmul.bf16.gmra.mxu0 %v471
        %v3830 = vpop.f32.mrf.mxu0
        %v3831 = vadd.f32 %v3818, %v3830
        %v3832 = vpop.f32.mrf.mxu0
        %3833 = vdwg.mxu0
        %3834 = vmatpush.bf16.msra.mxu0 %v2966
        %3835 = vmatpush.bf16.msra.mxu0 %v2958
        %3836 = vmatpush.bf16.msra.mxu0 %v2950
        %3837 = vmatpush.bf16.msra.mxu0 %v2942
        %3838 = vmatpush.bf16.msra.mxu0 %v2934
        %3839 = vmatpush.bf16.msra.mxu0 %v2926
        %3840 = vmatpush.bf16.msra.mxu0 %v2918
        %3841 = vmatpush.bf16.msra.mxu0 %v2910
        %3842 = vmatmul.bf16.gmra.mxu0 %v472
        %v3843 = vpop.f32.mrf.mxu0
        %v3844 = vadd.f32 %v3831, %v3843
        %v3845 = vpop.f32.mrf.mxu0
        %3846 = vdwg.mxu0
        %3847 = vmatpush.bf16.msra.mxu0 %v3030
        %3848 = vmatpush.bf16.msra.mxu0 %v3022
        %3849 = vmatpush.bf16.msra.mxu0 %v3014
        %3850 = vmatpush.bf16.msra.mxu0 %v3006
        %3851 = vmatpush.bf16.msra.mxu0 %v2998
        %3852 = vmatpush.bf16.msra.mxu0 %v2990
        %3853 = vmatpush.bf16.msra.mxu0 %v2982
        %3854 = vmatpush.bf16.msra.mxu0 %v2974
        %3855 = vmatmul.bf16.gmra.mxu0 %v473
        %v3856 = vpop.f32.mrf.mxu0
        %v3857 = vadd.f32 %v3844, %v3856
        %v3858 = vpop.f32.mrf.mxu0
        %3859 = vdwg.mxu0
        %3860 = vmatpush.bf16.msra.mxu0 %v2583
        %3861 = vmatpush.bf16.msra.mxu0 %v2575
        %3862 = vmatpush.bf16.msra.mxu0 %v2567
        %3863 = vmatpush.bf16.msra.mxu0 %v2559
        %3864 = vmatpush.bf16.msra.mxu0 %v2551
        %3865 = vmatpush.bf16.msra.mxu0 %v2543
        %3866 = vmatpush.bf16.msra.mxu0 %v2535
        %3867 = vmatpush.bf16.msra.mxu0 %v2527
        %3868 = vmatmul.bf16.gmra.mxu0 %v466
        %v3869 = vpop.f32.mrf.mxu0
        %v3870 = vadd.f32 0.0, %v3869
        %v3871 = vpop.f32.mrf.mxu0
        %3872 = vdwg.mxu0
        %3873 = vmatpush.bf16.msra.mxu0 %v2647
        %3874 = vmatpush.bf16.msra.mxu0 %v2639
        %3875 = vmatpush.bf16.msra.mxu0 %v2631
        %3876 = vmatpush.bf16.msra.mxu0 %v2623
        %3877 = vmatpush.bf16.msra.mxu0 %v2615
        %3878 = vmatpush.bf16.msra.mxu0 %v2607
        %3879 = vmatpush.bf16.msra.mxu0 %v2599
        %3880 = vmatpush.bf16.msra.mxu0 %v2591
        %3881 = vmatmul.bf16.gmra.mxu0 %v467
        %v3882 = vpop.f32.mrf.mxu0
        %v3883 = vadd.f32 %v3870, %v3882
        %v3884 = vpop.f32.mrf.mxu0
        %3885 = vdwg.mxu0
        %3886 = vmatpush.bf16.msra.mxu0 %v2711
        %3887 = vmatpush.bf16.msra.mxu0 %v2703
        %3888 = vmatpush.bf16.msra.mxu0 %v2695
        %3889 = vmatpush.bf16.msra.mxu0 %v2687
        %3890 = vmatpush.bf16.msra.mxu0 %v2679
        %3891 = vmatpush.bf16.msra.mxu0 %v2671
        %3892 = vmatpush.bf16.msra.mxu0 %v2663
        %3893 = vmatpush.bf16.msra.mxu0 %v2655
        %3894 = vmatmul.bf16.gmra.mxu0 %v468
        %v3895 = vpop.f32.mrf.mxu0
        %v3896 = vadd.f32 %v3883, %v3895
        %v3897 = vpop.f32.mrf.mxu0
        %3898 = vdwg.mxu0
        %3899 = vmatpush.bf16.msra.mxu0 %v2775
        %3900 = vmatpush.bf16.msra.mxu0 %v2767
        %3901 = vmatpush.bf16.msra.mxu0 %v2759
        %3902 = vmatpush.bf16.msra.mxu0 %v2751
        %3903 = vmatpush.bf16.msra.mxu0 %v2743
        %3904 = vmatpush.bf16.msra.mxu0 %v2735
        %3905 = vmatpush.bf16.msra.mxu0 %v2727
        %3906 = vmatpush.bf16.msra.mxu0 %v2719
        %3907 = vmatmul.bf16.gmra.mxu0 %v469
        %v3908 = vpop.f32.mrf.mxu0
        %v3909 = vadd.f32 %v3896, %v3908
        %v3910 = vpop.f32.mrf.mxu0
        %3911 = vdwg.mxu0
        %3912 = vmatpush.bf16.msra.mxu0 %v2839
        %3913 = vmatpush.bf16.msra.mxu0 %v2831
        %3914 = vmatpush.bf16.msra.mxu0 %v2823
        %3915 = vmatpush.bf16.msra.mxu0 %v2815
        %3916 = vmatpush.bf16.msra.mxu0 %v2807
        %3917 = vmatpush.bf16.msra.mxu0 %v2799
        %3918 = vmatpush.bf16.msra.mxu0 %v2791
        %3919 = vmatpush.bf16.msra.mxu0 %v2783
        %3920 = vmatmul.bf16.gmra.mxu0 %v470
        %v3921 = vpop.f32.mrf.mxu0
        %v3922 = vadd.f32 %v3909, %v3921
        %v3923 = vpop.f32.mrf.mxu0
        %3924 = vdwg.mxu0
        %3925 = vmatpush.bf16.msra.mxu0 %v2903
        %3926 = vmatpush.bf16.msra.mxu0 %v2895
        %3927 = vmatpush.bf16.msra.mxu0 %v2887
        %3928 = vmatpush.bf16.msra.mxu0 %v2879
        %3929 = vmatpush.bf16.msra.mxu0 %v2871
        %3930 = vmatpush.bf16.msra.mxu0 %v2863
        %3931 = vmatpush.bf16.msra.mxu0 %v2855
        %3932 = vmatpush.bf16.msra.mxu0 %v2847
        %3933 = vmatmul.bf16.gmra.mxu0 %v471
        %v3934 = vpop.f32.mrf.mxu0
        %v3935 = vadd.f32 %v3922, %v3934
        %v3936 = vpop.f32.mrf.mxu0
        %3937 = vdwg.mxu0
        %3938 = vmatpush.bf16.msra.mxu0 %v2967
        %3939 = vmatpush.bf16.msra.mxu0 %v2959
        %3940 = vmatpush.bf16.msra.mxu0 %v2951
        %3941 = vmatpush.bf16.msra.mxu0 %v2943
        %3942 = vmatpush.bf16.msra.mxu0 %v2935
        %3943 = vmatpush.bf16.msra.mxu0 %v2927
        %3944 = vmatpush.bf16.msra.mxu0 %v2919
        %3945 = vmatpush.bf16.msra.mxu0 %v2911
        %3946 = vmatmul.bf16.gmra.mxu0 %v472
        %v3947 = vpop.f32.mrf.mxu0
        %v3948 = vadd.f32 %v3935, %v3947
        %v3949 = vpop.f32.mrf.mxu0
        %3950 = vdwg.mxu0
        %3951 = vmatpush.bf16.msra.mxu0 %v3031
        %3952 = vmatpush.bf16.msra.mxu0 %v3023
        %3953 = vmatpush.bf16.msra.mxu0 %v3015
        %3954 = vmatpush.bf16.msra.mxu0 %v3007
        %3955 = vmatpush.bf16.msra.mxu0 %v2999
        %3956 = vmatpush.bf16.msra.mxu0 %v2991
        %3957 = vmatpush.bf16.msra.mxu0 %v2983
        %3958 = vmatpush.bf16.msra.mxu0 %v2975
        %3959 = vmatmul.bf16.gmra.mxu0 %v473
        %v3960 = vpop.f32.mrf.mxu0
        %v3961 = vadd.f32 %v3948, %v3960
        %v3962 = vpop.f32.mrf.mxu0
        %3963 = vdwg.mxu0
        %3964 = vmatpush.bf16.msra.mxu0 %v2584
        %3965 = vmatpush.bf16.msra.mxu0 %v2576
        %3966 = vmatpush.bf16.msra.mxu0 %v2568
        %3967 = vmatpush.bf16.msra.mxu0 %v2560
        %3968 = vmatpush.bf16.msra.mxu0 %v2552
        %3969 = vmatpush.bf16.msra.mxu0 %v2544
        %3970 = vmatpush.bf16.msra.mxu0 %v2536
        %3971 = vmatpush.bf16.msra.mxu0 %v2528
        %3972 = vmatmul.bf16.gmra.mxu0 %v466
        %v3973 = vpop.f32.mrf.mxu0
        %v3974 = vadd.f32 0.0, %v3973
        %v3975 = vpop.f32.mrf.mxu0
        %3976 = vdwg.mxu0
        %3977 = vmatpush.bf16.msra.mxu0 %v2648
        %3978 = vmatpush.bf16.msra.mxu0 %v2640
        %3979 = vmatpush.bf16.msra.mxu0 %v2632
        %3980 = vmatpush.bf16.msra.mxu0 %v2624
        %3981 = vmatpush.bf16.msra.mxu0 %v2616
        %3982 = vmatpush.bf16.msra.mxu0 %v2608
        %3983 = vmatpush.bf16.msra.mxu0 %v2600
        %3984 = vmatpush.bf16.msra.mxu0 %v2592
        %3985 = vmatmul.bf16.gmra.mxu0 %v467
        %v3986 = vpop.f32.mrf.mxu0
        %v3987 = vadd.f32 %v3974, %v3986
        %v3988 = vpop.f32.mrf.mxu0
        %3989 = vdwg.mxu0
        %3990 = vmatpush.bf16.msra.mxu0 %v2712
        %3991 = vmatpush.bf16.msra.mxu0 %v2704
        %3992 = vmatpush.bf16.msra.mxu0 %v2696
        %3993 = vmatpush.bf16.msra.mxu0 %v2688
        %3994 = vmatpush.bf16.msra.mxu0 %v2680
        %3995 = vmatpush.bf16.msra.mxu0 %v2672
        %3996 = vmatpush.bf16.msra.mxu0 %v2664
        %3997 = vmatpush.bf16.msra.mxu0 %v2656
        %3998 = vmatmul.bf16.gmra.mxu0 %v468
        %v3999 = vpop.f32.mrf.mxu0
        %v4000 = vadd.f32 %v3987, %v3999
        %v4001 = vpop.f32.mrf.mxu0
        %4002 = vdwg.mxu0
        %4003 = vmatpush.bf16.msra.mxu0 %v2776
        %4004 = vmatpush.bf16.msra.mxu0 %v2768
        %4005 = vmatpush.bf16.msra.mxu0 %v2760
        %4006 = vmatpush.bf16.msra.mxu0 %v2752
        %4007 = vmatpush.bf16.msra.mxu0 %v2744
        %4008 = vmatpush.bf16.msra.mxu0 %v2736
        %4009 = vmatpush.bf16.msra.mxu0 %v2728
        %4010 = vmatpush.bf16.msra.mxu0 %v2720
        %4011 = vmatmul.bf16.gmra.mxu0 %v469
        %v4012 = vpop.f32.mrf.mxu0
        %v4013 = vadd.f32 %v4000, %v4012
        %v4014 = vpop.f32.mrf.mxu0
        %4015 = vdwg.mxu0
        %4016 = vmatpush.bf16.msra.mxu0 %v2840
        %4017 = vmatpush.bf16.msra.mxu0 %v2832
        %4018 = vmatpush.bf16.msra.mxu0 %v2824
        %4019 = vmatpush.bf16.msra.mxu0 %v2816
        %4020 = vmatpush.bf16.msra.mxu0 %v2808
        %4021 = vmatpush.bf16.msra.mxu0 %v2800
        %4022 = vmatpush.bf16.msra.mxu0 %v2792
        %4023 = vmatpush.bf16.msra.mxu0 %v2784
        %4024 = vmatmul.bf16.gmra.mxu0 %v470
        %v4025 = vpop.f32.mrf.mxu0
        %v4026 = vadd.f32 %v4013, %v4025
        %v4027 = vpop.f32.mrf.mxu0
        %4028 = vdwg.mxu0
        %4029 = vmatpush.bf16.msra.mxu0 %v2904
        %4030 = vmatpush.bf16.msra.mxu0 %v2896
        %4031 = vmatpush.bf16.msra.mxu0 %v2888
        %4032 = vmatpush.bf16.msra.mxu0 %v2880
        %4033 = vmatpush.bf16.msra.mxu0 %v2872
        %4034 = vmatpush.bf16.msra.mxu0 %v2864
        %4035 = vmatpush.bf16.msra.mxu0 %v2856
        %4036 = vmatpush.bf16.msra.mxu0 %v2848
        %4037 = vmatmul.bf16.gmra.mxu0 %v471
        %v4038 = vpop.f32.mrf.mxu0
        %v4039 = vadd.f32 %v4026, %v4038
        %v4040 = vpop.f32.mrf.mxu0
        %4041 = vdwg.mxu0
        %4042 = vmatpush.bf16.msra.mxu0 %v2968
        %4043 = vmatpush.bf16.msra.mxu0 %v2960
        %4044 = vmatpush.bf16.msra.mxu0 %v2952
        %4045 = vmatpush.bf16.msra.mxu0 %v2944
        %4046 = vmatpush.bf16.msra.mxu0 %v2936
        %4047 = vmatpush.bf16.msra.mxu0 %v2928
        %4048 = vmatpush.bf16.msra.mxu0 %v2920
        %4049 = vmatpush.bf16.msra.mxu0 %v2912
        %4050 = vmatmul.bf16.gmra.mxu0 %v472
        %v4051 = vpop.f32.mrf.mxu0
        %v4052 = vadd.f32 %v4039, %v4051
        %v4053 = vpop.f32.mrf.mxu0
        %4054 = vdwg.mxu0
        %4055 = vmatpush.bf16.msra.mxu0 %v3032
        %4056 = vmatpush.bf16.msra.mxu0 %v3024
        %4057 = vmatpush.bf16.msra.mxu0 %v3016
        %4058 = vmatpush.bf16.msra.mxu0 %v3008
        %4059 = vmatpush.bf16.msra.mxu0 %v3000
        %4060 = vmatpush.bf16.msra.mxu0 %v2992
        %4061 = vmatpush.bf16.msra.mxu0 %v2984
        %4062 = vmatpush.bf16.msra.mxu0 %v2976
        %4063 = vmatmul.bf16.gmra.mxu0 %v473
        %v4064 = vpop.f32.mrf.mxu0
        %v4065 = vadd.f32 %v4052, %v4064
        %v4066 = vpop.f32.mrf.mxu0
        %4067 = vdwg.mxu0
        %4068 = vmatpush.bf16.msra.mxu0 %v2585
        %4069 = vmatpush.bf16.msra.mxu0 %v2577
        %4070 = vmatpush.bf16.msra.mxu0 %v2569
        %4071 = vmatpush.bf16.msra.mxu0 %v2561
        %4072 = vmatpush.bf16.msra.mxu0 %v2553
        %4073 = vmatpush.bf16.msra.mxu0 %v2545
        %4074 = vmatpush.bf16.msra.mxu0 %v2537
        %4075 = vmatpush.bf16.msra.mxu0 %v2529
        %4076 = vmatmul.bf16.gmra.mxu0 %v466
        %v4077 = vpop.f32.mrf.mxu0
        %v4078 = vadd.f32 0.0, %v4077
        %v4079 = vpop.f32.mrf.mxu0
        %4080 = vdwg.mxu0
        %4081 = vmatpush.bf16.msra.mxu0 %v2649
        %4082 = vmatpush.bf16.msra.mxu0 %v2641
        %4083 = vmatpush.bf16.msra.mxu0 %v2633
        %4084 = vmatpush.bf16.msra.mxu0 %v2625
        %4085 = vmatpush.bf16.msra.mxu0 %v2617
        %4086 = vmatpush.bf16.msra.mxu0 %v2609
        %4087 = vmatpush.bf16.msra.mxu0 %v2601
        %4088 = vmatpush.bf16.msra.mxu0 %v2593
        %4089 = vmatmul.bf16.gmra.mxu0 %v467
        %v4090 = vpop.f32.mrf.mxu0
        %v4091 = vadd.f32 %v4078, %v4090
        %v4092 = vpop.f32.mrf.mxu0
        %4093 = vdwg.mxu0
        %4094 = vmatpush.bf16.msra.mxu0 %v2713
        %4095 = vmatpush.bf16.msra.mxu0 %v2705
        %4096 = vmatpush.bf16.msra.mxu0 %v2697
        %4097 = vmatpush.bf16.msra.mxu0 %v2689
        %4098 = vmatpush.bf16.msra.mxu0 %v2681
        %4099 = vmatpush.bf16.msra.mxu0 %v2673
        %4100 = vmatpush.bf16.msra.mxu0 %v2665
        %4101 = vmatpush.bf16.msra.mxu0 %v2657
        %4102 = vmatmul.bf16.gmra.mxu0 %v468
        %v4103 = vpop.f32.mrf.mxu0
        %v4104 = vadd.f32 %v4091, %v4103
        %v4105 = vpop.f32.mrf.mxu0
        %4106 = vdwg.mxu0
        %4107 = vmatpush.bf16.msra.mxu0 %v2777
        %4108 = vmatpush.bf16.msra.mxu0 %v2769
        %4109 = vmatpush.bf16.msra.mxu0 %v2761
        %4110 = vmatpush.bf16.msra.mxu0 %v2753
        %4111 = vmatpush.bf16.msra.mxu0 %v2745
        %4112 = vmatpush.bf16.msra.mxu0 %v2737
        %4113 = vmatpush.bf16.msra.mxu0 %v2729
        %4114 = vmatpush.bf16.msra.mxu0 %v2721
        %4115 = vmatmul.bf16.gmra.mxu0 %v469
        %v4116 = vpop.f32.mrf.mxu0
        %v4117 = vadd.f32 %v4104, %v4116
        %v4118 = vpop.f32.mrf.mxu0
        %4119 = vdwg.mxu0
        %4120 = vmatpush.bf16.msra.mxu0 %v2841
        %4121 = vmatpush.bf16.msra.mxu0 %v2833
        %4122 = vmatpush.bf16.msra.mxu0 %v2825
        %4123 = vmatpush.bf16.msra.mxu0 %v2817
        %4124 = vmatpush.bf16.msra.mxu0 %v2809
        %4125 = vmatpush.bf16.msra.mxu0 %v2801
        %4126 = vmatpush.bf16.msra.mxu0 %v2793
        %4127 = vmatpush.bf16.msra.mxu0 %v2785
        %4128 = vmatmul.bf16.gmra.mxu0 %v470
        %v4129 = vpop.f32.mrf.mxu0
        %v4130 = vadd.f32 %v4117, %v4129
        %v4131 = vpop.f32.mrf.mxu0
        %4132 = vdwg.mxu0
        %4133 = vmatpush.bf16.msra.mxu0 %v2905
        %4134 = vmatpush.bf16.msra.mxu0 %v2897
        %4135 = vmatpush.bf16.msra.mxu0 %v2889
        %4136 = vmatpush.bf16.msra.mxu0 %v2881
        %4137 = vmatpush.bf16.msra.mxu0 %v2873
        %4138 = vmatpush.bf16.msra.mxu0 %v2865
        %4139 = vmatpush.bf16.msra.mxu0 %v2857
        %4140 = vmatpush.bf16.msra.mxu0 %v2849
        %4141 = vmatmul.bf16.gmra.mxu0 %v471
        %v4142 = vpop.f32.mrf.mxu0
        %v4143 = vadd.f32 %v4130, %v4142
        %v4144 = vpop.f32.mrf.mxu0
        %4145 = vdwg.mxu0
        %4146 = vmatpush.bf16.msra.mxu0 %v2969
        %4147 = vmatpush.bf16.msra.mxu0 %v2961
        %4148 = vmatpush.bf16.msra.mxu0 %v2953
        %4149 = vmatpush.bf16.msra.mxu0 %v2945
        %4150 = vmatpush.bf16.msra.mxu0 %v2937
        %4151 = vmatpush.bf16.msra.mxu0 %v2929
        %4152 = vmatpush.bf16.msra.mxu0 %v2921
        %4153 = vmatpush.bf16.msra.mxu0 %v2913
        %4154 = vmatmul.bf16.gmra.mxu0 %v472
        %v4155 = vpop.f32.mrf.mxu0
        %v4156 = vadd.f32 %v4143, %v4155
        %v4157 = vpop.f32.mrf.mxu0
        %4158 = vdwg.mxu0
        %4159 = vmatpush.bf16.msra.mxu0 %v3033
        %4160 = vmatpush.bf16.msra.mxu0 %v3025
        %4161 = vmatpush.bf16.msra.mxu0 %v3017
        %4162 = vmatpush.bf16.msra.mxu0 %v3009
        %4163 = vmatpush.bf16.msra.mxu0 %v3001
        %4164 = vmatpush.bf16.msra.mxu0 %v2993
        %4165 = vmatpush.bf16.msra.mxu0 %v2985
        %4166 = vmatpush.bf16.msra.mxu0 %v2977
        %4167 = vmatmul.bf16.gmra.mxu0 %v473
        %v4168 = vpop.f32.mrf.mxu0
        %v4169 = vadd.f32 %v4156, %v4168
        %v4170 = vpop.f32.mrf.mxu0
        %4171 = vdwg.mxu0
        %4172 = vmatpush.bf16.msra.mxu0 %v2586
        %4173 = vmatpush.bf16.msra.mxu0 %v2578
        %4174 = vmatpush.bf16.msra.mxu0 %v2570
        %4175 = vmatpush.bf16.msra.mxu0 %v2562
        %4176 = vmatpush.bf16.msra.mxu0 %v2554
        %4177 = vmatpush.bf16.msra.mxu0 %v2546
        %4178 = vmatpush.bf16.msra.mxu0 %v2538
        %4179 = vmatpush.bf16.msra.mxu0 %v2530
        %4180 = vmatmul.bf16.gmra.mxu0 %v466
        %v4181 = vpop.f32.mrf.mxu0
        %v4182 = vadd.f32 0.0, %v4181
        %v4183 = vpop.f32.mrf.mxu0
        %4184 = vdwg.mxu0
        %4185 = vmatpush.bf16.msra.mxu0 %v2650
        %4186 = vmatpush.bf16.msra.mxu0 %v2642
        %4187 = vmatpush.bf16.msra.mxu0 %v2634
        %4188 = vmatpush.bf16.msra.mxu0 %v2626
        %4189 = vmatpush.bf16.msra.mxu0 %v2618
        %4190 = vmatpush.bf16.msra.mxu0 %v2610
        %4191 = vmatpush.bf16.msra.mxu0 %v2602
        %4192 = vmatpush.bf16.msra.mxu0 %v2594
        %4193 = vmatmul.bf16.gmra.mxu0 %v467
        %v4194 = vpop.f32.mrf.mxu0
        %v4195 = vadd.f32 %v4182, %v4194
        %v4196 = vpop.f32.mrf.mxu0
        %4197 = vdwg.mxu0
        %4198 = vmatpush.bf16.msra.mxu0 %v2714
        %4199 = vmatpush.bf16.msra.mxu0 %v2706
        %4200 = vmatpush.bf16.msra.mxu0 %v2698
        %4201 = vmatpush.bf16.msra.mxu0 %v2690
        %4202 = vmatpush.bf16.msra.mxu0 %v2682
        %4203 = vmatpush.bf16.msra.mxu0 %v2674
        %4204 = vmatpush.bf16.msra.mxu0 %v2666
        %4205 = vmatpush.bf16.msra.mxu0 %v2658
        %4206 = vmatmul.bf16.gmra.mxu0 %v468
        %v4207 = vpop.f32.mrf.mxu0
        %v4208 = vadd.f32 %v4195, %v4207
        %v4209 = vpop.f32.mrf.mxu0
        %4210 = vdwg.mxu0
        %4211 = vmatpush.bf16.msra.mxu0 %v2778
        %4212 = vmatpush.bf16.msra.mxu0 %v2770
        %4213 = vmatpush.bf16.msra.mxu0 %v2762
        %4214 = vmatpush.bf16.msra.mxu0 %v2754
        %4215 = vmatpush.bf16.msra.mxu0 %v2746
        %4216 = vmatpush.bf16.msra.mxu0 %v2738
        %4217 = vmatpush.bf16.msra.mxu0 %v2730
        %4218 = vmatpush.bf16.msra.mxu0 %v2722
        %4219 = vmatmul.bf16.gmra.mxu0 %v469
        %v4220 = vpop.f32.mrf.mxu0
        %v4221 = vadd.f32 %v4208, %v4220
        %v4222 = vpop.f32.mrf.mxu0
        %4223 = vdwg.mxu0
        %4224 = vmatpush.bf16.msra.mxu0 %v2842
        %4225 = vmatpush.bf16.msra.mxu0 %v2834
        %4226 = vmatpush.bf16.msra.mxu0 %v2826
        %4227 = vmatpush.bf16.msra.mxu0 %v2818
        %4228 = vmatpush.bf16.msra.mxu0 %v2810
        %4229 = vmatpush.bf16.msra.mxu0 %v2802
        %4230 = vmatpush.bf16.msra.mxu0 %v2794
        %4231 = vmatpush.bf16.msra.mxu0 %v2786
        %4232 = vmatmul.bf16.gmra.mxu0 %v470
        %v4233 = vpop.f32.mrf.mxu0
        %v4234 = vadd.f32 %v4221, %v4233
        %v4235 = vpop.f32.mrf.mxu0
        %4236 = vdwg.mxu0
        %4237 = vmatpush.bf16.msra.mxu0 %v2906
        %4238 = vmatpush.bf16.msra.mxu0 %v2898
        %4239 = vmatpush.bf16.msra.mxu0 %v2890
        %4240 = vmatpush.bf16.msra.mxu0 %v2882
        %4241 = vmatpush.bf16.msra.mxu0 %v2874
        %4242 = vmatpush.bf16.msra.mxu0 %v2866
        %4243 = vmatpush.bf16.msra.mxu0 %v2858
        %4244 = vmatpush.bf16.msra.mxu0 %v2850
        %4245 = vmatmul.bf16.gmra.mxu0 %v471
        %v4246 = vpop.f32.mrf.mxu0
        %v4247 = vadd.f32 %v4234, %v4246
        %v4248 = vpop.f32.mrf.mxu0
        %4249 = vdwg.mxu0
        %4250 = vmatpush.bf16.msra.mxu0 %v2970
        %4251 = vmatpush.bf16.msra.mxu0 %v2962
        %4252 = vmatpush.bf16.msra.mxu0 %v2954
        %4253 = vmatpush.bf16.msra.mxu0 %v2946
        %4254 = vmatpush.bf16.msra.mxu0 %v2938
        %4255 = vmatpush.bf16.msra.mxu0 %v2930
        %4256 = vmatpush.bf16.msra.mxu0 %v2922
        %4257 = vmatpush.bf16.msra.mxu0 %v2914
        %4258 = vmatmul.bf16.gmra.mxu0 %v472
        %v4259 = vpop.f32.mrf.mxu0
        %v4260 = vadd.f32 %v4247, %v4259
        %v4261 = vpop.f32.mrf.mxu0
        %4262 = vdwg.mxu0
        %4263 = vmatpush.bf16.msra.mxu0 %v3034
        %4264 = vmatpush.bf16.msra.mxu0 %v3026
        %4265 = vmatpush.bf16.msra.mxu0 %v3018
        %4266 = vmatpush.bf16.msra.mxu0 %v3010
        %4267 = vmatpush.bf16.msra.mxu0 %v3002
        %4268 = vmatpush.bf16.msra.mxu0 %v2994
        %4269 = vmatpush.bf16.msra.mxu0 %v2986
        %4270 = vmatpush.bf16.msra.mxu0 %v2978
        %4271 = vmatmul.bf16.gmra.mxu0 %v473
        %v4272 = vpop.f32.mrf.mxu0
        %v4273 = vadd.f32 %v4260, %v4272
        %v4274 = vpop.f32.mrf.mxu0
        %4275 = vdwg.mxu0
        %4276 = vmatpush.bf16.msra.mxu0 %v2587
        %4277 = vmatpush.bf16.msra.mxu0 %v2579
        %4278 = vmatpush.bf16.msra.mxu0 %v2571
        %4279 = vmatpush.bf16.msra.mxu0 %v2563
        %4280 = vmatpush.bf16.msra.mxu0 %v2555
        %4281 = vmatpush.bf16.msra.mxu0 %v2547
        %4282 = vmatpush.bf16.msra.mxu0 %v2539
        %4283 = vmatpush.bf16.msra.mxu0 %v2531
        %4284 = vmatmul.bf16.gmra.mxu0 %v466
        %v4285 = vpop.f32.mrf.mxu0
        %v4286 = vadd.f32 0.0, %v4285
        %v4287 = vpop.f32.mrf.mxu0
        %4288 = vdwg.mxu0
        %4289 = vmatpush.bf16.msra.mxu0 %v2651
        %4290 = vmatpush.bf16.msra.mxu0 %v2643
        %4291 = vmatpush.bf16.msra.mxu0 %v2635
        %4292 = vmatpush.bf16.msra.mxu0 %v2627
        %4293 = vmatpush.bf16.msra.mxu0 %v2619
        %4294 = vmatpush.bf16.msra.mxu0 %v2611
        %4295 = vmatpush.bf16.msra.mxu0 %v2603
        %4296 = vmatpush.bf16.msra.mxu0 %v2595
        %4297 = vmatmul.bf16.gmra.mxu0 %v467
        %v4298 = vpop.f32.mrf.mxu0
        %v4299 = vadd.f32 %v4286, %v4298
        %v4300 = vpop.f32.mrf.mxu0
        %4301 = vdwg.mxu0
        %4302 = vmatpush.bf16.msra.mxu0 %v2715
        %4303 = vmatpush.bf16.msra.mxu0 %v2707
        %4304 = vmatpush.bf16.msra.mxu0 %v2699
        %4305 = vmatpush.bf16.msra.mxu0 %v2691
        %4306 = vmatpush.bf16.msra.mxu0 %v2683
        %4307 = vmatpush.bf16.msra.mxu0 %v2675
        %4308 = vmatpush.bf16.msra.mxu0 %v2667
        %4309 = vmatpush.bf16.msra.mxu0 %v2659
        %4310 = vmatmul.bf16.gmra.mxu0 %v468
        %v4311 = vpop.f32.mrf.mxu0
        %v4312 = vadd.f32 %v4299, %v4311
        %v4313 = vpop.f32.mrf.mxu0
        %4314 = vdwg.mxu0
        %4315 = vmatpush.bf16.msra.mxu0 %v2779
        %4316 = vmatpush.bf16.msra.mxu0 %v2771
        %4317 = vmatpush.bf16.msra.mxu0 %v2763
        %4318 = vmatpush.bf16.msra.mxu0 %v2755
        %4319 = vmatpush.bf16.msra.mxu0 %v2747
        %4320 = vmatpush.bf16.msra.mxu0 %v2739
        %4321 = vmatpush.bf16.msra.mxu0 %v2731
        %4322 = vmatpush.bf16.msra.mxu0 %v2723
        %4323 = vmatmul.bf16.gmra.mxu0 %v469
        %v4324 = vpop.f32.mrf.mxu0
        %v4325 = vadd.f32 %v4312, %v4324
        %v4326 = vpop.f32.mrf.mxu0
        %4327 = vdwg.mxu0
        %4328 = vmatpush.bf16.msra.mxu0 %v2843
        %4329 = vmatpush.bf16.msra.mxu0 %v2835
        %4330 = vmatpush.bf16.msra.mxu0 %v2827
        %4331 = vmatpush.bf16.msra.mxu0 %v2819
        %4332 = vmatpush.bf16.msra.mxu0 %v2811
        %4333 = vmatpush.bf16.msra.mxu0 %v2803
        %4334 = vmatpush.bf16.msra.mxu0 %v2795
        %4335 = vmatpush.bf16.msra.mxu0 %v2787
        %4336 = vmatmul.bf16.gmra.mxu0 %v470
        %v4337 = vpop.f32.mrf.mxu0
        %v4338 = vadd.f32 %v4325, %v4337
        %v4339 = vpop.f32.mrf.mxu0
        %4340 = vdwg.mxu0
        %4341 = vmatpush.bf16.msra.mxu0 %v2907
        %4342 = vmatpush.bf16.msra.mxu0 %v2899
        %4343 = vmatpush.bf16.msra.mxu0 %v2891
        %4344 = vmatpush.bf16.msra.mxu0 %v2883
        %4345 = vmatpush.bf16.msra.mxu0 %v2875
        %4346 = vmatpush.bf16.msra.mxu0 %v2867
        %4347 = vmatpush.bf16.msra.mxu0 %v2859
        %4348 = vmatpush.bf16.msra.mxu0 %v2851
        %4349 = vmatmul.bf16.gmra.mxu0 %v471
        %v4350 = vpop.f32.mrf.mxu0
        %v4351 = vadd.f32 %v4338, %v4350
        %v4352 = vpop.f32.mrf.mxu0
        %4353 = vdwg.mxu0
        %4354 = vmatpush.bf16.msra.mxu0 %v2971
        %4355 = vmatpush.bf16.msra.mxu0 %v2963
        %4356 = vmatpush.bf16.msra.mxu0 %v2955
        %4357 = vmatpush.bf16.msra.mxu0 %v2947
        %4358 = vmatpush.bf16.msra.mxu0 %v2939
        %4359 = vmatpush.bf16.msra.mxu0 %v2931
        %4360 = vmatpush.bf16.msra.mxu0 %v2923
        %4361 = vmatpush.bf16.msra.mxu0 %v2915
        %4362 = vmatmul.bf16.gmra.mxu0 %v472
        %v4363 = vpop.f32.mrf.mxu0
        %v4364 = vadd.f32 %v4351, %v4363
        %v4365 = vpop.f32.mrf.mxu0
        %4366 = vdwg.mxu0
        %4367 = vmatpush.bf16.msra.mxu0 %v3035
        %4368 = vmatpush.bf16.msra.mxu0 %v3027
        %4369 = vmatpush.bf16.msra.mxu0 %v3019
        %4370 = vmatpush.bf16.msra.mxu0 %v3011
        %4371 = vmatpush.bf16.msra.mxu0 %v3003
        %4372 = vmatpush.bf16.msra.mxu0 %v2995
        %4373 = vmatpush.bf16.msra.mxu0 %v2987
        %4374 = vmatpush.bf16.msra.mxu0 %v2979
        %4375 = vmatmul.bf16.gmra.mxu0 %v473
        %v4376 = vpop.f32.mrf.mxu0
        %v4377 = vadd.f32 %v4364, %v4376
        %v4378 = vpop.f32.mrf.mxu0
        %4379 = vdwg.mxu0
        %v4388 = vrot.slane %v3753, 6
        %v4389 = vrot.slane %v3857, 4
        %v4390 = vrot.slane %v3961, 2
        %v4391 = vrot.slane %v4169, 6
        %v4392 = vrot.slane %v4273, 4
        %v4393 = vrot.slane %v4377, 2
        %vm4394 = vcmask 1041408
        %v4395 = vsel %vm4394, %v3649, %v4388
        %vm4396 = vcmask 1045508
        %v4397 = vsel %vm4396, %v4389, %v4390
        %vm4398 = vcmask 1043456
        %v4399 = vsel %vm4398, %v4395, %v4397
        %v4400 = vsel %vm4394, %v4065, %v4391
        %v4401 = vsel %vm4396, %v4392, %v4393
        %v4402 = vsel %vm4398, %v4400, %v4401
        %v4405 = vadd.f32 %v474, %v4399
        %v4406 = vadd.f32 %v475, %v4402
        %4407 = vst [vmem:[#allocation2] sm:$0xff] %v4405
        %4408 = vst [vmem:[#allocation2 + $0x8] sm:$0xff] %v4406
        %p4409 = scmp.eq.s32.totalorder %s25, 2
        // Predicated region
        $region77: #{mlp2_forward_pallas.1} parent=71 // pred_check
          %p4410 = pneg %p4409
        $region78: #{mlp2_forward_pallas.1} parent=71 // pred_check_branch
          %4412 = sbr.rel (%p4410) target = $region80
        $region79: #{mlp2_forward_pallas.1} parent=71 // pred_region
          %v4413 = vld [vmem:[#allocation2] sm:$0xff]
          %v4414 = vld [vmem:[#allocation2 + $0x8] sm:$0xff]
          %v4415 = vld [vmem:[%s2] sm:$0xff]
          %v4417 = vperm.slane %v4415, 0
          %v4418 = vperm.slane %v4415, 1
          %v4419 = vperm.slane %v4415, 2
          %v4420 = vperm.slane %v4415, 3
          %v4421 = vperm.slane %v4415, 4
          %v4422 = vperm.slane %v4415, 5
          %v4423 = vperm.slane %v4415, 6
          %v4424 = vperm.slane %v4415, 7
          %v4425 = vrot.slane %v4418, 6
          %v4426 = vrot.slane %v4419, 4
          %v4427 = vrot.slane %v4420, 2
          %v4428 = vrot.slane %v4422, 6
          %v4429 = vrot.slane %v4423, 4
          %v4430 = vrot.slane %v4424, 2
          %v4431 = vsel %vm4394, %v4417, %v4425
          %v4432 = vsel %vm4396, %v4426, %v4427
          %v4433 = vsel %vm4398, %v4431, %v4432
          %v4434 = vsel %vm4394, %v4421, %v4428
          %v4435 = vsel %vm4396, %v4429, %v4430
          %v4436 = vsel %vm4398, %v4434, %v4435
          %v4439 = vadd.f32 %v4413, %v4433
          %v4440 = vadd.f32 %v4414, %v4436
          %v4441 = vmax.f32 %v4439, 0.0
          %v4442 = vmax.f32 %v4440, 0.0
          %4445 = vst [vmem:[#allocation1] ss:$4 sm:$0xff] %v4441
          %s4446 = scalar_lea.vmem [#allocation1], 32
          %4447 = vst [vmem:[%s4446] ss:$4 sm:$0xff] %v4442
          %v4448 = vld.sshfl [vmem:[#allocation1] sm:$0xff pattern:$0x73625140]
          %v4449 = vld.sshfl [vmem:[#allocation1 + $0x8] sm:$0xff pattern:$0x73625140]
          %v4450 = vld.sshfl [vmem:[#allocation1 + $0x10] sm:$0xff pattern:$0x73625140]
          %v4451 = vld.sshfl [vmem:[#allocation1 + $0x18] sm:$0xff pattern:$0x73625140]
          %v4452 = vld.sshfl [vmem:[#allocation1 + $0x20] sm:$0xff pattern:$0x73625140]
          %v4453 = vld.sshfl [vmem:[#allocation1 + $0x28] sm:$0xff pattern:$0x73625140]
          %v4454 = vld.sshfl [vmem:[#allocation1 + $0x30] sm:$0xff pattern:$0x73625140]
          %v4455 = vld.sshfl [vmem:[#allocation1 + $0x38] sm:$0xff pattern:$0x73625140]
          %v4464 = vpack.c.bf16 %v4448, %v4448
          %v4465 = vpack.c.bf16 %v4449, %v4449
          %v4466 = vpack.c.bf16 %v4450, %v4450
          %v4467 = vpack.c.bf16 %v4451, %v4451
          %v4468 = vpack.c.bf16 %v4452, %v4452
          %v4469 = vpack.c.bf16 %v4453, %v4453
          %v4470 = vpack.c.bf16 %v4454, %v4454
          %v4471 = vpack.c.bf16 %v4455, %v4455
          %v4472 = vld [vmem:[%s3] sm:$0xff]
          %v4473 = vld [vmem:[%s3 + $0x8] sm:$0xff]
          %v4474 = vld [vmem:[%s3 + $0x10] sm:$0xff]
          %v4475 = vld [vmem:[%s3 + $0x18] sm:$0xff]
          %v4476 = vld [vmem:[%s3 + $0x20] sm:$0xff]
          %v4477 = vld [vmem:[%s3 + $0x28] sm:$0xff]
          %v4478 = vld [vmem:[%s3 + $0x30] sm:$0xff]
          %v4479 = vld [vmem:[%s3 + $0x38] sm:$0xff]
          %v4480 = vld [vmem:[%s3 + $0x40] sm:$0xff]
          %v4481 = vld [vmem:[%s3 + $0x48] sm:$0xff]
          %v4482 = vld [vmem:[%s3 + $0x50] sm:$0xff]
          %v4483 = vld [vmem:[%s3 + $0x58] sm:$0xff]
          %v4484 = vld [vmem:[%s3 + $0x60] sm:$0xff]
          %v4485 = vld [vmem:[%s3 + $0x68] sm:$0xff]
          %v4486 = vld [vmem:[%s3 + $0x70] sm:$0xff]
          %v4487 = vld [vmem:[%s3 + $0x78] sm:$0xff]
          %v4488 = vld [vmem:[%s3 + $0x80] sm:$0xff]
          %v4489 = vld [vmem:[%s3 + $0x88] sm:$0xff]
          %v4490 = vld [vmem:[%s3 + $0x90] sm:$0xff]
          %v4491 = vld [vmem:[%s3 + $0x98] sm:$0xff]
          %v4492 = vld [vmem:[%s3 + $0xa0] sm:$0xff]
          %v4493 = vld [vmem:[%s3 + $0xa8] sm:$0xff]
          %v4494 = vld [vmem:[%s3 + $0xb0] sm:$0xff]
          %v4495 = vld [vmem:[%s3 + $0xb8] sm:$0xff]
          %v4496 = vld [vmem:[%s3 + $0xc0] sm:$0xff]
          %v4497 = vld [vmem:[%s3 + $0xc8] sm:$0xff]
          %v4498 = vld [vmem:[%s3 + $0xd0] sm:$0xff]
          %v4499 = vld [vmem:[%s3 + $0xd8] sm:$0xff]
          %v4500 = vld [vmem:[%s3 + $0xe0] sm:$0xff]
          %v4501 = vld [vmem:[%s3 + $0xe8] sm:$0xff]
          %v4502 = vld [vmem:[%s3 + $0xf0] sm:$0xff]
          %v4503 = vld [vmem:[%s3 + $0xf8] sm:$0xff]
          %v4504 = vld [vmem:[%s3 + $0x100] sm:$0xff]
          %v4505 = vld [vmem:[%s3 + $0x108] sm:$0xff]
          %v4506 = vld [vmem:[%s3 + $0x110] sm:$0xff]
          %v4507 = vld [vmem:[%s3 + $0x118] sm:$0xff]
          %v4508 = vld [vmem:[%s3 + $0x120] sm:$0xff]
          %v4509 = vld [vmem:[%s3 + $0x128] sm:$0xff]
          %v4510 = vld [vmem:[%s3 + $0x130] sm:$0xff]
          %v4511 = vld [vmem:[%s3 + $0x138] sm:$0xff]
          %v4512 = vld [vmem:[%s3 + $0x140] sm:$0xff]
          %v4513 = vld [vmem:[%s3 + $0x148] sm:$0xff]
          %v4514 = vld [vmem:[%s3 + $0x150] sm:$0xff]
          %v4515 = vld [vmem:[%s3 + $0x158] sm:$0xff]
          %v4516 = vld [vmem:[%s3 + $0x160] sm:$0xff]
          %v4517 = vld [vmem:[%s3 + $0x168] sm:$0xff]
          %v4518 = vld [vmem:[%s3 + $0x170] sm:$0xff]
          %v4519 = vld [vmem:[%s3 + $0x178] sm:$0xff]
          %v4520 = vld [vmem:[%s3 + $0x180] sm:$0xff]
          %v4521 = vld [vmem:[%s3 + $0x188] sm:$0xff]
          %v4522 = vld [vmem:[%s3 + $0x190] sm:$0xff]
          %v4523 = vld [vmem:[%s3 + $0x198] sm:$0xff]
          %v4524 = vld [vmem:[%s3 + $0x1a0] sm:$0xff]
          %v4525 = vld [vmem:[%s3 + $0x1a8] sm:$0xff]
          %v4526 = vld [vmem:[%s3 + $0x1b0] sm:$0xff]
          %v4527 = vld [vmem:[%s3 + $0x1b8] sm:$0xff]
          %v4528 = vld [vmem:[%s3 + $0x1c0] sm:$0xff]
          %v4529 = vld [vmem:[%s3 + $0x1c8] sm:$0xff]
          %v4530 = vld [vmem:[%s3 + $0x1d0] sm:$0xff]
          %v4531 = vld [vmem:[%s3 + $0x1d8] sm:$0xff]
          %v4532 = vld [vmem:[%s3 + $0x1e0] sm:$0xff]
          %v4533 = vld [vmem:[%s3 + $0x1e8] sm:$0xff]
          %v4534 = vld [vmem:[%s3 + $0x1f0] sm:$0xff]
          %v4535 = vld [vmem:[%s3 + $0x1f8] sm:$0xff]
          %v4536 = vld [vmem:[%s3 + $0x200] sm:$0xff]
          %v4537 = vld [vmem:[%s3 + $0x208] sm:$0xff]
          %v4538 = vld [vmem:[%s3 + $0x210] sm:$0xff]
          %v4539 = vld [vmem:[%s3 + $0x218] sm:$0xff]
          %v4540 = vld [vmem:[%s3 + $0x220] sm:$0xff]
          %v4541 = vld [vmem:[%s3 + $0x228] sm:$0xff]
          %v4542 = vld [vmem:[%s3 + $0x230] sm:$0xff]
          %v4543 = vld [vmem:[%s3 + $0x238] sm:$0xff]
          %v4544 = vld [vmem:[%s3 + $0x240] sm:$0xff]
          %v4545 = vld [vmem:[%s3 + $0x248] sm:$0xff]
          %v4546 = vld [vmem:[%s3 + $0x250] sm:$0xff]
          %v4547 = vld [vmem:[%s3 + $0x258] sm:$0xff]
          %v4548 = vld [vmem:[%s3 + $0x260] sm:$0xff]
          %v4549 = vld [vmem:[%s3 + $0x268] sm:$0xff]
          %v4550 = vld [vmem:[%s3 + $0x270] sm:$0xff]
          %v4551 = vld [vmem:[%s3 + $0x278] sm:$0xff]
          %v4552 = vld [vmem:[%s3 + $0x280] sm:$0xff]
          %v4553 = vld [vmem:[%s3 + $0x288] sm:$0xff]
          %v4554 = vld [vmem:[%s3 + $0x290] sm:$0xff]
          %v4555 = vld [vmem:[%s3 + $0x298] sm:$0xff]
          %v4556 = vld [vmem:[%s3 + $0x2a0] sm:$0xff]
          %v4557 = vld [vmem:[%s3 + $0x2a8] sm:$0xff]
          %v4558 = vld [vmem:[%s3 + $0x2b0] sm:$0xff]
          %v4559 = vld [vmem:[%s3 + $0x2b8] sm:$0xff]
          %v4560 = vld [vmem:[%s3 + $0x2c0] sm:$0xff]
          %v4561 = vld [vmem:[%s3 + $0x2c8] sm:$0xff]
          %v4562 = vld [vmem:[%s3 + $0x2d0] sm:$0xff]
          %v4563 = vld [vmem:[%s3 + $0x2d8] sm:$0xff]
          %v4564 = vld [vmem:[%s3 + $0x2e0] sm:$0xff]
          %v4565 = vld [vmem:[%s3 + $0x2e8] sm:$0xff]
          %v4566 = vld [vmem:[%s3 + $0x2f0] sm:$0xff]
          %v4567 = vld [vmem:[%s3 + $0x2f8] sm:$0xff]
          %v4568 = vld [vmem:[%s3 + $0x300] sm:$0xff]
          %v4569 = vld [vmem:[%s3 + $0x308] sm:$0xff]
          %v4570 = vld [vmem:[%s3 + $0x310] sm:$0xff]
          %v4571 = vld [vmem:[%s3 + $0x318] sm:$0xff]
          %v4572 = vld [vmem:[%s3 + $0x320] sm:$0xff]
          %v4573 = vld [vmem:[%s3 + $0x328] sm:$0xff]
          %v4574 = vld [vmem:[%s3 + $0x330] sm:$0xff]
          %v4575 = vld [vmem:[%s3 + $0x338] sm:$0xff]
          %v4576 = vld [vmem:[%s3 + $0x340] sm:$0xff]
          %v4577 = vld [vmem:[%s3 + $0x348] sm:$0xff]
          %v4578 = vld [vmem:[%s3 + $0x350] sm:$0xff]
          %v4579 = vld [vmem:[%s3 + $0x358] sm:$0xff]
          %v4580 = vld [vmem:[%s3 + $0x360] sm:$0xff]
          %v4581 = vld [vmem:[%s3 + $0x368] sm:$0xff]
          %v4582 = vld [vmem:[%s3 + $0x370] sm:$0xff]
          %v4583 = vld [vmem:[%s3 + $0x378] sm:$0xff]
          %v4584 = vld [vmem:[%s3 + $0x380] sm:$0xff]
          %v4585 = vld [vmem:[%s3 + $0x388] sm:$0xff]
          %v4586 = vld [vmem:[%s3 + $0x390] sm:$0xff]
          %v4587 = vld [vmem:[%s3 + $0x398] sm:$0xff]
          %v4588 = vld [vmem:[%s3 + $0x3a0] sm:$0xff]
          %v4589 = vld [vmem:[%s3 + $0x3a8] sm:$0xff]
          %v4590 = vld [vmem:[%s3 + $0x3b0] sm:$0xff]
          %v4591 = vld [vmem:[%s3 + $0x3b8] sm:$0xff]
          %v4592 = vld [vmem:[%s3 + $0x3c0] sm:$0xff]
          %v4593 = vld [vmem:[%s3 + $0x3c8] sm:$0xff]
          %v4594 = vld [vmem:[%s3 + $0x3d0] sm:$0xff]
          %v4595 = vld [vmem:[%s3 + $0x3d8] sm:$0xff]
          %v4596 = vld [vmem:[%s3 + $0x3e0] sm:$0xff]
          %v4597 = vld [vmem:[%s3 + $0x3e8] sm:$0xff]
          %v4598 = vld [vmem:[%s3 + $0x3f0] sm:$0xff]
          %v4599 = vld [vmem:[%s3 + $0x3f8] sm:$0xff]
          %v4600 = vld [vmem:[%s3 + $0x400] sm:$0xff]
          %v4601 = vld [vmem:[%s3 + $0x408] sm:$0xff]
          %v4602 = vld [vmem:[%s3 + $0x410] sm:$0xff]
          %v4603 = vld [vmem:[%s3 + $0x418] sm:$0xff]
          %v4604 = vld [vmem:[%s3 + $0x420] sm:$0xff]
          %v4605 = vld [vmem:[%s3 + $0x428] sm:$0xff]
          %v4606 = vld [vmem:[%s3 + $0x430] sm:$0xff]
          %v4607 = vld [vmem:[%s3 + $0x438] sm:$0xff]
          %v4608 = vld [vmem:[%s3 + $0x440] sm:$0xff]
          %v4609 = vld [vmem:[%s3 + $0x448] sm:$0xff]
          %v4610 = vld [vmem:[%s3 + $0x450] sm:$0xff]
          %v4611 = vld [vmem:[%s3 + $0x458] sm:$0xff]
          %v4612 = vld [vmem:[%s3 + $0x460] sm:$0xff]
          %v4613 = vld [vmem:[%s3 + $0x468] sm:$0xff]
          %v4614 = vld [vmem:[%s3 + $0x470] sm:$0xff]
          %v4615 = vld [vmem:[%s3 + $0x478] sm:$0xff]
          %v4616 = vld [vmem:[%s3 + $0x480] sm:$0xff]
          %v4617 = vld [vmem:[%s3 + $0x488] sm:$0xff]
          %v4618 = vld [vmem:[%s3 + $0x490] sm:$0xff]
          %v4619 = vld [vmem:[%s3 + $0x498] sm:$0xff]
          %v4620 = vld [vmem:[%s3 + $0x4a0] sm:$0xff]
          %v4621 = vld [vmem:[%s3 + $0x4a8] sm:$0xff]
          %v4622 = vld [vmem:[%s3 + $0x4b0] sm:$0xff]
          %v4623 = vld [vmem:[%s3 + $0x4b8] sm:$0xff]
          %v4624 = vld [vmem:[%s3 + $0x4c0] sm:$0xff]
          %v4625 = vld [vmem:[%s3 + $0x4c8] sm:$0xff]
          %v4626 = vld [vmem:[%s3 + $0x4d0] sm:$0xff]
          %v4627 = vld [vmem:[%s3 + $0x4d8] sm:$0xff]
          %v4628 = vld [vmem:[%s3 + $0x4e0] sm:$0xff]
          %v4629 = vld [vmem:[%s3 + $0x4e8] sm:$0xff]
          %v4630 = vld [vmem:[%s3 + $0x4f0] sm:$0xff]
          %v4631 = vld [vmem:[%s3 + $0x4f8] sm:$0xff]
          %v4632 = vld [vmem:[%s3 + $0x500] sm:$0xff]
          %v4633 = vld [vmem:[%s3 + $0x508] sm:$0xff]
          %v4634 = vld [vmem:[%s3 + $0x510] sm:$0xff]
          %v4635 = vld [vmem:[%s3 + $0x518] sm:$0xff]
          %v4636 = vld [vmem:[%s3 + $0x520] sm:$0xff]
          %v4637 = vld [vmem:[%s3 + $0x528] sm:$0xff]
          %v4638 = vld [vmem:[%s3 + $0x530] sm:$0xff]
          %v4639 = vld [vmem:[%s3 + $0x538] sm:$0xff]
          %v4640 = vld [vmem:[%s3 + $0x540] sm:$0xff]
          %v4641 = vld [vmem:[%s3 + $0x548] sm:$0xff]
          %v4642 = vld [vmem:[%s3 + $0x550] sm:$0xff]
          %v4643 = vld [vmem:[%s3 + $0x558] sm:$0xff]
          %v4644 = vld [vmem:[%s3 + $0x560] sm:$0xff]
          %v4645 = vld [vmem:[%s3 + $0x568] sm:$0xff]
          %v4646 = vld [vmem:[%s3 + $0x570] sm:$0xff]
          %v4647 = vld [vmem:[%s3 + $0x578] sm:$0xff]
          %v4648 = vld [vmem:[%s3 + $0x580] sm:$0xff]
          %v4649 = vld [vmem:[%s3 + $0x588] sm:$0xff]
          %v4650 = vld [vmem:[%s3 + $0x590] sm:$0xff]
          %v4651 = vld [vmem:[%s3 + $0x598] sm:$0xff]
          %v4652 = vld [vmem:[%s3 + $0x5a0] sm:$0xff]
          %v4653 = vld [vmem:[%s3 + $0x5a8] sm:$0xff]
          %v4654 = vld [vmem:[%s3 + $0x5b0] sm:$0xff]
          %v4655 = vld [vmem:[%s3 + $0x5b8] sm:$0xff]
          %v4656 = vld [vmem:[%s3 + $0x5c0] sm:$0xff]
          %v4657 = vld [vmem:[%s3 + $0x5c8] sm:$0xff]
          %v4658 = vld [vmem:[%s3 + $0x5d0] sm:$0xff]
          %v4659 = vld [vmem:[%s3 + $0x5d8] sm:$0xff]
          %v4660 = vld [vmem:[%s3 + $0x5e0] sm:$0xff]
          %v4661 = vld [vmem:[%s3 + $0x5e8] sm:$0xff]
          %v4662 = vld [vmem:[%s3 + $0x5f0] sm:$0xff]
          %v4663 = vld [vmem:[%s3 + $0x5f8] sm:$0xff]
          %v4664 = vld [vmem:[%s3 + $0x600] sm:$0xff]
          %v4665 = vld [vmem:[%s3 + $0x608] sm:$0xff]
          %v4666 = vld [vmem:[%s3 + $0x610] sm:$0xff]
          %v4667 = vld [vmem:[%s3 + $0x618] sm:$0xff]
          %v4668 = vld [vmem:[%s3 + $0x620] sm:$0xff]
          %v4669 = vld [vmem:[%s3 + $0x628] sm:$0xff]
          %v4670 = vld [vmem:[%s3 + $0x630] sm:$0xff]
          %v4671 = vld [vmem:[%s3 + $0x638] sm:$0xff]
          %v4672 = vld [vmem:[%s3 + $0x640] sm:$0xff]
          %v4673 = vld [vmem:[%s3 + $0x648] sm:$0xff]
          %v4674 = vld [vmem:[%s3 + $0x650] sm:$0xff]
          %v4675 = vld [vmem:[%s3 + $0x658] sm:$0xff]
          %v4676 = vld [vmem:[%s3 + $0x660] sm:$0xff]
          %v4677 = vld [vmem:[%s3 + $0x668] sm:$0xff]
          %v4678 = vld [vmem:[%s3 + $0x670] sm:$0xff]
          %v4679 = vld [vmem:[%s3 + $0x678] sm:$0xff]
          %v4680 = vld [vmem:[%s3 + $0x680] sm:$0xff]
          %v4681 = vld [vmem:[%s3 + $0x688] sm:$0xff]
          %v4682 = vld [vmem:[%s3 + $0x690] sm:$0xff]
          %v4683 = vld [vmem:[%s3 + $0x698] sm:$0xff]
          %v4684 = vld [vmem:[%s3 + $0x6a0] sm:$0xff]
          %v4685 = vld [vmem:[%s3 + $0x6a8] sm:$0xff]
          %v4686 = vld [vmem:[%s3 + $0x6b0] sm:$0xff]
          %v4687 = vld [vmem:[%s3 + $0x6b8] sm:$0xff]
          %v4688 = vld [vmem:[%s3 + $0x6c0] sm:$0xff]
          %v4689 = vld [vmem:[%s3 + $0x6c8] sm:$0xff]
          %v4690 = vld [vmem:[%s3 + $0x6d0] sm:$0xff]
          %v4691 = vld [vmem:[%s3 + $0x6d8] sm:$0xff]
          %v4692 = vld [vmem:[%s3 + $0x6e0] sm:$0xff]
          %v4693 = vld [vmem:[%s3 + $0x6e8] sm:$0xff]
          %v4694 = vld [vmem:[%s3 + $0x6f0] sm:$0xff]
          %v4695 = vld [vmem:[%s3 + $0x6f8] sm:$0xff]
          %v4696 = vld [vmem:[%s3 + $0x700] sm:$0xff]
          %v4697 = vld [vmem:[%s3 + $0x708] sm:$0xff]
          %v4698 = vld [vmem:[%s3 + $0x710] sm:$0xff]
          %v4699 = vld [vmem:[%s3 + $0x718] sm:$0xff]
          %v4700 = vld [vmem:[%s3 + $0x720] sm:$0xff]
          %v4701 = vld [vmem:[%s3 + $0x728] sm:$0xff]
          %v4702 = vld [vmem:[%s3 + $0x730] sm:$0xff]
          %v4703 = vld [vmem:[%s3 + $0x738] sm:$0xff]
          %v4704 = vld [vmem:[%s3 + $0x740] sm:$0xff]
          %v4705 = vld [vmem:[%s3 + $0x748] sm:$0xff]
          %v4706 = vld [vmem:[%s3 + $0x750] sm:$0xff]
          %v4707 = vld [vmem:[%s3 + $0x758] sm:$0xff]
          %v4708 = vld [vmem:[%s3 + $0x760] sm:$0xff]
          %v4709 = vld [vmem:[%s3 + $0x768] sm:$0xff]
          %v4710 = vld [vmem:[%s3 + $0x770] sm:$0xff]
          %v4711 = vld [vmem:[%s3 + $0x778] sm:$0xff]
          %v4712 = vld [vmem:[%s3 + $0x780] sm:$0xff]
          %v4713 = vld [vmem:[%s3 + $0x788] sm:$0xff]
          %v4714 = vld [vmem:[%s3 + $0x790] sm:$0xff]
          %v4715 = vld [vmem:[%s3 + $0x798] sm:$0xff]
          %v4716 = vld [vmem:[%s3 + $0x7a0] sm:$0xff]
          %v4717 = vld [vmem:[%s3 + $0x7a8] sm:$0xff]
          %v4718 = vld [vmem:[%s3 + $0x7b0] sm:$0xff]
          %v4719 = vld [vmem:[%s3 + $0x7b8] sm:$0xff]
          %v4720 = vld [vmem:[%s3 + $0x7c0] sm:$0xff]
          %v4721 = vld [vmem:[%s3 + $0x7c8] sm:$0xff]
          %v4722 = vld [vmem:[%s3 + $0x7d0] sm:$0xff]
          %v4723 = vld [vmem:[%s3 + $0x7d8] sm:$0xff]
          %v4724 = vld [vmem:[%s3 + $0x7e0] sm:$0xff]
          %v4725 = vld [vmem:[%s3 + $0x7e8] sm:$0xff]
          %v4726 = vld [vmem:[%s3 + $0x7f0] sm:$0xff]
          %v4727 = vld [vmem:[%s3 + $0x7f8] sm:$0xff]
          %v4728 = vld [vmem:[%s3 + $0x800] sm:$0xff]
          %v4729 = vld [vmem:[%s3 + $0x808] sm:$0xff]
          %v4730 = vld [vmem:[%s3 + $0x810] sm:$0xff]
          %v4731 = vld [vmem:[%s3 + $0x818] sm:$0xff]
          %v4732 = vld [vmem:[%s3 + $0x820] sm:$0xff]
          %v4733 = vld [vmem:[%s3 + $0x828] sm:$0xff]
          %v4734 = vld [vmem:[%s3 + $0x830] sm:$0xff]
          %v4735 = vld [vmem:[%s3 + $0x838] sm:$0xff]
          %v4736 = vld [vmem:[%s3 + $0x840] sm:$0xff]
          %v4737 = vld [vmem:[%s3 + $0x848] sm:$0xff]
          %v4738 = vld [vmem:[%s3 + $0x850] sm:$0xff]
          %v4739 = vld [vmem:[%s3 + $0x858] sm:$0xff]
          %v4740 = vld [vmem:[%s3 + $0x860] sm:$0xff]
          %v4741 = vld [vmem:[%s3 + $0x868] sm:$0xff]
          %v4742 = vld [vmem:[%s3 + $0x870] sm:$0xff]
          %v4743 = vld [vmem:[%s3 + $0x878] sm:$0xff]
          %v4744 = vld [vmem:[%s3 + $0x880] sm:$0xff]
          %v4745 = vld [vmem:[%s3 + $0x888] sm:$0xff]
          %v4746 = vld [vmem:[%s3 + $0x890] sm:$0xff]
          %v4747 = vld [vmem:[%s3 + $0x898] sm:$0xff]
          %v4748 = vld [vmem:[%s3 + $0x8a0] sm:$0xff]
          %v4749 = vld [vmem:[%s3 + $0x8a8] sm:$0xff]
          %v4750 = vld [vmem:[%s3 + $0x8b0] sm:$0xff]
          %v4751 = vld [vmem:[%s3 + $0x8b8] sm:$0xff]
          %v4752 = vld [vmem:[%s3 + $0x8c0] sm:$0xff]
          %v4753 = vld [vmem:[%s3 + $0x8c8] sm:$0xff]
          %v4754 = vld [vmem:[%s3 + $0x8d0] sm:$0xff]
          %v4755 = vld [vmem:[%s3 + $0x8d8] sm:$0xff]
          %v4756 = vld [vmem:[%s3 + $0x8e0] sm:$0xff]
          %v4757 = vld [vmem:[%s3 + $0x8e8] sm:$0xff]
          %v4758 = vld [vmem:[%s3 + $0x8f0] sm:$0xff]
          %v4759 = vld [vmem:[%s3 + $0x8f8] sm:$0xff]
          %v4760 = vld [vmem:[%s3 + $0x900] sm:$0xff]
          %v4761 = vld [vmem:[%s3 + $0x908] sm:$0xff]
          %v4762 = vld [vmem:[%s3 + $0x910] sm:$0xff]
          %v4763 = vld [vmem:[%s3 + $0x918] sm:$0xff]
          %v4764 = vld [vmem:[%s3 + $0x920] sm:$0xff]
          %v4765 = vld [vmem:[%s3 + $0x928] sm:$0xff]
          %v4766 = vld [vmem:[%s3 + $0x930] sm:$0xff]
          %v4767 = vld [vmem:[%s3 + $0x938] sm:$0xff]
          %v4768 = vld [vmem:[%s3 + $0x940] sm:$0xff]
          %v4769 = vld [vmem:[%s3 + $0x948] sm:$0xff]
          %v4770 = vld [vmem:[%s3 + $0x950] sm:$0xff]
          %v4771 = vld [vmem:[%s3 + $0x958] sm:$0xff]
          %v4772 = vld [vmem:[%s3 + $0x960] sm:$0xff]
          %v4773 = vld [vmem:[%s3 + $0x968] sm:$0xff]
          %v4774 = vld [vmem:[%s3 + $0x970] sm:$0xff]
          %v4775 = vld [vmem:[%s3 + $0x978] sm:$0xff]
          %v4776 = vld [vmem:[%s3 + $0x980] sm:$0xff]
          %v4777 = vld [vmem:[%s3 + $0x988] sm:$0xff]
          %v4778 = vld [vmem:[%s3 + $0x990] sm:$0xff]
          %v4779 = vld [vmem:[%s3 + $0x998] sm:$0xff]
          %v4780 = vld [vmem:[%s3 + $0x9a0] sm:$0xff]
          %v4781 = vld [vmem:[%s3 + $0x9a8] sm:$0xff]
          %v4782 = vld [vmem:[%s3 + $0x9b0] sm:$0xff]
          %v4783 = vld [vmem:[%s3 + $0x9b8] sm:$0xff]
          %v4784 = vld [vmem:[%s3 + $0x9c0] sm:$0xff]
          %v4785 = vld [vmem:[%s3 + $0x9c8] sm:$0xff]
          %v4786 = vld [vmem:[%s3 + $0x9d0] sm:$0xff]
          %v4787 = vld [vmem:[%s3 + $0x9d8] sm:$0xff]
          %v4788 = vld [vmem:[%s3 + $0x9e0] sm:$0xff]
          %v4789 = vld [vmem:[%s3 + $0x9e8] sm:$0xff]
          %v4790 = vld [vmem:[%s3 + $0x9f0] sm:$0xff]
          %v4791 = vld [vmem:[%s3 + $0x9f8] sm:$0xff]
          %v4792 = vld [vmem:[%s3 + $0xa00] sm:$0xff]
          %v4793 = vld [vmem:[%s3 + $0xa08] sm:$0xff]
          %v4794 = vld [vmem:[%s3 + $0xa10] sm:$0xff]
          %v4795 = vld [vmem:[%s3 + $0xa18] sm:$0xff]
          %v4796 = vld [vmem:[%s3 + $0xa20] sm:$0xff]
          %v4797 = vld [vmem:[%s3 + $0xa28] sm:$0xff]
          %v4798 = vld [vmem:[%s3 + $0xa30] sm:$0xff]
          %v4799 = vld [vmem:[%s3 + $0xa38] sm:$0xff]
          %v4800 = vld [vmem:[%s3 + $0xa40] sm:$0xff]
          %v4801 = vld [vmem:[%s3 + $0xa48] sm:$0xff]
          %v4802 = vld [vmem:[%s3 + $0xa50] sm:$0xff]
          %v4803 = vld [vmem:[%s3 + $0xa58] sm:$0xff]
          %v4804 = vld [vmem:[%s3 + $0xa60] sm:$0xff]
          %v4805 = vld [vmem:[%s3 + $0xa68] sm:$0xff]
          %v4806 = vld [vmem:[%s3 + $0xa70] sm:$0xff]
          %v4807 = vld [vmem:[%s3 + $0xa78] sm:$0xff]
          %v4808 = vld [vmem:[%s3 + $0xa80] sm:$0xff]
          %v4809 = vld [vmem:[%s3 + $0xa88] sm:$0xff]
          %v4810 = vld [vmem:[%s3 + $0xa90] sm:$0xff]
          %v4811 = vld [vmem:[%s3 + $0xa98] sm:$0xff]
          %v4812 = vld [vmem:[%s3 + $0xaa0] sm:$0xff]
          %v4813 = vld [vmem:[%s3 + $0xaa8] sm:$0xff]
          %v4814 = vld [vmem:[%s3 + $0xab0] sm:$0xff]
          %v4815 = vld [vmem:[%s3 + $0xab8] sm:$0xff]
          %v4816 = vld [vmem:[%s3 + $0xac0] sm:$0xff]
          %v4817 = vld [vmem:[%s3 + $0xac8] sm:$0xff]
          %v4818 = vld [vmem:[%s3 + $0xad0] sm:$0xff]
          %v4819 = vld [vmem:[%s3 + $0xad8] sm:$0xff]
          %v4820 = vld [vmem:[%s3 + $0xae0] sm:$0xff]
          %v4821 = vld [vmem:[%s3 + $0xae8] sm:$0xff]
          %v4822 = vld [vmem:[%s3 + $0xaf0] sm:$0xff]
          %v4823 = vld [vmem:[%s3 + $0xaf8] sm:$0xff]
          %v4824 = vld [vmem:[%s3 + $0xb00] sm:$0xff]
          %v4825 = vld [vmem:[%s3 + $0xb08] sm:$0xff]
          %v4826 = vld [vmem:[%s3 + $0xb10] sm:$0xff]
          %v4827 = vld [vmem:[%s3 + $0xb18] sm:$0xff]
          %v4828 = vld [vmem:[%s3 + $0xb20] sm:$0xff]
          %v4829 = vld [vmem:[%s3 + $0xb28] sm:$0xff]
          %v4830 = vld [vmem:[%s3 + $0xb30] sm:$0xff]
          %v4831 = vld [vmem:[%s3 + $0xb38] sm:$0xff]
          %v4832 = vld [vmem:[%s3 + $0xb40] sm:$0xff]
          %v4833 = vld [vmem:[%s3 + $0xb48] sm:$0xff]
          %v4834 = vld [vmem:[%s3 + $0xb50] sm:$0xff]
          %v4835 = vld [vmem:[%s3 + $0xb58] sm:$0xff]
          %v4836 = vld [vmem:[%s3 + $0xb60] sm:$0xff]
          %v4837 = vld [vmem:[%s3 + $0xb68] sm:$0xff]
          %v4838 = vld [vmem:[%s3 + $0xb70] sm:$0xff]
          %v4839 = vld [vmem:[%s3 + $0xb78] sm:$0xff]
          %v4840 = vld [vmem:[%s3 + $0xb80] sm:$0xff]
          %v4841 = vld [vmem:[%s3 + $0xb88] sm:$0xff]
          %v4842 = vld [vmem:[%s3 + $0xb90] sm:$0xff]
          %v4843 = vld [vmem:[%s3 + $0xb98] sm:$0xff]
          %v4844 = vld [vmem:[%s3 + $0xba0] sm:$0xff]
          %v4845 = vld [vmem:[%s3 + $0xba8] sm:$0xff]
          %v4846 = vld [vmem:[%s3 + $0xbb0] sm:$0xff]
          %v4847 = vld [vmem:[%s3 + $0xbb8] sm:$0xff]
          %v4848 = vld [vmem:[%s3 + $0xbc0] sm:$0xff]
          %v4849 = vld [vmem:[%s3 + $0xbc8] sm:$0xff]
          %v4850 = vld [vmem:[%s3 + $0xbd0] sm:$0xff]
          %v4851 = vld [vmem:[%s3 + $0xbd8] sm:$0xff]
          %v4852 = vld [vmem:[%s3 + $0xbe0] sm:$0xff]
          %v4853 = vld [vmem:[%s3 + $0xbe8] sm:$0xff]
          %v4854 = vld [vmem:[%s3 + $0xbf0] sm:$0xff]
          %v4855 = vld [vmem:[%s3 + $0xbf8] sm:$0xff]
          %v4856 = vld [vmem:[%s3 + $0xc00] sm:$0xff]
          %v4857 = vld [vmem:[%s3 + $0xc08] sm:$0xff]
          %v4858 = vld [vmem:[%s3 + $0xc10] sm:$0xff]
          %v4859 = vld [vmem:[%s3 + $0xc18] sm:$0xff]
          %v4860 = vld [vmem:[%s3 + $0xc20] sm:$0xff]
          %v4861 = vld [vmem:[%s3 + $0xc28] sm:$0xff]
          %v4862 = vld [vmem:[%s3 + $0xc30] sm:$0xff]
          %v4863 = vld [vmem:[%s3 + $0xc38] sm:$0xff]
          %v4864 = vld [vmem:[%s3 + $0xc40] sm:$0xff]
          %v4865 = vld [vmem:[%s3 + $0xc48] sm:$0xff]
          %v4866 = vld [vmem:[%s3 + $0xc50] sm:$0xff]
          %v4867 = vld [vmem:[%s3 + $0xc58] sm:$0xff]
          %v4868 = vld [vmem:[%s3 + $0xc60] sm:$0xff]
          %v4869 = vld [vmem:[%s3 + $0xc68] sm:$0xff]
          %v4870 = vld [vmem:[%s3 + $0xc70] sm:$0xff]
          %v4871 = vld [vmem:[%s3 + $0xc78] sm:$0xff]
          %v4872 = vld [vmem:[%s3 + $0xc80] sm:$0xff]
          %v4873 = vld [vmem:[%s3 + $0xc88] sm:$0xff]
          %v4874 = vld [vmem:[%s3 + $0xc90] sm:$0xff]
          %v4875 = vld [vmem:[%s3 + $0xc98] sm:$0xff]
          %v4876 = vld [vmem:[%s3 + $0xca0] sm:$0xff]
          %v4877 = vld [vmem:[%s3 + $0xca8] sm:$0xff]
          %v4878 = vld [vmem:[%s3 + $0xcb0] sm:$0xff]
          %v4879 = vld [vmem:[%s3 + $0xcb8] sm:$0xff]
          %v4880 = vld [vmem:[%s3 + $0xcc0] sm:$0xff]
          %v4881 = vld [vmem:[%s3 + $0xcc8] sm:$0xff]
          %v4882 = vld [vmem:[%s3 + $0xcd0] sm:$0xff]
          %v4883 = vld [vmem:[%s3 + $0xcd8] sm:$0xff]
          %v4884 = vld [vmem:[%s3 + $0xce0] sm:$0xff]
          %v4885 = vld [vmem:[%s3 + $0xce8] sm:$0xff]
          %v4886 = vld [vmem:[%s3 + $0xcf0] sm:$0xff]
          %v4887 = vld [vmem:[%s3 + $0xcf8] sm:$0xff]
          %v4888 = vld [vmem:[%s3 + $0xd00] sm:$0xff]
          %v4889 = vld [vmem:[%s3 + $0xd08] sm:$0xff]
          %v4890 = vld [vmem:[%s3 + $0xd10] sm:$0xff]
          %v4891 = vld [vmem:[%s3 + $0xd18] sm:$0xff]
          %v4892 = vld [vmem:[%s3 + $0xd20] sm:$0xff]
          %v4893 = vld [vmem:[%s3 + $0xd28] sm:$0xff]
          %v4894 = vld [vmem:[%s3 + $0xd30] sm:$0xff]
          %v4895 = vld [vmem:[%s3 + $0xd38] sm:$0xff]
          %v4896 = vld [vmem:[%s3 + $0xd40] sm:$0xff]
          %v4897 = vld [vmem:[%s3 + $0xd48] sm:$0xff]
          %v4898 = vld [vmem:[%s3 + $0xd50] sm:$0xff]
          %v4899 = vld [vmem:[%s3 + $0xd58] sm:$0xff]
          %v4900 = vld [vmem:[%s3 + $0xd60] sm:$0xff]
          %v4901 = vld [vmem:[%s3 + $0xd68] sm:$0xff]
          %v4902 = vld [vmem:[%s3 + $0xd70] sm:$0xff]
          %v4903 = vld [vmem:[%s3 + $0xd78] sm:$0xff]
          %v4904 = vld [vmem:[%s3 + $0xd80] sm:$0xff]
          %v4905 = vld [vmem:[%s3 + $0xd88] sm:$0xff]
          %v4906 = vld [vmem:[%s3 + $0xd90] sm:$0xff]
          %v4907 = vld [vmem:[%s3 + $0xd98] sm:$0xff]
          %v4908 = vld [vmem:[%s3 + $0xda0] sm:$0xff]
          %v4909 = vld [vmem:[%s3 + $0xda8] sm:$0xff]
          %v4910 = vld [vmem:[%s3 + $0xdb0] sm:$0xff]
          %v4911 = vld [vmem:[%s3 + $0xdb8] sm:$0xff]
          %v4912 = vld [vmem:[%s3 + $0xdc0] sm:$0xff]
          %v4913 = vld [vmem:[%s3 + $0xdc8] sm:$0xff]
          %v4914 = vld [vmem:[%s3 + $0xdd0] sm:$0xff]
          %v4915 = vld [vmem:[%s3 + $0xdd8] sm:$0xff]
          %v4916 = vld [vmem:[%s3 + $0xde0] sm:$0xff]
          %v4917 = vld [vmem:[%s3 + $0xde8] sm:$0xff]
          %v4918 = vld [vmem:[%s3 + $0xdf0] sm:$0xff]
          %v4919 = vld [vmem:[%s3 + $0xdf8] sm:$0xff]
          %v4920 = vld [vmem:[%s3 + $0xe00] sm:$0xff]
          %v4921 = vld [vmem:[%s3 + $0xe08] sm:$0xff]
          %v4922 = vld [vmem:[%s3 + $0xe10] sm:$0xff]
          %v4923 = vld [vmem:[%s3 + $0xe18] sm:$0xff]
          %v4924 = vld [vmem:[%s3 + $0xe20] sm:$0xff]
          %v4925 = vld [vmem:[%s3 + $0xe28] sm:$0xff]
          %v4926 = vld [vmem:[%s3 + $0xe30] sm:$0xff]
          %v4927 = vld [vmem:[%s3 + $0xe38] sm:$0xff]
          %v4928 = vld [vmem:[%s3 + $0xe40] sm:$0xff]
          %v4929 = vld [vmem:[%s3 + $0xe48] sm:$0xff]
          %v4930 = vld [vmem:[%s3 + $0xe50] sm:$0xff]
          %v4931 = vld [vmem:[%s3 + $0xe58] sm:$0xff]
          %v4932 = vld [vmem:[%s3 + $0xe60] sm:$0xff]
          %v4933 = vld [vmem:[%s3 + $0xe68] sm:$0xff]
          %v4934 = vld [vmem:[%s3 + $0xe70] sm:$0xff]
          %v4935 = vld [vmem:[%s3 + $0xe78] sm:$0xff]
          %v4936 = vld [vmem:[%s3 + $0xe80] sm:$0xff]
          %v4937 = vld [vmem:[%s3 + $0xe88] sm:$0xff]
          %v4938 = vld [vmem:[%s3 + $0xe90] sm:$0xff]
          %v4939 = vld [vmem:[%s3 + $0xe98] sm:$0xff]
          %v4940 = vld [vmem:[%s3 + $0xea0] sm:$0xff]
          %v4941 = vld [vmem:[%s3 + $0xea8] sm:$0xff]
          %v4942 = vld [vmem:[%s3 + $0xeb0] sm:$0xff]
          %v4943 = vld [vmem:[%s3 + $0xeb8] sm:$0xff]
          %v4944 = vld [vmem:[%s3 + $0xec0] sm:$0xff]
          %v4945 = vld [vmem:[%s3 + $0xec8] sm:$0xff]
          %v4946 = vld [vmem:[%s3 + $0xed0] sm:$0xff]
          %v4947 = vld [vmem:[%s3 + $0xed8] sm:$0xff]
          %v4948 = vld [vmem:[%s3 + $0xee0] sm:$0xff]
          %v4949 = vld [vmem:[%s3 + $0xee8] sm:$0xff]
          %v4950 = vld [vmem:[%s3 + $0xef0] sm:$0xff]
          %v4951 = vld [vmem:[%s3 + $0xef8] sm:$0xff]
          %v4952 = vld [vmem:[%s3 + $0xf00] sm:$0xff]
          %v4953 = vld [vmem:[%s3 + $0xf08] sm:$0xff]
          %v4954 = vld [vmem:[%s3 + $0xf10] sm:$0xff]
          %v4955 = vld [vmem:[%s3 + $0xf18] sm:$0xff]
          %v4956 = vld [vmem:[%s3 + $0xf20] sm:$0xff]
          %v4957 = vld [vmem:[%s3 + $0xf28] sm:$0xff]
          %v4958 = vld [vmem:[%s3 + $0xf30] sm:$0xff]
          %v4959 = vld [vmem:[%s3 + $0xf38] sm:$0xff]
          %v4960 = vld [vmem:[%s3 + $0xf40] sm:$0xff]
          %v4961 = vld [vmem:[%s3 + $0xf48] sm:$0xff]
          %v4962 = vld [vmem:[%s3 + $0xf50] sm:$0xff]
          %v4963 = vld [vmem:[%s3 + $0xf58] sm:$0xff]
          %v4964 = vld [vmem:[%s3 + $0xf60] sm:$0xff]
          %v4965 = vld [vmem:[%s3 + $0xf68] sm:$0xff]
          %v4966 = vld [vmem:[%s3 + $0xf70] sm:$0xff]
          %v4967 = vld [vmem:[%s3 + $0xf78] sm:$0xff]
          %v4968 = vld [vmem:[%s3 + $0xf80] sm:$0xff]
          %v4969 = vld [vmem:[%s3 + $0xf88] sm:$0xff]
          %v4970 = vld [vmem:[%s3 + $0xf90] sm:$0xff]
          %v4971 = vld [vmem:[%s3 + $0xf98] sm:$0xff]
          %v4972 = vld [vmem:[%s3 + $0xfa0] sm:$0xff]
          %v4973 = vld [vmem:[%s3 + $0xfa8] sm:$0xff]
          %v4974 = vld [vmem:[%s3 + $0xfb0] sm:$0xff]
          %v4975 = vld [vmem:[%s3 + $0xfb8] sm:$0xff]
          %v4976 = vld [vmem:[%s3 + $0xfc0] sm:$0xff]
          %v4977 = vld [vmem:[%s3 + $0xfc8] sm:$0xff]
          %v4978 = vld [vmem:[%s3 + $0xfd0] sm:$0xff]
          %v4979 = vld [vmem:[%s3 + $0xfd8] sm:$0xff]
          %v4980 = vld [vmem:[%s3 + $0xfe0] sm:$0xff]
          %v4981 = vld [vmem:[%s3 + $0xfe8] sm:$0xff]
          %v4982 = vld [vmem:[%s3 + $0xff0] sm:$0xff]
          %v4983 = vld [vmem:[%s3 + $0xff8] sm:$0xff]
          %v4984 = vld [vmem:[%s4] sm:$0xff]
          %v4986 = vperm.slane %v4984, 0
          %v4987 = vperm.slane %v4984, 1
          %v4988 = vperm.slane %v4984, 2
          %v4989 = vperm.slane %v4984, 3
          %v4990 = vperm.slane %v4984, 4
          %v4991 = vperm.slane %v4984, 5
          %v4992 = vperm.slane %v4984, 6
          %v4993 = vperm.slane %v4984, 7
          %v5514 = vunpack.c.l.b16 %v4472
          %v5515 = vunpack.c.h.b16 %v4472
          %v5516 = vunpack.c.l.b16 %v4473
          %v5517 = vunpack.c.h.b16 %v4473
          %v5518 = vunpack.c.l.b16 %v4474
          %v5519 = vunpack.c.h.b16 %v4474
          %v5520 = vunpack.c.l.b16 %v4475
          %v5521 = vunpack.c.h.b16 %v4475
          %v5522 = vunpack.c.l.b16 %v4476
          %v5523 = vunpack.c.h.b16 %v4476
          %v5524 = vunpack.c.l.b16 %v4477
          %v5525 = vunpack.c.h.b16 %v4477
          %v5526 = vunpack.c.l.b16 %v4478
          %v5527 = vunpack.c.h.b16 %v4478
          %v5528 = vunpack.c.l.b16 %v4479
          %v5529 = vunpack.c.h.b16 %v4479
          %v5530 = vunpack.c.l.b16 %v4480
          %v5531 = vunpack.c.h.b16 %v4480
          %v5532 = vunpack.c.l.b16 %v4481
          %v5533 = vunpack.c.h.b16 %v4481
          %v5534 = vunpack.c.l.b16 %v4482
          %v5535 = vunpack.c.h.b16 %v4482
          %v5536 = vunpack.c.l.b16 %v4483
          %v5537 = vunpack.c.h.b16 %v4483
          %v5538 = vunpack.c.l.b16 %v4484
          %v5539 = vunpack.c.h.b16 %v4484
          %v5540 = vunpack.c.l.b16 %v4485
          %v5541 = vunpack.c.h.b16 %v4485
          %v5542 = vunpack.c.l.b16 %v4486
          %v5543 = vunpack.c.h.b16 %v4486
          %v5544 = vunpack.c.l.b16 %v4487
          %v5545 = vunpack.c.h.b16 %v4487
          %v5546 = vunpack.c.l.b16 %v4488
          %v5547 = vunpack.c.h.b16 %v4488
          %v5548 = vunpack.c.l.b16 %v4489
          %v5549 = vunpack.c.h.b16 %v4489
          %v5550 = vunpack.c.l.b16 %v4490
          %v5551 = vunpack.c.h.b16 %v4490
          %v5552 = vunpack.c.l.b16 %v4491
          %v5553 = vunpack.c.h.b16 %v4491
          %v5554 = vunpack.c.l.b16 %v4492
          %v5555 = vunpack.c.h.b16 %v4492
          %v5556 = vunpack.c.l.b16 %v4493
          %v5557 = vunpack.c.h.b16 %v4493
          %v5558 = vunpack.c.l.b16 %v4494
          %v5559 = vunpack.c.h.b16 %v4494
          %v5560 = vunpack.c.l.b16 %v4495
          %v5561 = vunpack.c.h.b16 %v4495
          %v5562 = vunpack.c.l.b16 %v4496
          %v5563 = vunpack.c.h.b16 %v4496
          %v5564 = vunpack.c.l.b16 %v4497
          %v5565 = vunpack.c.h.b16 %v4497
          %v5566 = vunpack.c.l.b16 %v4498
          %v5567 = vunpack.c.h.b16 %v4498
          %v5568 = vunpack.c.l.b16 %v4499
          %v5569 = vunpack.c.h.b16 %v4499
          %v5570 = vunpack.c.l.b16 %v4500
          %v5571 = vunpack.c.h.b16 %v4500
          %v5572 = vunpack.c.l.b16 %v4501
          %v5573 = vunpack.c.h.b16 %v4501
          %v5574 = vunpack.c.l.b16 %v4502
          %v5575 = vunpack.c.h.b16 %v4502
          %v5576 = vunpack.c.l.b16 %v4503
          %v5577 = vunpack.c.h.b16 %v4503
          %v5578 = vunpack.c.l.b16 %v4504
          %v5579 = vunpack.c.h.b16 %v4504
          %v5580 = vunpack.c.l.b16 %v4505
          %v5581 = vunpack.c.h.b16 %v4505
          %v5582 = vunpack.c.l.b16 %v4506
          %v5583 = vunpack.c.h.b16 %v4506
          %v5584 = vunpack.c.l.b16 %v4507
          %v5585 = vunpack.c.h.b16 %v4507
          %v5586 = vunpack.c.l.b16 %v4508
          %v5587 = vunpack.c.h.b16 %v4508
          %v5588 = vunpack.c.l.b16 %v4509
          %v5589 = vunpack.c.h.b16 %v4509
          %v5590 = vunpack.c.l.b16 %v4510
          %v5591 = vunpack.c.h.b16 %v4510
          %v5592 = vunpack.c.l.b16 %v4511
          %v5593 = vunpack.c.h.b16 %v4511
          %v5594 = vunpack.c.l.b16 %v4512
          %v5595 = vunpack.c.h.b16 %v4512
          %v5596 = vunpack.c.l.b16 %v4513
          %v5597 = vunpack.c.h.b16 %v4513
          %v5598 = vunpack.c.l.b16 %v4514
          %v5599 = vunpack.c.h.b16 %v4514
          %v5600 = vunpack.c.l.b16 %v4515
          %v5601 = vunpack.c.h.b16 %v4515
          %v5602 = vunpack.c.l.b16 %v4516
          %v5603 = vunpack.c.h.b16 %v4516
          %v5604 = vunpack.c.l.b16 %v4517
          %v5605 = vunpack.c.h.b16 %v4517
          %v5606 = vunpack.c.l.b16 %v4518
          %v5607 = vunpack.c.h.b16 %v4518
          %v5608 = vunpack.c.l.b16 %v4519
          %v5609 = vunpack.c.h.b16 %v4519
          %v5610 = vunpack.c.l.b16 %v4520
          %v5611 = vunpack.c.h.b16 %v4520
          %v5612 = vunpack.c.l.b16 %v4521
          %v5613 = vunpack.c.h.b16 %v4521
          %v5614 = vunpack.c.l.b16 %v4522
          %v5615 = vunpack.c.h.b16 %v4522
          %v5616 = vunpack.c.l.b16 %v4523
          %v5617 = vunpack.c.h.b16 %v4523
          %v5618 = vunpack.c.l.b16 %v4524
          %v5619 = vunpack.c.h.b16 %v4524
          %v5620 = vunpack.c.l.b16 %v4525
          %v5621 = vunpack.c.h.b16 %v4525
          %v5622 = vunpack.c.l.b16 %v4526
          %v5623 = vunpack.c.h.b16 %v4526
          %v5624 = vunpack.c.l.b16 %v4527
          %v5625 = vunpack.c.h.b16 %v4527
          %v5626 = vunpack.c.l.b16 %v4528
          %v5627 = vunpack.c.h.b16 %v4528
          %v5628 = vunpack.c.l.b16 %v4529
          %v5629 = vunpack.c.h.b16 %v4529
          %v5630 = vunpack.c.l.b16 %v4530
          %v5631 = vunpack.c.h.b16 %v4530
          %v5632 = vunpack.c.l.b16 %v4531
          %v5633 = vunpack.c.h.b16 %v4531
          %v5634 = vunpack.c.l.b16 %v4532
          %v5635 = vunpack.c.h.b16 %v4532
          %v5636 = vunpack.c.l.b16 %v4533
          %v5637 = vunpack.c.h.b16 %v4533
          %v5638 = vunpack.c.l.b16 %v4534
          %v5639 = vunpack.c.h.b16 %v4534
          %v5640 = vunpack.c.l.b16 %v4535
          %v5641 = vunpack.c.h.b16 %v4535
          %v5642 = vunpack.c.l.b16 %v4536
          %v5643 = vunpack.c.h.b16 %v4536
          %v5644 = vunpack.c.l.b16 %v4537
          %v5645 = vunpack.c.h.b16 %v4537
          %v5646 = vunpack.c.l.b16 %v4538
          %v5647 = vunpack.c.h.b16 %v4538
          %v5648 = vunpack.c.l.b16 %v4539
          %v5649 = vunpack.c.h.b16 %v4539
          %v5650 = vunpack.c.l.b16 %v4540
          %v5651 = vunpack.c.h.b16 %v4540
          %v5652 = vunpack.c.l.b16 %v4541
          %v5653 = vunpack.c.h.b16 %v4541
          %v5654 = vunpack.c.l.b16 %v4542
          %v5655 = vunpack.c.h.b16 %v4542
          %v5656 = vunpack.c.l.b16 %v4543
          %v5657 = vunpack.c.h.b16 %v4543
          %v5658 = vunpack.c.l.b16 %v4544
          %v5659 = vunpack.c.h.b16 %v4544
          %v5660 = vunpack.c.l.b16 %v4545
          %v5661 = vunpack.c.h.b16 %v4545
          %v5662 = vunpack.c.l.b16 %v4546
          %v5663 = vunpack.c.h.b16 %v4546
          %v5664 = vunpack.c.l.b16 %v4547
          %v5665 = vunpack.c.h.b16 %v4547
          %v5666 = vunpack.c.l.b16 %v4548
          %v5667 = vunpack.c.h.b16 %v4548
          %v5668 = vunpack.c.l.b16 %v4549
          %v5669 = vunpack.c.h.b16 %v4549
          %v5670 = vunpack.c.l.b16 %v4550
          %v5671 = vunpack.c.h.b16 %v4550
          %v5672 = vunpack.c.l.b16 %v4551
          %v5673 = vunpack.c.h.b16 %v4551
          %v5674 = vunpack.c.l.b16 %v4552
          %v5675 = vunpack.c.h.b16 %v4552
          %v5676 = vunpack.c.l.b16 %v4553
          %v5677 = vunpack.c.h.b16 %v4553
          %v5678 = vunpack.c.l.b16 %v4554
          %v5679 = vunpack.c.h.b16 %v4554
          %v5680 = vunpack.c.l.b16 %v4555
          %v5681 = vunpack.c.h.b16 %v4555
          %v5682 = vunpack.c.l.b16 %v4556
          %v5683 = vunpack.c.h.b16 %v4556
          %v5684 = vunpack.c.l.b16 %v4557
          %v5685 = vunpack.c.h.b16 %v4557
          %v5686 = vunpack.c.l.b16 %v4558
          %v5687 = vunpack.c.h.b16 %v4558
          %v5688 = vunpack.c.l.b16 %v4559
          %v5689 = vunpack.c.h.b16 %v4559
          %v5690 = vunpack.c.l.b16 %v4560
          %v5691 = vunpack.c.h.b16 %v4560
          %v5692 = vunpack.c.l.b16 %v4561
          %v5693 = vunpack.c.h.b16 %v4561
          %v5694 = vunpack.c.l.b16 %v4562
          %v5695 = vunpack.c.h.b16 %v4562
          %v5696 = vunpack.c.l.b16 %v4563
          %v5697 = vunpack.c.h.b16 %v4563
          %v5698 = vunpack.c.l.b16 %v4564
          %v5699 = vunpack.c.h.b16 %v4564
          %v5700 = vunpack.c.l.b16 %v4565
          %v5701 = vunpack.c.h.b16 %v4565
          %v5702 = vunpack.c.l.b16 %v4566
          %v5703 = vunpack.c.h.b16 %v4566
          %v5704 = vunpack.c.l.b16 %v4567
          %v5705 = vunpack.c.h.b16 %v4567
          %v5706 = vunpack.c.l.b16 %v4568
          %v5707 = vunpack.c.h.b16 %v4568
          %v5708 = vunpack.c.l.b16 %v4569
          %v5709 = vunpack.c.h.b16 %v4569
          %v5710 = vunpack.c.l.b16 %v4570
          %v5711 = vunpack.c.h.b16 %v4570
          %v5712 = vunpack.c.l.b16 %v4571
          %v5713 = vunpack.c.h.b16 %v4571
          %v5714 = vunpack.c.l.b16 %v4572
          %v5715 = vunpack.c.h.b16 %v4572
          %v5716 = vunpack.c.l.b16 %v4573
          %v5717 = vunpack.c.h.b16 %v4573
          %v5718 = vunpack.c.l.b16 %v4574
          %v5719 = vunpack.c.h.b16 %v4574
          %v5720 = vunpack.c.l.b16 %v4575
          %v5721 = vunpack.c.h.b16 %v4575
          %v5722 = vunpack.c.l.b16 %v4576
          %v5723 = vunpack.c.h.b16 %v4576
          %v5724 = vunpack.c.l.b16 %v4577
          %v5725 = vunpack.c.h.b16 %v4577
          %v5726 = vunpack.c.l.b16 %v4578
          %v5727 = vunpack.c.h.b16 %v4578
          %v5728 = vunpack.c.l.b16 %v4579
          %v5729 = vunpack.c.h.b16 %v4579
          %v5730 = vunpack.c.l.b16 %v4580
          %v5731 = vunpack.c.h.b16 %v4580
          %v5732 = vunpack.c.l.b16 %v4581
          %v5733 = vunpack.c.h.b16 %v4581
          %v5734 = vunpack.c.l.b16 %v4582
          %v5735 = vunpack.c.h.b16 %v4582
          %v5736 = vunpack.c.l.b16 %v4583
          %v5737 = vunpack.c.h.b16 %v4583
          %v5738 = vunpack.c.l.b16 %v4584
          %v5739 = vunpack.c.h.b16 %v4584
          %v5740 = vunpack.c.l.b16 %v4585
          %v5741 = vunpack.c.h.b16 %v4585
          %v5742 = vunpack.c.l.b16 %v4586
          %v5743 = vunpack.c.h.b16 %v4586
          %v5744 = vunpack.c.l.b16 %v4587
          %v5745 = vunpack.c.h.b16 %v4587
          %v5746 = vunpack.c.l.b16 %v4588
          %v5747 = vunpack.c.h.b16 %v4588
          %v5748 = vunpack.c.l.b16 %v4589
          %v5749 = vunpack.c.h.b16 %v4589
          %v5750 = vunpack.c.l.b16 %v4590
          %v5751 = vunpack.c.h.b16 %v4590
          %v5752 = vunpack.c.l.b16 %v4591
          %v5753 = vunpack.c.h.b16 %v4591
          %v5754 = vunpack.c.l.b16 %v4592
          %v5755 = vunpack.c.h.b16 %v4592
          %v5756 = vunpack.c.l.b16 %v4593
          %v5757 = vunpack.c.h.b16 %v4593
          %v5758 = vunpack.c.l.b16 %v4594
          %v5759 = vunpack.c.h.b16 %v4594
          %v5760 = vunpack.c.l.b16 %v4595
          %v5761 = vunpack.c.h.b16 %v4595
          %v5762 = vunpack.c.l.b16 %v4596
          %v5763 = vunpack.c.h.b16 %v4596
          %v5764 = vunpack.c.l.b16 %v4597
          %v5765 = vunpack.c.h.b16 %v4597
          %v5766 = vunpack.c.l.b16 %v4598
          %v5767 = vunpack.c.h.b16 %v4598
          %v5768 = vunpack.c.l.b16 %v4599
          %v5769 = vunpack.c.h.b16 %v4599
          %v5770 = vunpack.c.l.b16 %v4600
          %v5771 = vunpack.c.h.b16 %v4600
          %v5772 = vunpack.c.l.b16 %v4601
          %v5773 = vunpack.c.h.b16 %v4601
          %v5774 = vunpack.c.l.b16 %v4602
          %v5775 = vunpack.c.h.b16 %v4602
          %v5776 = vunpack.c.l.b16 %v4603
          %v5777 = vunpack.c.h.b16 %v4603
          %v5778 = vunpack.c.l.b16 %v4604
          %v5779 = vunpack.c.h.b16 %v4604
          %v5780 = vunpack.c.l.b16 %v4605
          %v5781 = vunpack.c.h.b16 %v4605
          %v5782 = vunpack.c.l.b16 %v4606
          %v5783 = vunpack.c.h.b16 %v4606
          %v5784 = vunpack.c.l.b16 %v4607
          %v5785 = vunpack.c.h.b16 %v4607
          %v5786 = vunpack.c.l.b16 %v4608
          %v5787 = vunpack.c.h.b16 %v4608
          %v5788 = vunpack.c.l.b16 %v4609
          %v5789 = vunpack.c.h.b16 %v4609
          %v5790 = vunpack.c.l.b16 %v4610
          %v5791 = vunpack.c.h.b16 %v4610
          %v5792 = vunpack.c.l.b16 %v4611
          %v5793 = vunpack.c.h.b16 %v4611
          %v5794 = vunpack.c.l.b16 %v4612
          %v5795 = vunpack.c.h.b16 %v4612
          %v5796 = vunpack.c.l.b16 %v4613
          %v5797 = vunpack.c.h.b16 %v4613
          %v5798 = vunpack.c.l.b16 %v4614
          %v5799 = vunpack.c.h.b16 %v4614
          %v5800 = vunpack.c.l.b16 %v4615
          %v5801 = vunpack.c.h.b16 %v4615
          %v5802 = vunpack.c.l.b16 %v4616
          %v5803 = vunpack.c.h.b16 %v4616
          %v5804 = vunpack.c.l.b16 %v4617
          %v5805 = vunpack.c.h.b16 %v4617
          %v5806 = vunpack.c.l.b16 %v4618
          %v5807 = vunpack.c.h.b16 %v4618
          %v5808 = vunpack.c.l.b16 %v4619
          %v5809 = vunpack.c.h.b16 %v4619
          %v5810 = vunpack.c.l.b16 %v4620
          %v5811 = vunpack.c.h.b16 %v4620
          %v5812 = vunpack.c.l.b16 %v4621
          %v5813 = vunpack.c.h.b16 %v4621
          %v5814 = vunpack.c.l.b16 %v4622
          %v5815 = vunpack.c.h.b16 %v4622
          %v5816 = vunpack.c.l.b16 %v4623
          %v5817 = vunpack.c.h.b16 %v4623
          %v5818 = vunpack.c.l.b16 %v4624
          %v5819 = vunpack.c.h.b16 %v4624
          %v5820 = vunpack.c.l.b16 %v4625
          %v5821 = vunpack.c.h.b16 %v4625
          %v5822 = vunpack.c.l.b16 %v4626
          %v5823 = vunpack.c.h.b16 %v4626
          %v5824 = vunpack.c.l.b16 %v4627
          %v5825 = vunpack.c.h.b16 %v4627
          %v5826 = vunpack.c.l.b16 %v4628
          %v5827 = vunpack.c.h.b16 %v4628
          %v5828 = vunpack.c.l.b16 %v4629
          %v5829 = vunpack.c.h.b16 %v4629
          %v5830 = vunpack.c.l.b16 %v4630
          %v5831 = vunpack.c.h.b16 %v4630
          %v5832 = vunpack.c.l.b16 %v4631
          %v5833 = vunpack.c.h.b16 %v4631
          %v5834 = vunpack.c.l.b16 %v4632
          %v5835 = vunpack.c.h.b16 %v4632
          %v5836 = vunpack.c.l.b16 %v4633
          %v5837 = vunpack.c.h.b16 %v4633
          %v5838 = vunpack.c.l.b16 %v4634
          %v5839 = vunpack.c.h.b16 %v4634
          %v5840 = vunpack.c.l.b16 %v4635
          %v5841 = vunpack.c.h.b16 %v4635
          %v5842 = vunpack.c.l.b16 %v4636
          %v5843 = vunpack.c.h.b16 %v4636
          %v5844 = vunpack.c.l.b16 %v4637
          %v5845 = vunpack.c.h.b16 %v4637
          %v5846 = vunpack.c.l.b16 %v4638
          %v5847 = vunpack.c.h.b16 %v4638
          %v5848 = vunpack.c.l.b16 %v4639
          %v5849 = vunpack.c.h.b16 %v4639
          %v5850 = vunpack.c.l.b16 %v4640
          %v5851 = vunpack.c.h.b16 %v4640
          %v5852 = vunpack.c.l.b16 %v4641
          %v5853 = vunpack.c.h.b16 %v4641
          %v5854 = vunpack.c.l.b16 %v4642
          %v5855 = vunpack.c.h.b16 %v4642
          %v5856 = vunpack.c.l.b16 %v4643
          %v5857 = vunpack.c.h.b16 %v4643
          %v5858 = vunpack.c.l.b16 %v4644
          %v5859 = vunpack.c.h.b16 %v4644
          %v5860 = vunpack.c.l.b16 %v4645
          %v5861 = vunpack.c.h.b16 %v4645
          %v5862 = vunpack.c.l.b16 %v4646
          %v5863 = vunpack.c.h.b16 %v4646
          %v5864 = vunpack.c.l.b16 %v4647
          %v5865 = vunpack.c.h.b16 %v4647
          %v5866 = vunpack.c.l.b16 %v4648
          %v5867 = vunpack.c.h.b16 %v4648
          %v5868 = vunpack.c.l.b16 %v4649
          %v5869 = vunpack.c.h.b16 %v4649
          %v5870 = vunpack.c.l.b16 %v4650
          %v5871 = vunpack.c.h.b16 %v4650
          %v5872 = vunpack.c.l.b16 %v4651
          %v5873 = vunpack.c.h.b16 %v4651
          %v5874 = vunpack.c.l.b16 %v4652
          %v5875 = vunpack.c.h.b16 %v4652
          %v5876 = vunpack.c.l.b16 %v4653
          %v5877 = vunpack.c.h.b16 %v4653
          %v5878 = vunpack.c.l.b16 %v4654
          %v5879 = vunpack.c.h.b16 %v4654
          %v5880 = vunpack.c.l.b16 %v4655
          %v5881 = vunpack.c.h.b16 %v4655
          %v5882 = vunpack.c.l.b16 %v4656
          %v5883 = vunpack.c.h.b16 %v4656
          %v5884 = vunpack.c.l.b16 %v4657
          %v5885 = vunpack.c.h.b16 %v4657
          %v5886 = vunpack.c.l.b16 %v4658
          %v5887 = vunpack.c.h.b16 %v4658
          %v5888 = vunpack.c.l.b16 %v4659
          %v5889 = vunpack.c.h.b16 %v4659
          %v5890 = vunpack.c.l.b16 %v4660
          %v5891 = vunpack.c.h.b16 %v4660
          %v5892 = vunpack.c.l.b16 %v4661
          %v5893 = vunpack.c.h.b16 %v4661
          %v5894 = vunpack.c.l.b16 %v4662
          %v5895 = vunpack.c.h.b16 %v4662
          %v5896 = vunpack.c.l.b16 %v4663
          %v5897 = vunpack.c.h.b16 %v4663
          %v5898 = vunpack.c.l.b16 %v4664
          %v5899 = vunpack.c.h.b16 %v4664
          %v5900 = vunpack.c.l.b16 %v4665
          %v5901 = vunpack.c.h.b16 %v4665
          %v5902 = vunpack.c.l.b16 %v4666
          %v5903 = vunpack.c.h.b16 %v4666
          %v5904 = vunpack.c.l.b16 %v4667
          %v5905 = vunpack.c.h.b16 %v4667
          %v5906 = vunpack.c.l.b16 %v4668
          %v5907 = vunpack.c.h.b16 %v4668
          %v5908 = vunpack.c.l.b16 %v4669
          %v5909 = vunpack.c.h.b16 %v4669
          %v5910 = vunpack.c.l.b16 %v4670
          %v5911 = vunpack.c.h.b16 %v4670
          %v5912 = vunpack.c.l.b16 %v4671
          %v5913 = vunpack.c.h.b16 %v4671
          %v5914 = vunpack.c.l.b16 %v4672
          %v5915 = vunpack.c.h.b16 %v4672
          %v5916 = vunpack.c.l.b16 %v4673
          %v5917 = vunpack.c.h.b16 %v4673
          %v5918 = vunpack.c.l.b16 %v4674
          %v5919 = vunpack.c.h.b16 %v4674
          %v5920 = vunpack.c.l.b16 %v4675
          %v5921 = vunpack.c.h.b16 %v4675
          %v5922 = vunpack.c.l.b16 %v4676
          %v5923 = vunpack.c.h.b16 %v4676
          %v5924 = vunpack.c.l.b16 %v4677
          %v5925 = vunpack.c.h.b16 %v4677
          %v5926 = vunpack.c.l.b16 %v4678
          %v5927 = vunpack.c.h.b16 %v4678
          %v5928 = vunpack.c.l.b16 %v4679
          %v5929 = vunpack.c.h.b16 %v4679
          %v5930 = vunpack.c.l.b16 %v4680
          %v5931 = vunpack.c.h.b16 %v4680
          %v5932 = vunpack.c.l.b16 %v4681
          %v5933 = vunpack.c.h.b16 %v4681
          %v5934 = vunpack.c.l.b16 %v4682
          %v5935 = vunpack.c.h.b16 %v4682
          %v5936 = vunpack.c.l.b16 %v4683
          %v5937 = vunpack.c.h.b16 %v4683
          %v5938 = vunpack.c.l.b16 %v4684
          %v5939 = vunpack.c.h.b16 %v4684
          %v5940 = vunpack.c.l.b16 %v4685
          %v5941 = vunpack.c.h.b16 %v4685
          %v5942 = vunpack.c.l.b16 %v4686
          %v5943 = vunpack.c.h.b16 %v4686
          %v5944 = vunpack.c.l.b16 %v4687
          %v5945 = vunpack.c.h.b16 %v4687
          %v5946 = vunpack.c.l.b16 %v4688
          %v5947 = vunpack.c.h.b16 %v4688
          %v5948 = vunpack.c.l.b16 %v4689
          %v5949 = vunpack.c.h.b16 %v4689
          %v5950 = vunpack.c.l.b16 %v4690
          %v5951 = vunpack.c.h.b16 %v4690
          %v5952 = vunpack.c.l.b16 %v4691
          %v5953 = vunpack.c.h.b16 %v4691
          %v5954 = vunpack.c.l.b16 %v4692
          %v5955 = vunpack.c.h.b16 %v4692
          %v5956 = vunpack.c.l.b16 %v4693
          %v5957 = vunpack.c.h.b16 %v4693
          %v5958 = vunpack.c.l.b16 %v4694
          %v5959 = vunpack.c.h.b16 %v4694
          %v5960 = vunpack.c.l.b16 %v4695
          %v5961 = vunpack.c.h.b16 %v4695
          %v5962 = vunpack.c.l.b16 %v4696
          %v5963 = vunpack.c.h.b16 %v4696
          %v5964 = vunpack.c.l.b16 %v4697
          %v5965 = vunpack.c.h.b16 %v4697
          %v5966 = vunpack.c.l.b16 %v4698
          %v5967 = vunpack.c.h.b16 %v4698
          %v5968 = vunpack.c.l.b16 %v4699
          %v5969 = vunpack.c.h.b16 %v4699
          %v5970 = vunpack.c.l.b16 %v4700
          %v5971 = vunpack.c.h.b16 %v4700
          %v5972 = vunpack.c.l.b16 %v4701
          %v5973 = vunpack.c.h.b16 %v4701
          %v5974 = vunpack.c.l.b16 %v4702
          %v5975 = vunpack.c.h.b16 %v4702
          %v5976 = vunpack.c.l.b16 %v4703
          %v5977 = vunpack.c.h.b16 %v4703
          %v5978 = vunpack.c.l.b16 %v4704
          %v5979 = vunpack.c.h.b16 %v4704
          %v5980 = vunpack.c.l.b16 %v4705
          %v5981 = vunpack.c.h.b16 %v4705
          %v5982 = vunpack.c.l.b16 %v4706
          %v5983 = vunpack.c.h.b16 %v4706
          %v5984 = vunpack.c.l.b16 %v4707
          %v5985 = vunpack.c.h.b16 %v4707
          %v5986 = vunpack.c.l.b16 %v4708
          %v5987 = vunpack.c.h.b16 %v4708
          %v5988 = vunpack.c.l.b16 %v4709
          %v5989 = vunpack.c.h.b16 %v4709
          %v5990 = vunpack.c.l.b16 %v4710
          %v5991 = vunpack.c.h.b16 %v4710
          %v5992 = vunpack.c.l.b16 %v4711
          %v5993 = vunpack.c.h.b16 %v4711
          %v5994 = vunpack.c.l.b16 %v4712
          %v5995 = vunpack.c.h.b16 %v4712
          %v5996 = vunpack.c.l.b16 %v4713
          %v5997 = vunpack.c.h.b16 %v4713
          %v5998 = vunpack.c.l.b16 %v4714
          %v5999 = vunpack.c.h.b16 %v4714
          %v6000 = vunpack.c.l.b16 %v4715
          %v6001 = vunpack.c.h.b16 %v4715
          %v6002 = vunpack.c.l.b16 %v4716
          %v6003 = vunpack.c.h.b16 %v4716
          %v6004 = vunpack.c.l.b16 %v4717
          %v6005 = vunpack.c.h.b16 %v4717
          %v6006 = vunpack.c.l.b16 %v4718
          %v6007 = vunpack.c.h.b16 %v4718
          %v6008 = vunpack.c.l.b16 %v4719
          %v6009 = vunpack.c.h.b16 %v4719
          %v6010 = vunpack.c.l.b16 %v4720
          %v6011 = vunpack.c.h.b16 %v4720
          %v6012 = vunpack.c.l.b16 %v4721
          %v6013 = vunpack.c.h.b16 %v4721
          %v6014 = vunpack.c.l.b16 %v4722
          %v6015 = vunpack.c.h.b16 %v4722
          %v6016 = vunpack.c.l.b16 %v4723
          %v6017 = vunpack.c.h.b16 %v4723
          %v6018 = vunpack.c.l.b16 %v4724
          %v6019 = vunpack.c.h.b16 %v4724
          %v6020 = vunpack.c.l.b16 %v4725
          %v6021 = vunpack.c.h.b16 %v4725
          %v6022 = vunpack.c.l.b16 %v4726
          %v6023 = vunpack.c.h.b16 %v4726
          %v6024 = vunpack.c.l.b16 %v4727
          %v6025 = vunpack.c.h.b16 %v4727
          %v6026 = vunpack.c.l.b16 %v4728
          %v6027 = vunpack.c.h.b16 %v4728
          %v6028 = vunpack.c.l.b16 %v4729
          %v6029 = vunpack.c.h.b16 %v4729
          %v6030 = vunpack.c.l.b16 %v4730
          %v6031 = vunpack.c.h.b16 %v4730
          %v6032 = vunpack.c.l.b16 %v4731
          %v6033 = vunpack.c.h.b16 %v4731
          %v6034 = vunpack.c.l.b16 %v4732
          %v6035 = vunpack.c.h.b16 %v4732
          %v6036 = vunpack.c.l.b16 %v4733
          %v6037 = vunpack.c.h.b16 %v4733
          %v6038 = vunpack.c.l.b16 %v4734
          %v6039 = vunpack.c.h.b16 %v4734
          %v6040 = vunpack.c.l.b16 %v4735
          %v6041 = vunpack.c.h.b16 %v4735
          %v6042 = vunpack.c.l.b16 %v4736
          %v6043 = vunpack.c.h.b16 %v4736
          %v6044 = vunpack.c.l.b16 %v4737
          %v6045 = vunpack.c.h.b16 %v4737
          %v6046 = vunpack.c.l.b16 %v4738
          %v6047 = vunpack.c.h.b16 %v4738
          %v6048 = vunpack.c.l.b16 %v4739
          %v6049 = vunpack.c.h.b16 %v4739
          %v6050 = vunpack.c.l.b16 %v4740
          %v6051 = vunpack.c.h.b16 %v4740
          %v6052 = vunpack.c.l.b16 %v4741
          %v6053 = vunpack.c.h.b16 %v4741
          %v6054 = vunpack.c.l.b16 %v4742
          %v6055 = vunpack.c.h.b16 %v4742
          %v6056 = vunpack.c.l.b16 %v4743
          %v6057 = vunpack.c.h.b16 %v4743
          %v6058 = vunpack.c.l.b16 %v4744
          %v6059 = vunpack.c.h.b16 %v4744
          %v6060 = vunpack.c.l.b16 %v4745
          %v6061 = vunpack.c.h.b16 %v4745
          %v6062 = vunpack.c.l.b16 %v4746
          %v6063 = vunpack.c.h.b16 %v4746
          %v6064 = vunpack.c.l.b16 %v4747
          %v6065 = vunpack.c.h.b16 %v4747
          %v6066 = vunpack.c.l.b16 %v4748
          %v6067 = vunpack.c.h.b16 %v4748
          %v6068 = vunpack.c.l.b16 %v4749
          %v6069 = vunpack.c.h.b16 %v4749
          %v6070 = vunpack.c.l.b16 %v4750
          %v6071 = vunpack.c.h.b16 %v4750
          %v6072 = vunpack.c.l.b16 %v4751
          %v6073 = vunpack.c.h.b16 %v4751
          %v6074 = vunpack.c.l.b16 %v4752
          %v6075 = vunpack.c.h.b16 %v4752
          %v6076 = vunpack.c.l.b16 %v4753
          %v6077 = vunpack.c.h.b16 %v4753
          %v6078 = vunpack.c.l.b16 %v4754
          %v6079 = vunpack.c.h.b16 %v4754
          %v6080 = vunpack.c.l.b16 %v4755
          %v6081 = vunpack.c.h.b16 %v4755
          %v6082 = vunpack.c.l.b16 %v4756
          %v6083 = vunpack.c.h.b16 %v4756
          %v6084 = vunpack.c.l.b16 %v4757
          %v6085 = vunpack.c.h.b16 %v4757
          %v6086 = vunpack.c.l.b16 %v4758
          %v6087 = vunpack.c.h.b16 %v4758
          %v6088 = vunpack.c.l.b16 %v4759
          %v6089 = vunpack.c.h.b16 %v4759
          %v6090 = vunpack.c.l.b16 %v4760
          %v6091 = vunpack.c.h.b16 %v4760
          %v6092 = vunpack.c.l.b16 %v4761
          %v6093 = vunpack.c.h.b16 %v4761
          %v6094 = vunpack.c.l.b16 %v4762
          %v6095 = vunpack.c.h.b16 %v4762
          %v6096 = vunpack.c.l.b16 %v4763
          %v6097 = vunpack.c.h.b16 %v4763
          %v6098 = vunpack.c.l.b16 %v4764
          %v6099 = vunpack.c.h.b16 %v4764
          %v6100 = vunpack.c.l.b16 %v4765
          %v6101 = vunpack.c.h.b16 %v4765
          %v6102 = vunpack.c.l.b16 %v4766
          %v6103 = vunpack.c.h.b16 %v4766
          %v6104 = vunpack.c.l.b16 %v4767
          %v6105 = vunpack.c.h.b16 %v4767
          %v6106 = vunpack.c.l.b16 %v4768
          %v6107 = vunpack.c.h.b16 %v4768
          %v6108 = vunpack.c.l.b16 %v4769
          %v6109 = vunpack.c.h.b16 %v4769
          %v6110 = vunpack.c.l.b16 %v4770
          %v6111 = vunpack.c.h.b16 %v4770
          %v6112 = vunpack.c.l.b16 %v4771
          %v6113 = vunpack.c.h.b16 %v4771
          %v6114 = vunpack.c.l.b16 %v4772
          %v6115 = vunpack.c.h.b16 %v4772
          %v6116 = vunpack.c.l.b16 %v4773
          %v6117 = vunpack.c.h.b16 %v4773
          %v6118 = vunpack.c.l.b16 %v4774
          %v6119 = vunpack.c.h.b16 %v4774
          %v6120 = vunpack.c.l.b16 %v4775
          %v6121 = vunpack.c.h.b16 %v4775
          %v6122 = vunpack.c.l.b16 %v4776
          %v6123 = vunpack.c.h.b16 %v4776
          %v6124 = vunpack.c.l.b16 %v4777
          %v6125 = vunpack.c.h.b16 %v4777
          %v6126 = vunpack.c.l.b16 %v4778
          %v6127 = vunpack.c.h.b16 %v4778
          %v6128 = vunpack.c.l.b16 %v4779
          %v6129 = vunpack.c.h.b16 %v4779
          %v6130 = vunpack.c.l.b16 %v4780
          %v6131 = vunpack.c.h.b16 %v4780
          %v6132 = vunpack.c.l.b16 %v4781
          %v6133 = vunpack.c.h.b16 %v4781
          %v6134 = vunpack.c.l.b16 %v4782
          %v6135 = vunpack.c.h.b16 %v4782
          %v6136 = vunpack.c.l.b16 %v4783
          %v6137 = vunpack.c.h.b16 %v4783
          %v6138 = vunpack.c.l.b16 %v4784
          %v6139 = vunpack.c.h.b16 %v4784
          %v6140 = vunpack.c.l.b16 %v4785
          %v6141 = vunpack.c.h.b16 %v4785
          %v6142 = vunpack.c.l.b16 %v4786
          %v6143 = vunpack.c.h.b16 %v4786
          %v6144 = vunpack.c.l.b16 %v4787
          %v6145 = vunpack.c.h.b16 %v4787
          %v6146 = vunpack.c.l.b16 %v4788
          %v6147 = vunpack.c.h.b16 %v4788
          %v6148 = vunpack.c.l.b16 %v4789
          %v6149 = vunpack.c.h.b16 %v4789
          %v6150 = vunpack.c.l.b16 %v4790
          %v6151 = vunpack.c.h.b16 %v4790
          %v6152 = vunpack.c.l.b16 %v4791
          %v6153 = vunpack.c.h.b16 %v4791
          %v6154 = vunpack.c.l.b16 %v4792
          %v6155 = vunpack.c.h.b16 %v4792
          %v6156 = vunpack.c.l.b16 %v4793
          %v6157 = vunpack.c.h.b16 %v4793
          %v6158 = vunpack.c.l.b16 %v4794
          %v6159 = vunpack.c.h.b16 %v4794
          %v6160 = vunpack.c.l.b16 %v4795
          %v6161 = vunpack.c.h.b16 %v4795
          %v6162 = vunpack.c.l.b16 %v4796
          %v6163 = vunpack.c.h.b16 %v4796
          %v6164 = vunpack.c.l.b16 %v4797
          %v6165 = vunpack.c.h.b16 %v4797
          %v6166 = vunpack.c.l.b16 %v4798
          %v6167 = vunpack.c.h.b16 %v4798
          %v6168 = vunpack.c.l.b16 %v4799
          %v6169 = vunpack.c.h.b16 %v4799
          %v6170 = vunpack.c.l.b16 %v4800
          %v6171 = vunpack.c.h.b16 %v4800
          %v6172 = vunpack.c.l.b16 %v4801
          %v6173 = vunpack.c.h.b16 %v4801
          %v6174 = vunpack.c.l.b16 %v4802
          %v6175 = vunpack.c.h.b16 %v4802
          %v6176 = vunpack.c.l.b16 %v4803
          %v6177 = vunpack.c.h.b16 %v4803
          %v6178 = vunpack.c.l.b16 %v4804
          %v6179 = vunpack.c.h.b16 %v4804
          %v6180 = vunpack.c.l.b16 %v4805
          %v6181 = vunpack.c.h.b16 %v4805
          %v6182 = vunpack.c.l.b16 %v4806
          %v6183 = vunpack.c.h.b16 %v4806
          %v6184 = vunpack.c.l.b16 %v4807
          %v6185 = vunpack.c.h.b16 %v4807
          %v6186 = vunpack.c.l.b16 %v4808
          %v6187 = vunpack.c.h.b16 %v4808
          %v6188 = vunpack.c.l.b16 %v4809
          %v6189 = vunpack.c.h.b16 %v4809
          %v6190 = vunpack.c.l.b16 %v4810
          %v6191 = vunpack.c.h.b16 %v4810
          %v6192 = vunpack.c.l.b16 %v4811
          %v6193 = vunpack.c.h.b16 %v4811
          %v6194 = vunpack.c.l.b16 %v4812
          %v6195 = vunpack.c.h.b16 %v4812
          %v6196 = vunpack.c.l.b16 %v4813
          %v6197 = vunpack.c.h.b16 %v4813
          %v6198 = vunpack.c.l.b16 %v4814
          %v6199 = vunpack.c.h.b16 %v4814
          %v6200 = vunpack.c.l.b16 %v4815
          %v6201 = vunpack.c.h.b16 %v4815
          %v6202 = vunpack.c.l.b16 %v4816
          %v6203 = vunpack.c.h.b16 %v4816
          %v6204 = vunpack.c.l.b16 %v4817
          %v6205 = vunpack.c.h.b16 %v4817
          %v6206 = vunpack.c.l.b16 %v4818
          %v6207 = vunpack.c.h.b16 %v4818
          %v6208 = vunpack.c.l.b16 %v4819
          %v6209 = vunpack.c.h.b16 %v4819
          %v6210 = vunpack.c.l.b16 %v4820
          %v6211 = vunpack.c.h.b16 %v4820
          %v6212 = vunpack.c.l.b16 %v4821
          %v6213 = vunpack.c.h.b16 %v4821
          %v6214 = vunpack.c.l.b16 %v4822
          %v6215 = vunpack.c.h.b16 %v4822
          %v6216 = vunpack.c.l.b16 %v4823
          %v6217 = vunpack.c.h.b16 %v4823
          %v6218 = vunpack.c.l.b16 %v4824
          %v6219 = vunpack.c.h.b16 %v4824
          %v6220 = vunpack.c.l.b16 %v4825
          %v6221 = vunpack.c.h.b16 %v4825
          %v6222 = vunpack.c.l.b16 %v4826
          %v6223 = vunpack.c.h.b16 %v4826
          %v6224 = vunpack.c.l.b16 %v4827
          %v6225 = vunpack.c.h.b16 %v4827
          %v6226 = vunpack.c.l.b16 %v4828
          %v6227 = vunpack.c.h.b16 %v4828
          %v6228 = vunpack.c.l.b16 %v4829
          %v6229 = vunpack.c.h.b16 %v4829
          %v6230 = vunpack.c.l.b16 %v4830
          %v6231 = vunpack.c.h.b16 %v4830
          %v6232 = vunpack.c.l.b16 %v4831
          %v6233 = vunpack.c.h.b16 %v4831
          %v6234 = vunpack.c.l.b16 %v4832
          %v6235 = vunpack.c.h.b16 %v4832
          %v6236 = vunpack.c.l.b16 %v4833
          %v6237 = vunpack.c.h.b16 %v4833
          %v6238 = vunpack.c.l.b16 %v4834
          %v6239 = vunpack.c.h.b16 %v4834
          %v6240 = vunpack.c.l.b16 %v4835
          %v6241 = vunpack.c.h.b16 %v4835
          %v6242 = vunpack.c.l.b16 %v4836
          %v6243 = vunpack.c.h.b16 %v4836
          %v6244 = vunpack.c.l.b16 %v4837
          %v6245 = vunpack.c.h.b16 %v4837
          %v6246 = vunpack.c.l.b16 %v4838
          %v6247 = vunpack.c.h.b16 %v4838
          %v6248 = vunpack.c.l.b16 %v4839
          %v6249 = vunpack.c.h.b16 %v4839
          %v6250 = vunpack.c.l.b16 %v4840
          %v6251 = vunpack.c.h.b16 %v4840
          %v6252 = vunpack.c.l.b16 %v4841
          %v6253 = vunpack.c.h.b16 %v4841
          %v6254 = vunpack.c.l.b16 %v4842
          %v6255 = vunpack.c.h.b16 %v4842
          %v6256 = vunpack.c.l.b16 %v4843
          %v6257 = vunpack.c.h.b16 %v4843
          %v6258 = vunpack.c.l.b16 %v4844
          %v6259 = vunpack.c.h.b16 %v4844
          %v6260 = vunpack.c.l.b16 %v4845
          %v6261 = vunpack.c.h.b16 %v4845
          %v6262 = vunpack.c.l.b16 %v4846
          %v6263 = vunpack.c.h.b16 %v4846
          %v6264 = vunpack.c.l.b16 %v4847
          %v6265 = vunpack.c.h.b16 %v4847
          %v6266 = vunpack.c.l.b16 %v4848
          %v6267 = vunpack.c.h.b16 %v4848
          %v6268 = vunpack.c.l.b16 %v4849
          %v6269 = vunpack.c.h.b16 %v4849
          %v6270 = vunpack.c.l.b16 %v4850
          %v6271 = vunpack.c.h.b16 %v4850
          %v6272 = vunpack.c.l.b16 %v4851
          %v6273 = vunpack.c.h.b16 %v4851
          %v6274 = vunpack.c.l.b16 %v4852
          %v6275 = vunpack.c.h.b16 %v4852
          %v6276 = vunpack.c.l.b16 %v4853
          %v6277 = vunpack.c.h.b16 %v4853
          %v6278 = vunpack.c.l.b16 %v4854
          %v6279 = vunpack.c.h.b16 %v4854
          %v6280 = vunpack.c.l.b16 %v4855
          %v6281 = vunpack.c.h.b16 %v4855
          %v6282 = vunpack.c.l.b16 %v4856
          %v6283 = vunpack.c.h.b16 %v4856
          %v6284 = vunpack.c.l.b16 %v4857
          %v6285 = vunpack.c.h.b16 %v4857
          %v6286 = vunpack.c.l.b16 %v4858
          %v6287 = vunpack.c.h.b16 %v4858
          %v6288 = vunpack.c.l.b16 %v4859
          %v6289 = vunpack.c.h.b16 %v4859
          %v6290 = vunpack.c.l.b16 %v4860
          %v6291 = vunpack.c.h.b16 %v4860
          %v6292 = vunpack.c.l.b16 %v4861
          %v6293 = vunpack.c.h.b16 %v4861
          %v6294 = vunpack.c.l.b16 %v4862
          %v6295 = vunpack.c.h.b16 %v4862
          %v6296 = vunpack.c.l.b16 %v4863
          %v6297 = vunpack.c.h.b16 %v4863
          %v6298 = vunpack.c.l.b16 %v4864
          %v6299 = vunpack.c.h.b16 %v4864
          %v6300 = vunpack.c.l.b16 %v4865
          %v6301 = vunpack.c.h.b16 %v4865
          %v6302 = vunpack.c.l.b16 %v4866
          %v6303 = vunpack.c.h.b16 %v4866
          %v6304 = vunpack.c.l.b16 %v4867
          %v6305 = vunpack.c.h.b16 %v4867
          %v6306 = vunpack.c.l.b16 %v4868
          %v6307 = vunpack.c.h.b16 %v4868
          %v6308 = vunpack.c.l.b16 %v4869
          %v6309 = vunpack.c.h.b16 %v4869
          %v6310 = vunpack.c.l.b16 %v4870
          %v6311 = vunpack.c.h.b16 %v4870
          %v6312 = vunpack.c.l.b16 %v4871
          %v6313 = vunpack.c.h.b16 %v4871
          %v6314 = vunpack.c.l.b16 %v4872
          %v6315 = vunpack.c.h.b16 %v4872
          %v6316 = vunpack.c.l.b16 %v4873
          %v6317 = vunpack.c.h.b16 %v4873
          %v6318 = vunpack.c.l.b16 %v4874
          %v6319 = vunpack.c.h.b16 %v4874
          %v6320 = vunpack.c.l.b16 %v4875
          %v6321 = vunpack.c.h.b16 %v4875
          %v6322 = vunpack.c.l.b16 %v4876
          %v6323 = vunpack.c.h.b16 %v4876
          %v6324 = vunpack.c.l.b16 %v4877
          %v6325 = vunpack.c.h.b16 %v4877
          %v6326 = vunpack.c.l.b16 %v4878
          %v6327 = vunpack.c.h.b16 %v4878
          %v6328 = vunpack.c.l.b16 %v4879
          %v6329 = vunpack.c.h.b16 %v4879
          %v6330 = vunpack.c.l.b16 %v4880
          %v6331 = vunpack.c.h.b16 %v4880
          %v6332 = vunpack.c.l.b16 %v4881
          %v6333 = vunpack.c.h.b16 %v4881
          %v6334 = vunpack.c.l.b16 %v4882
          %v6335 = vunpack.c.h.b16 %v4882
          %v6336 = vunpack.c.l.b16 %v4883
          %v6337 = vunpack.c.h.b16 %v4883
          %v6338 = vunpack.c.l.b16 %v4884
          %v6339 = vunpack.c.h.b16 %v4884
          %v6340 = vunpack.c.l.b16 %v4885
          %v6341 = vunpack.c.h.b16 %v4885
          %v6342 = vunpack.c.l.b16 %v4886
          %v6343 = vunpack.c.h.b16 %v4886
          %v6344 = vunpack.c.l.b16 %v4887
          %v6345 = vunpack.c.h.b16 %v4887
          %v6346 = vunpack.c.l.b16 %v4888
          %v6347 = vunpack.c.h.b16 %v4888
          %v6348 = vunpack.c.l.b16 %v4889
          %v6349 = vunpack.c.h.b16 %v4889
          %v6350 = vunpack.c.l.b16 %v4890
          %v6351 = vunpack.c.h.b16 %v4890
          %v6352 = vunpack.c.l.b16 %v4891
          %v6353 = vunpack.c.h.b16 %v4891
          %v6354 = vunpack.c.l.b16 %v4892
          %v6355 = vunpack.c.h.b16 %v4892
          %v6356 = vunpack.c.l.b16 %v4893
          %v6357 = vunpack.c.h.b16 %v4893
          %v6358 = vunpack.c.l.b16 %v4894
          %v6359 = vunpack.c.h.b16 %v4894
          %v6360 = vunpack.c.l.b16 %v4895
          %v6361 = vunpack.c.h.b16 %v4895
          %v6362 = vunpack.c.l.b16 %v4896
          %v6363 = vunpack.c.h.b16 %v4896
          %v6364 = vunpack.c.l.b16 %v4897
          %v6365 = vunpack.c.h.b16 %v4897
          %v6366 = vunpack.c.l.b16 %v4898
          %v6367 = vunpack.c.h.b16 %v4898
          %v6368 = vunpack.c.l.b16 %v4899
          %v6369 = vunpack.c.h.b16 %v4899
          %v6370 = vunpack.c.l.b16 %v4900
          %v6371 = vunpack.c.h.b16 %v4900
          %v6372 = vunpack.c.l.b16 %v4901
          %v6373 = vunpack.c.h.b16 %v4901
          %v6374 = vunpack.c.l.b16 %v4902
          %v6375 = vunpack.c.h.b16 %v4902
          %v6376 = vunpack.c.l.b16 %v4903
          %v6377 = vunpack.c.h.b16 %v4903
          %v6378 = vunpack.c.l.b16 %v4904
          %v6379 = vunpack.c.h.b16 %v4904
          %v6380 = vunpack.c.l.b16 %v4905
          %v6381 = vunpack.c.h.b16 %v4905
          %v6382 = vunpack.c.l.b16 %v4906
          %v6383 = vunpack.c.h.b16 %v4906
          %v6384 = vunpack.c.l.b16 %v4907
          %v6385 = vunpack.c.h.b16 %v4907
          %v6386 = vunpack.c.l.b16 %v4908
          %v6387 = vunpack.c.h.b16 %v4908
          %v6388 = vunpack.c.l.b16 %v4909
          %v6389 = vunpack.c.h.b16 %v4909
          %v6390 = vunpack.c.l.b16 %v4910
          %v6391 = vunpack.c.h.b16 %v4910
          %v6392 = vunpack.c.l.b16 %v4911
          %v6393 = vunpack.c.h.b16 %v4911
          %v6394 = vunpack.c.l.b16 %v4912
          %v6395 = vunpack.c.h.b16 %v4912
          %v6396 = vunpack.c.l.b16 %v4913
          %v6397 = vunpack.c.h.b16 %v4913
          %v6398 = vunpack.c.l.b16 %v4914
          %v6399 = vunpack.c.h.b16 %v4914
          %v6400 = vunpack.c.l.b16 %v4915
          %v6401 = vunpack.c.h.b16 %v4915
          %v6402 = vunpack.c.l.b16 %v4916
          %v6403 = vunpack.c.h.b16 %v4916
          %v6404 = vunpack.c.l.b16 %v4917
          %v6405 = vunpack.c.h.b16 %v4917
          %v6406 = vunpack.c.l.b16 %v4918
          %v6407 = vunpack.c.h.b16 %v4918
          %v6408 = vunpack.c.l.b16 %v4919
          %v6409 = vunpack.c.h.b16 %v4919
          %v6410 = vunpack.c.l.b16 %v4920
          %v6411 = vunpack.c.h.b16 %v4920
          %v6412 = vunpack.c.l.b16 %v4921
          %v6413 = vunpack.c.h.b16 %v4921
          %v6414 = vunpack.c.l.b16 %v4922
          %v6415 = vunpack.c.h.b16 %v4922
          %v6416 = vunpack.c.l.b16 %v4923
          %v6417 = vunpack.c.h.b16 %v4923
          %v6418 = vunpack.c.l.b16 %v4924
          %v6419 = vunpack.c.h.b16 %v4924
          %v6420 = vunpack.c.l.b16 %v4925
          %v6421 = vunpack.c.h.b16 %v4925
          %v6422 = vunpack.c.l.b16 %v4926
          %v6423 = vunpack.c.h.b16 %v4926
          %v6424 = vunpack.c.l.b16 %v4927
          %v6425 = vunpack.c.h.b16 %v4927
          %v6426 = vunpack.c.l.b16 %v4928
          %v6427 = vunpack.c.h.b16 %v4928
          %v6428 = vunpack.c.l.b16 %v4929
          %v6429 = vunpack.c.h.b16 %v4929
          %v6430 = vunpack.c.l.b16 %v4930
          %v6431 = vunpack.c.h.b16 %v4930
          %v6432 = vunpack.c.l.b16 %v4931
          %v6433 = vunpack.c.h.b16 %v4931
          %v6434 = vunpack.c.l.b16 %v4932
          %v6435 = vunpack.c.h.b16 %v4932
          %v6436 = vunpack.c.l.b16 %v4933
          %v6437 = vunpack.c.h.b16 %v4933
          %v6438 = vunpack.c.l.b16 %v4934
          %v6439 = vunpack.c.h.b16 %v4934
          %v6440 = vunpack.c.l.b16 %v4935
          %v6441 = vunpack.c.h.b16 %v4935
          %v6442 = vunpack.c.l.b16 %v4936
          %v6443 = vunpack.c.h.b16 %v4936
          %v6444 = vunpack.c.l.b16 %v4937
          %v6445 = vunpack.c.h.b16 %v4937
          %v6446 = vunpack.c.l.b16 %v4938
          %v6447 = vunpack.c.h.b16 %v4938
          %v6448 = vunpack.c.l.b16 %v4939
          %v6449 = vunpack.c.h.b16 %v4939
          %v6450 = vunpack.c.l.b16 %v4940
          %v6451 = vunpack.c.h.b16 %v4940
          %v6452 = vunpack.c.l.b16 %v4941
          %v6453 = vunpack.c.h.b16 %v4941
          %v6454 = vunpack.c.l.b16 %v4942
          %v6455 = vunpack.c.h.b16 %v4942
          %v6456 = vunpack.c.l.b16 %v4943
          %v6457 = vunpack.c.h.b16 %v4943
          %v6458 = vunpack.c.l.b16 %v4944
          %v6459 = vunpack.c.h.b16 %v4944
          %v6460 = vunpack.c.l.b16 %v4945
          %v6461 = vunpack.c.h.b16 %v4945
          %v6462 = vunpack.c.l.b16 %v4946
          %v6463 = vunpack.c.h.b16 %v4946
          %v6464 = vunpack.c.l.b16 %v4947
          %v6465 = vunpack.c.h.b16 %v4947
          %v6466 = vunpack.c.l.b16 %v4948
          %v6467 = vunpack.c.h.b16 %v4948
          %v6468 = vunpack.c.l.b16 %v4949
          %v6469 = vunpack.c.h.b16 %v4949
          %v6470 = vunpack.c.l.b16 %v4950
          %v6471 = vunpack.c.h.b16 %v4950
          %v6472 = vunpack.c.l.b16 %v4951
          %v6473 = vunpack.c.h.b16 %v4951
          %v6474 = vunpack.c.l.b16 %v4952
          %v6475 = vunpack.c.h.b16 %v4952
          %v6476 = vunpack.c.l.b16 %v4953
          %v6477 = vunpack.c.h.b16 %v4953
          %v6478 = vunpack.c.l.b16 %v4954
          %v6479 = vunpack.c.h.b16 %v4954
          %v6480 = vunpack.c.l.b16 %v4955
          %v6481 = vunpack.c.h.b16 %v4955
          %v6482 = vunpack.c.l.b16 %v4956
          %v6483 = vunpack.c.h.b16 %v4956
          %v6484 = vunpack.c.l.b16 %v4957
          %v6485 = vunpack.c.h.b16 %v4957
          %v6486 = vunpack.c.l.b16 %v4958
          %v6487 = vunpack.c.h.b16 %v4958
          %v6488 = vunpack.c.l.b16 %v4959
          %v6489 = vunpack.c.h.b16 %v4959
          %v6490 = vunpack.c.l.b16 %v4960
          %v6491 = vunpack.c.h.b16 %v4960
          %v6492 = vunpack.c.l.b16 %v4961
          %v6493 = vunpack.c.h.b16 %v4961
          %v6494 = vunpack.c.l.b16 %v4962
          %v6495 = vunpack.c.h.b16 %v4962
          %v6496 = vunpack.c.l.b16 %v4963
          %v6497 = vunpack.c.h.b16 %v4963
          %v6498 = vunpack.c.l.b16 %v4964
          %v6499 = vunpack.c.h.b16 %v4964
          %v6500 = vunpack.c.l.b16 %v4965
          %v6501 = vunpack.c.h.b16 %v4965
          %v6502 = vunpack.c.l.b16 %v4966
          %v6503 = vunpack.c.h.b16 %v4966
          %v6504 = vunpack.c.l.b16 %v4967
          %v6505 = vunpack.c.h.b16 %v4967
          %v6506 = vunpack.c.l.b16 %v4968
          %v6507 = vunpack.c.h.b16 %v4968
          %v6508 = vunpack.c.l.b16 %v4969
          %v6509 = vunpack.c.h.b16 %v4969
          %v6510 = vunpack.c.l.b16 %v4970
          %v6511 = vunpack.c.h.b16 %v4970
          %v6512 = vunpack.c.l.b16 %v4971
          %v6513 = vunpack.c.h.b16 %v4971
          %v6514 = vunpack.c.l.b16 %v4972
          %v6515 = vunpack.c.h.b16 %v4972
          %v6516 = vunpack.c.l.b16 %v4973
          %v6517 = vunpack.c.h.b16 %v4973
          %v6518 = vunpack.c.l.b16 %v4974
          %v6519 = vunpack.c.h.b16 %v4974
          %v6520 = vunpack.c.l.b16 %v4975
          %v6521 = vunpack.c.h.b16 %v4975
          %v6522 = vunpack.c.l.b16 %v4976
          %v6523 = vunpack.c.h.b16 %v4976
          %v6524 = vunpack.c.l.b16 %v4977
          %v6525 = vunpack.c.h.b16 %v4977
          %v6526 = vunpack.c.l.b16 %v4978
          %v6527 = vunpack.c.h.b16 %v4978
          %v6528 = vunpack.c.l.b16 %v4979
          %v6529 = vunpack.c.h.b16 %v4979
          %v6530 = vunpack.c.l.b16 %v4980
          %v6531 = vunpack.c.h.b16 %v4980
          %v6532 = vunpack.c.l.b16 %v4981
          %v6533 = vunpack.c.h.b16 %v4981
          %v6534 = vunpack.c.l.b16 %v4982
          %v6535 = vunpack.c.h.b16 %v4982
          %v6536 = vunpack.c.l.b16 %v4983
          %v6537 = vunpack.c.h.b16 %v4983
          %v6538 = vpack.c.b16 %v5522, %v5514
          %v6539 = vpack.c.b16 %v5523, %v5515
          %v6540 = vpack.c.b16 %v5524, %v5516
          %v6541 = vpack.c.b16 %v5525, %v5517
          %v6542 = vpack.c.b16 %v5526, %v5518
          %v6543 = vpack.c.b16 %v5527, %v5519
          %v6544 = vpack.c.b16 %v5528, %v5520
          %v6545 = vpack.c.b16 %v5529, %v5521
          %v6546 = vpack.c.b16 %v5538, %v5530
          %v6547 = vpack.c.b16 %v5539, %v5531
          %v6548 = vpack.c.b16 %v5540, %v5532
          %v6549 = vpack.c.b16 %v5541, %v5533
          %v6550 = vpack.c.b16 %v5542, %v5534
          %v6551 = vpack.c.b16 %v5543, %v5535
          %v6552 = vpack.c.b16 %v5544, %v5536
          %v6553 = vpack.c.b16 %v5545, %v5537
          %v6554 = vpack.c.b16 %v5554, %v5546
          %v6555 = vpack.c.b16 %v5555, %v5547
          %v6556 = vpack.c.b16 %v5556, %v5548
          %v6557 = vpack.c.b16 %v5557, %v5549
          %v6558 = vpack.c.b16 %v5558, %v5550
          %v6559 = vpack.c.b16 %v5559, %v5551
          %v6560 = vpack.c.b16 %v5560, %v5552
          %v6561 = vpack.c.b16 %v5561, %v5553
          %v6562 = vpack.c.b16 %v5570, %v5562
          %v6563 = vpack.c.b16 %v5571, %v5563
          %v6564 = vpack.c.b16 %v5572, %v5564
          %v6565 = vpack.c.b16 %v5573, %v5565
          %v6566 = vpack.c.b16 %v5574, %v5566
          %v6567 = vpack.c.b16 %v5575, %v5567
          %v6568 = vpack.c.b16 %v5576, %v5568
          %v6569 = vpack.c.b16 %v5577, %v5569
          %v6570 = vpack.c.b16 %v5586, %v5578
          %v6571 = vpack.c.b16 %v5587, %v5579
          %v6572 = vpack.c.b16 %v5588, %v5580
          %v6573 = vpack.c.b16 %v5589, %v5581
          %v6574 = vpack.c.b16 %v5590, %v5582
          %v6575 = vpack.c.b16 %v5591, %v5583
          %v6576 = vpack.c.b16 %v5592, %v5584
          %v6577 = vpack.c.b16 %v5593, %v5585
          %v6578 = vpack.c.b16 %v5602, %v5594
          %v6579 = vpack.c.b16 %v5603, %v5595
          %v6580 = vpack.c.b16 %v5604, %v5596
          %v6581 = vpack.c.b16 %v5605, %v5597
          %v6582 = vpack.c.b16 %v5606, %v5598
          %v6583 = vpack.c.b16 %v5607, %v5599
          %v6584 = vpack.c.b16 %v5608, %v5600
          %v6585 = vpack.c.b16 %v5609, %v5601
          %v6586 = vpack.c.b16 %v5618, %v5610
          %v6587 = vpack.c.b16 %v5619, %v5611
          %v6588 = vpack.c.b16 %v5620, %v5612
          %v6589 = vpack.c.b16 %v5621, %v5613
          %v6590 = vpack.c.b16 %v5622, %v5614
          %v6591 = vpack.c.b16 %v5623, %v5615
          %v6592 = vpack.c.b16 %v5624, %v5616
          %v6593 = vpack.c.b16 %v5625, %v5617
          %v6594 = vpack.c.b16 %v5634, %v5626
          %v6595 = vpack.c.b16 %v5635, %v5627
          %v6596 = vpack.c.b16 %v5636, %v5628
          %v6597 = vpack.c.b16 %v5637, %v5629
          %v6598 = vpack.c.b16 %v5638, %v5630
          %v6599 = vpack.c.b16 %v5639, %v5631
          %v6600 = vpack.c.b16 %v5640, %v5632
          %v6601 = vpack.c.b16 %v5641, %v5633
          %v6602 = vpack.c.b16 %v5650, %v5642
          %v6603 = vpack.c.b16 %v5651, %v5643
          %v6604 = vpack.c.b16 %v5652, %v5644
          %v6605 = vpack.c.b16 %v5653, %v5645
          %v6606 = vpack.c.b16 %v5654, %v5646
          %v6607 = vpack.c.b16 %v5655, %v5647
          %v6608 = vpack.c.b16 %v5656, %v5648
          %v6609 = vpack.c.b16 %v5657, %v5649
          %v6610 = vpack.c.b16 %v5666, %v5658
          %v6611 = vpack.c.b16 %v5667, %v5659
          %v6612 = vpack.c.b16 %v5668, %v5660
          %v6613 = vpack.c.b16 %v5669, %v5661
          %v6614 = vpack.c.b16 %v5670, %v5662
          %v6615 = vpack.c.b16 %v5671, %v5663
          %v6616 = vpack.c.b16 %v5672, %v5664
          %v6617 = vpack.c.b16 %v5673, %v5665
          %v6618 = vpack.c.b16 %v5682, %v5674
          %v6619 = vpack.c.b16 %v5683, %v5675
          %v6620 = vpack.c.b16 %v5684, %v5676
          %v6621 = vpack.c.b16 %v5685, %v5677
          %v6622 = vpack.c.b16 %v5686, %v5678
          %v6623 = vpack.c.b16 %v5687, %v5679
          %v6624 = vpack.c.b16 %v5688, %v5680
          %v6625 = vpack.c.b16 %v5689, %v5681
          %v6626 = vpack.c.b16 %v5698, %v5690
          %v6627 = vpack.c.b16 %v5699, %v5691
          %v6628 = vpack.c.b16 %v5700, %v5692
          %v6629 = vpack.c.b16 %v5701, %v5693
          %v6630 = vpack.c.b16 %v5702, %v5694
          %v6631 = vpack.c.b16 %v5703, %v5695
          %v6632 = vpack.c.b16 %v5704, %v5696
          %v6633 = vpack.c.b16 %v5705, %v5697
          %v6634 = vpack.c.b16 %v5714, %v5706
          %v6635 = vpack.c.b16 %v5715, %v5707
          %v6636 = vpack.c.b16 %v5716, %v5708
          %v6637 = vpack.c.b16 %v5717, %v5709
          %v6638 = vpack.c.b16 %v5718, %v5710
          %v6639 = vpack.c.b16 %v5719, %v5711
          %v6640 = vpack.c.b16 %v5720, %v5712
          %v6641 = vpack.c.b16 %v5721, %v5713
          %v6642 = vpack.c.b16 %v5730, %v5722
          %v6643 = vpack.c.b16 %v5731, %v5723
          %v6644 = vpack.c.b16 %v5732, %v5724
          %v6645 = vpack.c.b16 %v5733, %v5725
          %v6646 = vpack.c.b16 %v5734, %v5726
          %v6647 = vpack.c.b16 %v5735, %v5727
          %v6648 = vpack.c.b16 %v5736, %v5728
          %v6649 = vpack.c.b16 %v5737, %v5729
          %v6650 = vpack.c.b16 %v5746, %v5738
          %v6651 = vpack.c.b16 %v5747, %v5739
          %v6652 = vpack.c.b16 %v5748, %v5740
          %v6653 = vpack.c.b16 %v5749, %v5741
          %v6654 = vpack.c.b16 %v5750, %v5742
          %v6655 = vpack.c.b16 %v5751, %v5743
          %v6656 = vpack.c.b16 %v5752, %v5744
          %v6657 = vpack.c.b16 %v5753, %v5745
          %v6658 = vpack.c.b16 %v5762, %v5754
          %v6659 = vpack.c.b16 %v5763, %v5755
          %v6660 = vpack.c.b16 %v5764, %v5756
          %v6661 = vpack.c.b16 %v5765, %v5757
          %v6662 = vpack.c.b16 %v5766, %v5758
          %v6663 = vpack.c.b16 %v5767, %v5759
          %v6664 = vpack.c.b16 %v5768, %v5760
          %v6665 = vpack.c.b16 %v5769, %v5761
          %v6666 = vpack.c.b16 %v5778, %v5770
          %v6667 = vpack.c.b16 %v5779, %v5771
          %v6668 = vpack.c.b16 %v5780, %v5772
          %v6669 = vpack.c.b16 %v5781, %v5773
          %v6670 = vpack.c.b16 %v5782, %v5774
          %v6671 = vpack.c.b16 %v5783, %v5775
          %v6672 = vpack.c.b16 %v5784, %v5776
          %v6673 = vpack.c.b16 %v5785, %v5777
          %v6674 = vpack.c.b16 %v5794, %v5786
          %v6675 = vpack.c.b16 %v5795, %v5787
          %v6676 = vpack.c.b16 %v5796, %v5788
          %v6677 = vpack.c.b16 %v5797, %v5789
          %v6678 = vpack.c.b16 %v5798, %v5790
          %v6679 = vpack.c.b16 %v5799, %v5791
          %v6680 = vpack.c.b16 %v5800, %v5792
          %v6681 = vpack.c.b16 %v5801, %v5793
          %v6682 = vpack.c.b16 %v5810, %v5802
          %v6683 = vpack.c.b16 %v5811, %v5803
          %v6684 = vpack.c.b16 %v5812, %v5804
          %v6685 = vpack.c.b16 %v5813, %v5805
          %v6686 = vpack.c.b16 %v5814, %v5806
          %v6687 = vpack.c.b16 %v5815, %v5807
          %v6688 = vpack.c.b16 %v5816, %v5808
          %v6689 = vpack.c.b16 %v5817, %v5809
          %v6690 = vpack.c.b16 %v5826, %v5818
          %v6691 = vpack.c.b16 %v5827, %v5819
          %v6692 = vpack.c.b16 %v5828, %v5820
          %v6693 = vpack.c.b16 %v5829, %v5821
          %v6694 = vpack.c.b16 %v5830, %v5822
          %v6695 = vpack.c.b16 %v5831, %v5823
          %v6696 = vpack.c.b16 %v5832, %v5824
          %v6697 = vpack.c.b16 %v5833, %v5825
          %v6698 = vpack.c.b16 %v5842, %v5834
          %v6699 = vpack.c.b16 %v5843, %v5835
          %v6700 = vpack.c.b16 %v5844, %v5836
          %v6701 = vpack.c.b16 %v5845, %v5837
          %v6702 = vpack.c.b16 %v5846, %v5838
          %v6703 = vpack.c.b16 %v5847, %v5839
          %v6704 = vpack.c.b16 %v5848, %v5840
          %v6705 = vpack.c.b16 %v5849, %v5841
          %v6706 = vpack.c.b16 %v5858, %v5850
          %v6707 = vpack.c.b16 %v5859, %v5851
          %v6708 = vpack.c.b16 %v5860, %v5852
          %v6709 = vpack.c.b16 %v5861, %v5853
          %v6710 = vpack.c.b16 %v5862, %v5854
          %v6711 = vpack.c.b16 %v5863, %v5855
          %v6712 = vpack.c.b16 %v5864, %v5856
          %v6713 = vpack.c.b16 %v5865, %v5857
          %v6714 = vpack.c.b16 %v5874, %v5866
          %v6715 = vpack.c.b16 %v5875, %v5867
          %v6716 = vpack.c.b16 %v5876, %v5868
          %v6717 = vpack.c.b16 %v5877, %v5869
          %v6718 = vpack.c.b16 %v5878, %v5870
          %v6719 = vpack.c.b16 %v5879, %v5871
          %v6720 = vpack.c.b16 %v5880, %v5872
          %v6721 = vpack.c.b16 %v5881, %v5873
          %v6722 = vpack.c.b16 %v5890, %v5882
          %v6723 = vpack.c.b16 %v5891, %v5883
          %v6724 = vpack.c.b16 %v5892, %v5884
          %v6725 = vpack.c.b16 %v5893, %v5885
          %v6726 = vpack.c.b16 %v5894, %v5886
          %v6727 = vpack.c.b16 %v5895, %v5887
          %v6728 = vpack.c.b16 %v5896, %v5888
          %v6729 = vpack.c.b16 %v5897, %v5889
          %v6730 = vpack.c.b16 %v5906, %v5898
          %v6731 = vpack.c.b16 %v5907, %v5899
          %v6732 = vpack.c.b16 %v5908, %v5900
          %v6733 = vpack.c.b16 %v5909, %v5901
          %v6734 = vpack.c.b16 %v5910, %v5902
          %v6735 = vpack.c.b16 %v5911, %v5903
          %v6736 = vpack.c.b16 %v5912, %v5904
          %v6737 = vpack.c.b16 %v5913, %v5905
          %v6738 = vpack.c.b16 %v5922, %v5914
          %v6739 = vpack.c.b16 %v5923, %v5915
          %v6740 = vpack.c.b16 %v5924, %v5916
          %v6741 = vpack.c.b16 %v5925, %v5917
          %v6742 = vpack.c.b16 %v5926, %v5918
          %v6743 = vpack.c.b16 %v5927, %v5919
          %v6744 = vpack.c.b16 %v5928, %v5920
          %v6745 = vpack.c.b16 %v5929, %v5921
          %v6746 = vpack.c.b16 %v5938, %v5930
          %v6747 = vpack.c.b16 %v5939, %v5931
          %v6748 = vpack.c.b16 %v5940, %v5932
          %v6749 = vpack.c.b16 %v5941, %v5933
          %v6750 = vpack.c.b16 %v5942, %v5934
          %v6751 = vpack.c.b16 %v5943, %v5935
          %v6752 = vpack.c.b16 %v5944, %v5936
          %v6753 = vpack.c.b16 %v5945, %v5937
          %v6754 = vpack.c.b16 %v5954, %v5946
          %v6755 = vpack.c.b16 %v5955, %v5947
          %v6756 = vpack.c.b16 %v5956, %v5948
          %v6757 = vpack.c.b16 %v5957, %v5949
          %v6758 = vpack.c.b16 %v5958, %v5950
          %v6759 = vpack.c.b16 %v5959, %v5951
          %v6760 = vpack.c.b16 %v5960, %v5952
          %v6761 = vpack.c.b16 %v5961, %v5953
          %v6762 = vpack.c.b16 %v5970, %v5962
          %v6763 = vpack.c.b16 %v5971, %v5963
          %v6764 = vpack.c.b16 %v5972, %v5964
          %v6765 = vpack.c.b16 %v5973, %v5965
          %v6766 = vpack.c.b16 %v5974, %v5966
          %v6767 = vpack.c.b16 %v5975, %v5967
          %v6768 = vpack.c.b16 %v5976, %v5968
          %v6769 = vpack.c.b16 %v5977, %v5969
          %v6770 = vpack.c.b16 %v5986, %v5978
          %v6771 = vpack.c.b16 %v5987, %v5979
          %v6772 = vpack.c.b16 %v5988, %v5980
          %v6773 = vpack.c.b16 %v5989, %v5981
          %v6774 = vpack.c.b16 %v5990, %v5982
          %v6775 = vpack.c.b16 %v5991, %v5983
          %v6776 = vpack.c.b16 %v5992, %v5984
          %v6777 = vpack.c.b16 %v5993, %v5985
          %v6778 = vpack.c.b16 %v6002, %v5994
          %v6779 = vpack.c.b16 %v6003, %v5995
          %v6780 = vpack.c.b16 %v6004, %v5996
          %v6781 = vpack.c.b16 %v6005, %v5997
          %v6782 = vpack.c.b16 %v6006, %v5998
          %v6783 = vpack.c.b16 %v6007, %v5999
          %v6784 = vpack.c.b16 %v6008, %v6000
          %v6785 = vpack.c.b16 %v6009, %v6001
          %v6786 = vpack.c.b16 %v6018, %v6010
          %v6787 = vpack.c.b16 %v6019, %v6011
          %v6788 = vpack.c.b16 %v6020, %v6012
          %v6789 = vpack.c.b16 %v6021, %v6013
          %v6790 = vpack.c.b16 %v6022, %v6014
          %v6791 = vpack.c.b16 %v6023, %v6015
          %v6792 = vpack.c.b16 %v6024, %v6016
          %v6793 = vpack.c.b16 %v6025, %v6017
          %v6794 = vpack.c.b16 %v6034, %v6026
          %v6795 = vpack.c.b16 %v6035, %v6027
          %v6796 = vpack.c.b16 %v6036, %v6028
          %v6797 = vpack.c.b16 %v6037, %v6029
          %v6798 = vpack.c.b16 %v6038, %v6030
          %v6799 = vpack.c.b16 %v6039, %v6031
          %v6800 = vpack.c.b16 %v6040, %v6032
          %v6801 = vpack.c.b16 %v6041, %v6033
          %v6802 = vpack.c.b16 %v6050, %v6042
          %v6803 = vpack.c.b16 %v6051, %v6043
          %v6804 = vpack.c.b16 %v6052, %v6044
          %v6805 = vpack.c.b16 %v6053, %v6045
          %v6806 = vpack.c.b16 %v6054, %v6046
          %v6807 = vpack.c.b16 %v6055, %v6047
          %v6808 = vpack.c.b16 %v6056, %v6048
          %v6809 = vpack.c.b16 %v6057, %v6049
          %v6810 = vpack.c.b16 %v6066, %v6058
          %v6811 = vpack.c.b16 %v6067, %v6059
          %v6812 = vpack.c.b16 %v6068, %v6060
          %v6813 = vpack.c.b16 %v6069, %v6061
          %v6814 = vpack.c.b16 %v6070, %v6062
          %v6815 = vpack.c.b16 %v6071, %v6063
          %v6816 = vpack.c.b16 %v6072, %v6064
          %v6817 = vpack.c.b16 %v6073, %v6065
          %v6818 = vpack.c.b16 %v6082, %v6074
          %v6819 = vpack.c.b16 %v6083, %v6075
          %v6820 = vpack.c.b16 %v6084, %v6076
          %v6821 = vpack.c.b16 %v6085, %v6077
          %v6822 = vpack.c.b16 %v6086, %v6078
          %v6823 = vpack.c.b16 %v6087, %v6079
          %v6824 = vpack.c.b16 %v6088, %v6080
          %v6825 = vpack.c.b16 %v6089, %v6081
          %v6826 = vpack.c.b16 %v6098, %v6090
          %v6827 = vpack.c.b16 %v6099, %v6091
          %v6828 = vpack.c.b16 %v6100, %v6092
          %v6829 = vpack.c.b16 %v6101, %v6093
          %v6830 = vpack.c.b16 %v6102, %v6094
          %v6831 = vpack.c.b16 %v6103, %v6095
          %v6832 = vpack.c.b16 %v6104, %v6096
          %v6833 = vpack.c.b16 %v6105, %v6097
          %v6834 = vpack.c.b16 %v6114, %v6106
          %v6835 = vpack.c.b16 %v6115, %v6107
          %v6836 = vpack.c.b16 %v6116, %v6108
          %v6837 = vpack.c.b16 %v6117, %v6109
          %v6838 = vpack.c.b16 %v6118, %v6110
          %v6839 = vpack.c.b16 %v6119, %v6111
          %v6840 = vpack.c.b16 %v6120, %v6112
          %v6841 = vpack.c.b16 %v6121, %v6113
          %v6842 = vpack.c.b16 %v6130, %v6122
          %v6843 = vpack.c.b16 %v6131, %v6123
          %v6844 = vpack.c.b16 %v6132, %v6124
          %v6845 = vpack.c.b16 %v6133, %v6125
          %v6846 = vpack.c.b16 %v6134, %v6126
          %v6847 = vpack.c.b16 %v6135, %v6127
          %v6848 = vpack.c.b16 %v6136, %v6128
          %v6849 = vpack.c.b16 %v6137, %v6129
          %v6850 = vpack.c.b16 %v6146, %v6138
          %v6851 = vpack.c.b16 %v6147, %v6139
          %v6852 = vpack.c.b16 %v6148, %v6140
          %v6853 = vpack.c.b16 %v6149, %v6141
          %v6854 = vpack.c.b16 %v6150, %v6142
          %v6855 = vpack.c.b16 %v6151, %v6143
          %v6856 = vpack.c.b16 %v6152, %v6144
          %v6857 = vpack.c.b16 %v6153, %v6145
          %v6858 = vpack.c.b16 %v6162, %v6154
          %v6859 = vpack.c.b16 %v6163, %v6155
          %v6860 = vpack.c.b16 %v6164, %v6156
          %v6861 = vpack.c.b16 %v6165, %v6157
          %v6862 = vpack.c.b16 %v6166, %v6158
          %v6863 = vpack.c.b16 %v6167, %v6159
          %v6864 = vpack.c.b16 %v6168, %v6160
          %v6865 = vpack.c.b16 %v6169, %v6161
          %v6866 = vpack.c.b16 %v6178, %v6170
          %v6867 = vpack.c.b16 %v6179, %v6171
          %v6868 = vpack.c.b16 %v6180, %v6172
          %v6869 = vpack.c.b16 %v6181, %v6173
          %v6870 = vpack.c.b16 %v6182, %v6174
          %v6871 = vpack.c.b16 %v6183, %v6175
          %v6872 = vpack.c.b16 %v6184, %v6176
          %v6873 = vpack.c.b16 %v6185, %v6177
          %v6874 = vpack.c.b16 %v6194, %v6186
          %v6875 = vpack.c.b16 %v6195, %v6187
          %v6876 = vpack.c.b16 %v6196, %v6188
          %v6877 = vpack.c.b16 %v6197, %v6189
          %v6878 = vpack.c.b16 %v6198, %v6190
          %v6879 = vpack.c.b16 %v6199, %v6191
          %v6880 = vpack.c.b16 %v6200, %v6192
          %v6881 = vpack.c.b16 %v6201, %v6193
          %v6882 = vpack.c.b16 %v6210, %v6202
          %v6883 = vpack.c.b16 %v6211, %v6203
          %v6884 = vpack.c.b16 %v6212, %v6204
          %v6885 = vpack.c.b16 %v6213, %v6205
          %v6886 = vpack.c.b16 %v6214, %v6206
          %v6887 = vpack.c.b16 %v6215, %v6207
          %v6888 = vpack.c.b16 %v6216, %v6208
          %v6889 = vpack.c.b16 %v6217, %v6209
          %v6890 = vpack.c.b16 %v6226, %v6218
          %v6891 = vpack.c.b16 %v6227, %v6219
          %v6892 = vpack.c.b16 %v6228, %v6220
          %v6893 = vpack.c.b16 %v6229, %v6221
          %v6894 = vpack.c.b16 %v6230, %v6222
          %v6895 = vpack.c.b16 %v6231, %v6223
          %v6896 = vpack.c.b16 %v6232, %v6224
          %v6897 = vpack.c.b16 %v6233, %v6225
          %v6898 = vpack.c.b16 %v6242, %v6234
          %v6899 = vpack.c.b16 %v6243, %v6235
          %v6900 = vpack.c.b16 %v6244, %v6236
          %v6901 = vpack.c.b16 %v6245, %v6237
          %v6902 = vpack.c.b16 %v6246, %v6238
          %v6903 = vpack.c.b16 %v6247, %v6239
          %v6904 = vpack.c.b16 %v6248, %v6240
          %v6905 = vpack.c.b16 %v6249, %v6241
          %v6906 = vpack.c.b16 %v6258, %v6250
          %v6907 = vpack.c.b16 %v6259, %v6251
          %v6908 = vpack.c.b16 %v6260, %v6252
          %v6909 = vpack.c.b16 %v6261, %v6253
          %v6910 = vpack.c.b16 %v6262, %v6254
          %v6911 = vpack.c.b16 %v6263, %v6255
          %v6912 = vpack.c.b16 %v6264, %v6256
          %v6913 = vpack.c.b16 %v6265, %v6257
          %v6914 = vpack.c.b16 %v6274, %v6266
          %v6915 = vpack.c.b16 %v6275, %v6267
          %v6916 = vpack.c.b16 %v6276, %v6268
          %v6917 = vpack.c.b16 %v6277, %v6269
          %v6918 = vpack.c.b16 %v6278, %v6270
          %v6919 = vpack.c.b16 %v6279, %v6271
          %v6920 = vpack.c.b16 %v6280, %v6272
          %v6921 = vpack.c.b16 %v6281, %v6273
          %v6922 = vpack.c.b16 %v6290, %v6282
          %v6923 = vpack.c.b16 %v6291, %v6283
          %v6924 = vpack.c.b16 %v6292, %v6284
          %v6925 = vpack.c.b16 %v6293, %v6285
          %v6926 = vpack.c.b16 %v6294, %v6286
          %v6927 = vpack.c.b16 %v6295, %v6287
          %v6928 = vpack.c.b16 %v6296, %v6288
          %v6929 = vpack.c.b16 %v6297, %v6289
          %v6930 = vpack.c.b16 %v6306, %v6298
          %v6931 = vpack.c.b16 %v6307, %v6299
          %v6932 = vpack.c.b16 %v6308, %v6300
          %v6933 = vpack.c.b16 %v6309, %v6301
          %v6934 = vpack.c.b16 %v6310, %v6302
          %v6935 = vpack.c.b16 %v6311, %v6303
          %v6936 = vpack.c.b16 %v6312, %v6304
          %v6937 = vpack.c.b16 %v6313, %v6305
          %v6938 = vpack.c.b16 %v6322, %v6314
          %v6939 = vpack.c.b16 %v6323, %v6315
          %v6940 = vpack.c.b16 %v6324, %v6316
          %v6941 = vpack.c.b16 %v6325, %v6317
          %v6942 = vpack.c.b16 %v6326, %v6318
          %v6943 = vpack.c.b16 %v6327, %v6319
          %v6944 = vpack.c.b16 %v6328, %v6320
          %v6945 = vpack.c.b16 %v6329, %v6321
          %v6946 = vpack.c.b16 %v6338, %v6330
          %v6947 = vpack.c.b16 %v6339, %v6331
          %v6948 = vpack.c.b16 %v6340, %v6332
          %v6949 = vpack.c.b16 %v6341, %v6333
          %v6950 = vpack.c.b16 %v6342, %v6334
          %v6951 = vpack.c.b16 %v6343, %v6335
          %v6952 = vpack.c.b16 %v6344, %v6336
          %v6953 = vpack.c.b16 %v6345, %v6337
          %v6954 = vpack.c.b16 %v6354, %v6346
          %v6955 = vpack.c.b16 %v6355, %v6347
          %v6956 = vpack.c.b16 %v6356, %v6348
          %v6957 = vpack.c.b16 %v6357, %v6349
          %v6958 = vpack.c.b16 %v6358, %v6350
          %v6959 = vpack.c.b16 %v6359, %v6351
          %v6960 = vpack.c.b16 %v6360, %v6352
          %v6961 = vpack.c.b16 %v6361, %v6353
          %v6962 = vpack.c.b16 %v6370, %v6362
          %v6963 = vpack.c.b16 %v6371, %v6363
          %v6964 = vpack.c.b16 %v6372, %v6364
          %v6965 = vpack.c.b16 %v6373, %v6365
          %v6966 = vpack.c.b16 %v6374, %v6366
          %v6967 = vpack.c.b16 %v6375, %v6367
          %v6968 = vpack.c.b16 %v6376, %v6368
          %v6969 = vpack.c.b16 %v6377, %v6369
          %v6970 = vpack.c.b16 %v6386, %v6378
          %v6971 = vpack.c.b16 %v6387, %v6379
          %v6972 = vpack.c.b16 %v6388, %v6380
          %v6973 = vpack.c.b16 %v6389, %v6381
          %v6974 = vpack.c.b16 %v6390, %v6382
          %v6975 = vpack.c.b16 %v6391, %v6383
          %v6976 = vpack.c.b16 %v6392, %v6384
          %v6977 = vpack.c.b16 %v6393, %v6385
          %v6978 = vpack.c.b16 %v6402, %v6394
          %v6979 = vpack.c.b16 %v6403, %v6395
          %v6980 = vpack.c.b16 %v6404, %v6396
          %v6981 = vpack.c.b16 %v6405, %v6397
          %v6982 = vpack.c.b16 %v6406, %v6398
          %v6983 = vpack.c.b16 %v6407, %v6399
          %v6984 = vpack.c.b16 %v6408, %v6400
          %v6985 = vpack.c.b16 %v6409, %v6401
          %v6986 = vpack.c.b16 %v6418, %v6410
          %v6987 = vpack.c.b16 %v6419, %v6411
          %v6988 = vpack.c.b16 %v6420, %v6412
          %v6989 = vpack.c.b16 %v6421, %v6413
          %v6990 = vpack.c.b16 %v6422, %v6414
          %v6991 = vpack.c.b16 %v6423, %v6415
          %v6992 = vpack.c.b16 %v6424, %v6416
          %v6993 = vpack.c.b16 %v6425, %v6417
          %v6994 = vpack.c.b16 %v6434, %v6426
          %v6995 = vpack.c.b16 %v6435, %v6427
          %v6996 = vpack.c.b16 %v6436, %v6428
          %v6997 = vpack.c.b16 %v6437, %v6429
          %v6998 = vpack.c.b16 %v6438, %v6430
          %v6999 = vpack.c.b16 %v6439, %v6431
          %v7000 = vpack.c.b16 %v6440, %v6432
          %v7001 = vpack.c.b16 %v6441, %v6433
          %v7002 = vpack.c.b16 %v6450, %v6442
          %v7003 = vpack.c.b16 %v6451, %v6443
          %v7004 = vpack.c.b16 %v6452, %v6444
          %v7005 = vpack.c.b16 %v6453, %v6445
          %v7006 = vpack.c.b16 %v6454, %v6446
          %v7007 = vpack.c.b16 %v6455, %v6447
          %v7008 = vpack.c.b16 %v6456, %v6448
          %v7009 = vpack.c.b16 %v6457, %v6449
          %v7010 = vpack.c.b16 %v6466, %v6458
          %v7011 = vpack.c.b16 %v6467, %v6459
          %v7012 = vpack.c.b16 %v6468, %v6460
          %v7013 = vpack.c.b16 %v6469, %v6461
          %v7014 = vpack.c.b16 %v6470, %v6462
          %v7015 = vpack.c.b16 %v6471, %v6463
          %v7016 = vpack.c.b16 %v6472, %v6464
          %v7017 = vpack.c.b16 %v6473, %v6465
          %v7018 = vpack.c.b16 %v6482, %v6474
          %v7019 = vpack.c.b16 %v6483, %v6475
          %v7020 = vpack.c.b16 %v6484, %v6476
          %v7021 = vpack.c.b16 %v6485, %v6477
          %v7022 = vpack.c.b16 %v6486, %v6478
          %v7023 = vpack.c.b16 %v6487, %v6479
          %v7024 = vpack.c.b16 %v6488, %v6480
          %v7025 = vpack.c.b16 %v6489, %v6481
          %v7026 = vpack.c.b16 %v6498, %v6490
          %v7027 = vpack.c.b16 %v6499, %v6491
          %v7028 = vpack.c.b16 %v6500, %v6492
          %v7029 = vpack.c.b16 %v6501, %v6493
          %v7030 = vpack.c.b16 %v6502, %v6494
          %v7031 = vpack.c.b16 %v6503, %v6495
          %v7032 = vpack.c.b16 %v6504, %v6496
          %v7033 = vpack.c.b16 %v6505, %v6497
          %v7034 = vpack.c.b16 %v6514, %v6506
          %v7035 = vpack.c.b16 %v6515, %v6507
          %v7036 = vpack.c.b16 %v6516, %v6508
          %v7037 = vpack.c.b16 %v6517, %v6509
          %v7038 = vpack.c.b16 %v6518, %v6510
          %v7039 = vpack.c.b16 %v6519, %v6511
          %v7040 = vpack.c.b16 %v6520, %v6512
          %v7041 = vpack.c.b16 %v6521, %v6513
          %v7042 = vpack.c.b16 %v6530, %v6522
          %v7043 = vpack.c.b16 %v6531, %v6523
          %v7044 = vpack.c.b16 %v6532, %v6524
          %v7045 = vpack.c.b16 %v6533, %v6525
          %v7046 = vpack.c.b16 %v6534, %v6526
          %v7047 = vpack.c.b16 %v6535, %v6527
          %v7048 = vpack.c.b16 %v6536, %v6528
          %v7049 = vpack.c.b16 %v6537, %v6529
          %7562 = vmatpush.bf16.msra.mxu0 %v6594
          %7563 = vmatpush.bf16.msra.mxu0 %v6586
          %7564 = vmatpush.bf16.msra.mxu0 %v6578
          %7565 = vmatpush.bf16.msra.mxu0 %v6570
          %7566 = vmatpush.bf16.msra.mxu0 %v6562
          %7567 = vmatpush.bf16.msra.mxu0 %v6554
          %7568 = vmatpush.bf16.msra.mxu0 %v6546
          %7569 = vmatpush.bf16.msra.mxu0 %v6538
          %7570 = vmatmul.bf16.gmra.mxu0 %v4464
          %v7571 = vpop.f32.mrf.mxu0
          %v7572 = vadd.f32 %v4986, %v7571
          %v7573 = vpop.f32.mrf.mxu0
          %7574 = vdwg.mxu0
          %7575 = vmatpush.bf16.msra.mxu0 %v6658
          %7576 = vmatpush.bf16.msra.mxu0 %v6650
          %7577 = vmatpush.bf16.msra.mxu0 %v6642
          %7578 = vmatpush.bf16.msra.mxu0 %v6634
          %7579 = vmatpush.bf16.msra.mxu0 %v6626
          %7580 = vmatpush.bf16.msra.mxu0 %v6618
          %7581 = vmatpush.bf16.msra.mxu0 %v6610
          %7582 = vmatpush.bf16.msra.mxu0 %v6602
          %7583 = vmatmul.bf16.gmra.mxu0 %v4465
          %v7584 = vpop.f32.mrf.mxu0
          %v7585 = vadd.f32 %v7572, %v7584
          %v7586 = vpop.f32.mrf.mxu0
          %7587 = vdwg.mxu0
          %7588 = vmatpush.bf16.msra.mxu0 %v6722
          %7589 = vmatpush.bf16.msra.mxu0 %v6714
          %7590 = vmatpush.bf16.msra.mxu0 %v6706
          %7591 = vmatpush.bf16.msra.mxu0 %v6698
          %7592 = vmatpush.bf16.msra.mxu0 %v6690
          %7593 = vmatpush.bf16.msra.mxu0 %v6682
          %7594 = vmatpush.bf16.msra.mxu0 %v6674
          %7595 = vmatpush.bf16.msra.mxu0 %v6666
          %7596 = vmatmul.bf16.gmra.mxu0 %v4466
          %v7597 = vpop.f32.mrf.mxu0
          %v7598 = vadd.f32 %v7585, %v7597
          %v7599 = vpop.f32.mrf.mxu0
          %7600 = vdwg.mxu0
          %7601 = vmatpush.bf16.msra.mxu0 %v6786
          %7602 = vmatpush.bf16.msra.mxu0 %v6778
          %7603 = vmatpush.bf16.msra.mxu0 %v6770
          %7604 = vmatpush.bf16.msra.mxu0 %v6762
          %7605 = vmatpush.bf16.msra.mxu0 %v6754
          %7606 = vmatpush.bf16.msra.mxu0 %v6746
          %7607 = vmatpush.bf16.msra.mxu0 %v6738
          %7608 = vmatpush.bf16.msra.mxu0 %v6730
          %7609 = vmatmul.bf16.gmra.mxu0 %v4467
          %v7610 = vpop.f32.mrf.mxu0
          %v7611 = vadd.f32 %v7598, %v7610
          %v7612 = vpop.f32.mrf.mxu0
          %7613 = vdwg.mxu0
          %7614 = vmatpush.bf16.msra.mxu0 %v6850
          %7615 = vmatpush.bf16.msra.mxu0 %v6842
          %7616 = vmatpush.bf16.msra.mxu0 %v6834
          %7617 = vmatpush.bf16.msra.mxu0 %v6826
          %7618 = vmatpush.bf16.msra.mxu0 %v6818
          %7619 = vmatpush.bf16.msra.mxu0 %v6810
          %7620 = vmatpush.bf16.msra.mxu0 %v6802
          %7621 = vmatpush.bf16.msra.mxu0 %v6794
          %7622 = vmatmul.bf16.gmra.mxu0 %v4468
          %v7623 = vpop.f32.mrf.mxu0
          %v7624 = vadd.f32 %v7611, %v7623
          %v7625 = vpop.f32.mrf.mxu0
          %7626 = vdwg.mxu0
          %7627 = vmatpush.bf16.msra.mxu0 %v6914
          %7628 = vmatpush.bf16.msra.mxu0 %v6906
          %7629 = vmatpush.bf16.msra.mxu0 %v6898
          %7630 = vmatpush.bf16.msra.mxu0 %v6890
          %7631 = vmatpush.bf16.msra.mxu0 %v6882
          %7632 = vmatpush.bf16.msra.mxu0 %v6874
          %7633 = vmatpush.bf16.msra.mxu0 %v6866
          %7634 = vmatpush.bf16.msra.mxu0 %v6858
          %7635 = vmatmul.bf16.gmra.mxu0 %v4469
          %v7636 = vpop.f32.mrf.mxu0
          %v7637 = vadd.f32 %v7624, %v7636
          %v7638 = vpop.f32.mrf.mxu0
          %7639 = vdwg.mxu0
          %7640 = vmatpush.bf16.msra.mxu0 %v6978
          %7641 = vmatpush.bf16.msra.mxu0 %v6970
          %7642 = vmatpush.bf16.msra.mxu0 %v6962
          %7643 = vmatpush.bf16.msra.mxu0 %v6954
          %7644 = vmatpush.bf16.msra.mxu0 %v6946
          %7645 = vmatpush.bf16.msra.mxu0 %v6938
          %7646 = vmatpush.bf16.msra.mxu0 %v6930
          %7647 = vmatpush.bf16.msra.mxu0 %v6922
          %7648 = vmatmul.bf16.gmra.mxu0 %v4470
          %v7649 = vpop.f32.mrf.mxu0
          %v7650 = vadd.f32 %v7637, %v7649
          %v7651 = vpop.f32.mrf.mxu0
          %7652 = vdwg.mxu0
          %7653 = vmatpush.bf16.msra.mxu0 %v7042
          %7654 = vmatpush.bf16.msra.mxu0 %v7034
          %7655 = vmatpush.bf16.msra.mxu0 %v7026
          %7656 = vmatpush.bf16.msra.mxu0 %v7018
          %7657 = vmatpush.bf16.msra.mxu0 %v7010
          %7658 = vmatpush.bf16.msra.mxu0 %v7002
          %7659 = vmatpush.bf16.msra.mxu0 %v6994
          %7660 = vmatpush.bf16.msra.mxu0 %v6986
          %7661 = vmatmul.bf16.gmra.mxu0 %v4471
          %v7662 = vpop.f32.mrf.mxu0
          %v7663 = vadd.f32 %v7650, %v7662
          %v7664 = vpop.f32.mrf.mxu0
          %7665 = vdwg.mxu0
          %7666 = vmatpush.bf16.msra.mxu0 %v6595
          %7667 = vmatpush.bf16.msra.mxu0 %v6587
          %7668 = vmatpush.bf16.msra.mxu0 %v6579
          %7669 = vmatpush.bf16.msra.mxu0 %v6571
          %7670 = vmatpush.bf16.msra.mxu0 %v6563
          %7671 = vmatpush.bf16.msra.mxu0 %v6555
          %7672 = vmatpush.bf16.msra.mxu0 %v6547
          %7673 = vmatpush.bf16.msra.mxu0 %v6539
          %7674 = vmatmul.bf16.gmra.mxu0 %v4464
          %v7675 = vpop.f32.mrf.mxu0
          %v7676 = vadd.f32 %v4987, %v7675
          %v7677 = vpop.f32.mrf.mxu0
          %7678 = vdwg.mxu0
          %7679 = vmatpush.bf16.msra.mxu0 %v6659
          %7680 = vmatpush.bf16.msra.mxu0 %v6651
          %7681 = vmatpush.bf16.msra.mxu0 %v6643
          %7682 = vmatpush.bf16.msra.mxu0 %v6635
          %7683 = vmatpush.bf16.msra.mxu0 %v6627
          %7684 = vmatpush.bf16.msra.mxu0 %v6619
          %7685 = vmatpush.bf16.msra.mxu0 %v6611
          %7686 = vmatpush.bf16.msra.mxu0 %v6603
          %7687 = vmatmul.bf16.gmra.mxu0 %v4465
          %v7688 = vpop.f32.mrf.mxu0
          %v7689 = vadd.f32 %v7676, %v7688
          %v7690 = vpop.f32.mrf.mxu0
          %7691 = vdwg.mxu0
          %7692 = vmatpush.bf16.msra.mxu0 %v6723
          %7693 = vmatpush.bf16.msra.mxu0 %v6715
          %7694 = vmatpush.bf16.msra.mxu0 %v6707
          %7695 = vmatpush.bf16.msra.mxu0 %v6699
          %7696 = vmatpush.bf16.msra.mxu0 %v6691
          %7697 = vmatpush.bf16.msra.mxu0 %v6683
          %7698 = vmatpush.bf16.msra.mxu0 %v6675
          %7699 = vmatpush.bf16.msra.mxu0 %v6667
          %7700 = vmatmul.bf16.gmra.mxu0 %v4466
          %v7701 = vpop.f32.mrf.mxu0
          %v7702 = vadd.f32 %v7689, %v7701
          %v7703 = vpop.f32.mrf.mxu0
          %7704 = vdwg.mxu0
          %7705 = vmatpush.bf16.msra.mxu0 %v6787
          %7706 = vmatpush.bf16.msra.mxu0 %v6779
          %7707 = vmatpush.bf16.msra.mxu0 %v6771
          %7708 = vmatpush.bf16.msra.mxu0 %v6763
          %7709 = vmatpush.bf16.msra.mxu0 %v6755
          %7710 = vmatpush.bf16.msra.mxu0 %v6747
          %7711 = vmatpush.bf16.msra.mxu0 %v6739
          %7712 = vmatpush.bf16.msra.mxu0 %v6731
          %7713 = vmatmul.bf16.gmra.mxu0 %v4467
          %v7714 = vpop.f32.mrf.mxu0
          %v7715 = vadd.f32 %v7702, %v7714
          %v7716 = vpop.f32.mrf.mxu0
          %7717 = vdwg.mxu0
          %7718 = vmatpush.bf16.msra.mxu0 %v6851
          %7719 = vmatpush.bf16.msra.mxu0 %v6843
          %7720 = vmatpush.bf16.msra.mxu0 %v6835
          %7721 = vmatpush.bf16.msra.mxu0 %v6827
          %7722 = vmatpush.bf16.msra.mxu0 %v6819
          %7723 = vmatpush.bf16.msra.mxu0 %v6811
          %7724 = vmatpush.bf16.msra.mxu0 %v6803
          %7725 = vmatpush.bf16.msra.mxu0 %v6795
          %7726 = vmatmul.bf16.gmra.mxu0 %v4468
          %v7727 = vpop.f32.mrf.mxu0
          %v7728 = vadd.f32 %v7715, %v7727
          %v7729 = vpop.f32.mrf.mxu0
          %7730 = vdwg.mxu0
          %7731 = vmatpush.bf16.msra.mxu0 %v6915
          %7732 = vmatpush.bf16.msra.mxu0 %v6907
          %7733 = vmatpush.bf16.msra.mxu0 %v6899
          %7734 = vmatpush.bf16.msra.mxu0 %v6891
          %7735 = vmatpush.bf16.msra.mxu0 %v6883
          %7736 = vmatpush.bf16.msra.mxu0 %v6875
          %7737 = vmatpush.bf16.msra.mxu0 %v6867
          %7738 = vmatpush.bf16.msra.mxu0 %v6859
          %7739 = vmatmul.bf16.gmra.mxu0 %v4469
          %v7740 = vpop.f32.mrf.mxu0
          %v7741 = vadd.f32 %v7728, %v7740
          %v7742 = vpop.f32.mrf.mxu0
          %7743 = vdwg.mxu0
          %7744 = vmatpush.bf16.msra.mxu0 %v6979
          %7745 = vmatpush.bf16.msra.mxu0 %v6971
          %7746 = vmatpush.bf16.msra.mxu0 %v6963
          %7747 = vmatpush.bf16.msra.mxu0 %v6955
          %7748 = vmatpush.bf16.msra.mxu0 %v6947
          %7749 = vmatpush.bf16.msra.mxu0 %v6939
          %7750 = vmatpush.bf16.msra.mxu0 %v6931
          %7751 = vmatpush.bf16.msra.mxu0 %v6923
          %7752 = vmatmul.bf16.gmra.mxu0 %v4470
          %v7753 = vpop.f32.mrf.mxu0
          %v7754 = vadd.f32 %v7741, %v7753
          %v7755 = vpop.f32.mrf.mxu0
          %7756 = vdwg.mxu0
          %7757 = vmatpush.bf16.msra.mxu0 %v7043
          %7758 = vmatpush.bf16.msra.mxu0 %v7035
          %7759 = vmatpush.bf16.msra.mxu0 %v7027
          %7760 = vmatpush.bf16.msra.mxu0 %v7019
          %7761 = vmatpush.bf16.msra.mxu0 %v7011
          %7762 = vmatpush.bf16.msra.mxu0 %v7003
          %7763 = vmatpush.bf16.msra.mxu0 %v6995
          %7764 = vmatpush.bf16.msra.mxu0 %v6987
          %7765 = vmatmul.bf16.gmra.mxu0 %v4471
          %v7766 = vpop.f32.mrf.mxu0
          %v7767 = vadd.f32 %v7754, %v7766
          %v7768 = vpop.f32.mrf.mxu0
          %7769 = vdwg.mxu0
          %7770 = vmatpush.bf16.msra.mxu0 %v6596
          %7771 = vmatpush.bf16.msra.mxu0 %v6588
          %7772 = vmatpush.bf16.msra.mxu0 %v6580
          %7773 = vmatpush.bf16.msra.mxu0 %v6572
          %7774 = vmatpush.bf16.msra.mxu0 %v6564
          %7775 = vmatpush.bf16.msra.mxu0 %v6556
          %7776 = vmatpush.bf16.msra.mxu0 %v6548
          %7777 = vmatpush.bf16.msra.mxu0 %v6540
          %7778 = vmatmul.bf16.gmra.mxu0 %v4464
          %v7779 = vpop.f32.mrf.mxu0
          %v7780 = vadd.f32 %v4988, %v7779
          %v7781 = vpop.f32.mrf.mxu0
          %7782 = vdwg.mxu0
          %7783 = vmatpush.bf16.msra.mxu0 %v6660
          %7784 = vmatpush.bf16.msra.mxu0 %v6652
          %7785 = vmatpush.bf16.msra.mxu0 %v6644
          %7786 = vmatpush.bf16.msra.mxu0 %v6636
          %7787 = vmatpush.bf16.msra.mxu0 %v6628
          %7788 = vmatpush.bf16.msra.mxu0 %v6620
          %7789 = vmatpush.bf16.msra.mxu0 %v6612
          %7790 = vmatpush.bf16.msra.mxu0 %v6604
          %7791 = vmatmul.bf16.gmra.mxu0 %v4465
          %v7792 = vpop.f32.mrf.mxu0
          %v7793 = vadd.f32 %v7780, %v7792
          %v7794 = vpop.f32.mrf.mxu0
          %7795 = vdwg.mxu0
          %7796 = vmatpush.bf16.msra.mxu0 %v6724
          %7797 = vmatpush.bf16.msra.mxu0 %v6716
          %7798 = vmatpush.bf16.msra.mxu0 %v6708
          %7799 = vmatpush.bf16.msra.mxu0 %v6700
          %7800 = vmatpush.bf16.msra.mxu0 %v6692
          %7801 = vmatpush.bf16.msra.mxu0 %v6684
          %7802 = vmatpush.bf16.msra.mxu0 %v6676
          %7803 = vmatpush.bf16.msra.mxu0 %v6668
          %7804 = vmatmul.bf16.gmra.mxu0 %v4466
          %v7805 = vpop.f32.mrf.mxu0
          %v7806 = vadd.f32 %v7793, %v7805
          %v7807 = vpop.f32.mrf.mxu0
          %7808 = vdwg.mxu0
          %7809 = vmatpush.bf16.msra.mxu0 %v6788
          %7810 = vmatpush.bf16.msra.mxu0 %v6780
          %7811 = vmatpush.bf16.msra.mxu0 %v6772
          %7812 = vmatpush.bf16.msra.mxu0 %v6764
          %7813 = vmatpush.bf16.msra.mxu0 %v6756
          %7814 = vmatpush.bf16.msra.mxu0 %v6748
          %7815 = vmatpush.bf16.msra.mxu0 %v6740
          %7816 = vmatpush.bf16.msra.mxu0 %v6732
          %7817 = vmatmul.bf16.gmra.mxu0 %v4467
          %v7818 = vpop.f32.mrf.mxu0
          %v7819 = vadd.f32 %v7806, %v7818
          %v7820 = vpop.f32.mrf.mxu0
          %7821 = vdwg.mxu0
          %7822 = vmatpush.bf16.msra.mxu0 %v6852
          %7823 = vmatpush.bf16.msra.mxu0 %v6844
          %7824 = vmatpush.bf16.msra.mxu0 %v6836
          %7825 = vmatpush.bf16.msra.mxu0 %v6828
          %7826 = vmatpush.bf16.msra.mxu0 %v6820
          %7827 = vmatpush.bf16.msra.mxu0 %v6812
          %7828 = vmatpush.bf16.msra.mxu0 %v6804
          %7829 = vmatpush.bf16.msra.mxu0 %v6796
          %7830 = vmatmul.bf16.gmra.mxu0 %v4468
          %v7831 = vpop.f32.mrf.mxu0
          %v7832 = vadd.f32 %v7819, %v7831
          %v7833 = vpop.f32.mrf.mxu0
          %7834 = vdwg.mxu0
          %7835 = vmatpush.bf16.msra.mxu0 %v6916
          %7836 = vmatpush.bf16.msra.mxu0 %v6908
          %7837 = vmatpush.bf16.msra.mxu0 %v6900
          %7838 = vmatpush.bf16.msra.mxu0 %v6892
          %7839 = vmatpush.bf16.msra.mxu0 %v6884
          %7840 = vmatpush.bf16.msra.mxu0 %v6876
          %7841 = vmatpush.bf16.msra.mxu0 %v6868
          %7842 = vmatpush.bf16.msra.mxu0 %v6860
          %7843 = vmatmul.bf16.gmra.mxu0 %v4469
          %v7844 = vpop.f32.mrf.mxu0
          %v7845 = vadd.f32 %v7832, %v7844
          %v7846 = vpop.f32.mrf.mxu0
          %7847 = vdwg.mxu0
          %7848 = vmatpush.bf16.msra.mxu0 %v6980
          %7849 = vmatpush.bf16.msra.mxu0 %v6972
          %7850 = vmatpush.bf16.msra.mxu0 %v6964
          %7851 = vmatpush.bf16.msra.mxu0 %v6956
          %7852 = vmatpush.bf16.msra.mxu0 %v6948
          %7853 = vmatpush.bf16.msra.mxu0 %v6940
          %7854 = vmatpush.bf16.msra.mxu0 %v6932
          %7855 = vmatpush.bf16.msra.mxu0 %v6924
          %7856 = vmatmul.bf16.gmra.mxu0 %v4470
          %v7857 = vpop.f32.mrf.mxu0
          %v7858 = vadd.f32 %v7845, %v7857
          %v7859 = vpop.f32.mrf.mxu0
          %7860 = vdwg.mxu0
          %7861 = vmatpush.bf16.msra.mxu0 %v7044
          %7862 = vmatpush.bf16.msra.mxu0 %v7036
          %7863 = vmatpush.bf16.msra.mxu0 %v7028
          %7864 = vmatpush.bf16.msra.mxu0 %v7020
          %7865 = vmatpush.bf16.msra.mxu0 %v7012
          %7866 = vmatpush.bf16.msra.mxu0 %v7004
          %7867 = vmatpush.bf16.msra.mxu0 %v6996
          %7868 = vmatpush.bf16.msra.mxu0 %v6988
          %7869 = vmatmul.bf16.gmra.mxu0 %v4471
          %v7870 = vpop.f32.mrf.mxu0
          %v7871 = vadd.f32 %v7858, %v7870
          %v7872 = vpop.f32.mrf.mxu0
          %7873 = vdwg.mxu0
          %7874 = vmatpush.bf16.msra.mxu0 %v6597
          %7875 = vmatpush.bf16.msra.mxu0 %v6589
          %7876 = vmatpush.bf16.msra.mxu0 %v6581
          %7877 = vmatpush.bf16.msra.mxu0 %v6573
          %7878 = vmatpush.bf16.msra.mxu0 %v6565
          %7879 = vmatpush.bf16.msra.mxu0 %v6557
          %7880 = vmatpush.bf16.msra.mxu0 %v6549
          %7881 = vmatpush.bf16.msra.mxu0 %v6541
          %7882 = vmatmul.bf16.gmra.mxu0 %v4464
          %v7883 = vpop.f32.mrf.mxu0
          %v7884 = vadd.f32 %v4989, %v7883
          %v7885 = vpop.f32.mrf.mxu0
          %7886 = vdwg.mxu0
          %7887 = vmatpush.bf16.msra.mxu0 %v6661
          %7888 = vmatpush.bf16.msra.mxu0 %v6653
          %7889 = vmatpush.bf16.msra.mxu0 %v6645
          %7890 = vmatpush.bf16.msra.mxu0 %v6637
          %7891 = vmatpush.bf16.msra.mxu0 %v6629
          %7892 = vmatpush.bf16.msra.mxu0 %v6621
          %7893 = vmatpush.bf16.msra.mxu0 %v6613
          %7894 = vmatpush.bf16.msra.mxu0 %v6605
          %7895 = vmatmul.bf16.gmra.mxu0 %v4465
          %v7896 = vpop.f32.mrf.mxu0
          %v7897 = vadd.f32 %v7884, %v7896
          %v7898 = vpop.f32.mrf.mxu0
          %7899 = vdwg.mxu0
          %7900 = vmatpush.bf16.msra.mxu0 %v6725
          %7901 = vmatpush.bf16.msra.mxu0 %v6717
          %7902 = vmatpush.bf16.msra.mxu0 %v6709
          %7903 = vmatpush.bf16.msra.mxu0 %v6701
          %7904 = vmatpush.bf16.msra.mxu0 %v6693
          %7905 = vmatpush.bf16.msra.mxu0 %v6685
          %7906 = vmatpush.bf16.msra.mxu0 %v6677
          %7907 = vmatpush.bf16.msra.mxu0 %v6669
          %7908 = vmatmul.bf16.gmra.mxu0 %v4466
          %v7909 = vpop.f32.mrf.mxu0
          %v7910 = vadd.f32 %v7897, %v7909
          %v7911 = vpop.f32.mrf.mxu0
          %7912 = vdwg.mxu0
          %7913 = vmatpush.bf16.msra.mxu0 %v6789
          %7914 = vmatpush.bf16.msra.mxu0 %v6781
          %7915 = vmatpush.bf16.msra.mxu0 %v6773
          %7916 = vmatpush.bf16.msra.mxu0 %v6765
          %7917 = vmatpush.bf16.msra.mxu0 %v6757
          %7918 = vmatpush.bf16.msra.mxu0 %v6749
          %7919 = vmatpush.bf16.msra.mxu0 %v6741
          %7920 = vmatpush.bf16.msra.mxu0 %v6733
          %7921 = vmatmul.bf16.gmra.mxu0 %v4467
          %v7922 = vpop.f32.mrf.mxu0
          %v7923 = vadd.f32 %v7910, %v7922
          %v7924 = vpop.f32.mrf.mxu0
          %7925 = vdwg.mxu0
          %7926 = vmatpush.bf16.msra.mxu0 %v6853
          %7927 = vmatpush.bf16.msra.mxu0 %v6845
          %7928 = vmatpush.bf16.msra.mxu0 %v6837
          %7929 = vmatpush.bf16.msra.mxu0 %v6829
          %7930 = vmatpush.bf16.msra.mxu0 %v6821
          %7931 = vmatpush.bf16.msra.mxu0 %v6813
          %7932 = vmatpush.bf16.msra.mxu0 %v6805
          %7933 = vmatpush.bf16.msra.mxu0 %v6797
          %7934 = vmatmul.bf16.gmra.mxu0 %v4468
          %v7935 = vpop.f32.mrf.mxu0
          %v7936 = vadd.f32 %v7923, %v7935
          %v7937 = vpop.f32.mrf.mxu0
          %7938 = vdwg.mxu0
          %7939 = vmatpush.bf16.msra.mxu0 %v6917
          %7940 = vmatpush.bf16.msra.mxu0 %v6909
          %7941 = vmatpush.bf16.msra.mxu0 %v6901
          %7942 = vmatpush.bf16.msra.mxu0 %v6893
          %7943 = vmatpush.bf16.msra.mxu0 %v6885
          %7944 = vmatpush.bf16.msra.mxu0 %v6877
          %7945 = vmatpush.bf16.msra.mxu0 %v6869
          %7946 = vmatpush.bf16.msra.mxu0 %v6861
          %7947 = vmatmul.bf16.gmra.mxu0 %v4469
          %v7948 = vpop.f32.mrf.mxu0
          %v7949 = vadd.f32 %v7936, %v7948
          %v7950 = vpop.f32.mrf.mxu0
          %7951 = vdwg.mxu0
          %7952 = vmatpush.bf16.msra.mxu0 %v6981
          %7953 = vmatpush.bf16.msra.mxu0 %v6973
          %7954 = vmatpush.bf16.msra.mxu0 %v6965
          %7955 = vmatpush.bf16.msra.mxu0 %v6957
          %7956 = vmatpush.bf16.msra.mxu0 %v6949
          %7957 = vmatpush.bf16.msra.mxu0 %v6941
          %7958 = vmatpush.bf16.msra.mxu0 %v6933
          %7959 = vmatpush.bf16.msra.mxu0 %v6925
          %7960 = vmatmul.bf16.gmra.mxu0 %v4470
          %v7961 = vpop.f32.mrf.mxu0
          %v7962 = vadd.f32 %v7949, %v7961
          %v7963 = vpop.f32.mrf.mxu0
          %7964 = vdwg.mxu0
          %7965 = vmatpush.bf16.msra.mxu0 %v7045
          %7966 = vmatpush.bf16.msra.mxu0 %v7037
          %7967 = vmatpush.bf16.msra.mxu0 %v7029
          %7968 = vmatpush.bf16.msra.mxu0 %v7021
          %7969 = vmatpush.bf16.msra.mxu0 %v7013
          %7970 = vmatpush.bf16.msra.mxu0 %v7005
          %7971 = vmatpush.bf16.msra.mxu0 %v6997
          %7972 = vmatpush.bf16.msra.mxu0 %v6989
          %7973 = vmatmul.bf16.gmra.mxu0 %v4471
          %v7974 = vpop.f32.mrf.mxu0
          %v7975 = vadd.f32 %v7962, %v7974
          %v7976 = vpop.f32.mrf.mxu0
          %7977 = vdwg.mxu0
          %7978 = vmatpush.bf16.msra.mxu0 %v6598
          %7979 = vmatpush.bf16.msra.mxu0 %v6590
          %7980 = vmatpush.bf16.msra.mxu0 %v6582
          %7981 = vmatpush.bf16.msra.mxu0 %v6574
          %7982 = vmatpush.bf16.msra.mxu0 %v6566
          %7983 = vmatpush.bf16.msra.mxu0 %v6558
          %7984 = vmatpush.bf16.msra.mxu0 %v6550
          %7985 = vmatpush.bf16.msra.mxu0 %v6542
          %7986 = vmatmul.bf16.gmra.mxu0 %v4464
          %v7987 = vpop.f32.mrf.mxu0
          %v7988 = vadd.f32 %v4990, %v7987
          %v7989 = vpop.f32.mrf.mxu0
          %7990 = vdwg.mxu0
          %7991 = vmatpush.bf16.msra.mxu0 %v6662
          %7992 = vmatpush.bf16.msra.mxu0 %v6654
          %7993 = vmatpush.bf16.msra.mxu0 %v6646
          %7994 = vmatpush.bf16.msra.mxu0 %v6638
          %7995 = vmatpush.bf16.msra.mxu0 %v6630
          %7996 = vmatpush.bf16.msra.mxu0 %v6622
          %7997 = vmatpush.bf16.msra.mxu0 %v6614
          %7998 = vmatpush.bf16.msra.mxu0 %v6606
          %7999 = vmatmul.bf16.gmra.mxu0 %v4465
          %v8000 = vpop.f32.mrf.mxu0
          %v8001 = vadd.f32 %v7988, %v8000
          %v8002 = vpop.f32.mrf.mxu0
          %8003 = vdwg.mxu0
          %8004 = vmatpush.bf16.msra.mxu0 %v6726
          %8005 = vmatpush.bf16.msra.mxu0 %v6718
          %8006 = vmatpush.bf16.msra.mxu0 %v6710
          %8007 = vmatpush.bf16.msra.mxu0 %v6702
          %8008 = vmatpush.bf16.msra.mxu0 %v6694
          %8009 = vmatpush.bf16.msra.mxu0 %v6686
          %8010 = vmatpush.bf16.msra.mxu0 %v6678
          %8011 = vmatpush.bf16.msra.mxu0 %v6670
          %8012 = vmatmul.bf16.gmra.mxu0 %v4466
          %v8013 = vpop.f32.mrf.mxu0
          %v8014 = vadd.f32 %v8001, %v8013
          %v8015 = vpop.f32.mrf.mxu0
          %8016 = vdwg.mxu0
          %8017 = vmatpush.bf16.msra.mxu0 %v6790
          %8018 = vmatpush.bf16.msra.mxu0 %v6782
          %8019 = vmatpush.bf16.msra.mxu0 %v6774
          %8020 = vmatpush.bf16.msra.mxu0 %v6766
          %8021 = vmatpush.bf16.msra.mxu0 %v6758
          %8022 = vmatpush.bf16.msra.mxu0 %v6750
          %8023 = vmatpush.bf16.msra.mxu0 %v6742
          %8024 = vmatpush.bf16.msra.mxu0 %v6734
          %8025 = vmatmul.bf16.gmra.mxu0 %v4467
          %v8026 = vpop.f32.mrf.mxu0
          %v8027 = vadd.f32 %v8014, %v8026
          %v8028 = vpop.f32.mrf.mxu0
          %8029 = vdwg.mxu0
          %8030 = vmatpush.bf16.msra.mxu0 %v6854
          %8031 = vmatpush.bf16.msra.mxu0 %v6846
          %8032 = vmatpush.bf16.msra.mxu0 %v6838
          %8033 = vmatpush.bf16.msra.mxu0 %v6830
          %8034 = vmatpush.bf16.msra.mxu0 %v6822
          %8035 = vmatpush.bf16.msra.mxu0 %v6814
          %8036 = vmatpush.bf16.msra.mxu0 %v6806
          %8037 = vmatpush.bf16.msra.mxu0 %v6798
          %8038 = vmatmul.bf16.gmra.mxu0 %v4468
          %v8039 = vpop.f32.mrf.mxu0
          %v8040 = vadd.f32 %v8027, %v8039
          %v8041 = vpop.f32.mrf.mxu0
          %8042 = vdwg.mxu0
          %8043 = vmatpush.bf16.msra.mxu0 %v6918
          %8044 = vmatpush.bf16.msra.mxu0 %v6910
          %8045 = vmatpush.bf16.msra.mxu0 %v6902
          %8046 = vmatpush.bf16.msra.mxu0 %v6894
          %8047 = vmatpush.bf16.msra.mxu0 %v6886
          %8048 = vmatpush.bf16.msra.mxu0 %v6878
          %8049 = vmatpush.bf16.msra.mxu0 %v6870
          %8050 = vmatpush.bf16.msra.mxu0 %v6862
          %8051 = vmatmul.bf16.gmra.mxu0 %v4469
          %v8052 = vpop.f32.mrf.mxu0
          %v8053 = vadd.f32 %v8040, %v8052
          %v8054 = vpop.f32.mrf.mxu0
          %8055 = vdwg.mxu0
          %8056 = vmatpush.bf16.msra.mxu0 %v6982
          %8057 = vmatpush.bf16.msra.mxu0 %v6974
          %8058 = vmatpush.bf16.msra.mxu0 %v6966
          %8059 = vmatpush.bf16.msra.mxu0 %v6958
          %8060 = vmatpush.bf16.msra.mxu0 %v6950
          %8061 = vmatpush.bf16.msra.mxu0 %v6942
          %8062 = vmatpush.bf16.msra.mxu0 %v6934
          %8063 = vmatpush.bf16.msra.mxu0 %v6926
          %8064 = vmatmul.bf16.gmra.mxu0 %v4470
          %v8065 = vpop.f32.mrf.mxu0
          %v8066 = vadd.f32 %v8053, %v8065
          %v8067 = vpop.f32.mrf.mxu0
          %8068 = vdwg.mxu0
          %8069 = vmatpush.bf16.msra.mxu0 %v7046
          %8070 = vmatpush.bf16.msra.mxu0 %v7038
          %8071 = vmatpush.bf16.msra.mxu0 %v7030
          %8072 = vmatpush.bf16.msra.mxu0 %v7022
          %8073 = vmatpush.bf16.msra.mxu0 %v7014
          %8074 = vmatpush.bf16.msra.mxu0 %v7006
          %8075 = vmatpush.bf16.msra.mxu0 %v6998
          %8076 = vmatpush.bf16.msra.mxu0 %v6990
          %8077 = vmatmul.bf16.gmra.mxu0 %v4471
          %v8078 = vpop.f32.mrf.mxu0
          %v8079 = vadd.f32 %v8066, %v8078
          %v8080 = vpop.f32.mrf.mxu0
          %8081 = vdwg.mxu0
          %8082 = vmatpush.bf16.msra.mxu0 %v6599
          %8083 = vmatpush.bf16.msra.mxu0 %v6591
          %8084 = vmatpush.bf16.msra.mxu0 %v6583
          %8085 = vmatpush.bf16.msra.mxu0 %v6575
          %8086 = vmatpush.bf16.msra.mxu0 %v6567
          %8087 = vmatpush.bf16.msra.mxu0 %v6559
          %8088 = vmatpush.bf16.msra.mxu0 %v6551
          %8089 = vmatpush.bf16.msra.mxu0 %v6543
          %8090 = vmatmul.bf16.gmra.mxu0 %v4464
          %v8091 = vpop.f32.mrf.mxu0
          %v8092 = vadd.f32 %v4991, %v8091
          %v8093 = vpop.f32.mrf.mxu0
          %8094 = vdwg.mxu0
          %8095 = vmatpush.bf16.msra.mxu0 %v6663
          %8096 = vmatpush.bf16.msra.mxu0 %v6655
          %8097 = vmatpush.bf16.msra.mxu0 %v6647
          %8098 = vmatpush.bf16.msra.mxu0 %v6639
          %8099 = vmatpush.bf16.msra.mxu0 %v6631
          %8100 = vmatpush.bf16.msra.mxu0 %v6623
          %8101 = vmatpush.bf16.msra.mxu0 %v6615
          %8102 = vmatpush.bf16.msra.mxu0 %v6607
          %8103 = vmatmul.bf16.gmra.mxu0 %v4465
          %v8104 = vpop.f32.mrf.mxu0
          %v8105 = vadd.f32 %v8092, %v8104
          %v8106 = vpop.f32.mrf.mxu0
          %8107 = vdwg.mxu0
          %8108 = vmatpush.bf16.msra.mxu0 %v6727
          %8109 = vmatpush.bf16.msra.mxu0 %v6719
          %8110 = vmatpush.bf16.msra.mxu0 %v6711
          %8111 = vmatpush.bf16.msra.mxu0 %v6703
          %8112 = vmatpush.bf16.msra.mxu0 %v6695
          %8113 = vmatpush.bf16.msra.mxu0 %v6687
          %8114 = vmatpush.bf16.msra.mxu0 %v6679
          %8115 = vmatpush.bf16.msra.mxu0 %v6671
          %8116 = vmatmul.bf16.gmra.mxu0 %v4466
          %v8117 = vpop.f32.mrf.mxu0
          %v8118 = vadd.f32 %v8105, %v8117
          %v8119 = vpop.f32.mrf.mxu0
          %8120 = vdwg.mxu0
          %8121 = vmatpush.bf16.msra.mxu0 %v6791
          %8122 = vmatpush.bf16.msra.mxu0 %v6783
          %8123 = vmatpush.bf16.msra.mxu0 %v6775
          %8124 = vmatpush.bf16.msra.mxu0 %v6767
          %8125 = vmatpush.bf16.msra.mxu0 %v6759
          %8126 = vmatpush.bf16.msra.mxu0 %v6751
          %8127 = vmatpush.bf16.msra.mxu0 %v6743
          %8128 = vmatpush.bf16.msra.mxu0 %v6735
          %8129 = vmatmul.bf16.gmra.mxu0 %v4467
          %v8130 = vpop.f32.mrf.mxu0
          %v8131 = vadd.f32 %v8118, %v8130
          %v8132 = vpop.f32.mrf.mxu0
          %8133 = vdwg.mxu0
          %8134 = vmatpush.bf16.msra.mxu0 %v6855
          %8135 = vmatpush.bf16.msra.mxu0 %v6847
          %8136 = vmatpush.bf16.msra.mxu0 %v6839
          %8137 = vmatpush.bf16.msra.mxu0 %v6831
          %8138 = vmatpush.bf16.msra.mxu0 %v6823
          %8139 = vmatpush.bf16.msra.mxu0 %v6815
          %8140 = vmatpush.bf16.msra.mxu0 %v6807
          %8141 = vmatpush.bf16.msra.mxu0 %v6799
          %8142 = vmatmul.bf16.gmra.mxu0 %v4468
          %v8143 = vpop.f32.mrf.mxu0
          %v8144 = vadd.f32 %v8131, %v8143
          %v8145 = vpop.f32.mrf.mxu0
          %8146 = vdwg.mxu0
          %8147 = vmatpush.bf16.msra.mxu0 %v6919
          %8148 = vmatpush.bf16.msra.mxu0 %v6911
          %8149 = vmatpush.bf16.msra.mxu0 %v6903
          %8150 = vmatpush.bf16.msra.mxu0 %v6895
          %8151 = vmatpush.bf16.msra.mxu0 %v6887
          %8152 = vmatpush.bf16.msra.mxu0 %v6879
          %8153 = vmatpush.bf16.msra.mxu0 %v6871
          %8154 = vmatpush.bf16.msra.mxu0 %v6863
          %8155 = vmatmul.bf16.gmra.mxu0 %v4469
          %v8156 = vpop.f32.mrf.mxu0
          %v8157 = vadd.f32 %v8144, %v8156
          %v8158 = vpop.f32.mrf.mxu0
          %8159 = vdwg.mxu0
          %8160 = vmatpush.bf16.msra.mxu0 %v6983
          %8161 = vmatpush.bf16.msra.mxu0 %v6975
          %8162 = vmatpush.bf16.msra.mxu0 %v6967
          %8163 = vmatpush.bf16.msra.mxu0 %v6959
          %8164 = vmatpush.bf16.msra.mxu0 %v6951
          %8165 = vmatpush.bf16.msra.mxu0 %v6943
          %8166 = vmatpush.bf16.msra.mxu0 %v6935
          %8167 = vmatpush.bf16.msra.mxu0 %v6927
          %8168 = vmatmul.bf16.gmra.mxu0 %v4470
          %v8169 = vpop.f32.mrf.mxu0
          %v8170 = vadd.f32 %v8157, %v8169
          %v8171 = vpop.f32.mrf.mxu0
          %8172 = vdwg.mxu0
          %8173 = vmatpush.bf16.msra.mxu0 %v7047
          %8174 = vmatpush.bf16.msra.mxu0 %v7039
          %8175 = vmatpush.bf16.msra.mxu0 %v7031
          %8176 = vmatpush.bf16.msra.mxu0 %v7023
          %8177 = vmatpush.bf16.msra.mxu0 %v7015
          %8178 = vmatpush.bf16.msra.mxu0 %v7007
          %8179 = vmatpush.bf16.msra.mxu0 %v6999
          %8180 = vmatpush.bf16.msra.mxu0 %v6991
          %8181 = vmatmul.bf16.gmra.mxu0 %v4471
          %v8182 = vpop.f32.mrf.mxu0
          %v8183 = vadd.f32 %v8170, %v8182
          %v8184 = vpop.f32.mrf.mxu0
          %8185 = vdwg.mxu0
          %8186 = vmatpush.bf16.msra.mxu0 %v6600
          %8187 = vmatpush.bf16.msra.mxu0 %v6592
          %8188 = vmatpush.bf16.msra.mxu0 %v6584
          %8189 = vmatpush.bf16.msra.mxu0 %v6576
          %8190 = vmatpush.bf16.msra.mxu0 %v6568
          %8191 = vmatpush.bf16.msra.mxu0 %v6560
          %8192 = vmatpush.bf16.msra.mxu0 %v6552
          %8193 = vmatpush.bf16.msra.mxu0 %v6544
          %8194 = vmatmul.bf16.gmra.mxu0 %v4464
          %v8195 = vpop.f32.mrf.mxu0
          %v8196 = vadd.f32 %v4992, %v8195
          %v8197 = vpop.f32.mrf.mxu0
          %8198 = vdwg.mxu0
          %8199 = vmatpush.bf16.msra.mxu0 %v6664
          %8200 = vmatpush.bf16.msra.mxu0 %v6656
          %8201 = vmatpush.bf16.msra.mxu0 %v6648
          %8202 = vmatpush.bf16.msra.mxu0 %v6640
          %8203 = vmatpush.bf16.msra.mxu0 %v6632
          %8204 = vmatpush.bf16.msra.mxu0 %v6624
          %8205 = vmatpush.bf16.msra.mxu0 %v6616
          %8206 = vmatpush.bf16.msra.mxu0 %v6608
          %8207 = vmatmul.bf16.gmra.mxu0 %v4465
          %v8208 = vpop.f32.mrf.mxu0
          %v8209 = vadd.f32 %v8196, %v8208
          %v8210 = vpop.f32.mrf.mxu0
          %8211 = vdwg.mxu0
          %8212 = vmatpush.bf16.msra.mxu0 %v6728
          %8213 = vmatpush.bf16.msra.mxu0 %v6720
          %8214 = vmatpush.bf16.msra.mxu0 %v6712
          %8215 = vmatpush.bf16.msra.mxu0 %v6704
          %8216 = vmatpush.bf16.msra.mxu0 %v6696
          %8217 = vmatpush.bf16.msra.mxu0 %v6688
          %8218 = vmatpush.bf16.msra.mxu0 %v6680
          %8219 = vmatpush.bf16.msra.mxu0 %v6672
          %8220 = vmatmul.bf16.gmra.mxu0 %v4466
          %v8221 = vpop.f32.mrf.mxu0
          %v8222 = vadd.f32 %v8209, %v8221
          %v8223 = vpop.f32.mrf.mxu0
          %8224 = vdwg.mxu0
          %8225 = vmatpush.bf16.msra.mxu0 %v6792
          %8226 = vmatpush.bf16.msra.mxu0 %v6784
          %8227 = vmatpush.bf16.msra.mxu0 %v6776
          %8228 = vmatpush.bf16.msra.mxu0 %v6768
          %8229 = vmatpush.bf16.msra.mxu0 %v6760
          %8230 = vmatpush.bf16.msra.mxu0 %v6752
          %8231 = vmatpush.bf16.msra.mxu0 %v6744
          %8232 = vmatpush.bf16.msra.mxu0 %v6736
          %8233 = vmatmul.bf16.gmra.mxu0 %v4467
          %v8234 = vpop.f32.mrf.mxu0
          %v8235 = vadd.f32 %v8222, %v8234
          %v8236 = vpop.f32.mrf.mxu0
          %8237 = vdwg.mxu0
          %8238 = vmatpush.bf16.msra.mxu0 %v6856
          %8239 = vmatpush.bf16.msra.mxu0 %v6848
          %8240 = vmatpush.bf16.msra.mxu0 %v6840
          %8241 = vmatpush.bf16.msra.mxu0 %v6832
          %8242 = vmatpush.bf16.msra.mxu0 %v6824
          %8243 = vmatpush.bf16.msra.mxu0 %v6816
          %8244 = vmatpush.bf16.msra.mxu0 %v6808
          %8245 = vmatpush.bf16.msra.mxu0 %v6800
          %8246 = vmatmul.bf16.gmra.mxu0 %v4468
          %v8247 = vpop.f32.mrf.mxu0
          %v8248 = vadd.f32 %v8235, %v8247
          %v8249 = vpop.f32.mrf.mxu0
          %8250 = vdwg.mxu0
          %8251 = vmatpush.bf16.msra.mxu0 %v6920
          %8252 = vmatpush.bf16.msra.mxu0 %v6912
          %8253 = vmatpush.bf16.msra.mxu0 %v6904
          %8254 = vmatpush.bf16.msra.mxu0 %v6896
          %8255 = vmatpush.bf16.msra.mxu0 %v6888
          %8256 = vmatpush.bf16.msra.mxu0 %v6880
          %8257 = vmatpush.bf16.msra.mxu0 %v6872
          %8258 = vmatpush.bf16.msra.mxu0 %v6864
          %8259 = vmatmul.bf16.gmra.mxu0 %v4469
          %v8260 = vpop.f32.mrf.mxu0
          %v8261 = vadd.f32 %v8248, %v8260
          %v8262 = vpop.f32.mrf.mxu0
          %8263 = vdwg.mxu0
          %8264 = vmatpush.bf16.msra.mxu0 %v6984
          %8265 = vmatpush.bf16.msra.mxu0 %v6976
          %8266 = vmatpush.bf16.msra.mxu0 %v6968
          %8267 = vmatpush.bf16.msra.mxu0 %v6960
          %8268 = vmatpush.bf16.msra.mxu0 %v6952
          %8269 = vmatpush.bf16.msra.mxu0 %v6944
          %8270 = vmatpush.bf16.msra.mxu0 %v6936
          %8271 = vmatpush.bf16.msra.mxu0 %v6928
          %8272 = vmatmul.bf16.gmra.mxu0 %v4470
          %v8273 = vpop.f32.mrf.mxu0
          %v8274 = vadd.f32 %v8261, %v8273
          %v8275 = vpop.f32.mrf.mxu0
          %8276 = vdwg.mxu0
          %8277 = vmatpush.bf16.msra.mxu0 %v7048
          %8278 = vmatpush.bf16.msra.mxu0 %v7040
          %8279 = vmatpush.bf16.msra.mxu0 %v7032
          %8280 = vmatpush.bf16.msra.mxu0 %v7024
          %8281 = vmatpush.bf16.msra.mxu0 %v7016
          %8282 = vmatpush.bf16.msra.mxu0 %v7008
          %8283 = vmatpush.bf16.msra.mxu0 %v7000
          %8284 = vmatpush.bf16.msra.mxu0 %v6992
          %8285 = vmatmul.bf16.gmra.mxu0 %v4471
          %v8286 = vpop.f32.mrf.mxu0
          %v8287 = vadd.f32 %v8274, %v8286
          %v8288 = vpop.f32.mrf.mxu0
          %8289 = vdwg.mxu0
          %8290 = vmatpush.bf16.msra.mxu0 %v6601
          %8291 = vmatpush.bf16.msra.mxu0 %v6593
          %8292 = vmatpush.bf16.msra.mxu0 %v6585
          %8293 = vmatpush.bf16.msra.mxu0 %v6577
          %8294 = vmatpush.bf16.msra.mxu0 %v6569
          %8295 = vmatpush.bf16.msra.mxu0 %v6561
          %8296 = vmatpush.bf16.msra.mxu0 %v6553
          %8297 = vmatpush.bf16.msra.mxu0 %v6545
          %8298 = vmatmul.bf16.gmra.mxu0 %v4464
          %v8299 = vpop.f32.mrf.mxu0
          %v8300 = vadd.f32 %v4993, %v8299
          %v8301 = vpop.f32.mrf.mxu0
          %8302 = vdwg.mxu0
          %8303 = vmatpush.bf16.msra.mxu0 %v6665
          %8304 = vmatpush.bf16.msra.mxu0 %v6657
          %8305 = vmatpush.bf16.msra.mxu0 %v6649
          %8306 = vmatpush.bf16.msra.mxu0 %v6641
          %8307 = vmatpush.bf16.msra.mxu0 %v6633
          %8308 = vmatpush.bf16.msra.mxu0 %v6625
          %8309 = vmatpush.bf16.msra.mxu0 %v6617
          %8310 = vmatpush.bf16.msra.mxu0 %v6609
          %8311 = vmatmul.bf16.gmra.mxu0 %v4465
          %v8312 = vpop.f32.mrf.mxu0
          %v8313 = vadd.f32 %v8300, %v8312
          %v8314 = vpop.f32.mrf.mxu0
          %8315 = vdwg.mxu0
          %8316 = vmatpush.bf16.msra.mxu0 %v6729
          %8317 = vmatpush.bf16.msra.mxu0 %v6721
          %8318 = vmatpush.bf16.msra.mxu0 %v6713
          %8319 = vmatpush.bf16.msra.mxu0 %v6705
          %8320 = vmatpush.bf16.msra.mxu0 %v6697
          %8321 = vmatpush.bf16.msra.mxu0 %v6689
          %8322 = vmatpush.bf16.msra.mxu0 %v6681
          %8323 = vmatpush.bf16.msra.mxu0 %v6673
          %8324 = vmatmul.bf16.gmra.mxu0 %v4466
          %v8325 = vpop.f32.mrf.mxu0
          %v8326 = vadd.f32 %v8313, %v8325
          %v8327 = vpop.f32.mrf.mxu0
          %8328 = vdwg.mxu0
          %8329 = vmatpush.bf16.msra.mxu0 %v6793
          %8330 = vmatpush.bf16.msra.mxu0 %v6785
          %8331 = vmatpush.bf16.msra.mxu0 %v6777
          %8332 = vmatpush.bf16.msra.mxu0 %v6769
          %8333 = vmatpush.bf16.msra.mxu0 %v6761
          %8334 = vmatpush.bf16.msra.mxu0 %v6753
          %8335 = vmatpush.bf16.msra.mxu0 %v6745
          %8336 = vmatpush.bf16.msra.mxu0 %v6737
          %8337 = vmatmul.bf16.gmra.mxu0 %v4467
          %v8338 = vpop.f32.mrf.mxu0
          %v8339 = vadd.f32 %v8326, %v8338
          %v8340 = vpop.f32.mrf.mxu0
          %8341 = vdwg.mxu0
          %8342 = vmatpush.bf16.msra.mxu0 %v6857
          %8343 = vmatpush.bf16.msra.mxu0 %v6849
          %8344 = vmatpush.bf16.msra.mxu0 %v6841
          %8345 = vmatpush.bf16.msra.mxu0 %v6833
          %8346 = vmatpush.bf16.msra.mxu0 %v6825
          %8347 = vmatpush.bf16.msra.mxu0 %v6817
          %8348 = vmatpush.bf16.msra.mxu0 %v6809
          %8349 = vmatpush.bf16.msra.mxu0 %v6801
          %8350 = vmatmul.bf16.gmra.mxu0 %v4468
          %v8351 = vpop.f32.mrf.mxu0
          %v8352 = vadd.f32 %v8339, %v8351
          %v8353 = vpop.f32.mrf.mxu0
          %8354 = vdwg.mxu0
          %8355 = vmatpush.bf16.msra.mxu0 %v6921
          %8356 = vmatpush.bf16.msra.mxu0 %v6913
          %8357 = vmatpush.bf16.msra.mxu0 %v6905
          %8358 = vmatpush.bf16.msra.mxu0 %v6897
          %8359 = vmatpush.bf16.msra.mxu0 %v6889
          %8360 = vmatpush.bf16.msra.mxu0 %v6881
          %8361 = vmatpush.bf16.msra.mxu0 %v6873
          %8362 = vmatpush.bf16.msra.mxu0 %v6865
          %8363 = vmatmul.bf16.gmra.mxu0 %v4469
          %v8364 = vpop.f32.mrf.mxu0
          %v8365 = vadd.f32 %v8352, %v8364
          %v8366 = vpop.f32.mrf.mxu0
          %8367 = vdwg.mxu0
          %8368 = vmatpush.bf16.msra.mxu0 %v6985
          %8369 = vmatpush.bf16.msra.mxu0 %v6977
          %8370 = vmatpush.bf16.msra.mxu0 %v6969
          %8371 = vmatpush.bf16.msra.mxu0 %v6961
          %8372 = vmatpush.bf16.msra.mxu0 %v6953
          %8373 = vmatpush.bf16.msra.mxu0 %v6945
          %8374 = vmatpush.bf16.msra.mxu0 %v6937
          %8375 = vmatpush.bf16.msra.mxu0 %v6929
          %8376 = vmatmul.bf16.gmra.mxu0 %v4470
          %v8377 = vpop.f32.mrf.mxu0
          %v8378 = vadd.f32 %v8365, %v8377
          %v8379 = vpop.f32.mrf.mxu0
          %8380 = vdwg.mxu0
          %8381 = vmatpush.bf16.msra.mxu0 %v7049
          %8382 = vmatpush.bf16.msra.mxu0 %v7041
          %8383 = vmatpush.bf16.msra.mxu0 %v7033
          %8384 = vmatpush.bf16.msra.mxu0 %v7025
          %8385 = vmatpush.bf16.msra.mxu0 %v7017
          %8386 = vmatpush.bf16.msra.mxu0 %v7009
          %8387 = vmatpush.bf16.msra.mxu0 %v7001
          %8388 = vmatpush.bf16.msra.mxu0 %v6993
          %8389 = vmatmul.bf16.gmra.mxu0 %v4471
          %v8390 = vpop.f32.mrf.mxu0
          %v8391 = vadd.f32 %v8378, %v8390
          %v8392 = vpop.f32.mrf.mxu0
          %8393 = vdwg.mxu0
          %v8394 = vmax.f32 %v7663, 0.0
          %v8395 = vmax.f32 %v7767, 0.0
          %v8396 = vmax.f32 %v7871, 0.0
          %v8397 = vmax.f32 %v7975, 0.0
          %v8398 = vmax.f32 %v8079, 0.0
          %v8399 = vmax.f32 %v8183, 0.0
          %v8400 = vmax.f32 %v8287, 0.0
          %v8401 = vmax.f32 %v8391, 0.0
          %v8402 = vpack.c.bf16 %v8394, %v8394
          %v8403 = vpack.c.bf16 %v8395, %v8395
          %v8404 = vpack.c.bf16 %v8396, %v8396
          %v8405 = vpack.c.bf16 %v8397, %v8397
          %v8406 = vpack.c.bf16 %v8398, %v8398
          %v8407 = vpack.c.bf16 %v8399, %v8399
          %v8408 = vpack.c.bf16 %v8400, %v8400
          %v8409 = vpack.c.bf16 %v8401, %v8401
          %v8410 = vld [vmem:[%s5] sm:$0xff]
          %v8411 = vld [vmem:[%s5 + $0x8] sm:$0xff]
          %v8412 = vld [vmem:[%s5 + $0x10] sm:$0xff]
          %v8413 = vld [vmem:[%s5 + $0x18] sm:$0xff]
          %v8414 = vld [vmem:[%s5 + $0x20] sm:$0xff]
          %v8415 = vld [vmem:[%s5 + $0x28] sm:$0xff]
          %v8416 = vld [vmem:[%s5 + $0x30] sm:$0xff]
          %v8417 = vld [vmem:[%s5 + $0x38] sm:$0xff]
          %v8418 = vld [vmem:[%s5 + $0x40] sm:$0xff]
          %v8419 = vld [vmem:[%s5 + $0x48] sm:$0xff]
          %v8420 = vld [vmem:[%s5 + $0x50] sm:$0xff]
          %v8421 = vld [vmem:[%s5 + $0x58] sm:$0xff]
          %v8422 = vld [vmem:[%s5 + $0x60] sm:$0xff]
          %v8423 = vld [vmem:[%s5 + $0x68] sm:$0xff]
          %v8424 = vld [vmem:[%s5 + $0x70] sm:$0xff]
          %v8425 = vld [vmem:[%s5 + $0x78] sm:$0xff]
          %v8426 = vld [vmem:[%s5 + $0x80] sm:$0xff]
          %v8427 = vld [vmem:[%s5 + $0x88] sm:$0xff]
          %v8428 = vld [vmem:[%s5 + $0x90] sm:$0xff]
          %v8429 = vld [vmem:[%s5 + $0x98] sm:$0xff]
          %v8430 = vld [vmem:[%s5 + $0xa0] sm:$0xff]
          %v8431 = vld [vmem:[%s5 + $0xa8] sm:$0xff]
          %v8432 = vld [vmem:[%s5 + $0xb0] sm:$0xff]
          %v8433 = vld [vmem:[%s5 + $0xb8] sm:$0xff]
          %v8434 = vld [vmem:[%s5 + $0xc0] sm:$0xff]
          %v8435 = vld [vmem:[%s5 + $0xc8] sm:$0xff]
          %v8436 = vld [vmem:[%s5 + $0xd0] sm:$0xff]
          %v8437 = vld [vmem:[%s5 + $0xd8] sm:$0xff]
          %v8438 = vld [vmem:[%s5 + $0xe0] sm:$0xff]
          %v8439 = vld [vmem:[%s5 + $0xe8] sm:$0xff]
          %v8440 = vld [vmem:[%s5 + $0xf0] sm:$0xff]
          %v8441 = vld [vmem:[%s5 + $0xf8] sm:$0xff]
          %v8442 = vld [vmem:[%s5 + $0x100] sm:$0xff]
          %v8443 = vld [vmem:[%s5 + $0x108] sm:$0xff]
          %v8444 = vld [vmem:[%s5 + $0x110] sm:$0xff]
          %v8445 = vld [vmem:[%s5 + $0x118] sm:$0xff]
          %v8446 = vld [vmem:[%s5 + $0x120] sm:$0xff]
          %v8447 = vld [vmem:[%s5 + $0x128] sm:$0xff]
          %v8448 = vld [vmem:[%s5 + $0x130] sm:$0xff]
          %v8449 = vld [vmem:[%s5 + $0x138] sm:$0xff]
          %v8450 = vld [vmem:[%s5 + $0x140] sm:$0xff]
          %v8451 = vld [vmem:[%s5 + $0x148] sm:$0xff]
          %v8452 = vld [vmem:[%s5 + $0x150] sm:$0xff]
          %v8453 = vld [vmem:[%s5 + $0x158] sm:$0xff]
          %v8454 = vld [vmem:[%s5 + $0x160] sm:$0xff]
          %v8455 = vld [vmem:[%s5 + $0x168] sm:$0xff]
          %v8456 = vld [vmem:[%s5 + $0x170] sm:$0xff]
          %v8457 = vld [vmem:[%s5 + $0x178] sm:$0xff]
          %v8458 = vld [vmem:[%s5 + $0x180] sm:$0xff]
          %v8459 = vld [vmem:[%s5 + $0x188] sm:$0xff]
          %v8460 = vld [vmem:[%s5 + $0x190] sm:$0xff]
          %v8461 = vld [vmem:[%s5 + $0x198] sm:$0xff]
          %v8462 = vld [vmem:[%s5 + $0x1a0] sm:$0xff]
          %v8463 = vld [vmem:[%s5 + $0x1a8] sm:$0xff]
          %v8464 = vld [vmem:[%s5 + $0x1b0] sm:$0xff]
          %v8465 = vld [vmem:[%s5 + $0x1b8] sm:$0xff]
          %v8466 = vld [vmem:[%s5 + $0x1c0] sm:$0xff]
          %v8467 = vld [vmem:[%s5 + $0x1c8] sm:$0xff]
          %v8468 = vld [vmem:[%s5 + $0x1d0] sm:$0xff]
          %v8469 = vld [vmem:[%s5 + $0x1d8] sm:$0xff]
          %v8470 = vld [vmem:[%s5 + $0x1e0] sm:$0xff]
          %v8471 = vld [vmem:[%s5 + $0x1e8] sm:$0xff]
          %v8472 = vld [vmem:[%s5 + $0x1f0] sm:$0xff]
          %v8473 = vld [vmem:[%s5 + $0x1f8] sm:$0xff]
          %v8474 = vld [vmem:[%s5 + $0x200] sm:$0xff]
          %v8475 = vld [vmem:[%s5 + $0x208] sm:$0xff]
          %v8476 = vld [vmem:[%s5 + $0x210] sm:$0xff]
          %v8477 = vld [vmem:[%s5 + $0x218] sm:$0xff]
          %v8478 = vld [vmem:[%s5 + $0x220] sm:$0xff]
          %v8479 = vld [vmem:[%s5 + $0x228] sm:$0xff]
          %v8480 = vld [vmem:[%s5 + $0x230] sm:$0xff]
          %v8481 = vld [vmem:[%s5 + $0x238] sm:$0xff]
          %v8482 = vld [vmem:[%s5 + $0x240] sm:$0xff]
          %v8483 = vld [vmem:[%s5 + $0x248] sm:$0xff]
          %v8484 = vld [vmem:[%s5 + $0x250] sm:$0xff]
          %v8485 = vld [vmem:[%s5 + $0x258] sm:$0xff]
          %v8486 = vld [vmem:[%s5 + $0x260] sm:$0xff]
          %v8487 = vld [vmem:[%s5 + $0x268] sm:$0xff]
          %v8488 = vld [vmem:[%s5 + $0x270] sm:$0xff]
          %v8489 = vld [vmem:[%s5 + $0x278] sm:$0xff]
          %v8490 = vld [vmem:[%s5 + $0x280] sm:$0xff]
          %v8491 = vld [vmem:[%s5 + $0x288] sm:$0xff]
          %v8492 = vld [vmem:[%s5 + $0x290] sm:$0xff]
          %v8493 = vld [vmem:[%s5 + $0x298] sm:$0xff]
          %v8494 = vld [vmem:[%s5 + $0x2a0] sm:$0xff]
          %v8495 = vld [vmem:[%s5 + $0x2a8] sm:$0xff]
          %v8496 = vld [vmem:[%s5 + $0x2b0] sm:$0xff]
          %v8497 = vld [vmem:[%s5 + $0x2b8] sm:$0xff]
          %v8498 = vld [vmem:[%s5 + $0x2c0] sm:$0xff]
          %v8499 = vld [vmem:[%s5 + $0x2c8] sm:$0xff]
          %v8500 = vld [vmem:[%s5 + $0x2d0] sm:$0xff]
          %v8501 = vld [vmem:[%s5 + $0x2d8] sm:$0xff]
          %v8502 = vld [vmem:[%s5 + $0x2e0] sm:$0xff]
          %v8503 = vld [vmem:[%s5 + $0x2e8] sm:$0xff]
          %v8504 = vld [vmem:[%s5 + $0x2f0] sm:$0xff]
          %v8505 = vld [vmem:[%s5 + $0x2f8] sm:$0xff]
          %v8506 = vld [vmem:[%s5 + $0x300] sm:$0xff]
          %v8507 = vld [vmem:[%s5 + $0x308] sm:$0xff]
          %v8508 = vld [vmem:[%s5 + $0x310] sm:$0xff]
          %v8509 = vld [vmem:[%s5 + $0x318] sm:$0xff]
          %v8510 = vld [vmem:[%s5 + $0x320] sm:$0xff]
          %v8511 = vld [vmem:[%s5 + $0x328] sm:$0xff]
          %v8512 = vld [vmem:[%s5 + $0x330] sm:$0xff]
          %v8513 = vld [vmem:[%s5 + $0x338] sm:$0xff]
          %v8514 = vld [vmem:[%s5 + $0x340] sm:$0xff]
          %v8515 = vld [vmem:[%s5 + $0x348] sm:$0xff]
          %v8516 = vld [vmem:[%s5 + $0x350] sm:$0xff]
          %v8517 = vld [vmem:[%s5 + $0x358] sm:$0xff]
          %v8518 = vld [vmem:[%s5 + $0x360] sm:$0xff]
          %v8519 = vld [vmem:[%s5 + $0x368] sm:$0xff]
          %v8520 = vld [vmem:[%s5 + $0x370] sm:$0xff]
          %v8521 = vld [vmem:[%s5 + $0x378] sm:$0xff]
          %v8522 = vld [vmem:[%s5 + $0x380] sm:$0xff]
          %v8523 = vld [vmem:[%s5 + $0x388] sm:$0xff]
          %v8524 = vld [vmem:[%s5 + $0x390] sm:$0xff]
          %v8525 = vld [vmem:[%s5 + $0x398] sm:$0xff]
          %v8526 = vld [vmem:[%s5 + $0x3a0] sm:$0xff]
          %v8527 = vld [vmem:[%s5 + $0x3a8] sm:$0xff]
          %v8528 = vld [vmem:[%s5 + $0x3b0] sm:$0xff]
          %v8529 = vld [vmem:[%s5 + $0x3b8] sm:$0xff]
          %v8530 = vld [vmem:[%s5 + $0x3c0] sm:$0xff]
          %v8531 = vld [vmem:[%s5 + $0x3c8] sm:$0xff]
          %v8532 = vld [vmem:[%s5 + $0x3d0] sm:$0xff]
          %v8533 = vld [vmem:[%s5 + $0x3d8] sm:$0xff]
          %v8534 = vld [vmem:[%s5 + $0x3e0] sm:$0xff]
          %v8535 = vld [vmem:[%s5 + $0x3e8] sm:$0xff]
          %v8536 = vld [vmem:[%s5 + $0x3f0] sm:$0xff]
          %v8537 = vld [vmem:[%s5 + $0x3f8] sm:$0xff]
          %v8538 = vld [vmem:[%s5 + $0x400] sm:$0xff]
          %v8539 = vld [vmem:[%s5 + $0x408] sm:$0xff]
          %v8540 = vld [vmem:[%s5 + $0x410] sm:$0xff]
          %v8541 = vld [vmem:[%s5 + $0x418] sm:$0xff]
          %v8542 = vld [vmem:[%s5 + $0x420] sm:$0xff]
          %v8543 = vld [vmem:[%s5 + $0x428] sm:$0xff]
          %v8544 = vld [vmem:[%s5 + $0x430] sm:$0xff]
          %v8545 = vld [vmem:[%s5 + $0x438] sm:$0xff]
          %v8546 = vld [vmem:[%s5 + $0x440] sm:$0xff]
          %v8547 = vld [vmem:[%s5 + $0x448] sm:$0xff]
          %v8548 = vld [vmem:[%s5 + $0x450] sm:$0xff]
          %v8549 = vld [vmem:[%s5 + $0x458] sm:$0xff]
          %v8550 = vld [vmem:[%s5 + $0x460] sm:$0xff]
          %v8551 = vld [vmem:[%s5 + $0x468] sm:$0xff]
          %v8552 = vld [vmem:[%s5 + $0x470] sm:$0xff]
          %v8553 = vld [vmem:[%s5 + $0x478] sm:$0xff]
          %v8554 = vld [vmem:[%s5 + $0x480] sm:$0xff]
          %v8555 = vld [vmem:[%s5 + $0x488] sm:$0xff]
          %v8556 = vld [vmem:[%s5 + $0x490] sm:$0xff]
          %v8557 = vld [vmem:[%s5 + $0x498] sm:$0xff]
          %v8558 = vld [vmem:[%s5 + $0x4a0] sm:$0xff]
          %v8559 = vld [vmem:[%s5 + $0x4a8] sm:$0xff]
          %v8560 = vld [vmem:[%s5 + $0x4b0] sm:$0xff]
          %v8561 = vld [vmem:[%s5 + $0x4b8] sm:$0xff]
          %v8562 = vld [vmem:[%s5 + $0x4c0] sm:$0xff]
          %v8563 = vld [vmem:[%s5 + $0x4c8] sm:$0xff]
          %v8564 = vld [vmem:[%s5 + $0x4d0] sm:$0xff]
          %v8565 = vld [vmem:[%s5 + $0x4d8] sm:$0xff]
          %v8566 = vld [vmem:[%s5 + $0x4e0] sm:$0xff]
          %v8567 = vld [vmem:[%s5 + $0x4e8] sm:$0xff]
          %v8568 = vld [vmem:[%s5 + $0x4f0] sm:$0xff]
          %v8569 = vld [vmem:[%s5 + $0x4f8] sm:$0xff]
          %v8570 = vld [vmem:[%s5 + $0x500] sm:$0xff]
          %v8571 = vld [vmem:[%s5 + $0x508] sm:$0xff]
          %v8572 = vld [vmem:[%s5 + $0x510] sm:$0xff]
          %v8573 = vld [vmem:[%s5 + $0x518] sm:$0xff]
          %v8574 = vld [vmem:[%s5 + $0x520] sm:$0xff]
          %v8575 = vld [vmem:[%s5 + $0x528] sm:$0xff]
          %v8576 = vld [vmem:[%s5 + $0x530] sm:$0xff]
          %v8577 = vld [vmem:[%s5 + $0x538] sm:$0xff]
          %v8578 = vld [vmem:[%s5 + $0x540] sm:$0xff]
          %v8579 = vld [vmem:[%s5 + $0x548] sm:$0xff]
          %v8580 = vld [vmem:[%s5 + $0x550] sm:$0xff]
          %v8581 = vld [vmem:[%s5 + $0x558] sm:$0xff]
          %v8582 = vld [vmem:[%s5 + $0x560] sm:$0xff]
          %v8583 = vld [vmem:[%s5 + $0x568] sm:$0xff]
          %v8584 = vld [vmem:[%s5 + $0x570] sm:$0xff]
          %v8585 = vld [vmem:[%s5 + $0x578] sm:$0xff]
          %v8586 = vld [vmem:[%s5 + $0x580] sm:$0xff]
          %v8587 = vld [vmem:[%s5 + $0x588] sm:$0xff]
          %v8588 = vld [vmem:[%s5 + $0x590] sm:$0xff]
          %v8589 = vld [vmem:[%s5 + $0x598] sm:$0xff]
          %v8590 = vld [vmem:[%s5 + $0x5a0] sm:$0xff]
          %v8591 = vld [vmem:[%s5 + $0x5a8] sm:$0xff]
          %v8592 = vld [vmem:[%s5 + $0x5b0] sm:$0xff]
          %v8593 = vld [vmem:[%s5 + $0x5b8] sm:$0xff]
          %v8594 = vld [vmem:[%s5 + $0x5c0] sm:$0xff]
          %v8595 = vld [vmem:[%s5 + $0x5c8] sm:$0xff]
          %v8596 = vld [vmem:[%s5 + $0x5d0] sm:$0xff]
          %v8597 = vld [vmem:[%s5 + $0x5d8] sm:$0xff]
          %v8598 = vld [vmem:[%s5 + $0x5e0] sm:$0xff]
          %v8599 = vld [vmem:[%s5 + $0x5e8] sm:$0xff]
          %v8600 = vld [vmem:[%s5 + $0x5f0] sm:$0xff]
          %v8601 = vld [vmem:[%s5 + $0x5f8] sm:$0xff]
          %v8602 = vld [vmem:[%s5 + $0x600] sm:$0xff]
          %v8603 = vld [vmem:[%s5 + $0x608] sm:$0xff]
          %v8604 = vld [vmem:[%s5 + $0x610] sm:$0xff]
          %v8605 = vld [vmem:[%s5 + $0x618] sm:$0xff]
          %v8606 = vld [vmem:[%s5 + $0x620] sm:$0xff]
          %v8607 = vld [vmem:[%s5 + $0x628] sm:$0xff]
          %v8608 = vld [vmem:[%s5 + $0x630] sm:$0xff]
          %v8609 = vld [vmem:[%s5 + $0x638] sm:$0xff]
          %v8610 = vld [vmem:[%s5 + $0x640] sm:$0xff]
          %v8611 = vld [vmem:[%s5 + $0x648] sm:$0xff]
          %v8612 = vld [vmem:[%s5 + $0x650] sm:$0xff]
          %v8613 = vld [vmem:[%s5 + $0x658] sm:$0xff]
          %v8614 = vld [vmem:[%s5 + $0x660] sm:$0xff]
          %v8615 = vld [vmem:[%s5 + $0x668] sm:$0xff]
          %v8616 = vld [vmem:[%s5 + $0x670] sm:$0xff]
          %v8617 = vld [vmem:[%s5 + $0x678] sm:$0xff]
          %v8618 = vld [vmem:[%s5 + $0x680] sm:$0xff]
          %v8619 = vld [vmem:[%s5 + $0x688] sm:$0xff]
          %v8620 = vld [vmem:[%s5 + $0x690] sm:$0xff]
          %v8621 = vld [vmem:[%s5 + $0x698] sm:$0xff]
          %v8622 = vld [vmem:[%s5 + $0x6a0] sm:$0xff]
          %v8623 = vld [vmem:[%s5 + $0x6a8] sm:$0xff]
          %v8624 = vld [vmem:[%s5 + $0x6b0] sm:$0xff]
          %v8625 = vld [vmem:[%s5 + $0x6b8] sm:$0xff]
          %v8626 = vld [vmem:[%s5 + $0x6c0] sm:$0xff]
          %v8627 = vld [vmem:[%s5 + $0x6c8] sm:$0xff]
          %v8628 = vld [vmem:[%s5 + $0x6d0] sm:$0xff]
          %v8629 = vld [vmem:[%s5 + $0x6d8] sm:$0xff]
          %v8630 = vld [vmem:[%s5 + $0x6e0] sm:$0xff]
          %v8631 = vld [vmem:[%s5 + $0x6e8] sm:$0xff]
          %v8632 = vld [vmem:[%s5 + $0x6f0] sm:$0xff]
          %v8633 = vld [vmem:[%s5 + $0x6f8] sm:$0xff]
          %v8634 = vld [vmem:[%s5 + $0x700] sm:$0xff]
          %v8635 = vld [vmem:[%s5 + $0x708] sm:$0xff]
          %v8636 = vld [vmem:[%s5 + $0x710] sm:$0xff]
          %v8637 = vld [vmem:[%s5 + $0x718] sm:$0xff]
          %v8638 = vld [vmem:[%s5 + $0x720] sm:$0xff]
          %v8639 = vld [vmem:[%s5 + $0x728] sm:$0xff]
          %v8640 = vld [vmem:[%s5 + $0x730] sm:$0xff]
          %v8641 = vld [vmem:[%s5 + $0x738] sm:$0xff]
          %v8642 = vld [vmem:[%s5 + $0x740] sm:$0xff]
          %v8643 = vld [vmem:[%s5 + $0x748] sm:$0xff]
          %v8644 = vld [vmem:[%s5 + $0x750] sm:$0xff]
          %v8645 = vld [vmem:[%s5 + $0x758] sm:$0xff]
          %v8646 = vld [vmem:[%s5 + $0x760] sm:$0xff]
          %v8647 = vld [vmem:[%s5 + $0x768] sm:$0xff]
          %v8648 = vld [vmem:[%s5 + $0x770] sm:$0xff]
          %v8649 = vld [vmem:[%s5 + $0x778] sm:$0xff]
          %v8650 = vld [vmem:[%s5 + $0x780] sm:$0xff]
          %v8651 = vld [vmem:[%s5 + $0x788] sm:$0xff]
          %v8652 = vld [vmem:[%s5 + $0x790] sm:$0xff]
          %v8653 = vld [vmem:[%s5 + $0x798] sm:$0xff]
          %v8654 = vld [vmem:[%s5 + $0x7a0] sm:$0xff]
          %v8655 = vld [vmem:[%s5 + $0x7a8] sm:$0xff]
          %v8656 = vld [vmem:[%s5 + $0x7b0] sm:$0xff]
          %v8657 = vld [vmem:[%s5 + $0x7b8] sm:$0xff]
          %v8658 = vld [vmem:[%s5 + $0x7c0] sm:$0xff]
          %v8659 = vld [vmem:[%s5 + $0x7c8] sm:$0xff]
          %v8660 = vld [vmem:[%s5 + $0x7d0] sm:$0xff]
          %v8661 = vld [vmem:[%s5 + $0x7d8] sm:$0xff]
          %v8662 = vld [vmem:[%s5 + $0x7e0] sm:$0xff]
          %v8663 = vld [vmem:[%s5 + $0x7e8] sm:$0xff]
          %v8664 = vld [vmem:[%s5 + $0x7f0] sm:$0xff]
          %v8665 = vld [vmem:[%s5 + $0x7f8] sm:$0xff]
          %v8666 = vld [vmem:[%s6] sm:$0xf]
          %v8668 = vperm.slane %v8666, 0
          %v8669 = vperm.slane %v8666, 1
          %v8670 = vperm.slane %v8666, 2
          %v8671 = vperm.slane %v8666, 3
          %v8932 = vunpack.c.l.b16 %v8410
          %v8933 = vunpack.c.h.b16 %v8410
          %v8934 = vunpack.c.l.b16 %v8411
          %v8935 = vunpack.c.h.b16 %v8411
          %v8936 = vunpack.c.l.b16 %v8412
          %v8937 = vunpack.c.h.b16 %v8412
          %v8938 = vunpack.c.l.b16 %v8413
          %v8939 = vunpack.c.h.b16 %v8413
          %v8940 = vunpack.c.l.b16 %v8414
          %v8941 = vunpack.c.h.b16 %v8414
          %v8942 = vunpack.c.l.b16 %v8415
          %v8943 = vunpack.c.h.b16 %v8415
          %v8944 = vunpack.c.l.b16 %v8416
          %v8945 = vunpack.c.h.b16 %v8416
          %v8946 = vunpack.c.l.b16 %v8417
          %v8947 = vunpack.c.h.b16 %v8417
          %v8948 = vunpack.c.l.b16 %v8418
          %v8949 = vunpack.c.h.b16 %v8418
          %v8950 = vunpack.c.l.b16 %v8419
          %v8951 = vunpack.c.h.b16 %v8419
          %v8952 = vunpack.c.l.b16 %v8420
          %v8953 = vunpack.c.h.b16 %v8420
          %v8954 = vunpack.c.l.b16 %v8421
          %v8955 = vunpack.c.h.b16 %v8421
          %v8956 = vunpack.c.l.b16 %v8422
          %v8957 = vunpack.c.h.b16 %v8422
          %v8958 = vunpack.c.l.b16 %v8423
          %v8959 = vunpack.c.h.b16 %v8423
          %v8960 = vunpack.c.l.b16 %v8424
          %v8961 = vunpack.c.h.b16 %v8424
          %v8962 = vunpack.c.l.b16 %v8425
          %v8963 = vunpack.c.h.b16 %v8425
          %v8964 = vunpack.c.l.b16 %v8426
          %v8965 = vunpack.c.h.b16 %v8426
          %v8966 = vunpack.c.l.b16 %v8427
          %v8967 = vunpack.c.h.b16 %v8427
          %v8968 = vunpack.c.l.b16 %v8428
          %v8969 = vunpack.c.h.b16 %v8428
          %v8970 = vunpack.c.l.b16 %v8429
          %v8971 = vunpack.c.h.b16 %v8429
          %v8972 = vunpack.c.l.b16 %v8430
          %v8973 = vunpack.c.h.b16 %v8430
          %v8974 = vunpack.c.l.b16 %v8431
          %v8975 = vunpack.c.h.b16 %v8431
          %v8976 = vunpack.c.l.b16 %v8432
          %v8977 = vunpack.c.h.b16 %v8432
          %v8978 = vunpack.c.l.b16 %v8433
          %v8979 = vunpack.c.h.b16 %v8433
          %v8980 = vunpack.c.l.b16 %v8434
          %v8981 = vunpack.c.h.b16 %v8434
          %v8982 = vunpack.c.l.b16 %v8435
          %v8983 = vunpack.c.h.b16 %v8435
          %v8984 = vunpack.c.l.b16 %v8436
          %v8985 = vunpack.c.h.b16 %v8436
          %v8986 = vunpack.c.l.b16 %v8437
          %v8987 = vunpack.c.h.b16 %v8437
          %v8988 = vunpack.c.l.b16 %v8438
          %v8989 = vunpack.c.h.b16 %v8438
          %v8990 = vunpack.c.l.b16 %v8439
          %v8991 = vunpack.c.h.b16 %v8439
          %v8992 = vunpack.c.l.b16 %v8440
          %v8993 = vunpack.c.h.b16 %v8440
          %v8994 = vunpack.c.l.b16 %v8441
          %v8995 = vunpack.c.h.b16 %v8441
          %v8996 = vunpack.c.l.b16 %v8442
          %v8997 = vunpack.c.h.b16 %v8442
          %v8998 = vunpack.c.l.b16 %v8443
          %v8999 = vunpack.c.h.b16 %v8443
          %v9000 = vunpack.c.l.b16 %v8444
          %v9001 = vunpack.c.h.b16 %v8444
          %v9002 = vunpack.c.l.b16 %v8445
          %v9003 = vunpack.c.h.b16 %v8445
          %v9004 = vunpack.c.l.b16 %v8446
          %v9005 = vunpack.c.h.b16 %v8446
          %v9006 = vunpack.c.l.b16 %v8447
          %v9007 = vunpack.c.h.b16 %v8447
          %v9008 = vunpack.c.l.b16 %v8448
          %v9009 = vunpack.c.h.b16 %v8448
          %v9010 = vunpack.c.l.b16 %v8449
          %v9011 = vunpack.c.h.b16 %v8449
          %v9012 = vunpack.c.l.b16 %v8450
          %v9013 = vunpack.c.h.b16 %v8450
          %v9014 = vunpack.c.l.b16 %v8451
          %v9015 = vunpack.c.h.b16 %v8451
          %v9016 = vunpack.c.l.b16 %v8452
          %v9017 = vunpack.c.h.b16 %v8452
          %v9018 = vunpack.c.l.b16 %v8453
          %v9019 = vunpack.c.h.b16 %v8453
          %v9020 = vunpack.c.l.b16 %v8454
          %v9021 = vunpack.c.h.b16 %v8454
          %v9022 = vunpack.c.l.b16 %v8455
          %v9023 = vunpack.c.h.b16 %v8455
          %v9024 = vunpack.c.l.b16 %v8456
          %v9025 = vunpack.c.h.b16 %v8456
          %v9026 = vunpack.c.l.b16 %v8457
          %v9027 = vunpack.c.h.b16 %v8457
          %v9028 = vunpack.c.l.b16 %v8458
          %v9029 = vunpack.c.h.b16 %v8458
          %v9030 = vunpack.c.l.b16 %v8459
          %v9031 = vunpack.c.h.b16 %v8459
          %v9032 = vunpack.c.l.b16 %v8460
          %v9033 = vunpack.c.h.b16 %v8460
          %v9034 = vunpack.c.l.b16 %v8461
          %v9035 = vunpack.c.h.b16 %v8461
          %v9036 = vunpack.c.l.b16 %v8462
          %v9037 = vunpack.c.h.b16 %v8462
          %v9038 = vunpack.c.l.b16 %v8463
          %v9039 = vunpack.c.h.b16 %v8463
          %v9040 = vunpack.c.l.b16 %v8464
          %v9041 = vunpack.c.h.b16 %v8464
          %v9042 = vunpack.c.l.b16 %v8465
          %v9043 = vunpack.c.h.b16 %v8465
          %v9044 = vunpack.c.l.b16 %v8466
          %v9045 = vunpack.c.h.b16 %v8466
          %v9046 = vunpack.c.l.b16 %v8467
          %v9047 = vunpack.c.h.b16 %v8467
          %v9048 = vunpack.c.l.b16 %v8468
          %v9049 = vunpack.c.h.b16 %v8468
          %v9050 = vunpack.c.l.b16 %v8469
          %v9051 = vunpack.c.h.b16 %v8469
          %v9052 = vunpack.c.l.b16 %v8470
          %v9053 = vunpack.c.h.b16 %v8470
          %v9054 = vunpack.c.l.b16 %v8471
          %v9055 = vunpack.c.h.b16 %v8471
          %v9056 = vunpack.c.l.b16 %v8472
          %v9057 = vunpack.c.h.b16 %v8472
          %v9058 = vunpack.c.l.b16 %v8473
          %v9059 = vunpack.c.h.b16 %v8473
          %v9060 = vunpack.c.l.b16 %v8474
          %v9061 = vunpack.c.h.b16 %v8474
          %v9062 = vunpack.c.l.b16 %v8475
          %v9063 = vunpack.c.h.b16 %v8475
          %v9064 = vunpack.c.l.b16 %v8476
          %v9065 = vunpack.c.h.b16 %v8476
          %v9066 = vunpack.c.l.b16 %v8477
          %v9067 = vunpack.c.h.b16 %v8477
          %v9068 = vunpack.c.l.b16 %v8478
          %v9069 = vunpack.c.h.b16 %v8478
          %v9070 = vunpack.c.l.b16 %v8479
          %v9071 = vunpack.c.h.b16 %v8479
          %v9072 = vunpack.c.l.b16 %v8480
          %v9073 = vunpack.c.h.b16 %v8480
          %v9074 = vunpack.c.l.b16 %v8481
          %v9075 = vunpack.c.h.b16 %v8481
          %v9076 = vunpack.c.l.b16 %v8482
          %v9077 = vunpack.c.h.b16 %v8482
          %v9078 = vunpack.c.l.b16 %v8483
          %v9079 = vunpack.c.h.b16 %v8483
          %v9080 = vunpack.c.l.b16 %v8484
          %v9081 = vunpack.c.h.b16 %v8484
          %v9082 = vunpack.c.l.b16 %v8485
          %v9083 = vunpack.c.h.b16 %v8485
          %v9084 = vunpack.c.l.b16 %v8486
          %v9085 = vunpack.c.h.b16 %v8486
          %v9086 = vunpack.c.l.b16 %v8487
          %v9087 = vunpack.c.h.b16 %v8487
          %v9088 = vunpack.c.l.b16 %v8488
          %v9089 = vunpack.c.h.b16 %v8488
          %v9090 = vunpack.c.l.b16 %v8489
          %v9091 = vunpack.c.h.b16 %v8489
          %v9092 = vunpack.c.l.b16 %v8490
          %v9093 = vunpack.c.h.b16 %v8490
          %v9094 = vunpack.c.l.b16 %v8491
          %v9095 = vunpack.c.h.b16 %v8491
          %v9096 = vunpack.c.l.b16 %v8492
          %v9097 = vunpack.c.h.b16 %v8492
          %v9098 = vunpack.c.l.b16 %v8493
          %v9099 = vunpack.c.h.b16 %v8493
          %v9100 = vunpack.c.l.b16 %v8494
          %v9101 = vunpack.c.h.b16 %v8494
          %v9102 = vunpack.c.l.b16 %v8495
          %v9103 = vunpack.c.h.b16 %v8495
          %v9104 = vunpack.c.l.b16 %v8496
          %v9105 = vunpack.c.h.b16 %v8496
          %v9106 = vunpack.c.l.b16 %v8497
          %v9107 = vunpack.c.h.b16 %v8497
          %v9108 = vunpack.c.l.b16 %v8498
          %v9109 = vunpack.c.h.b16 %v8498
          %v9110 = vunpack.c.l.b16 %v8499
          %v9111 = vunpack.c.h.b16 %v8499
          %v9112 = vunpack.c.l.b16 %v8500
          %v9113 = vunpack.c.h.b16 %v8500
          %v9114 = vunpack.c.l.b16 %v8501
          %v9115 = vunpack.c.h.b16 %v8501
          %v9116 = vunpack.c.l.b16 %v8502
          %v9117 = vunpack.c.h.b16 %v8502
          %v9118 = vunpack.c.l.b16 %v8503
          %v9119 = vunpack.c.h.b16 %v8503
          %v9120 = vunpack.c.l.b16 %v8504
          %v9121 = vunpack.c.h.b16 %v8504
          %v9122 = vunpack.c.l.b16 %v8505
          %v9123 = vunpack.c.h.b16 %v8505
          %v9124 = vunpack.c.l.b16 %v8506
          %v9125 = vunpack.c.h.b16 %v8506
          %v9126 = vunpack.c.l.b16 %v8507
          %v9127 = vunpack.c.h.b16 %v8507
          %v9128 = vunpack.c.l.b16 %v8508
          %v9129 = vunpack.c.h.b16 %v8508
          %v9130 = vunpack.c.l.b16 %v8509
          %v9131 = vunpack.c.h.b16 %v8509
          %v9132 = vunpack.c.l.b16 %v8510
          %v9133 = vunpack.c.h.b16 %v8510
          %v9134 = vunpack.c.l.b16 %v8511
          %v9135 = vunpack.c.h.b16 %v8511
          %v9136 = vunpack.c.l.b16 %v8512
          %v9137 = vunpack.c.h.b16 %v8512
          %v9138 = vunpack.c.l.b16 %v8513
          %v9139 = vunpack.c.h.b16 %v8513
          %v9140 = vunpack.c.l.b16 %v8514
          %v9141 = vunpack.c.h.b16 %v8514
          %v9142 = vunpack.c.l.b16 %v8515
          %v9143 = vunpack.c.h.b16 %v8515
          %v9144 = vunpack.c.l.b16 %v8516
          %v9145 = vunpack.c.h.b16 %v8516
          %v9146 = vunpack.c.l.b16 %v8517
          %v9147 = vunpack.c.h.b16 %v8517
          %v9148 = vunpack.c.l.b16 %v8518
          %v9149 = vunpack.c.h.b16 %v8518
          %v9150 = vunpack.c.l.b16 %v8519
          %v9151 = vunpack.c.h.b16 %v8519
          %v9152 = vunpack.c.l.b16 %v8520
          %v9153 = vunpack.c.h.b16 %v8520
          %v9154 = vunpack.c.l.b16 %v8521
          %v9155 = vunpack.c.h.b16 %v8521
          %v9156 = vunpack.c.l.b16 %v8522
          %v9157 = vunpack.c.h.b16 %v8522
          %v9158 = vunpack.c.l.b16 %v8523
          %v9159 = vunpack.c.h.b16 %v8523
          %v9160 = vunpack.c.l.b16 %v8524
          %v9161 = vunpack.c.h.b16 %v8524
          %v9162 = vunpack.c.l.b16 %v8525
          %v9163 = vunpack.c.h.b16 %v8525
          %v9164 = vunpack.c.l.b16 %v8526
          %v9165 = vunpack.c.h.b16 %v8526
          %v9166 = vunpack.c.l.b16 %v8527
          %v9167 = vunpack.c.h.b16 %v8527
          %v9168 = vunpack.c.l.b16 %v8528
          %v9169 = vunpack.c.h.b16 %v8528
          %v9170 = vunpack.c.l.b16 %v8529
          %v9171 = vunpack.c.h.b16 %v8529
          %v9172 = vunpack.c.l.b16 %v8530
          %v9173 = vunpack.c.h.b16 %v8530
          %v9174 = vunpack.c.l.b16 %v8531
          %v9175 = vunpack.c.h.b16 %v8531
          %v9176 = vunpack.c.l.b16 %v8532
          %v9177 = vunpack.c.h.b16 %v8532
          %v9178 = vunpack.c.l.b16 %v8533
          %v9179 = vunpack.c.h.b16 %v8533
          %v9180 = vunpack.c.l.b16 %v8534
          %v9181 = vunpack.c.h.b16 %v8534
          %v9182 = vunpack.c.l.b16 %v8535
          %v9183 = vunpack.c.h.b16 %v8535
          %v9184 = vunpack.c.l.b16 %v8536
          %v9185 = vunpack.c.h.b16 %v8536
          %v9186 = vunpack.c.l.b16 %v8537
          %v9187 = vunpack.c.h.b16 %v8537
          %v9188 = vunpack.c.l.b16 %v8538
          %v9189 = vunpack.c.h.b16 %v8538
          %v9190 = vunpack.c.l.b16 %v8539
          %v9191 = vunpack.c.h.b16 %v8539
          %v9192 = vunpack.c.l.b16 %v8540
          %v9193 = vunpack.c.h.b16 %v8540
          %v9194 = vunpack.c.l.b16 %v8541
          %v9195 = vunpack.c.h.b16 %v8541
          %v9196 = vunpack.c.l.b16 %v8542
          %v9197 = vunpack.c.h.b16 %v8542
          %v9198 = vunpack.c.l.b16 %v8543
          %v9199 = vunpack.c.h.b16 %v8543
          %v9200 = vunpack.c.l.b16 %v8544
          %v9201 = vunpack.c.h.b16 %v8544
          %v9202 = vunpack.c.l.b16 %v8545
          %v9203 = vunpack.c.h.b16 %v8545
          %v9204 = vunpack.c.l.b16 %v8546
          %v9205 = vunpack.c.h.b16 %v8546
          %v9206 = vunpack.c.l.b16 %v8547
          %v9207 = vunpack.c.h.b16 %v8547
          %v9208 = vunpack.c.l.b16 %v8548
          %v9209 = vunpack.c.h.b16 %v8548
          %v9210 = vunpack.c.l.b16 %v8549
          %v9211 = vunpack.c.h.b16 %v8549
          %v9212 = vunpack.c.l.b16 %v8550
          %v9213 = vunpack.c.h.b16 %v8550
          %v9214 = vunpack.c.l.b16 %v8551
          %v9215 = vunpack.c.h.b16 %v8551
          %v9216 = vunpack.c.l.b16 %v8552
          %v9217 = vunpack.c.h.b16 %v8552
          %v9218 = vunpack.c.l.b16 %v8553
          %v9219 = vunpack.c.h.b16 %v8553
          %v9220 = vunpack.c.l.b16 %v8554
          %v9221 = vunpack.c.h.b16 %v8554
          %v9222 = vunpack.c.l.b16 %v8555
          %v9223 = vunpack.c.h.b16 %v8555
          %v9224 = vunpack.c.l.b16 %v8556
          %v9225 = vunpack.c.h.b16 %v8556
          %v9226 = vunpack.c.l.b16 %v8557
          %v9227 = vunpack.c.h.b16 %v8557
          %v9228 = vunpack.c.l.b16 %v8558
          %v9229 = vunpack.c.h.b16 %v8558
          %v9230 = vunpack.c.l.b16 %v8559
          %v9231 = vunpack.c.h.b16 %v8559
          %v9232 = vunpack.c.l.b16 %v8560
          %v9233 = vunpack.c.h.b16 %v8560
          %v9234 = vunpack.c.l.b16 %v8561
          %v9235 = vunpack.c.h.b16 %v8561
          %v9236 = vunpack.c.l.b16 %v8562
          %v9237 = vunpack.c.h.b16 %v8562
          %v9238 = vunpack.c.l.b16 %v8563
          %v9239 = vunpack.c.h.b16 %v8563
          %v9240 = vunpack.c.l.b16 %v8564
          %v9241 = vunpack.c.h.b16 %v8564
          %v9242 = vunpack.c.l.b16 %v8565
          %v9243 = vunpack.c.h.b16 %v8565
          %v9244 = vunpack.c.l.b16 %v8566
          %v9245 = vunpack.c.h.b16 %v8566
          %v9246 = vunpack.c.l.b16 %v8567
          %v9247 = vunpack.c.h.b16 %v8567
          %v9248 = vunpack.c.l.b16 %v8568
          %v9249 = vunpack.c.h.b16 %v8568
          %v9250 = vunpack.c.l.b16 %v8569
          %v9251 = vunpack.c.h.b16 %v8569
          %v9252 = vunpack.c.l.b16 %v8570
          %v9253 = vunpack.c.h.b16 %v8570
          %v9254 = vunpack.c.l.b16 %v8571
          %v9255 = vunpack.c.h.b16 %v8571
          %v9256 = vunpack.c.l.b16 %v8572
          %v9257 = vunpack.c.h.b16 %v8572
          %v9258 = vunpack.c.l.b16 %v8573
          %v9259 = vunpack.c.h.b16 %v8573
          %v9260 = vunpack.c.l.b16 %v8574
          %v9261 = vunpack.c.h.b16 %v8574
          %v9262 = vunpack.c.l.b16 %v8575
          %v9263 = vunpack.c.h.b16 %v8575
          %v9264 = vunpack.c.l.b16 %v8576
          %v9265 = vunpack.c.h.b16 %v8576
          %v9266 = vunpack.c.l.b16 %v8577
          %v9267 = vunpack.c.h.b16 %v8577
          %v9268 = vunpack.c.l.b16 %v8578
          %v9269 = vunpack.c.h.b16 %v8578
          %v9270 = vunpack.c.l.b16 %v8579
          %v9271 = vunpack.c.h.b16 %v8579
          %v9272 = vunpack.c.l.b16 %v8580
          %v9273 = vunpack.c.h.b16 %v8580
          %v9274 = vunpack.c.l.b16 %v8581
          %v9275 = vunpack.c.h.b16 %v8581
          %v9276 = vunpack.c.l.b16 %v8582
          %v9277 = vunpack.c.h.b16 %v8582
          %v9278 = vunpack.c.l.b16 %v8583
          %v9279 = vunpack.c.h.b16 %v8583
          %v9280 = vunpack.c.l.b16 %v8584
          %v9281 = vunpack.c.h.b16 %v8584
          %v9282 = vunpack.c.l.b16 %v8585
          %v9283 = vunpack.c.h.b16 %v8585
          %v9284 = vunpack.c.l.b16 %v8586
          %v9285 = vunpack.c.h.b16 %v8586
          %v9286 = vunpack.c.l.b16 %v8587
          %v9287 = vunpack.c.h.b16 %v8587
          %v9288 = vunpack.c.l.b16 %v8588
          %v9289 = vunpack.c.h.b16 %v8588
          %v9290 = vunpack.c.l.b16 %v8589
          %v9291 = vunpack.c.h.b16 %v8589
          %v9292 = vunpack.c.l.b16 %v8590
          %v9293 = vunpack.c.h.b16 %v8590
          %v9294 = vunpack.c.l.b16 %v8591
          %v9295 = vunpack.c.h.b16 %v8591
          %v9296 = vunpack.c.l.b16 %v8592
          %v9297 = vunpack.c.h.b16 %v8592
          %v9298 = vunpack.c.l.b16 %v8593
          %v9299 = vunpack.c.h.b16 %v8593
          %v9300 = vunpack.c.l.b16 %v8594
          %v9301 = vunpack.c.h.b16 %v8594
          %v9302 = vunpack.c.l.b16 %v8595
          %v9303 = vunpack.c.h.b16 %v8595
          %v9304 = vunpack.c.l.b16 %v8596
          %v9305 = vunpack.c.h.b16 %v8596
          %v9306 = vunpack.c.l.b16 %v8597
          %v9307 = vunpack.c.h.b16 %v8597
          %v9308 = vunpack.c.l.b16 %v8598
          %v9309 = vunpack.c.h.b16 %v8598
          %v9310 = vunpack.c.l.b16 %v8599
          %v9311 = vunpack.c.h.b16 %v8599
          %v9312 = vunpack.c.l.b16 %v8600
          %v9313 = vunpack.c.h.b16 %v8600
          %v9314 = vunpack.c.l.b16 %v8601
          %v9315 = vunpack.c.h.b16 %v8601
          %v9316 = vunpack.c.l.b16 %v8602
          %v9317 = vunpack.c.h.b16 %v8602
          %v9318 = vunpack.c.l.b16 %v8603
          %v9319 = vunpack.c.h.b16 %v8603
          %v9320 = vunpack.c.l.b16 %v8604
          %v9321 = vunpack.c.h.b16 %v8604
          %v9322 = vunpack.c.l.b16 %v8605
          %v9323 = vunpack.c.h.b16 %v8605
          %v9324 = vunpack.c.l.b16 %v8606
          %v9325 = vunpack.c.h.b16 %v8606
          %v9326 = vunpack.c.l.b16 %v8607
          %v9327 = vunpack.c.h.b16 %v8607
          %v9328 = vunpack.c.l.b16 %v8608
          %v9329 = vunpack.c.h.b16 %v8608
          %v9330 = vunpack.c.l.b16 %v8609
          %v9331 = vunpack.c.h.b16 %v8609
          %v9332 = vunpack.c.l.b16 %v8610
          %v9333 = vunpack.c.h.b16 %v8610
          %v9334 = vunpack.c.l.b16 %v8611
          %v9335 = vunpack.c.h.b16 %v8611
          %v9336 = vunpack.c.l.b16 %v8612
          %v9337 = vunpack.c.h.b16 %v8612
          %v9338 = vunpack.c.l.b16 %v8613
          %v9339 = vunpack.c.h.b16 %v8613
          %v9340 = vunpack.c.l.b16 %v8614
          %v9341 = vunpack.c.h.b16 %v8614
          %v9342 = vunpack.c.l.b16 %v8615
          %v9343 = vunpack.c.h.b16 %v8615
          %v9344 = vunpack.c.l.b16 %v8616
          %v9345 = vunpack.c.h.b16 %v8616
          %v9346 = vunpack.c.l.b16 %v8617
          %v9347 = vunpack.c.h.b16 %v8617
          %v9348 = vunpack.c.l.b16 %v8618
          %v9349 = vunpack.c.h.b16 %v8618
          %v9350 = vunpack.c.l.b16 %v8619
          %v9351 = vunpack.c.h.b16 %v8619
          %v9352 = vunpack.c.l.b16 %v8620
          %v9353 = vunpack.c.h.b16 %v8620
          %v9354 = vunpack.c.l.b16 %v8621
          %v9355 = vunpack.c.h.b16 %v8621
          %v9356 = vunpack.c.l.b16 %v8622
          %v9357 = vunpack.c.h.b16 %v8622
          %v9358 = vunpack.c.l.b16 %v8623
          %v9359 = vunpack.c.h.b16 %v8623
          %v9360 = vunpack.c.l.b16 %v8624
          %v9361 = vunpack.c.h.b16 %v8624
          %v9362 = vunpack.c.l.b16 %v8625
          %v9363 = vunpack.c.h.b16 %v8625
          %v9364 = vunpack.c.l.b16 %v8626
          %v9365 = vunpack.c.h.b16 %v8626
          %v9366 = vunpack.c.l.b16 %v8627
          %v9367 = vunpack.c.h.b16 %v8627
          %v9368 = vunpack.c.l.b16 %v8628
          %v9369 = vunpack.c.h.b16 %v8628
          %v9370 = vunpack.c.l.b16 %v8629
          %v9371 = vunpack.c.h.b16 %v8629
          %v9372 = vunpack.c.l.b16 %v8630
          %v9373 = vunpack.c.h.b16 %v8630
          %v9374 = vunpack.c.l.b16 %v8631
          %v9375 = vunpack.c.h.b16 %v8631
          %v9376 = vunpack.c.l.b16 %v8632
          %v9377 = vunpack.c.h.b16 %v8632
          %v9378 = vunpack.c.l.b16 %v8633
          %v9379 = vunpack.c.h.b16 %v8633
          %v9380 = vunpack.c.l.b16 %v8634
          %v9381 = vunpack.c.h.b16 %v8634
          %v9382 = vunpack.c.l.b16 %v8635
          %v9383 = vunpack.c.h.b16 %v8635
          %v9384 = vunpack.c.l.b16 %v8636
          %v9385 = vunpack.c.h.b16 %v8636
          %v9386 = vunpack.c.l.b16 %v8637
          %v9387 = vunpack.c.h.b16 %v8637
          %v9388 = vunpack.c.l.b16 %v8638
          %v9389 = vunpack.c.h.b16 %v8638
          %v9390 = vunpack.c.l.b16 %v8639
          %v9391 = vunpack.c.h.b16 %v8639
          %v9392 = vunpack.c.l.b16 %v8640
          %v9393 = vunpack.c.h.b16 %v8640
          %v9394 = vunpack.c.l.b16 %v8641
          %v9395 = vunpack.c.h.b16 %v8641
          %v9396 = vunpack.c.l.b16 %v8642
          %v9397 = vunpack.c.h.b16 %v8642
          %v9398 = vunpack.c.l.b16 %v8643
          %v9399 = vunpack.c.h.b16 %v8643
          %v9400 = vunpack.c.l.b16 %v8644
          %v9401 = vunpack.c.h.b16 %v8644
          %v9402 = vunpack.c.l.b16 %v8645
          %v9403 = vunpack.c.h.b16 %v8645
          %v9404 = vunpack.c.l.b16 %v8646
          %v9405 = vunpack.c.h.b16 %v8646
          %v9406 = vunpack.c.l.b16 %v8647
          %v9407 = vunpack.c.h.b16 %v8647
          %v9408 = vunpack.c.l.b16 %v8648
          %v9409 = vunpack.c.h.b16 %v8648
          %v9410 = vunpack.c.l.b16 %v8649
          %v9411 = vunpack.c.h.b16 %v8649
          %v9412 = vunpack.c.l.b16 %v8650
          %v9413 = vunpack.c.h.b16 %v8650
          %v9414 = vunpack.c.l.b16 %v8651
          %v9415 = vunpack.c.h.b16 %v8651
          %v9416 = vunpack.c.l.b16 %v8652
          %v9417 = vunpack.c.h.b16 %v8652
          %v9418 = vunpack.c.l.b16 %v8653
          %v9419 = vunpack.c.h.b16 %v8653
          %v9420 = vunpack.c.l.b16 %v8654
          %v9421 = vunpack.c.h.b16 %v8654
          %v9422 = vunpack.c.l.b16 %v8655
          %v9423 = vunpack.c.h.b16 %v8655
          %v9424 = vunpack.c.l.b16 %v8656
          %v9425 = vunpack.c.h.b16 %v8656
          %v9426 = vunpack.c.l.b16 %v8657
          %v9427 = vunpack.c.h.b16 %v8657
          %v9428 = vunpack.c.l.b16 %v8658
          %v9429 = vunpack.c.h.b16 %v8658
          %v9430 = vunpack.c.l.b16 %v8659
          %v9431 = vunpack.c.h.b16 %v8659
          %v9432 = vunpack.c.l.b16 %v8660
          %v9433 = vunpack.c.h.b16 %v8660
          %v9434 = vunpack.c.l.b16 %v8661
          %v9435 = vunpack.c.h.b16 %v8661
          %v9436 = vunpack.c.l.b16 %v8662
          %v9437 = vunpack.c.h.b16 %v8662
          %v9438 = vunpack.c.l.b16 %v8663
          %v9439 = vunpack.c.h.b16 %v8663
          %v9440 = vunpack.c.l.b16 %v8664
          %v9441 = vunpack.c.h.b16 %v8664
          %v9442 = vunpack.c.l.b16 %v8665
          %v9443 = vunpack.c.h.b16 %v8665
          %v9444 = vpack.c.b16 %v8936, %v8932
          %v9445 = vpack.c.b16 %v8937, %v8933
          %v9446 = vpack.c.b16 %v8938, %v8934
          %v9447 = vpack.c.b16 %v8939, %v8935
          %v9448 = vpack.c.b16 %v8944, %v8940
          %v9449 = vpack.c.b16 %v8945, %v8941
          %v9450 = vpack.c.b16 %v8946, %v8942
          %v9451 = vpack.c.b16 %v8947, %v8943
          %v9452 = vpack.c.b16 %v8952, %v8948
          %v9453 = vpack.c.b16 %v8953, %v8949
          %v9454 = vpack.c.b16 %v8954, %v8950
          %v9455 = vpack.c.b16 %v8955, %v8951
          %v9456 = vpack.c.b16 %v8960, %v8956
          %v9457 = vpack.c.b16 %v8961, %v8957
          %v9458 = vpack.c.b16 %v8962, %v8958
          %v9459 = vpack.c.b16 %v8963, %v8959
          %v9460 = vpack.c.b16 %v8968, %v8964
          %v9461 = vpack.c.b16 %v8969, %v8965
          %v9462 = vpack.c.b16 %v8970, %v8966
          %v9463 = vpack.c.b16 %v8971, %v8967
          %v9464 = vpack.c.b16 %v8976, %v8972
          %v9465 = vpack.c.b16 %v8977, %v8973
          %v9466 = vpack.c.b16 %v8978, %v8974
          %v9467 = vpack.c.b16 %v8979, %v8975
          %v9468 = vpack.c.b16 %v8984, %v8980
          %v9469 = vpack.c.b16 %v8985, %v8981
          %v9470 = vpack.c.b16 %v8986, %v8982
          %v9471 = vpack.c.b16 %v8987, %v8983
          %v9472 = vpack.c.b16 %v8992, %v8988
          %v9473 = vpack.c.b16 %v8993, %v8989
          %v9474 = vpack.c.b16 %v8994, %v8990
          %v9475 = vpack.c.b16 %v8995, %v8991
          %v9476 = vpack.c.b16 %v9000, %v8996
          %v9477 = vpack.c.b16 %v9001, %v8997
          %v9478 = vpack.c.b16 %v9002, %v8998
          %v9479 = vpack.c.b16 %v9003, %v8999
          %v9480 = vpack.c.b16 %v9008, %v9004
          %v9481 = vpack.c.b16 %v9009, %v9005
          %v9482 = vpack.c.b16 %v9010, %v9006
          %v9483 = vpack.c.b16 %v9011, %v9007
          %v9484 = vpack.c.b16 %v9016, %v9012
          %v9485 = vpack.c.b16 %v9017, %v9013
          %v9486 = vpack.c.b16 %v9018, %v9014
          %v9487 = vpack.c.b16 %v9019, %v9015
          %v9488 = vpack.c.b16 %v9024, %v9020
          %v9489 = vpack.c.b16 %v9025, %v9021
          %v9490 = vpack.c.b16 %v9026, %v9022
          %v9491 = vpack.c.b16 %v9027, %v9023
          %v9492 = vpack.c.b16 %v9032, %v9028
          %v9493 = vpack.c.b16 %v9033, %v9029
          %v9494 = vpack.c.b16 %v9034, %v9030
          %v9495 = vpack.c.b16 %v9035, %v9031
          %v9496 = vpack.c.b16 %v9040, %v9036
          %v9497 = vpack.c.b16 %v9041, %v9037
          %v9498 = vpack.c.b16 %v9042, %v9038
          %v9499 = vpack.c.b16 %v9043, %v9039
          %v9500 = vpack.c.b16 %v9048, %v9044
          %v9501 = vpack.c.b16 %v9049, %v9045
          %v9502 = vpack.c.b16 %v9050, %v9046
          %v9503 = vpack.c.b16 %v9051, %v9047
          %v9504 = vpack.c.b16 %v9056, %v9052
          %v9505 = vpack.c.b16 %v9057, %v9053
          %v9506 = vpack.c.b16 %v9058, %v9054
          %v9507 = vpack.c.b16 %v9059, %v9055
          %v9508 = vpack.c.b16 %v9064, %v9060
          %v9509 = vpack.c.b16 %v9065, %v9061
          %v9510 = vpack.c.b16 %v9066, %v9062
          %v9511 = vpack.c.b16 %v9067, %v9063
          %v9512 = vpack.c.b16 %v9072, %v9068
          %v9513 = vpack.c.b16 %v9073, %v9069
          %v9514 = vpack.c.b16 %v9074, %v9070
          %v9515 = vpack.c.b16 %v9075, %v9071
          %v9516 = vpack.c.b16 %v9080, %v9076
          %v9517 = vpack.c.b16 %v9081, %v9077
          %v9518 = vpack.c.b16 %v9082, %v9078
          %v9519 = vpack.c.b16 %v9083, %v9079
          %v9520 = vpack.c.b16 %v9088, %v9084
          %v9521 = vpack.c.b16 %v9089, %v9085
          %v9522 = vpack.c.b16 %v9090, %v9086
          %v9523 = vpack.c.b16 %v9091, %v9087
          %v9524 = vpack.c.b16 %v9096, %v9092
          %v9525 = vpack.c.b16 %v9097, %v9093
          %v9526 = vpack.c.b16 %v9098, %v9094
          %v9527 = vpack.c.b16 %v9099, %v9095
          %v9528 = vpack.c.b16 %v9104, %v9100
          %v9529 = vpack.c.b16 %v9105, %v9101
          %v9530 = vpack.c.b16 %v9106, %v9102
          %v9531 = vpack.c.b16 %v9107, %v9103
          %v9532 = vpack.c.b16 %v9112, %v9108
          %v9533 = vpack.c.b16 %v9113, %v9109
          %v9534 = vpack.c.b16 %v9114, %v9110
          %v9535 = vpack.c.b16 %v9115, %v9111
          %v9536 = vpack.c.b16 %v9120, %v9116
          %v9537 = vpack.c.b16 %v9121, %v9117
          %v9538 = vpack.c.b16 %v9122, %v9118
          %v9539 = vpack.c.b16 %v9123, %v9119
          %v9540 = vpack.c.b16 %v9128, %v9124
          %v9541 = vpack.c.b16 %v9129, %v9125
          %v9542 = vpack.c.b16 %v9130, %v9126
          %v9543 = vpack.c.b16 %v9131, %v9127
          %v9544 = vpack.c.b16 %v9136, %v9132
          %v9545 = vpack.c.b16 %v9137, %v9133
          %v9546 = vpack.c.b16 %v9138, %v9134
          %v9547 = vpack.c.b16 %v9139, %v9135
          %v9548 = vpack.c.b16 %v9144, %v9140
          %v9549 = vpack.c.b16 %v9145, %v9141
          %v9550 = vpack.c.b16 %v9146, %v9142
          %v9551 = vpack.c.b16 %v9147, %v9143
          %v9552 = vpack.c.b16 %v9152, %v9148
          %v9553 = vpack.c.b16 %v9153, %v9149
          %v9554 = vpack.c.b16 %v9154, %v9150
          %v9555 = vpack.c.b16 %v9155, %v9151
          %v9556 = vpack.c.b16 %v9160, %v9156
          %v9557 = vpack.c.b16 %v9161, %v9157
          %v9558 = vpack.c.b16 %v9162, %v9158
          %v9559 = vpack.c.b16 %v9163, %v9159
          %v9560 = vpack.c.b16 %v9168, %v9164
          %v9561 = vpack.c.b16 %v9169, %v9165
          %v9562 = vpack.c.b16 %v9170, %v9166
          %v9563 = vpack.c.b16 %v9171, %v9167
          %v9564 = vpack.c.b16 %v9176, %v9172
          %v9565 = vpack.c.b16 %v9177, %v9173
          %v9566 = vpack.c.b16 %v9178, %v9174
          %v9567 = vpack.c.b16 %v9179, %v9175
          %v9568 = vpack.c.b16 %v9184, %v9180
          %v9569 = vpack.c.b16 %v9185, %v9181
          %v9570 = vpack.c.b16 %v9186, %v9182
          %v9571 = vpack.c.b16 %v9187, %v9183
          %v9572 = vpack.c.b16 %v9192, %v9188
          %v9573 = vpack.c.b16 %v9193, %v9189
          %v9574 = vpack.c.b16 %v9194, %v9190
          %v9575 = vpack.c.b16 %v9195, %v9191
          %v9576 = vpack.c.b16 %v9200, %v9196
          %v9577 = vpack.c.b16 %v9201, %v9197
          %v9578 = vpack.c.b16 %v9202, %v9198
          %v9579 = vpack.c.b16 %v9203, %v9199
          %v9580 = vpack.c.b16 %v9208, %v9204
          %v9581 = vpack.c.b16 %v9209, %v9205
          %v9582 = vpack.c.b16 %v9210, %v9206
          %v9583 = vpack.c.b16 %v9211, %v9207
          %v9584 = vpack.c.b16 %v9216, %v9212
          %v9585 = vpack.c.b16 %v9217, %v9213
          %v9586 = vpack.c.b16 %v9218, %v9214
          %v9587 = vpack.c.b16 %v9219, %v9215
          %v9588 = vpack.c.b16 %v9224, %v9220
          %v9589 = vpack.c.b16 %v9225, %v9221
          %v9590 = vpack.c.b16 %v9226, %v9222
          %v9591 = vpack.c.b16 %v9227, %v9223
          %v9592 = vpack.c.b16 %v9232, %v9228
          %v9593 = vpack.c.b16 %v9233, %v9229
          %v9594 = vpack.c.b16 %v9234, %v9230
          %v9595 = vpack.c.b16 %v9235, %v9231
          %v9596 = vpack.c.b16 %v9240, %v9236
          %v9597 = vpack.c.b16 %v9241, %v9237
          %v9598 = vpack.c.b16 %v9242, %v9238
          %v9599 = vpack.c.b16 %v9243, %v9239
          %v9600 = vpack.c.b16 %v9248, %v9244
          %v9601 = vpack.c.b16 %v9249, %v9245
          %v9602 = vpack.c.b16 %v9250, %v9246
          %v9603 = vpack.c.b16 %v9251, %v9247
          %v9604 = vpack.c.b16 %v9256, %v9252
          %v9605 = vpack.c.b16 %v9257, %v9253
          %v9606 = vpack.c.b16 %v9258, %v9254
          %v9607 = vpack.c.b16 %v9259, %v9255
          %v9608 = vpack.c.b16 %v9264, %v9260
          %v9609 = vpack.c.b16 %v9265, %v9261
          %v9610 = vpack.c.b16 %v9266, %v9262
          %v9611 = vpack.c.b16 %v9267, %v9263
          %v9612 = vpack.c.b16 %v9272, %v9268
          %v9613 = vpack.c.b16 %v9273, %v9269
          %v9614 = vpack.c.b16 %v9274, %v9270
          %v9615 = vpack.c.b16 %v9275, %v9271
          %v9616 = vpack.c.b16 %v9280, %v9276
          %v9617 = vpack.c.b16 %v9281, %v9277
          %v9618 = vpack.c.b16 %v9282, %v9278
          %v9619 = vpack.c.b16 %v9283, %v9279
          %v9620 = vpack.c.b16 %v9288, %v9284
          %v9621 = vpack.c.b16 %v9289, %v9285
          %v9622 = vpack.c.b16 %v9290, %v9286
          %v9623 = vpack.c.b16 %v9291, %v9287
          %v9624 = vpack.c.b16 %v9296, %v9292
          %v9625 = vpack.c.b16 %v9297, %v9293
          %v9626 = vpack.c.b16 %v9298, %v9294
          %v9627 = vpack.c.b16 %v9299, %v9295
          %v9628 = vpack.c.b16 %v9304, %v9300
          %v9629 = vpack.c.b16 %v9305, %v9301
          %v9630 = vpack.c.b16 %v9306, %v9302
          %v9631 = vpack.c.b16 %v9307, %v9303
          %v9632 = vpack.c.b16 %v9312, %v9308
          %v9633 = vpack.c.b16 %v9313, %v9309
          %v9634 = vpack.c.b16 %v9314, %v9310
          %v9635 = vpack.c.b16 %v9315, %v9311
          %v9636 = vpack.c.b16 %v9320, %v9316
          %v9637 = vpack.c.b16 %v9321, %v9317
          %v9638 = vpack.c.b16 %v9322, %v9318
          %v9639 = vpack.c.b16 %v9323, %v9319
          %v9640 = vpack.c.b16 %v9328, %v9324
          %v9641 = vpack.c.b16 %v9329, %v9325
          %v9642 = vpack.c.b16 %v9330, %v9326
          %v9643 = vpack.c.b16 %v9331, %v9327
          %v9644 = vpack.c.b16 %v9336, %v9332
          %v9645 = vpack.c.b16 %v9337, %v9333
          %v9646 = vpack.c.b16 %v9338, %v9334
          %v9647 = vpack.c.b16 %v9339, %v9335
          %v9648 = vpack.c.b16 %v9344, %v9340
          %v9649 = vpack.c.b16 %v9345, %v9341
          %v9650 = vpack.c.b16 %v9346, %v9342
          %v9651 = vpack.c.b16 %v9347, %v9343
          %v9652 = vpack.c.b16 %v9352, %v9348
          %v9653 = vpack.c.b16 %v9353, %v9349
          %v9654 = vpack.c.b16 %v9354, %v9350
          %v9655 = vpack.c.b16 %v9355, %v9351
          %v9656 = vpack.c.b16 %v9360, %v9356
          %v9657 = vpack.c.b16 %v9361, %v9357
          %v9658 = vpack.c.b16 %v9362, %v9358
          %v9659 = vpack.c.b16 %v9363, %v9359
          %v9660 = vpack.c.b16 %v9368, %v9364
          %v9661 = vpack.c.b16 %v9369, %v9365
          %v9662 = vpack.c.b16 %v9370, %v9366
          %v9663 = vpack.c.b16 %v9371, %v9367
          %v9664 = vpack.c.b16 %v9376, %v9372
          %v9665 = vpack.c.b16 %v9377, %v9373
          %v9666 = vpack.c.b16 %v9378, %v9374
          %v9667 = vpack.c.b16 %v9379, %v9375
          %v9668 = vpack.c.b16 %v9384, %v9380
          %v9669 = vpack.c.b16 %v9385, %v9381
          %v9670 = vpack.c.b16 %v9386, %v9382
          %v9671 = vpack.c.b16 %v9387, %v9383
          %v9672 = vpack.c.b16 %v9392, %v9388
          %v9673 = vpack.c.b16 %v9393, %v9389
          %v9674 = vpack.c.b16 %v9394, %v9390
          %v9675 = vpack.c.b16 %v9395, %v9391
          %v9676 = vpack.c.b16 %v9400, %v9396
          %v9677 = vpack.c.b16 %v9401, %v9397
          %v9678 = vpack.c.b16 %v9402, %v9398
          %v9679 = vpack.c.b16 %v9403, %v9399
          %v9680 = vpack.c.b16 %v9408, %v9404
          %v9681 = vpack.c.b16 %v9409, %v9405
          %v9682 = vpack.c.b16 %v9410, %v9406
          %v9683 = vpack.c.b16 %v9411, %v9407
          %v9684 = vpack.c.b16 %v9416, %v9412
          %v9685 = vpack.c.b16 %v9417, %v9413
          %v9686 = vpack.c.b16 %v9418, %v9414
          %v9687 = vpack.c.b16 %v9419, %v9415
          %v9688 = vpack.c.b16 %v9424, %v9420
          %v9689 = vpack.c.b16 %v9425, %v9421
          %v9690 = vpack.c.b16 %v9426, %v9422
          %v9691 = vpack.c.b16 %v9427, %v9423
          %v9692 = vpack.c.b16 %v9432, %v9428
          %v9693 = vpack.c.b16 %v9433, %v9429
          %v9694 = vpack.c.b16 %v9434, %v9430
          %v9695 = vpack.c.b16 %v9435, %v9431
          %v9696 = vpack.c.b16 %v9440, %v9436
          %v9697 = vpack.c.b16 %v9441, %v9437
          %v9698 = vpack.c.b16 %v9442, %v9438
          %v9699 = vpack.c.b16 %v9443, %v9439
          %9956 = vmatpush.bf16.msra.mxu0 %v9472
          %9957 = vmatpush.bf16.msra.mxu0 %v9468
          %9958 = vmatpush.bf16.msra.mxu0 %v9464
          %9959 = vmatpush.bf16.msra.mxu0 %v9460
          %9960 = vmatpush.bf16.msra.mxu0 %v9456
          %9961 = vmatpush.bf16.msra.mxu0 %v9452
          %9962 = vmatpush.bf16.msra.mxu0 %v9448
          %9963 = vmatpush.bf16.msra.mxu0 %v9444
          %9964 = vmatmul.bf16.gmra.mxu0 %v8402
          %v9965 = vpop.f32.mrf.mxu0
          %v9966 = vadd.f32 %v8668, %v9965
          %v9967 = vpop.f32.mrf.mxu0
          %9968 = vdwg.mxu0
          %9969 = vmatpush.bf16.msra.mxu0 %v9504
          %9970 = vmatpush.bf16.msra.mxu0 %v9500
          %9971 = vmatpush.bf16.msra.mxu0 %v9496
          %9972 = vmatpush.bf16.msra.mxu0 %v9492
          %9973 = vmatpush.bf16.msra.mxu0 %v9488
          %9974 = vmatpush.bf16.msra.mxu0 %v9484
          %9975 = vmatpush.bf16.msra.mxu0 %v9480
          %9976 = vmatpush.bf16.msra.mxu0 %v9476
          %9977 = vmatmul.bf16.gmra.mxu0 %v8403
          %v9978 = vpop.f32.mrf.mxu0
          %v9979 = vadd.f32 %v9966, %v9978
          %v9980 = vpop.f32.mrf.mxu0
          %9981 = vdwg.mxu0
          %9982 = vmatpush.bf16.msra.mxu0 %v9536
          %9983 = vmatpush.bf16.msra.mxu0 %v9532
          %9984 = vmatpush.bf16.msra.mxu0 %v9528
          %9985 = vmatpush.bf16.msra.mxu0 %v9524
          %9986 = vmatpush.bf16.msra.mxu0 %v9520
          %9987 = vmatpush.bf16.msra.mxu0 %v9516
          %9988 = vmatpush.bf16.msra.mxu0 %v9512
          %9989 = vmatpush.bf16.msra.mxu0 %v9508
          %9990 = vmatmul.bf16.gmra.mxu0 %v8404
          %v9991 = vpop.f32.mrf.mxu0
          %v9992 = vadd.f32 %v9979, %v9991
          %v9993 = vpop.f32.mrf.mxu0
          %9994 = vdwg.mxu0
          %9995 = vmatpush.bf16.msra.mxu0 %v9568
          %9996 = vmatpush.bf16.msra.mxu0 %v9564
          %9997 = vmatpush.bf16.msra.mxu0 %v9560
          %9998 = vmatpush.bf16.msra.mxu0 %v9556
          %9999 = vmatpush.bf16.msra.mxu0 %v9552
          %10000 = vmatpush.bf16.msra.mxu0 %v9548
          %10001 = vmatpush.bf16.msra.mxu0 %v9544
          %10002 = vmatpush.bf16.msra.mxu0 %v9540
          %10003 = vmatmul.bf16.gmra.mxu0 %v8405
          %v10004 = vpop.f32.mrf.mxu0
          %v10005 = vadd.f32 %v9992, %v10004
          %v10006 = vpop.f32.mrf.mxu0
          %10007 = vdwg.mxu0
          %10008 = vmatpush.bf16.msra.mxu0 %v9600
          %10009 = vmatpush.bf16.msra.mxu0 %v9596
          %10010 = vmatpush.bf16.msra.mxu0 %v9592
          %10011 = vmatpush.bf16.msra.mxu0 %v9588
          %10012 = vmatpush.bf16.msra.mxu0 %v9584
          %10013 = vmatpush.bf16.msra.mxu0 %v9580
          %10014 = vmatpush.bf16.msra.mxu0 %v9576
          %10015 = vmatpush.bf16.msra.mxu0 %v9572
          %10016 = vmatmul.bf16.gmra.mxu0 %v8406
          %v10017 = vpop.f32.mrf.mxu0
          %v10018 = vadd.f32 %v10005, %v10017
          %v10019 = vpop.f32.mrf.mxu0
          %10020 = vdwg.mxu0
          %10021 = vmatpush.bf16.msra.mxu0 %v9632
          %10022 = vmatpush.bf16.msra.mxu0 %v9628
          %10023 = vmatpush.bf16.msra.mxu0 %v9624
          %10024 = vmatpush.bf16.msra.mxu0 %v9620
          %10025 = vmatpush.bf16.msra.mxu0 %v9616
          %10026 = vmatpush.bf16.msra.mxu0 %v9612
          %10027 = vmatpush.bf16.msra.mxu0 %v9608
          %10028 = vmatpush.bf16.msra.mxu0 %v9604
          %10029 = vmatmul.bf16.gmra.mxu0 %v8407
          %v10030 = vpop.f32.mrf.mxu0
          %v10031 = vadd.f32 %v10018, %v10030
          %v10032 = vpop.f32.mrf.mxu0
          %10033 = vdwg.mxu0
          %10034 = vmatpush.bf16.msra.mxu0 %v9664
          %10035 = vmatpush.bf16.msra.mxu0 %v9660
          %10036 = vmatpush.bf16.msra.mxu0 %v9656
          %10037 = vmatpush.bf16.msra.mxu0 %v9652
          %10038 = vmatpush.bf16.msra.mxu0 %v9648
          %10039 = vmatpush.bf16.msra.mxu0 %v9644
          %10040 = vmatpush.bf16.msra.mxu0 %v9640
          %10041 = vmatpush.bf16.msra.mxu0 %v9636
          %10042 = vmatmul.bf16.gmra.mxu0 %v8408
          %v10043 = vpop.f32.mrf.mxu0
          %v10044 = vadd.f32 %v10031, %v10043
          %v10045 = vpop.f32.mrf.mxu0
          %10046 = vdwg.mxu0
          %10047 = vmatpush.bf16.msra.mxu0 %v9696
          %10048 = vmatpush.bf16.msra.mxu0 %v9692
          %10049 = vmatpush.bf16.msra.mxu0 %v9688
          %10050 = vmatpush.bf16.msra.mxu0 %v9684
          %10051 = vmatpush.bf16.msra.mxu0 %v9680
          %10052 = vmatpush.bf16.msra.mxu0 %v9676
          %10053 = vmatpush.bf16.msra.mxu0 %v9672
          %10054 = vmatpush.bf16.msra.mxu0 %v9668
          %10055 = vmatmul.bf16.gmra.mxu0 %v8409
          %v10056 = vpop.f32.mrf.mxu0
          %v10057 = vadd.f32 %v10044, %v10056
          %v10058 = vpop.f32.mrf.mxu0
          %10059 = vdwg.mxu0
          %10060 = vmatpush.bf16.msra.mxu0 %v9473
          %10061 = vmatpush.bf16.msra.mxu0 %v9469
          %10062 = vmatpush.bf16.msra.mxu0 %v9465
          %10063 = vmatpush.bf16.msra.mxu0 %v9461
          %10064 = vmatpush.bf16.msra.mxu0 %v9457
          %10065 = vmatpush.bf16.msra.mxu0 %v9453
          %10066 = vmatpush.bf16.msra.mxu0 %v9449
          %10067 = vmatpush.bf16.msra.mxu0 %v9445
          %10068 = vmatmul.bf16.gmra.mxu0 %v8402
          %v10069 = vpop.f32.mrf.mxu0
          %v10070 = vadd.f32 %v8669, %v10069
          %v10071 = vpop.f32.mrf.mxu0
          %10072 = vdwg.mxu0
          %10073 = vmatpush.bf16.msra.mxu0 %v9505
          %10074 = vmatpush.bf16.msra.mxu0 %v9501
          %10075 = vmatpush.bf16.msra.mxu0 %v9497
          %10076 = vmatpush.bf16.msra.mxu0 %v9493
          %10077 = vmatpush.bf16.msra.mxu0 %v9489
          %10078 = vmatpush.bf16.msra.mxu0 %v9485
          %10079 = vmatpush.bf16.msra.mxu0 %v9481
          %10080 = vmatpush.bf16.msra.mxu0 %v9477
          %10081 = vmatmul.bf16.gmra.mxu0 %v8403
          %v10082 = vpop.f32.mrf.mxu0
          %v10083 = vadd.f32 %v10070, %v10082
          %v10084 = vpop.f32.mrf.mxu0
          %10085 = vdwg.mxu0
          %10086 = vmatpush.bf16.msra.mxu0 %v9537
          %10087 = vmatpush.bf16.msra.mxu0 %v9533
          %10088 = vmatpush.bf16.msra.mxu0 %v9529
          %10089 = vmatpush.bf16.msra.mxu0 %v9525
          %10090 = vmatpush.bf16.msra.mxu0 %v9521
          %10091 = vmatpush.bf16.msra.mxu0 %v9517
          %10092 = vmatpush.bf16.msra.mxu0 %v9513
          %10093 = vmatpush.bf16.msra.mxu0 %v9509
          %10094 = vmatmul.bf16.gmra.mxu0 %v8404
          %v10095 = vpop.f32.mrf.mxu0
          %v10096 = vadd.f32 %v10083, %v10095
          %v10097 = vpop.f32.mrf.mxu0
          %10098 = vdwg.mxu0
          %10099 = vmatpush.bf16.msra.mxu0 %v9569
          %10100 = vmatpush.bf16.msra.mxu0 %v9565
          %10101 = vmatpush.bf16.msra.mxu0 %v9561
          %10102 = vmatpush.bf16.msra.mxu0 %v9557
          %10103 = vmatpush.bf16.msra.mxu0 %v9553
          %10104 = vmatpush.bf16.msra.mxu0 %v9549
          %10105 = vmatpush.bf16.msra.mxu0 %v9545
          %10106 = vmatpush.bf16.msra.mxu0 %v9541
          %10107 = vmatmul.bf16.gmra.mxu0 %v8405
          %v10108 = vpop.f32.mrf.mxu0
          %v10109 = vadd.f32 %v10096, %v10108
          %v10110 = vpop.f32.mrf.mxu0
          %10111 = vdwg.mxu0
          %10112 = vmatpush.bf16.msra.mxu0 %v9601
          %10113 = vmatpush.bf16.msra.mxu0 %v9597
          %10114 = vmatpush.bf16.msra.mxu0 %v9593
          %10115 = vmatpush.bf16.msra.mxu0 %v9589
          %10116 = vmatpush.bf16.msra.mxu0 %v9585
          %10117 = vmatpush.bf16.msra.mxu0 %v9581
          %10118 = vmatpush.bf16.msra.mxu0 %v9577
          %10119 = vmatpush.bf16.msra.mxu0 %v9573
          %10120 = vmatmul.bf16.gmra.mxu0 %v8406
          %v10121 = vpop.f32.mrf.mxu0
          %v10122 = vadd.f32 %v10109, %v10121
          %v10123 = vpop.f32.mrf.mxu0
          %10124 = vdwg.mxu0
          %10125 = vmatpush.bf16.msra.mxu0 %v9633
          %10126 = vmatpush.bf16.msra.mxu0 %v9629
          %10127 = vmatpush.bf16.msra.mxu0 %v9625
          %10128 = vmatpush.bf16.msra.mxu0 %v9621
          %10129 = vmatpush.bf16.msra.mxu0 %v9617
          %10130 = vmatpush.bf16.msra.mxu0 %v9613
          %10131 = vmatpush.bf16.msra.mxu0 %v9609
          %10132 = vmatpush.bf16.msra.mxu0 %v9605
          %10133 = vmatmul.bf16.gmra.mxu0 %v8407
          %v10134 = vpop.f32.mrf.mxu0
          %v10135 = vadd.f32 %v10122, %v10134
          %v10136 = vpop.f32.mrf.mxu0
          %10137 = vdwg.mxu0
          %10138 = vmatpush.bf16.msra.mxu0 %v9665
          %10139 = vmatpush.bf16.msra.mxu0 %v9661
          %10140 = vmatpush.bf16.msra.mxu0 %v9657
          %10141 = vmatpush.bf16.msra.mxu0 %v9653
          %10142 = vmatpush.bf16.msra.mxu0 %v9649
          %10143 = vmatpush.bf16.msra.mxu0 %v9645
          %10144 = vmatpush.bf16.msra.mxu0 %v9641
          %10145 = vmatpush.bf16.msra.mxu0 %v9637
          %10146 = vmatmul.bf16.gmra.mxu0 %v8408
          %v10147 = vpop.f32.mrf.mxu0
          %v10148 = vadd.f32 %v10135, %v10147
          %v10149 = vpop.f32.mrf.mxu0
          %10150 = vdwg.mxu0
          %10151 = vmatpush.bf16.msra.mxu0 %v9697
          %10152 = vmatpush.bf16.msra.mxu0 %v9693
          %10153 = vmatpush.bf16.msra.mxu0 %v9689
          %10154 = vmatpush.bf16.msra.mxu0 %v9685
          %10155 = vmatpush.bf16.msra.mxu0 %v9681
          %10156 = vmatpush.bf16.msra.mxu0 %v9677
          %10157 = vmatpush.bf16.msra.mxu0 %v9673
          %10158 = vmatpush.bf16.msra.mxu0 %v9669
          %10159 = vmatmul.bf16.gmra.mxu0 %v8409
          %v10160 = vpop.f32.mrf.mxu0
          %v10161 = vadd.f32 %v10148, %v10160
          %v10162 = vpop.f32.mrf.mxu0
          %10163 = vdwg.mxu0
          %10164 = vmatpush.bf16.msra.mxu0 %v9474
          %10165 = vmatpush.bf16.msra.mxu0 %v9470
          %10166 = vmatpush.bf16.msra.mxu0 %v9466
          %10167 = vmatpush.bf16.msra.mxu0 %v9462
          %10168 = vmatpush.bf16.msra.mxu0 %v9458
          %10169 = vmatpush.bf16.msra.mxu0 %v9454
          %10170 = vmatpush.bf16.msra.mxu0 %v9450
          %10171 = vmatpush.bf16.msra.mxu0 %v9446
          %10172 = vmatmul.bf16.gmra.mxu0 %v8402
          %v10173 = vpop.f32.mrf.mxu0
          %v10174 = vadd.f32 %v8670, %v10173
          %v10175 = vpop.f32.mrf.mxu0
          %10176 = vdwg.mxu0
          %10177 = vmatpush.bf16.msra.mxu0 %v9506
          %10178 = vmatpush.bf16.msra.mxu0 %v9502
          %10179 = vmatpush.bf16.msra.mxu0 %v9498
          %10180 = vmatpush.bf16.msra.mxu0 %v9494
          %10181 = vmatpush.bf16.msra.mxu0 %v9490
          %10182 = vmatpush.bf16.msra.mxu0 %v9486
          %10183 = vmatpush.bf16.msra.mxu0 %v9482
          %10184 = vmatpush.bf16.msra.mxu0 %v9478
          %10185 = vmatmul.bf16.gmra.mxu0 %v8403
          %v10186 = vpop.f32.mrf.mxu0
          %v10187 = vadd.f32 %v10174, %v10186
          %v10188 = vpop.f32.mrf.mxu0
          %10189 = vdwg.mxu0
          %10190 = vmatpush.bf16.msra.mxu0 %v9538
          %10191 = vmatpush.bf16.msra.mxu0 %v9534
          %10192 = vmatpush.bf16.msra.mxu0 %v9530
          %10193 = vmatpush.bf16.msra.mxu0 %v9526
          %10194 = vmatpush.bf16.msra.mxu0 %v9522
          %10195 = vmatpush.bf16.msra.mxu0 %v9518
          %10196 = vmatpush.bf16.msra.mxu0 %v9514
          %10197 = vmatpush.bf16.msra.mxu0 %v9510
          %10198 = vmatmul.bf16.gmra.mxu0 %v8404
          %v10199 = vpop.f32.mrf.mxu0
          %v10200 = vadd.f32 %v10187, %v10199
          %v10201 = vpop.f32.mrf.mxu0
          %10202 = vdwg.mxu0
          %10203 = vmatpush.bf16.msra.mxu0 %v9570
          %10204 = vmatpush.bf16.msra.mxu0 %v9566
          %10205 = vmatpush.bf16.msra.mxu0 %v9562
          %10206 = vmatpush.bf16.msra.mxu0 %v9558
          %10207 = vmatpush.bf16.msra.mxu0 %v9554
          %10208 = vmatpush.bf16.msra.mxu0 %v9550
          %10209 = vmatpush.bf16.msra.mxu0 %v9546
          %10210 = vmatpush.bf16.msra.mxu0 %v9542
          %10211 = vmatmul.bf16.gmra.mxu0 %v8405
          %v10212 = vpop.f32.mrf.mxu0
          %v10213 = vadd.f32 %v10200, %v10212
          %v10214 = vpop.f32.mrf.mxu0
          %10215 = vdwg.mxu0
          %10216 = vmatpush.bf16.msra.mxu0 %v9602
          %10217 = vmatpush.bf16.msra.mxu0 %v9598
          %10218 = vmatpush.bf16.msra.mxu0 %v9594
          %10219 = vmatpush.bf16.msra.mxu0 %v9590
          %10220 = vmatpush.bf16.msra.mxu0 %v9586
          %10221 = vmatpush.bf16.msra.mxu0 %v9582
          %10222 = vmatpush.bf16.msra.mxu0 %v9578
          %10223 = vmatpush.bf16.msra.mxu0 %v9574
          %10224 = vmatmul.bf16.gmra.mxu0 %v8406
          %v10225 = vpop.f32.mrf.mxu0
          %v10226 = vadd.f32 %v10213, %v10225
          %v10227 = vpop.f32.mrf.mxu0
          %10228 = vdwg.mxu0
          %10229 = vmatpush.bf16.msra.mxu0 %v9634
          %10230 = vmatpush.bf16.msra.mxu0 %v9630
          %10231 = vmatpush.bf16.msra.mxu0 %v9626
          %10232 = vmatpush.bf16.msra.mxu0 %v9622
          %10233 = vmatpush.bf16.msra.mxu0 %v9618
          %10234 = vmatpush.bf16.msra.mxu0 %v9614
          %10235 = vmatpush.bf16.msra.mxu0 %v9610
          %10236 = vmatpush.bf16.msra.mxu0 %v9606
          %10237 = vmatmul.bf16.gmra.mxu0 %v8407
          %v10238 = vpop.f32.mrf.mxu0
          %v10239 = vadd.f32 %v10226, %v10238
          %v10240 = vpop.f32.mrf.mxu0
          %10241 = vdwg.mxu0
          %10242 = vmatpush.bf16.msra.mxu0 %v9666
          %10243 = vmatpush.bf16.msra.mxu0 %v9662
          %10244 = vmatpush.bf16.msra.mxu0 %v9658
          %10245 = vmatpush.bf16.msra.mxu0 %v9654
          %10246 = vmatpush.bf16.msra.mxu0 %v9650
          %10247 = vmatpush.bf16.msra.mxu0 %v9646
          %10248 = vmatpush.bf16.msra.mxu0 %v9642
          %10249 = vmatpush.bf16.msra.mxu0 %v9638
          %10250 = vmatmul.bf16.gmra.mxu0 %v8408
          %v10251 = vpop.f32.mrf.mxu0
          %v10252 = vadd.f32 %v10239, %v10251
          %v10253 = vpop.f32.mrf.mxu0
          %10254 = vdwg.mxu0
          %10255 = vmatpush.bf16.msra.mxu0 %v9698
          %10256 = vmatpush.bf16.msra.mxu0 %v9694
          %10257 = vmatpush.bf16.msra.mxu0 %v9690
          %10258 = vmatpush.bf16.msra.mxu0 %v9686
          %10259 = vmatpush.bf16.msra.mxu0 %v9682
          %10260 = vmatpush.bf16.msra.mxu0 %v9678
          %10261 = vmatpush.bf16.msra.mxu0 %v9674
          %10262 = vmatpush.bf16.msra.mxu0 %v9670
          %10263 = vmatmul.bf16.gmra.mxu0 %v8409
          %v10264 = vpop.f32.mrf.mxu0
          %v10265 = vadd.f32 %v10252, %v10264
          %v10266 = vpop.f32.mrf.mxu0
          %10267 = vdwg.mxu0
          %10268 = vmatpush.bf16.msra.mxu0 %v9475
          %10269 = vmatpush.bf16.msra.mxu0 %v9471
          %10270 = vmatpush.bf16.msra.mxu0 %v9467
          %10271 = vmatpush.bf16.msra.mxu0 %v9463
          %10272 = vmatpush.bf16.msra.mxu0 %v9459
          %10273 = vmatpush.bf16.msra.mxu0 %v9455
          %10274 = vmatpush.bf16.msra.mxu0 %v9451
          %10275 = vmatpush.bf16.msra.mxu0 %v9447
          %10276 = vmatmul.bf16.gmra.mxu0 %v8402
          %v10277 = vpop.f32.mrf.mxu0
          %v10278 = vadd.f32 %v8671, %v10277
          %v10279 = vpop.f32.mrf.mxu0
          %10280 = vdwg.mxu0
          %10281 = vmatpush.bf16.msra.mxu0 %v9507
          %10282 = vmatpush.bf16.msra.mxu0 %v9503
          %10283 = vmatpush.bf16.msra.mxu0 %v9499
          %10284 = vmatpush.bf16.msra.mxu0 %v9495
          %10285 = vmatpush.bf16.msra.mxu0 %v9491
          %10286 = vmatpush.bf16.msra.mxu0 %v9487
          %10287 = vmatpush.bf16.msra.mxu0 %v9483
          %10288 = vmatpush.bf16.msra.mxu0 %v9479
          %10289 = vmatmul.bf16.gmra.mxu0 %v8403
          %v10290 = vpop.f32.mrf.mxu0
          %v10291 = vadd.f32 %v10278, %v10290
          %v10292 = vpop.f32.mrf.mxu0
          %10293 = vdwg.mxu0
          %10294 = vmatpush.bf16.msra.mxu0 %v9539
          %10295 = vmatpush.bf16.msra.mxu0 %v9535
          %10296 = vmatpush.bf16.msra.mxu0 %v9531
          %10297 = vmatpush.bf16.msra.mxu0 %v9527
          %10298 = vmatpush.bf16.msra.mxu0 %v9523
          %10299 = vmatpush.bf16.msra.mxu0 %v9519
          %10300 = vmatpush.bf16.msra.mxu0 %v9515
          %10301 = vmatpush.bf16.msra.mxu0 %v9511
          %10302 = vmatmul.bf16.gmra.mxu0 %v8404
          %v10303 = vpop.f32.mrf.mxu0
          %v10304 = vadd.f32 %v10291, %v10303
          %v10305 = vpop.f32.mrf.mxu0
          %10306 = vdwg.mxu0
          %10307 = vmatpush.bf16.msra.mxu0 %v9571
          %10308 = vmatpush.bf16.msra.mxu0 %v9567
          %10309 = vmatpush.bf16.msra.mxu0 %v9563
          %10310 = vmatpush.bf16.msra.mxu0 %v9559
          %10311 = vmatpush.bf16.msra.mxu0 %v9555
          %10312 = vmatpush.bf16.msra.mxu0 %v9551
          %10313 = vmatpush.bf16.msra.mxu0 %v9547
          %10314 = vmatpush.bf16.msra.mxu0 %v9543
          %10315 = vmatmul.bf16.gmra.mxu0 %v8405
          %v10316 = vpop.f32.mrf.mxu0
          %v10317 = vadd.f32 %v10304, %v10316
          %v10318 = vpop.f32.mrf.mxu0
          %10319 = vdwg.mxu0
          %10320 = vmatpush.bf16.msra.mxu0 %v9603
          %10321 = vmatpush.bf16.msra.mxu0 %v9599
          %10322 = vmatpush.bf16.msra.mxu0 %v9595
          %10323 = vmatpush.bf16.msra.mxu0 %v9591
          %10324 = vmatpush.bf16.msra.mxu0 %v9587
          %10325 = vmatpush.bf16.msra.mxu0 %v9583
          %10326 = vmatpush.bf16.msra.mxu0 %v9579
          %10327 = vmatpush.bf16.msra.mxu0 %v9575
          %10328 = vmatmul.bf16.gmra.mxu0 %v8406
          %v10329 = vpop.f32.mrf.mxu0
          %v10330 = vadd.f32 %v10317, %v10329
          %v10331 = vpop.f32.mrf.mxu0
          %10332 = vdwg.mxu0
          %10333 = vmatpush.bf16.msra.mxu0 %v9635
          %10334 = vmatpush.bf16.msra.mxu0 %v9631
          %10335 = vmatpush.bf16.msra.mxu0 %v9627
          %10336 = vmatpush.bf16.msra.mxu0 %v9623
          %10337 = vmatpush.bf16.msra.mxu0 %v9619
          %10338 = vmatpush.bf16.msra.mxu0 %v9615
          %10339 = vmatpush.bf16.msra.mxu0 %v9611
          %10340 = vmatpush.bf16.msra.mxu0 %v9607
          %10341 = vmatmul.bf16.gmra.mxu0 %v8407
          %v10342 = vpop.f32.mrf.mxu0
          %v10343 = vadd.f32 %v10330, %v10342
          %v10344 = vpop.f32.mrf.mxu0
          %10345 = vdwg.mxu0
          %10346 = vmatpush.bf16.msra.mxu0 %v9667
          %10347 = vmatpush.bf16.msra.mxu0 %v9663
          %10348 = vmatpush.bf16.msra.mxu0 %v9659
          %10349 = vmatpush.bf16.msra.mxu0 %v9655
          %10350 = vmatpush.bf16.msra.mxu0 %v9651
          %10351 = vmatpush.bf16.msra.mxu0 %v9647
          %10352 = vmatpush.bf16.msra.mxu0 %v9643
          %10353 = vmatpush.bf16.msra.mxu0 %v9639
          %10354 = vmatmul.bf16.gmra.mxu0 %v8408
          %v10355 = vpop.f32.mrf.mxu0
          %v10356 = vadd.f32 %v10343, %v10355
          %v10357 = vpop.f32.mrf.mxu0
          %10358 = vdwg.mxu0
          %10359 = vmatpush.bf16.msra.mxu0 %v9699
          %10360 = vmatpush.bf16.msra.mxu0 %v9695
          %10361 = vmatpush.bf16.msra.mxu0 %v9691
          %10362 = vmatpush.bf16.msra.mxu0 %v9687
          %10363 = vmatpush.bf16.msra.mxu0 %v9683
          %10364 = vmatpush.bf16.msra.mxu0 %v9679
          %10365 = vmatpush.bf16.msra.mxu0 %v9675
          %10366 = vmatpush.bf16.msra.mxu0 %v9671
          %10367 = vmatmul.bf16.gmra.mxu0 %v8409
          %v10368 = vpop.f32.mrf.mxu0
          %v10369 = vadd.f32 %v10356, %v10368
          %v10370 = vpop.f32.mrf.mxu0
          %10371 = vdwg.mxu0
          %v10372 = vmax.f32 %v10057, 0.0
          %v10373 = vmax.f32 %v10161, 0.0
          %v10374 = vmax.f32 %v10265, 0.0
          %v10375 = vmax.f32 %v10369, 0.0
          %v10376 = vpack.c.bf16 %v10372, %v10372
          %v10377 = vpack.c.bf16 %v10373, %v10373
          %v10378 = vpack.c.bf16 %v10374, %v10374
          %v10379 = vpack.c.bf16 %v10375, %v10375
          %v10380 = vld [vmem:[%s7] sm:$0xff]
          %v10381 = vld [vmem:[%s7 + $0x8] sm:$0xff]
          %v10382 = vld [vmem:[%s7 + $0x10] sm:$0xff]
          %v10383 = vld [vmem:[%s7 + $0x18] sm:$0xff]
          %v10384 = vld [vmem:[%s7 + $0x20] sm:$0xff]
          %v10385 = vld [vmem:[%s7 + $0x28] sm:$0xff]
          %v10386 = vld [vmem:[%s7 + $0x30] sm:$0xff]
          %v10387 = vld [vmem:[%s7 + $0x38] sm:$0xff]
          %v10388 = vld [vmem:[%s7 + $0x40] sm:$0xff]
          %v10389 = vld [vmem:[%s7 + $0x48] sm:$0xff]
          %v10390 = vld [vmem:[%s7 + $0x50] sm:$0xff]
          %v10391 = vld [vmem:[%s7 + $0x58] sm:$0xff]
          %v10392 = vld [vmem:[%s7 + $0x60] sm:$0xff]
          %v10393 = vld [vmem:[%s7 + $0x68] sm:$0xff]
          %v10394 = vld [vmem:[%s7 + $0x70] sm:$0xff]
          %v10395 = vld [vmem:[%s7 + $0x78] sm:$0xff]
          %v10396 = vld [vmem:[%s7 + $0x80] sm:$0xff]
          %v10397 = vld [vmem:[%s7 + $0x88] sm:$0xff]
          %v10398 = vld [vmem:[%s7 + $0x90] sm:$0xff]
          %v10399 = vld [vmem:[%s7 + $0x98] sm:$0xff]
          %v10400 = vld [vmem:[%s7 + $0xa0] sm:$0xff]
          %v10401 = vld [vmem:[%s7 + $0xa8] sm:$0xff]
          %v10402 = vld [vmem:[%s7 + $0xb0] sm:$0xff]
          %v10403 = vld [vmem:[%s7 + $0xb8] sm:$0xff]
          %v10404 = vld [vmem:[%s7 + $0xc0] sm:$0xff]
          %v10405 = vld [vmem:[%s7 + $0xc8] sm:$0xff]
          %v10406 = vld [vmem:[%s7 + $0xd0] sm:$0xff]
          %v10407 = vld [vmem:[%s7 + $0xd8] sm:$0xff]
          %v10408 = vld [vmem:[%s7 + $0xe0] sm:$0xff]
          %v10409 = vld [vmem:[%s7 + $0xe8] sm:$0xff]
          %v10410 = vld [vmem:[%s7 + $0xf0] sm:$0xff]
          %v10411 = vld [vmem:[%s7 + $0xf8] sm:$0xff]
          %v10412 = vld [vmem:[%s7 + $0x100] sm:$0xff]
          %v10413 = vld [vmem:[%s7 + $0x108] sm:$0xff]
          %v10414 = vld [vmem:[%s7 + $0x110] sm:$0xff]
          %v10415 = vld [vmem:[%s7 + $0x118] sm:$0xff]
          %v10416 = vld [vmem:[%s7 + $0x120] sm:$0xff]
          %v10417 = vld [vmem:[%s7 + $0x128] sm:$0xff]
          %v10418 = vld [vmem:[%s7 + $0x130] sm:$0xff]
          %v10419 = vld [vmem:[%s7 + $0x138] sm:$0xff]
          %v10420 = vld [vmem:[%s7 + $0x140] sm:$0xff]
          %v10421 = vld [vmem:[%s7 + $0x148] sm:$0xff]
          %v10422 = vld [vmem:[%s7 + $0x150] sm:$0xff]
          %v10423 = vld [vmem:[%s7 + $0x158] sm:$0xff]
          %v10424 = vld [vmem:[%s7 + $0x160] sm:$0xff]
          %v10425 = vld [vmem:[%s7 + $0x168] sm:$0xff]
          %v10426 = vld [vmem:[%s7 + $0x170] sm:$0xff]
          %v10427 = vld [vmem:[%s7 + $0x178] sm:$0xff]
          %v10428 = vld [vmem:[%s7 + $0x180] sm:$0xff]
          %v10429 = vld [vmem:[%s7 + $0x188] sm:$0xff]
          %v10430 = vld [vmem:[%s7 + $0x190] sm:$0xff]
          %v10431 = vld [vmem:[%s7 + $0x198] sm:$0xff]
          %v10432 = vld [vmem:[%s7 + $0x1a0] sm:$0xff]
          %v10433 = vld [vmem:[%s7 + $0x1a8] sm:$0xff]
          %v10434 = vld [vmem:[%s7 + $0x1b0] sm:$0xff]
          %v10435 = vld [vmem:[%s7 + $0x1b8] sm:$0xff]
          %v10436 = vld [vmem:[%s7 + $0x1c0] sm:$0xff]
          %v10437 = vld [vmem:[%s7 + $0x1c8] sm:$0xff]
          %v10438 = vld [vmem:[%s7 + $0x1d0] sm:$0xff]
          %v10439 = vld [vmem:[%s7 + $0x1d8] sm:$0xff]
          %v10440 = vld [vmem:[%s7 + $0x1e0] sm:$0xff]
          %v10441 = vld [vmem:[%s7 + $0x1e8] sm:$0xff]
          %v10442 = vld [vmem:[%s7 + $0x1f0] sm:$0xff]
          %v10443 = vld [vmem:[%s7 + $0x1f8] sm:$0xff]
          %v10444 = vld [vmem:[%s8] sm:$0x3]
          %v10446 = vperm.slane %v10444, 0
          %v10447 = vperm.slane %v10444, 1
          %v10514 = vunpack.c.l.b16 %v10380
          %v10515 = vunpack.c.h.b16 %v10380
          %v10516 = vunpack.c.l.b16 %v10381
          %v10517 = vunpack.c.h.b16 %v10381
          %v10518 = vunpack.c.l.b16 %v10382
          %v10519 = vunpack.c.h.b16 %v10382
          %v10520 = vunpack.c.l.b16 %v10383
          %v10521 = vunpack.c.h.b16 %v10383
          %v10522 = vunpack.c.l.b16 %v10384
          %v10523 = vunpack.c.h.b16 %v10384
          %v10524 = vunpack.c.l.b16 %v10385
          %v10525 = vunpack.c.h.b16 %v10385
          %v10526 = vunpack.c.l.b16 %v10386
          %v10527 = vunpack.c.h.b16 %v10386
          %v10528 = vunpack.c.l.b16 %v10387
          %v10529 = vunpack.c.h.b16 %v10387
          %v10530 = vunpack.c.l.b16 %v10388
          %v10531 = vunpack.c.h.b16 %v10388
          %v10532 = vunpack.c.l.b16 %v10389
          %v10533 = vunpack.c.h.b16 %v10389
          %v10534 = vunpack.c.l.b16 %v10390
          %v10535 = vunpack.c.h.b16 %v10390
          %v10536 = vunpack.c.l.b16 %v10391
          %v10537 = vunpack.c.h.b16 %v10391
          %v10538 = vunpack.c.l.b16 %v10392
          %v10539 = vunpack.c.h.b16 %v10392
          %v10540 = vunpack.c.l.b16 %v10393
          %v10541 = vunpack.c.h.b16 %v10393
          %v10542 = vunpack.c.l.b16 %v10394
          %v10543 = vunpack.c.h.b16 %v10394
          %v10544 = vunpack.c.l.b16 %v10395
          %v10545 = vunpack.c.h.b16 %v10395
          %v10546 = vunpack.c.l.b16 %v10396
          %v10547 = vunpack.c.h.b16 %v10396
          %v10548 = vunpack.c.l.b16 %v10397
          %v10549 = vunpack.c.h.b16 %v10397
          %v10550 = vunpack.c.l.b16 %v10398
          %v10551 = vunpack.c.h.b16 %v10398
          %v10552 = vunpack.c.l.b16 %v10399
          %v10553 = vunpack.c.h.b16 %v10399
          %v10554 = vunpack.c.l.b16 %v10400
          %v10555 = vunpack.c.h.b16 %v10400
          %v10556 = vunpack.c.l.b16 %v10401
          %v10557 = vunpack.c.h.b16 %v10401
          %v10558 = vunpack.c.l.b16 %v10402
          %v10559 = vunpack.c.h.b16 %v10402
          %v10560 = vunpack.c.l.b16 %v10403
          %v10561 = vunpack.c.h.b16 %v10403
          %v10562 = vunpack.c.l.b16 %v10404
          %v10563 = vunpack.c.h.b16 %v10404
          %v10564 = vunpack.c.l.b16 %v10405
          %v10565 = vunpack.c.h.b16 %v10405
          %v10566 = vunpack.c.l.b16 %v10406
          %v10567 = vunpack.c.h.b16 %v10406
          %v10568 = vunpack.c.l.b16 %v10407
          %v10569 = vunpack.c.h.b16 %v10407
          %v10570 = vunpack.c.l.b16 %v10408
          %v10571 = vunpack.c.h.b16 %v10408
          %v10572 = vunpack.c.l.b16 %v10409
          %v10573 = vunpack.c.h.b16 %v10409
          %v10574 = vunpack.c.l.b16 %v10410
          %v10575 = vunpack.c.h.b16 %v10410
          %v10576 = vunpack.c.l.b16 %v10411
          %v10577 = vunpack.c.h.b16 %v10411
          %v10578 = vunpack.c.l.b16 %v10412
          %v10579 = vunpack.c.h.b16 %v10412
          %v10580 = vunpack.c.l.b16 %v10413
          %v10581 = vunpack.c.h.b16 %v10413
          %v10582 = vunpack.c.l.b16 %v10414
          %v10583 = vunpack.c.h.b16 %v10414
          %v10584 = vunpack.c.l.b16 %v10415
          %v10585 = vunpack.c.h.b16 %v10415
          %v10586 = vunpack.c.l.b16 %v10416
          %v10587 = vunpack.c.h.b16 %v10416
          %v10588 = vunpack.c.l.b16 %v10417
          %v10589 = vunpack.c.h.b16 %v10417
          %v10590 = vunpack.c.l.b16 %v10418
          %v10591 = vunpack.c.h.b16 %v10418
          %v10592 = vunpack.c.l.b16 %v10419
          %v10593 = vunpack.c.h.b16 %v10419
          %v10594 = vunpack.c.l.b16 %v10420
          %v10595 = vunpack.c.h.b16 %v10420
          %v10596 = vunpack.c.l.b16 %v10421
          %v10597 = vunpack.c.h.b16 %v10421
          %v10598 = vunpack.c.l.b16 %v10422
          %v10599 = vunpack.c.h.b16 %v10422
          %v10600 = vunpack.c.l.b16 %v10423
          %v10601 = vunpack.c.h.b16 %v10423
          %v10602 = vunpack.c.l.b16 %v10424
          %v10603 = vunpack.c.h.b16 %v10424
          %v10604 = vunpack.c.l.b16 %v10425
          %v10605 = vunpack.c.h.b16 %v10425
          %v10606 = vunpack.c.l.b16 %v10426
          %v10607 = vunpack.c.h.b16 %v10426
          %v10608 = vunpack.c.l.b16 %v10427
          %v10609 = vunpack.c.h.b16 %v10427
          %v10610 = vunpack.c.l.b16 %v10428
          %v10611 = vunpack.c.h.b16 %v10428
          %v10612 = vunpack.c.l.b16 %v10429
          %v10613 = vunpack.c.h.b16 %v10429
          %v10614 = vunpack.c.l.b16 %v10430
          %v10615 = vunpack.c.h.b16 %v10430
          %v10616 = vunpack.c.l.b16 %v10431
          %v10617 = vunpack.c.h.b16 %v10431
          %v10618 = vunpack.c.l.b16 %v10432
          %v10619 = vunpack.c.h.b16 %v10432
          %v10620 = vunpack.c.l.b16 %v10433
          %v10621 = vunpack.c.h.b16 %v10433
          %v10622 = vunpack.c.l.b16 %v10434
          %v10623 = vunpack.c.h.b16 %v10434
          %v10624 = vunpack.c.l.b16 %v10435
          %v10625 = vunpack.c.h.b16 %v10435
          %v10626 = vunpack.c.l.b16 %v10436
          %v10627 = vunpack.c.h.b16 %v10436
          %v10628 = vunpack.c.l.b16 %v10437
          %v10629 = vunpack.c.h.b16 %v10437
          %v10630 = vunpack.c.l.b16 %v10438
          %v10631 = vunpack.c.h.b16 %v10438
          %v10632 = vunpack.c.l.b16 %v10439
          %v10633 = vunpack.c.h.b16 %v10439
          %v10634 = vunpack.c.l.b16 %v10440
          %v10635 = vunpack.c.h.b16 %v10440
          %v10636 = vunpack.c.l.b16 %v10441
          %v10637 = vunpack.c.h.b16 %v10441
          %v10638 = vunpack.c.l.b16 %v10442
          %v10639 = vunpack.c.h.b16 %v10442
          %v10640 = vunpack.c.l.b16 %v10443
          %v10641 = vunpack.c.h.b16 %v10443
          %v10642 = vpack.c.b16 %v10516, %v10514
          %v10643 = vpack.c.b16 %v10517, %v10515
          %v10644 = vpack.c.b16 %v10520, %v10518
          %v10645 = vpack.c.b16 %v10521, %v10519
          %v10646 = vpack.c.b16 %v10524, %v10522
          %v10647 = vpack.c.b16 %v10525, %v10523
          %v10648 = vpack.c.b16 %v10528, %v10526
          %v10649 = vpack.c.b16 %v10529, %v10527
          %v10650 = vpack.c.b16 %v10532, %v10530
          %v10651 = vpack.c.b16 %v10533, %v10531
          %v10652 = vpack.c.b16 %v10536, %v10534
          %v10653 = vpack.c.b16 %v10537, %v10535
          %v10654 = vpack.c.b16 %v10540, %v10538
          %v10655 = vpack.c.b16 %v10541, %v10539
          %v10656 = vpack.c.b16 %v10544, %v10542
          %v10657 = vpack.c.b16 %v10545, %v10543
          %v10658 = vpack.c.b16 %v10548, %v10546
          %v10659 = vpack.c.b16 %v10549, %v10547
          %v10660 = vpack.c.b16 %v10552, %v10550
          %v10661 = vpack.c.b16 %v10553, %v10551
          %v10662 = vpack.c.b16 %v10556, %v10554
          %v10663 = vpack.c.b16 %v10557, %v10555
          %v10664 = vpack.c.b16 %v10560, %v10558
          %v10665 = vpack.c.b16 %v10561, %v10559
          %v10666 = vpack.c.b16 %v10564, %v10562
          %v10667 = vpack.c.b16 %v10565, %v10563
          %v10668 = vpack.c.b16 %v10568, %v10566
          %v10669 = vpack.c.b16 %v10569, %v10567
          %v10670 = vpack.c.b16 %v10572, %v10570
          %v10671 = vpack.c.b16 %v10573, %v10571
          %v10672 = vpack.c.b16 %v10576, %v10574
          %v10673 = vpack.c.b16 %v10577, %v10575
          %v10674 = vpack.c.b16 %v10580, %v10578
          %v10675 = vpack.c.b16 %v10581, %v10579
          %v10676 = vpack.c.b16 %v10584, %v10582
          %v10677 = vpack.c.b16 %v10585, %v10583
          %v10678 = vpack.c.b16 %v10588, %v10586
          %v10679 = vpack.c.b16 %v10589, %v10587
          %v10680 = vpack.c.b16 %v10592, %v10590
          %v10681 = vpack.c.b16 %v10593, %v10591
          %v10682 = vpack.c.b16 %v10596, %v10594
          %v10683 = vpack.c.b16 %v10597, %v10595
          %v10684 = vpack.c.b16 %v10600, %v10598
          %v10685 = vpack.c.b16 %v10601, %v10599
          %v10686 = vpack.c.b16 %v10604, %v10602
          %v10687 = vpack.c.b16 %v10605, %v10603
          %v10688 = vpack.c.b16 %v10608, %v10606
          %v10689 = vpack.c.b16 %v10609, %v10607
          %v10690 = vpack.c.b16 %v10612, %v10610
          %v10691 = vpack.c.b16 %v10613, %v10611
          %v10692 = vpack.c.b16 %v10616, %v10614
          %v10693 = vpack.c.b16 %v10617, %v10615
          %v10694 = vpack.c.b16 %v10620, %v10618
          %v10695 = vpack.c.b16 %v10621, %v10619
          %v10696 = vpack.c.b16 %v10624, %v10622
          %v10697 = vpack.c.b16 %v10625, %v10623
          %v10698 = vpack.c.b16 %v10628, %v10626
          %v10699 = vpack.c.b16 %v10629, %v10627
          %v10700 = vpack.c.b16 %v10632, %v10630
          %v10701 = vpack.c.b16 %v10633, %v10631
          %v10702 = vpack.c.b16 %v10636, %v10634
          %v10703 = vpack.c.b16 %v10637, %v10635
          %v10704 = vpack.c.b16 %v10640, %v10638
          %v10705 = vpack.c.b16 %v10641, %v10639
          %10770 = vmatpush.bf16.msra.mxu0 %v10656
          %10771 = vmatpush.bf16.msra.mxu0 %v10654
          %10772 = vmatpush.bf16.msra.mxu0 %v10652
          %10773 = vmatpush.bf16.msra.mxu0 %v10650
          %10774 = vmatpush.bf16.msra.mxu0 %v10648
          %10775 = vmatpush.bf16.msra.mxu0 %v10646
          %10776 = vmatpush.bf16.msra.mxu0 %v10644
          %10777 = vmatpush.bf16.msra.mxu0 %v10642
          %10778 = vmatmul.bf16.gmra.mxu0 %v10376
          %v10779 = vpop.f32.mrf.mxu0
          %v10780 = vadd.f32 %v10446, %v10779
          %v10781 = vpop.f32.mrf.mxu0
          %10782 = vdwg.mxu0
          %10783 = vmatpush.bf16.msra.mxu0 %v10672
          %10784 = vmatpush.bf16.msra.mxu0 %v10670
          %10785 = vmatpush.bf16.msra.mxu0 %v10668
          %10786 = vmatpush.bf16.msra.mxu0 %v10666
          %10787 = vmatpush.bf16.msra.mxu0 %v10664
          %10788 = vmatpush.bf16.msra.mxu0 %v10662
          %10789 = vmatpush.bf16.msra.mxu0 %v10660
          %10790 = vmatpush.bf16.msra.mxu0 %v10658
          %10791 = vmatmul.bf16.gmra.mxu0 %v10377
          %v10792 = vpop.f32.mrf.mxu0
          %v10793 = vadd.f32 %v10780, %v10792
          %v10794 = vpop.f32.mrf.mxu0
          %10795 = vdwg.mxu0
          %10796 = vmatpush.bf16.msra.mxu0 %v10688
          %10797 = vmatpush.bf16.msra.mxu0 %v10686
          %10798 = vmatpush.bf16.msra.mxu0 %v10684
          %10799 = vmatpush.bf16.msra.mxu0 %v10682
          %10800 = vmatpush.bf16.msra.mxu0 %v10680
          %10801 = vmatpush.bf16.msra.mxu0 %v10678
          %10802 = vmatpush.bf16.msra.mxu0 %v10676
          %10803 = vmatpush.bf16.msra.mxu0 %v10674
          %10804 = vmatmul.bf16.gmra.mxu0 %v10378
          %v10805 = vpop.f32.mrf.mxu0
          %v10806 = vadd.f32 %v10793, %v10805
          %v10807 = vpop.f32.mrf.mxu0
          %10808 = vdwg.mxu0
          %10809 = vmatpush.bf16.msra.mxu0 %v10704
          %10810 = vmatpush.bf16.msra.mxu0 %v10702
          %10811 = vmatpush.bf16.msra.mxu0 %v10700
          %10812 = vmatpush.bf16.msra.mxu0 %v10698
          %10813 = vmatpush.bf16.msra.mxu0 %v10696
          %10814 = vmatpush.bf16.msra.mxu0 %v10694
          %10815 = vmatpush.bf16.msra.mxu0 %v10692
          %10816 = vmatpush.bf16.msra.mxu0 %v10690
          %10817 = vmatmul.bf16.gmra.mxu0 %v10379
          %v10818 = vpop.f32.mrf.mxu0
          %v10819 = vadd.f32 %v10806, %v10818
          %v10820 = vpop.f32.mrf.mxu0
          %10821 = vdwg.mxu0
          %10822 = vmatpush.bf16.msra.mxu0 %v10657
          %10823 = vmatpush.bf16.msra.mxu0 %v10655
          %10824 = vmatpush.bf16.msra.mxu0 %v10653
          %10825 = vmatpush.bf16.msra.mxu0 %v10651
          %10826 = vmatpush.bf16.msra.mxu0 %v10649
          %10827 = vmatpush.bf16.msra.mxu0 %v10647
          %10828 = vmatpush.bf16.msra.mxu0 %v10645
          %10829 = vmatpush.bf16.msra.mxu0 %v10643
          %10830 = vmatmul.bf16.gmra.mxu0 %v10376
          %v10831 = vpop.f32.mrf.mxu0
          %v10832 = vadd.f32 %v10447, %v10831
          %v10833 = vpop.f32.mrf.mxu0
          %10834 = vdwg.mxu0
          %10835 = vmatpush.bf16.msra.mxu0 %v10673
          %10836 = vmatpush.bf16.msra.mxu0 %v10671
          %10837 = vmatpush.bf16.msra.mxu0 %v10669
          %10838 = vmatpush.bf16.msra.mxu0 %v10667
          %10839 = vmatpush.bf16.msra.mxu0 %v10665
          %10840 = vmatpush.bf16.msra.mxu0 %v10663
          %10841 = vmatpush.bf16.msra.mxu0 %v10661
          %10842 = vmatpush.bf16.msra.mxu0 %v10659
          %10843 = vmatmul.bf16.gmra.mxu0 %v10377
          %v10844 = vpop.f32.mrf.mxu0
          %v10845 = vadd.f32 %v10832, %v10844
          %v10846 = vpop.f32.mrf.mxu0
          %10847 = vdwg.mxu0
          %10848 = vmatpush.bf16.msra.mxu0 %v10689
          %10849 = vmatpush.bf16.msra.mxu0 %v10687
          %10850 = vmatpush.bf16.msra.mxu0 %v10685
          %10851 = vmatpush.bf16.msra.mxu0 %v10683
          %10852 = vmatpush.bf16.msra.mxu0 %v10681
          %10853 = vmatpush.bf16.msra.mxu0 %v10679
          %10854 = vmatpush.bf16.msra.mxu0 %v10677
          %10855 = vmatpush.bf16.msra.mxu0 %v10675
          %10856 = vmatmul.bf16.gmra.mxu0 %v10378
          %v10857 = vpop.f32.mrf.mxu0
          %v10858 = vadd.f32 %v10845, %v10857
          %v10859 = vpop.f32.mrf.mxu0
          %10860 = vdwg.mxu0
          %10861 = vmatpush.bf16.msra.mxu0 %v10705
          %10862 = vmatpush.bf16.msra.mxu0 %v10703
          %10863 = vmatpush.bf16.msra.mxu0 %v10701
          %10864 = vmatpush.bf16.msra.mxu0 %v10699
          %10865 = vmatpush.bf16.msra.mxu0 %v10697
          %10866 = vmatpush.bf16.msra.mxu0 %v10695
          %10867 = vmatpush.bf16.msra.mxu0 %v10693
          %10868 = vmatpush.bf16.msra.mxu0 %v10691
          %10869 = vmatmul.bf16.gmra.mxu0 %v10379
          %v10870 = vpop.f32.mrf.mxu0
          %v10871 = vadd.f32 %v10858, %v10870
          %v10872 = vpop.f32.mrf.mxu0
          %10873 = vdwg.mxu0
          %v10874 = vmax.f32 %v10819, 0.0
          %v10875 = vmax.f32 %v10871, 0.0
          %v10876 = vpack.c.bf16 %v10874, %v10874
          %v10877 = vpack.c.bf16 %v10875, %v10875
          %v10878 = vld [vmem:[%s9] sm:$0xf]
          %v10879 = vld [vmem:[%s9 + $0x4] sm:$0xf]
          %v10880 = vld [vmem:[%s9 + $0x8] sm:$0xf]
          %v10881 = vld [vmem:[%s9 + $0xc] sm:$0xf]
          %v10882 = vld [vmem:[%s9 + $0x10] sm:$0xf]
          %v10883 = vld [vmem:[%s9 + $0x14] sm:$0xf]
          %v10884 = vld [vmem:[%s9 + $0x18] sm:$0xf]
          %v10885 = vld [vmem:[%s9 + $0x1c] sm:$0xf]
          %v10886 = vld [vmem:[%s9 + $0x20] sm:$0xf]
          %v10887 = vld [vmem:[%s9 + $0x24] sm:$0xf]
          %v10888 = vld [vmem:[%s9 + $0x28] sm:$0xf]
          %v10889 = vld [vmem:[%s9 + $0x2c] sm:$0xf]
          %v10890 = vld [vmem:[%s9 + $0x30] sm:$0xf]
          %v10891 = vld [vmem:[%s9 + $0x34] sm:$0xf]
          %v10892 = vld [vmem:[%s9 + $0x38] sm:$0xf]
          %v10893 = vld [vmem:[%s9 + $0x3c] sm:$0xf]
          %v10894 = vld [vmem:[%s9 + $0x40] sm:$0xf]
          %v10895 = vld [vmem:[%s9 + $0x44] sm:$0xf]
          %v10896 = vld [vmem:[%s9 + $0x48] sm:$0xf]
          %v10897 = vld [vmem:[%s9 + $0x4c] sm:$0xf]
          %v10898 = vld [vmem:[%s9 + $0x50] sm:$0xf]
          %v10899 = vld [vmem:[%s9 + $0x54] sm:$0xf]
          %v10900 = vld [vmem:[%s9 + $0x58] sm:$0xf]
          %v10901 = vld [vmem:[%s9 + $0x5c] sm:$0xf]
          %v10902 = vld [vmem:[%s9 + $0x60] sm:$0xf]
          %v10903 = vld [vmem:[%s9 + $0x64] sm:$0xf]
          %v10904 = vld [vmem:[%s9 + $0x68] sm:$0xf]
          %v10905 = vld [vmem:[%s9 + $0x6c] sm:$0xf]
          %v10906 = vld [vmem:[%s9 + $0x70] sm:$0xf]
          %v10907 = vld [vmem:[%s9 + $0x74] sm:$0xf]
          %v10908 = vld [vmem:[%s9 + $0x78] sm:$0xf]
          %v10909 = vld [vmem:[%s9 + $0x7c] sm:$0xf]
          %v10910 = vld [vmem:[%s10] sm:$0x1]
          %v10912 = vperm.slane %v10910, 0
          %v10946 = vunpack.c.l.b16 %v10878
          %v10947 = vunpack.c.l.b16 %v10879
          %v10948 = vunpack.c.l.b16 %v10880
          %v10949 = vunpack.c.l.b16 %v10881
          %v10950 = vunpack.c.l.b16 %v10882
          %v10951 = vunpack.c.l.b16 %v10883
          %v10952 = vunpack.c.l.b16 %v10884
          %v10953 = vunpack.c.l.b16 %v10885
          %v10954 = vunpack.c.l.b16 %v10886
          %v10955 = vunpack.c.l.b16 %v10887
          %v10956 = vunpack.c.l.b16 %v10888
          %v10957 = vunpack.c.l.b16 %v10889
          %v10958 = vunpack.c.l.b16 %v10890
          %v10959 = vunpack.c.l.b16 %v10891
          %v10960 = vunpack.c.l.b16 %v10892
          %v10961 = vunpack.c.l.b16 %v10893
          %v10962 = vunpack.c.l.b16 %v10894
          %v10963 = vunpack.c.l.b16 %v10895
          %v10964 = vunpack.c.l.b16 %v10896
          %v10965 = vunpack.c.l.b16 %v10897
          %v10966 = vunpack.c.l.b16 %v10898
          %v10967 = vunpack.c.l.b16 %v10899
          %v10968 = vunpack.c.l.b16 %v10900
          %v10969 = vunpack.c.l.b16 %v10901
          %v10970 = vunpack.c.l.b16 %v10902
          %v10971 = vunpack.c.l.b16 %v10903
          %v10972 = vunpack.c.l.b16 %v10904
          %v10973 = vunpack.c.l.b16 %v10905
          %v10974 = vunpack.c.l.b16 %v10906
          %v10975 = vunpack.c.l.b16 %v10907
          %v10976 = vunpack.c.l.b16 %v10908
          %v10977 = vunpack.c.l.b16 %v10909
          %v10978 = vpack.c.b16 %v10947, %v10946
          %v10979 = vpack.c.b16 %v10949, %v10948
          %v10980 = vpack.c.b16 %v10951, %v10950
          %v10981 = vpack.c.b16 %v10953, %v10952
          %v10982 = vpack.c.b16 %v10955, %v10954
          %v10983 = vpack.c.b16 %v10957, %v10956
          %v10984 = vpack.c.b16 %v10959, %v10958
          %v10985 = vpack.c.b16 %v10961, %v10960
          %v10986 = vpack.c.b16 %v10963, %v10962
          %v10987 = vpack.c.b16 %v10965, %v10964
          %v10988 = vpack.c.b16 %v10967, %v10966
          %v10989 = vpack.c.b16 %v10969, %v10968
          %v10990 = vpack.c.b16 %v10971, %v10970
          %v10991 = vpack.c.b16 %v10973, %v10972
          %v10992 = vpack.c.b16 %v10975, %v10974
          %v10993 = vpack.c.b16 %v10977, %v10976
          %11010 = vmatpush.bf16.msra.mxu0 %v10985
          %11011 = vmatpush.bf16.msra.mxu0 %v10984
          %11012 = vmatpush.bf16.msra.mxu0 %v10983
          %11013 = vmatpush.bf16.msra.mxu0 %v10982
          %11014 = vmatpush.bf16.msra.mxu0 %v10981
          %11015 = vmatpush.bf16.msra.mxu0 %v10980
          %11016 = vmatpush.bf16.msra.mxu0 %v10979
          %11017 = vmatpush.bf16.msra.mxu0 %v10978
          %11018 = vmatmul.bf16.gmra.mxu0 %v10876
          %v11019 = vpop.f32.mrf.mxu0
          %v11020 = vadd.f32 %v10912, %v11019
          %v11021 = vpop.f32.mrf.mxu0
          %11022 = vdwg.mxu0
          %11023 = vmatpush.bf16.msra.mxu0 %v10993
          %11024 = vmatpush.bf16.msra.mxu0 %v10992
          %11025 = vmatpush.bf16.msra.mxu0 %v10991
          %11026 = vmatpush.bf16.msra.mxu0 %v10990
          %11027 = vmatpush.bf16.msra.mxu0 %v10989
          %11028 = vmatpush.bf16.msra.mxu0 %v10988
          %11029 = vmatpush.bf16.msra.mxu0 %v10987
          %11030 = vmatpush.bf16.msra.mxu0 %v10986
          %11031 = vmatmul.bf16.gmra.mxu0 %v10877
          %v11032 = vpop.f32.mrf.mxu0
          %v11033 = vadd.f32 %v11020, %v11032
          %v11034 = vpop.f32.mrf.mxu0
          %11035 = vdwg.mxu0
          %v11036 = vmax.f32 %v11033, 0.0
          %v11037 = vpack.c.bf16 %v11036, %v11036
          %v11038 = vld [vmem:[%s11] sm:$0xf]
          %v11039 = vld [vmem:[%s11 + $0x4] sm:$0xf]
          %v11040 = vld [vmem:[%s11 + $0x8] sm:$0xf]
          %v11041 = vld [vmem:[%s11 + $0xc] sm:$0xf]
          %v11042 = vld [vmem:[%s11 + $0x10] sm:$0xf]
          %v11043 = vld [vmem:[%s11 + $0x14] sm:$0xf]
          %v11044 = vld [vmem:[%s11 + $0x18] sm:$0xf]
          %v11045 = vld [vmem:[%s11 + $0x1c] sm:$0xf]
          %v11046 = vld [vmem:[%s11 + $0x20] sm:$0xf]
          %v11047 = vld [vmem:[%s11 + $0x24] sm:$0xf]
          %v11048 = vld [vmem:[%s11 + $0x28] sm:$0xf]
          %v11049 = vld [vmem:[%s11 + $0x2c] sm:$0xf]
          %v11050 = vld [vmem:[%s11 + $0x30] sm:$0xf]
          %v11051 = vld [vmem:[%s11 + $0x34] sm:$0xf]
          %v11052 = vld [vmem:[%s11 + $0x38] sm:$0xf]
          %v11053 = vld [vmem:[%s11 + $0x3c] sm:$0xf]
          %v11054 = vld [vmem:[%s12] sm:$0x1]
          %v11056 = vperm.slane %v11054, 0
          %v11074 = vunpack.c.l.b16 %v11038
          %v11075 = vunpack.c.l.b16 %v11039
          %v11076 = vunpack.c.l.b16 %v11040
          %v11077 = vunpack.c.l.b16 %v11041
          %v11078 = vunpack.c.l.b16 %v11042
          %v11079 = vunpack.c.l.b16 %v11043
          %v11080 = vunpack.c.l.b16 %v11044
          %v11081 = vunpack.c.l.b16 %v11045
          %v11082 = vunpack.c.l.b16 %v11046
          %v11083 = vunpack.c.l.b16 %v11047
          %v11084 = vunpack.c.l.b16 %v11048
          %v11085 = vunpack.c.l.b16 %v11049
          %v11086 = vunpack.c.l.b16 %v11050
          %v11087 = vunpack.c.l.b16 %v11051
          %v11088 = vunpack.c.l.b16 %v11052
          %v11089 = vunpack.c.l.b16 %v11053
          %v11090 = vpack.c.b16 %v11075, %v11074
          %v11091 = vpack.c.b16 %v11077, %v11076
          %v11092 = vpack.c.b16 %v11079, %v11078
          %v11093 = vpack.c.b16 %v11081, %v11080
          %v11094 = vpack.c.b16 %v11083, %v11082
          %v11095 = vpack.c.b16 %v11085, %v11084
          %v11096 = vpack.c.b16 %v11087, %v11086
          %v11097 = vpack.c.b16 %v11089, %v11088
          %11106 = vmatpush.bf16.msra.mxu0 %v11097
          %11107 = vmatpush.bf16.msra.mxu0 %v11096
          %11108 = vmatpush.bf16.msra.mxu0 %v11095
          %11109 = vmatpush.bf16.msra.mxu0 %v11094
          %11110 = vmatpush.bf16.msra.mxu0 %v11093
          %11111 = vmatpush.bf16.msra.mxu0 %v11092
          %11112 = vmatpush.bf16.msra.mxu0 %v11091
          %11113 = vmatpush.bf16.msra.mxu0 %v11090
          %11114 = vmatmul.bf16.gmra.mxu0 %v11037
          %v11115 = vpop.f32.mrf.mxu0
          %v11116 = vadd.f32 %v11056, %v11115
          %v11117 = vpop.f32.mrf.mxu0
          %11118 = vdwg.mxu0
          %11119 = vst [vmem:[#allocation3] sm:$0x3] %v11116
        $region80: #{mlp2_forward_pallas.1} parent=71 // pred_fallthru
          _
        // Predicated region
        $region81: #{mlp2_forward_pallas.1} parent=71 // pred_check
          %p11120 = pneg %p316
        $region82: #{mlp2_forward_pallas.1} parent=71 // pred_check_branch
          %11122 = sbr.rel (%p11120) target = $region84
        $region83: #{mlp2_forward_pallas.1} parent=71 // pred_region
          %11124 = vsyncadd [#allocation4], 0
          %s11126 = sshll.u32 [#allocation3], 4
          %s11127 = int_to_ptr.vmem [resolvable:$true] %s11126
          %s11128 = sshll.u32 %s13, 4
          %s11129 = int_to_ptr.hbm [resolvable:$true] %s11128
          %11131 = dma.vmem_to_hbm [thread:$0]  %s11127, 32, %s11129, [#allocation4]
        $region84: #{mlp2_forward_pallas.1} parent=71 // pred_fallthru
          _
        // Predicated region
        $region85: #{mlp2_forward_pallas.1} parent=71 // pred_check
          %p11132 = pneg %p316
        $region86: #{mlp2_forward_pallas.1} parent=71 // pred_check_branch
          %11134 = sbr.rel (%p11132) target = $region88
        $region87: #{mlp2_forward_pallas.1} parent=71 // pred_region
          %11136 = dma.done [#allocation4], 32
        $region88: #{mlp2_forward_pallas.1} parent=71 // pred_fallthru
          _
      $region72: #{mlp2_forward_pallas.1} parent=5 // pred_fallthru
        _
      %p11137 = scmp.le.s32.totalorder 2, %s20
      // Predicated region
      $region89: #{mlp2_forward_pallas.1} parent=5 // pred_check
        %p11138 = pneg %p11137
      $region90: #{mlp2_forward_pallas.1} parent=5 // pred_check_branch
        %11140 = sbr.rel (%p11138) target = $region92
      $region91: #{mlp2_forward_pallas.1} parent=5 // pred_region
        %s11141 = ssub.s32 %s20, 2
      $region92: #{mlp2_forward_pallas.1} parent=5 // pred_fallthru
        _
    $region6: #{mlp2_forward_pallas.1} parent=1 // loop_footer
      %s24 = sadd.s32 1, %s20
    $region7: #{mlp2_forward_pallas.1} parent=1 // loop_footer_branch
      %19 = sbr.rel target = $region3
    $region8: #{mlp2_forward_pallas.1} parent=1 // loop_exit
      _
    %11142 = vsyncpa [#allocation4], 1
    %s11143 = scalar_lea.sflag [#allocation4], 1
    %11144 = vsyncpa %s11143, 1

</llo_original>
